<compile_context>
chip_gen: v7x
topology: tpu7x:2x2x1
jax: 0.10.0
libtpu: 0.0.40
codegen_flags: <defaults>
</compile_context>

<pallas_src>
import numpy as np
import jax
import jax.numpy as jnp
from jax import lax
from jax.experimental import pallas as pl
from jax.experimental.pallas import tpu as pltpu

H_ENC, W_ENC, C_ENC = 23, 29, 64           # encoder output spatial dims / channels
SEG = 32                                   # per-sample padded segment (>= 29, > max dilation 16)
K_ENC = 16                                 # 3x3 = 9 encoder taps, padded to 16
SLAB_LANES = 256                           # weight-slab lane width (widest weight is 144)
TCN_CHANNELS = [72, 36, 24, 12, 6]         # TemporalConvNet(64, [72,36,24,12,6])
C_OUT = TCN_CHANNELS[-1]                   # 6


# --------------------------------------------------------------------------
# Host-side weight packing: one bf16 slab + static row-offset layout
# --------------------------------------------------------------------------
def pack_weights(params):
    entries = []  # (name, 2-D np.float32)

    enc_w = np.zeros((K_ENC, C_ENC), np.float32)
    enc_w[:9] = np.asarray(params["enc_w"])
    entries.append(("enc_w", enc_w))
    entries.append(("enc_b", np.asarray(params["enc_b"])))          # (1, 64)

    for stack, blocks in (("t1", params["tcn1"]), ("t2", params["tcn2"])):
        cin = C_ENC
        for i, (w1, b1, w2, b2, wd, bd) in enumerate(blocks):
            cout = TCN_CHANNELS[i]
            w1 = np.asarray(w1); w2 = np.asarray(w2); wd = np.asarray(wd)
            # Fused conv1 + 1x1 residual:  rows = [prev-tap ; cur-tap],
            # cols = [conv1 | residual]  -> (2*cin, 2*cout)
            top = np.concatenate([w1[0], np.zeros((cin, cout), np.float32)], axis=1)
            bot = np.concatenate([w1[1], wd], axis=1)
            entries.append((f"{stack}_wf{i}", np.concatenate([top, bot], axis=0)))
            entries.append((f"{stack}_bf{i}",
                            np.concatenate([np.asarray(b1), np.asarray(bd)], axis=1)))
            entries.append((f"{stack}_w2{i}", np.concatenate([w2[0], w2[1]], axis=0)))
            entries.append((f"{stack}_b2{i}", np.asarray(b2)))
            cin = cout

    layout, cur = {}, 0
    for name, arr in entries:
        r, c = arr.shape
        layout[name] = (cur, r, c)
        cur += -(-r // 8) * 8                                        # 8-row alignment
    total_rows = -(-cur // 8) * 8

    slab = np.zeros((total_rows, SLAB_LANES), np.float32)
    for name, arr in entries:
        r0, r, c = layout[name]
        slab[r0:r0 + r, :c] = arr
    return jnp.asarray(slab, dtype=jnp.bfloat16), layout


# --------------------------------------------------------------------------
# Fused Pallas kernel: encoder matmul + max reductions + both TCN stacks
# --------------------------------------------------------------------------
def make_kernel(layout, n):
    L = n * SEG                                                      # stacked time length

    def kernel(cols_ref, slab_ref, out_ref):
        def wslice(name):
            r0, nr, nc = layout[name]
            return slab_ref[r0:r0 + nr, 0:nc]                        # static bf16 slice

        # ---- encoder: ONE matmul over all (n, h, w) positions ----
        enc_w = wslice("enc_w")                                      # (16, 64) bf16
        enc_b = wslice("enc_b").astype(jnp.float32)                  # (1, 64)
        feat = jnp.dot(cols_ref[...], enc_w,
                       preferred_element_type=jnp.float32)           # (n*32*32, 64)
        feat = jnp.maximum(feat + enc_b, 0.0)

        # ---- both max reductions, fully vectorized ----
        # matrix2 (torch max over W): mask padded w>=29 positions, sublane reduce.
        feat3 = feat.reshape(n * SEG, SEG, C_ENC)                    # rows=(n,h), sublanes=w
        w_ok = lax.broadcasted_iota(jnp.int32, (SEG, C_ENC), 0) < W_ENC
        x1_in = jnp.max(jnp.where(w_ok, feat3, -1e30), axis=1)       # (n*32, 64)
        # matrix1 (torch max over H): slice valid h<23, reduce the leading axis.
        feat4 = feat.reshape(n, SEG, SEG, C_ENC)
        x2_in = jnp.max(feat4[:, :H_ENC], axis=1).reshape(n * SEG, C_ENC)

        # ---- TemporalConvNet blocks (k=2, dilations 1,2,4,8,16) ----
        rowi = lax.broadcasted_iota(jnp.int32, (L, 1), 0) % SEG      # per-sample time idx

        def causal_taps(xv, d):
            # [shift(x, d) | x] with per-sample causal masking (no cross-sample leak).
            prev = pltpu.roll(xv, shift=d, axis=0)
            prev = jnp.where(rowi >= d, prev, 0.0)
            return jnp.concatenate([prev, xv], axis=1).astype(jnp.bfloat16)

        def temporal_block(xv, stack, i):
            cout = TCN_CHANNELS[i]
            d = 1 << i
            wf = wslice(f"{stack}_wf{i}")                            # (2*cin, 2*cout)
            bf = wslice(f"{stack}_bf{i}").astype(jnp.float32)        # (1, 2*cout) = [b1|bd]
            w2 = wslice(f"{stack}_w2{i}")                            # (2*cout, cout)
            b2 = wslice(f"{stack}_b2{i}").astype(jnp.float32)        # (1, cout)
            # conv1 + residual downsample fused into one MXU matmul
            y = jnp.dot(causal_taps(xv, d), wf,
                        preferred_element_type=jnp.float32) + bf     # (L, 2*cout)
            h1 = jnp.maximum(y[:, :cout], 0.0)                       # conv1+chomp+relu
            res = y[:, cout:2 * cout]                                # 1x1 residual
            h2 = jnp.dot(causal_taps(h1, d), w2,
                         preferred_element_type=jnp.float32) + b2    # conv2+chomp
            h2 = jnp.maximum(h2, 0.0)
            return jnp.maximum(h2 + res, 0.0)                        # relu(out + res)

        def run_tcn(xv, stack):
            for i in range(len(TCN_CHANNELS)):
                xv = temporal_block(xv, stack, i)
            return xv                                                # (L, 6)

        o1 = run_tcn(x1_in, "t1")                                    # TCN1 on matrix2 (time=H)
        o2 = run_tcn(x2_in, "t2")                                    # TCN2 on matrix1 (time=W)

        # lane-dense merged output slab: lanes 0:6 = x1, 6:12 = x2, rest zero
        out_ref[...] = jnp.concatenate(
            [o1, o2, jnp.zeros((L, 128 - 2 * C_OUT), jnp.float32)], axis=1)

    return kernel


# --------------------------------------------------------------------------
# Forward pass (kernel + tiny XLA head)
# --------------------------------------------------------------------------
def _tmajor(w, length):
    # torch.flatten(x,1,2) on (N, 6, L) is channel-major; permute weight rows to
    # time-major so the kernel's (t, c) outputs can be used without transposes.
    return w.reshape(C_OUT, length, w.shape[-1]).transpose(1, 0, 2).reshape(
        C_OUT * length, -1)


def make_forward(layout, n):
    kernel = make_kernel(layout, n)

    @jax.jit
    def forward(x, slab, head):
        # im2col for the stand-in 3x3 encoder conv, padded to (32, 32, 16) so every
        # in-kernel reshape is (8,128)-tile aligned.  Pad taps are zero -> relu(bias),
        # which is masked / never read downstream (causal TCN, sliced outputs).
        xp = jnp.pad(x[:, 0], ((0, 0), (1, 1), (1, 1)))              # (n, 25, 31)
        taps = jnp.stack([xp[:, dh:dh + H_ENC, dw:dw + W_ENC]
                          for dh in range(3) for dw in range(3)], axis=-1)
        cols = jnp.pad(taps, ((0, 0), (0, SEG - H_ENC), (0, SEG - W_ENC), (0, K_ENC - 9)))
        cols = cols.reshape(n * SEG * SEG, K_ENC).astype(jnp.bfloat16)

        out = pl.pallas_call(
            kernel,
            out_shape=jax.ShapeDtypeStruct((n * SEG, 128), jnp.float32),
            grid=(1,),
            in_specs=[pl.BlockSpec((n * SEG * SEG, K_ENC), lambda i: (0, 0)),
                      pl.BlockSpec(slab.shape, lambda i: (0, 0))],
            out_specs=pl.BlockSpec((n * SEG, 128), lambda i: (0, 0)),
            compiler_params=pltpu.CompilerParams(
                dimension_semantics=("arbitrary",)),
        )(cols, slab)

        y = out.reshape(n, SEG, 128)
        x1 = y[:, :H_ENC, 0:C_OUT].reshape(n, C_OUT * H_ENC)         # (n, 138) time-major
        x2 = y[:, :W_ENC, C_OUT:2 * C_OUT].reshape(n, C_OUT * W_ENC) # (n, 174) time-major

        # tiny head in plain XLA (per review: launch-bound, <5 KFLOP)
        a1 = jax.nn.relu(x1 @ _tmajor(head["lin1_w"], H_ENC) + head["lin1_b"])
        a2 = jax.nn.relu(x2 @ _tmajor(head["lin2_w"], W_ENC) + head["lin2_b"])
        last = jax.nn.relu(jnp.concatenate([a1, a2], axis=1) @ head["lin3_w"]
                           + head["lin3_b"])
        logits = last @ head["lin4_w"] + head["lin4_b"]
        return last, logits

    return forward


# --------------------------------------------------------------------------
# Parameter initialization (deterministic, synthetic)
# --------------------------------------------------------------------------
def init_params(key):
    keys = iter(jax.random.split(key, 80))

    def rnd(shape, scale=0.05):
        return (scale * jax.random.normal(next(keys), shape)).astype(jnp.float32)

    params = {
        "enc_w": rnd((9, C_ENC)),                                    # Conv2d(1,64,3) as (kh*kw, Cout)
        "enc_b": rnd((1, C_ENC)),
        "lin1_w": rnd((C_OUT * H_ENC, 4)), "lin1_b": rnd((1, 4)),    # Linear(138, 4)
        "lin2_w": rnd((C_OUT * W_ENC, 4)), "lin2_b": rnd((1, 4)),    # Linear(174, 4)
        "lin3_w": rnd((8, 54)), "lin3_b": rnd((1, 54)),              # Linear(8, 54)
        "lin4_w": rnd((54, 2)), "lin4_b": rnd((1, 2)),               # Linear(54, 2)
    }

    def make_tcn():
        blocks, cin = [], C_ENC
        for cout in TCN_CHANNELS:
            blocks.append((
                rnd((2, cin, cout)), rnd((1, cout)),                 # conv1 (weight-norm folded)
                rnd((2, cout, cout)), rnd((1, cout)),                # conv2
                rnd((cin, cout)), rnd((1, cout)),                    # 1x1 residual downsample
            ))
            cin = cout
        return blocks

    params["tcn1"] = make_tcn()
    params["tcn2"] = make_tcn()
    return params


# --------------------------------------------------------------------------
if __name__ == "__main__":
    key = jax.random.PRNGKey(0)
    k_param, k_x = jax.random.split(key)
    params = init_params(k_param)

    slab, layout = pack_weights(params)                              # one bf16 weight slab
    head = {k: params[k] for k in ("lin1_w", "lin1_b", "lin2_w", "lin2_b",
                                   "lin3_w", "lin3_b", "lin4_w", "lin4_b")}

    N = 2
    # Small input consistent with the implied encoder output (N, 64, 23, 29).
    x = jax.random.normal(k_x, (N, 1, H_ENC, W_ENC), dtype=jnp.float32)

    forward = make_forward(layout, N)
    last_layer, logits = forward(x, slab, head)
    jax.block_until_ready((last_layer, logits))

    assert last_layer.shape == (N, 54), last_layer.shape
    assert logits.shape == (N, 2), logits.shape
    print("KERNEL_OK")
</pallas_src>

<mosaic_0001>
module attributes {stable_mosaic.version = 11 : i64} {
  func.func @kernel(%arg0: i32, %arg1: memref<2048x16xbf16, #tpu.memory_space<vmem>>, %arg2: memref<1624x256xbf16, #tpu.memory_space<vmem>>, %arg3: memref<64x128xf32, #tpu.memory_space<vmem>>) attributes {dimension_semantics = [#tpu.dimension_semantics<arbitrary>], iteration_bounds = array<i64: 1>, scalar_prefetch = 0 : i64, scratch_operands = 0 : i64, tpu.core_type = #tpu.core_type<tc>, window_params = [{pipeline_mode = #tpu.pipeline_mode<synchronous>, transform_indices = @transform_0, window_bounds = array<i64: 2048, 16>}, {pipeline_mode = #tpu.pipeline_mode<synchronous>, transform_indices = @transform_1, window_bounds = array<i64: 1624, 256>}, {pipeline_mode = #tpu.pipeline_mode<synchronous>, transform_indices = @transform_2, window_bounds = array<i64: 64, 128>}]} {
    %c0 = arith.constant 0 : index
    %c0_0 = arith.constant 0 : index
    %0 = vector.load %arg2[%c0, %c0_0] : memref<1624x256xbf16, #tpu.memory_space<vmem>>, vector<16x64xbf16>
    %c16 = arith.constant 16 : index
    %c0_1 = arith.constant 0 : index
    %1 = vector.load %arg2[%c16, %c0_1] : memref<1624x256xbf16, #tpu.memory_space<vmem>>, vector<1x64xbf16>
    %2 = arith.extf %1 : vector<1x64xbf16> to vector<1x64xf32>
    %c0_2 = arith.constant 0 : index
    %c0_3 = arith.constant 0 : index
    %3 = vector.load %arg1[%c0_2, %c0_3] : memref<2048x16xbf16, #tpu.memory_space<vmem>>, vector<2048x16xbf16>
    %cst = arith.constant dense<0.000000e+00> : vector<2048x64xf32>
    %4 = tpu.matmul %3, %0, %cst {dimension_numbers = #tpu.dot_dimension_numbers<[1], [0], [0], [1], [0, 0, 1, 1], [], []>} : vector<2048x16xbf16>, vector<16x64xbf16>, vector<2048x64xf32> -> vector<2048x64xf32>
    %5 = vector.broadcast %2 : vector<1x64xf32> to vector<2048x64xf32>
    %6 = arith.addf %4, %5 : vector<2048x64xf32>
    %cst_4 = arith.constant 0.000000e+00 : f32
    %7 = vector.broadcast %cst_4 : f32 to vector<2048x64xf32>
    %8 = arith.maximumf %6, %7 : vector<2048x64xf32>
    %9 = vector.shape_cast %8 : vector<2048x64xf32> to vector<64x32x64xf32>
    %10 = tpu.iota {dimensions = array<i32: 0>} : vector<32x64xi32>
    %c29_i32 = arith.constant 29 : i32
    %11 = vector.broadcast %c29_i32 : i32 to vector<32x64xi32>
    %12 = arith.cmpi slt, %10, %11 : vector<32x64xi32>
    %cst_5 = arith.constant -1.000000e+30 : f32
    %13 = vector.shape_cast %12 : vector<32x64xi1> to vector<1x32x64xi1>
    %14 = vector.broadcast %13 : vector<1x32x64xi1> to vector<64x32x64xi1>
    %15 = vector.broadcast %cst_5 : f32 to vector<64x32x64xf32>
    %16 = arith.select %14, %9, %15 : vector<64x32x64xi1>, vector<64x32x64xf32>
    %cst_6 = arith.constant dense<0xFF800000> : vector<64x64xf32>
    %17 = vector.multi_reduction <maximumf>, %16, %cst_6 [1] : vector<64x32x64xf32> to vector<64x64xf32>
    %18 = vector.shape_cast %8 : vector<2048x64xf32> to vector<2x32x32x64xf32>
    %19 = vector.extract_strided_slice %18 {offsets = [0, 0, 0, 0], sizes = [2, 23, 32, 64], strides = [1, 1, 1, 1]} : vector<2x32x32x64xf32> to vector<2x23x32x64xf32>
    %cst_7 = arith.constant dense<0xFF800000> : vector<2x32x64xf32>
    %20 = vector.multi_reduction <maximumf>, %19, %cst_7 [1] : vector<2x23x32x64xf32> to vector<2x32x64xf32>
    %21 = vector.shape_cast %20 : vector<2x32x64xf32> to vector<64x64xf32>
    %22 = tpu.iota {dimensions = array<i32: 0>} : vector<64x1xi32>
    %c32_i32 = arith.constant 32 : i32
    %c0_i32 = arith.constant 0 : i32
    %23 = arith.cmpi eq, %c32_i32, %c0_i32 : i32
    %c1_i32 = arith.constant 1 : i32
    %24 = arith.select %23, %c1_i32, %c32_i32 : i32
    %25 = vector.broadcast %24 : i32 to vector<64x1xi32>
    %26 = arith.remsi %22, %25 : vector<64x1xi32>
    %c0_i32_8 = arith.constant 0 : i32
    %27 = vector.broadcast %c0_i32_8 : i32 to vector<64x1xi32>
    %28 = arith.cmpi ne, %26, %27 : vector<64x1xi32>
    %c0_i32_9 = arith.constant 0 : i32
    %29 = vector.broadcast %c0_i32_9 : i32 to vector<64x1xi32>
    %30 = arith.cmpi slt, %26, %29 : vector<64x1xi32>
    %c0_i32_10 = arith.constant 0 : i32
    %31 = arith.cmpi slt, %24, %c0_i32_10 : i32
    %32 = vector.broadcast %31 : i1 to vector<64x1xi1>
    %33 = vector.broadcast %32 : vector<64x1xi1> to vector<64x1xi1>
    %34 = arith.xori %30, %33 : vector<64x1xi1>
    %35 = arith.andi %34, %28 : vector<64x1xi1>
    %36 = vector.broadcast %24 : i32 to vector<64x1xi32>
    %37 = arith.addi %26, %36 : vector<64x1xi32>
    %38 = arith.select %35, %37, %26 : vector<64x1xi1>, vector<64x1xi32>
    %c24 = arith.constant 24 : index
    %c0_11 = arith.constant 0 : index
    %39 = vector.load %arg2[%c24, %c0_11] : memref<1624x256xbf16, #tpu.memory_space<vmem>>, vector<128x144xbf16>
    %c152 = arith.constant 152 : index
    %c0_12 = arith.constant 0 : index
    %40 = vector.load %arg2[%c152, %c0_12] : memref<1624x256xbf16, #tpu.memory_space<vmem>>, vector<1x144xbf16>
    %41 = arith.extf %40 : vector<1x144xbf16> to vector<1x144xf32>
    %c160 = arith.constant 160 : index
    %c0_13 = arith.constant 0 : index
    %42 = vector.load %arg2[%c160, %c0_13] : memref<1624x256xbf16, #tpu.memory_space<vmem>>, vector<144x72xbf16>
    %c304 = arith.constant 304 : index
    %c0_14 = arith.constant 0 : index
    %43 = vector.load %arg2[%c304, %c0_14] : memref<1624x256xbf16, #tpu.memory_space<vmem>>, vector<1x72xbf16>
    %44 = arith.extf %43 : vector<1x72xbf16> to vector<1x72xf32>
    %c1_i32_15 = arith.constant 1 : i32
    %45 = tpu.dynamic_rotate %17 by %c1_i32_15 dim 0 : vector<64x64xf32>, i32 -> vector<64x64xf32>
    %c1_i32_16 = arith.constant 1 : i32
    %46 = vector.broadcast %c1_i32_16 : i32 to vector<64x1xi32>
    %47 = arith.cmpi sge, %38, %46 : vector<64x1xi32>
    %cst_17 = arith.constant 0.000000e+00 : f32
    %48 = vector.shape_cast %47 : vector<64x1xi1> to vector<64x1xi1>
    %49 = vector.broadcast %48 : vector<64x1xi1> to vector<64x64xi1>
    %50 = vector.broadcast %cst_17 : f32 to vector<64x64xf32>
    %51 = arith.select %49, %45, %50 : vector<64x64xi1>, vector<64x64xf32>
    %52 = tpu.concatenate %51, %17 in 1 : vector<64x64xf32>, vector<64x64xf32> -> vector<64x128xf32>
    %53 = arith.truncf %52 : vector<64x128xf32> to vector<64x128xbf16>
    %cst_18 = arith.constant dense<0.000000e+00> : vector<64x144xf32>
    %54 = tpu.matmul %53, %39, %cst_18 {dimension_numbers = #tpu.dot_dimension_numbers<[1], [0], [0], [1], [0, 0, 1, 1], [], []>} : vector<64x128xbf16>, vector<128x144xbf16>, vector<64x144xf32> -> vector<64x144xf32>
    %55 = vector.broadcast %41 : vector<1x144xf32> to vector<64x144xf32>
    %56 = arith.addf %54, %55 : vector<64x144xf32>
    %57 = vector.extract_strided_slice %56 {offsets = [0, 0], sizes = [64, 72], strides = [1, 1]} : vector<64x144xf32> to vector<64x72xf32>
    %cst_19 = arith.constant 0.000000e+00 : f32
    %58 = vector.broadcast %cst_19 : f32 to vector<64x72xf32>
    %59 = arith.maximumf %57, %58 : vector<64x72xf32>
    %60 = vector.extract_strided_slice %56 {offsets = [0, 72], sizes = [64, 72], strides = [1, 1]} : vector<64x144xf32> to vector<64x72xf32>
    %c1_i32_20 = arith.constant 1 : i32
    %61 = tpu.dynamic_rotate %59 by %c1_i32_20 dim 0 : vector<64x72xf32>, i32 -> vector<64x72xf32>
    %c1_i32_21 = arith.constant 1 : i32
    %62 = vector.broadcast %c1_i32_21 : i32 to vector<64x1xi32>
    %63 = arith.cmpi sge, %38, %62 : vector<64x1xi32>
    %cst_22 = arith.constant 0.000000e+00 : f32
    %64 = vector.shape_cast %63 : vector<64x1xi1> to vector<64x1xi1>
    %65 = vector.broadcast %64 : vector<64x1xi1> to vector<64x72xi1>
    %66 = vector.broadcast %cst_22 : f32 to vector<64x72xf32>
    %67 = arith.select %65, %61, %66 : vector<64x72xi1>, vector<64x72xf32>
    %68 = tpu.concatenate %67, %59 in 1 : vector<64x72xf32>, vector<64x72xf32> -> vector<64x144xf32>
    %69 = arith.truncf %68 : vector<64x144xf32> to vector<64x144xbf16>
    %cst_23 = arith.constant dense<0.000000e+00> : vector<64x72xf32>
    %70 = tpu.matmul %69, %42, %cst_23 {dimension_numbers = #tpu.dot_dimension_numbers<[1], [0], [0], [1], [0, 0, 1, 1], [], []>} : vector<64x144xbf16>, vector<144x72xbf16>, vector<64x72xf32> -> vector<64x72xf32>
    %71 = vector.broadcast %44 : vector<1x72xf32> to vector<64x72xf32>
    %72 = arith.addf %70, %71 : vector<64x72xf32>
    %cst_24 = arith.constant 0.000000e+00 : f32
    %73 = vector.broadcast %cst_24 : f32 to vector<64x72xf32>
    %74 = arith.maximumf %72, %73 : vector<64x72xf32>
    %75 = arith.addf %74, %60 : vector<64x72xf32>
    %cst_25 = arith.constant 0.000000e+00 : f32
    %76 = vector.broadcast %cst_25 : f32 to vector<64x72xf32>
    %77 = arith.maximumf %75, %76 : vector<64x72xf32>
    %c312 = arith.constant 312 : index
    %c0_26 = arith.constant 0 : index
    %78 = vector.load %arg2[%c312, %c0_26] : memref<1624x256xbf16, #tpu.memory_space<vmem>>, vector<144x72xbf16>
    %c456 = arith.constant 456 : index
    %c0_27 = arith.constant 0 : index
    %79 = vector.load %arg2[%c456, %c0_27] : memref<1624x256xbf16, #tpu.memory_space<vmem>>, vector<1x72xbf16>
    %80 = arith.extf %79 : vector<1x72xbf16> to vector<1x72xf32>
    %c464 = arith.constant 464 : index
    %c0_28 = arith.constant 0 : index
    %81 = vector.load %arg2[%c464, %c0_28] : memref<1624x256xbf16, #tpu.memory_space<vmem>>, vector<72x36xbf16>
    %c536 = arith.constant 536 : index
    %c0_29 = arith.constant 0 : index
    %82 = vector.load %arg2[%c536, %c0_29] : memref<1624x256xbf16, #tpu.memory_space<vmem>>, vector<1x36xbf16>
    %83 = arith.extf %82 : vector<1x36xbf16> to vector<1x36xf32>
    %c2_i32 = arith.constant 2 : i32
    %84 = tpu.dynamic_rotate %77 by %c2_i32 dim 0 : vector<64x72xf32>, i32 -> vector<64x72xf32>
    %c2_i32_30 = arith.constant 2 : i32
    %85 = vector.broadcast %c2_i32_30 : i32 to vector<64x1xi32>
    %86 = arith.cmpi sge, %38, %85 : vector<64x1xi32>
    %cst_31 = arith.constant 0.000000e+00 : f32
    %87 = vector.shape_cast %86 : vector<64x1xi1> to vector<64x1xi1>
    %88 = vector.broadcast %87 : vector<64x1xi1> to vector<64x72xi1>
    %89 = vector.broadcast %cst_31 : f32 to vector<64x72xf32>
    %90 = arith.select %88, %84, %89 : vector<64x72xi1>, vector<64x72xf32>
    %91 = tpu.concatenate %90, %77 in 1 : vector<64x72xf32>, vector<64x72xf32> -> vector<64x144xf32>
    %92 = arith.truncf %91 : vector<64x144xf32> to vector<64x144xbf16>
    %cst_32 = arith.constant dense<0.000000e+00> : vector<64x72xf32>
    %93 = tpu.matmul %92, %78, %cst_32 {dimension_numbers = #tpu.dot_dimension_numbers<[1], [0], [0], [1], [0, 0, 1, 1], [], []>} : vector<64x144xbf16>, vector<144x72xbf16>, vector<64x72xf32> -> vector<64x72xf32>
    %94 = vector.broadcast %80 : vector<1x72xf32> to vector<64x72xf32>
    %95 = arith.addf %93, %94 : vector<64x72xf32>
    %96 = vector.extract_strided_slice %95 {offsets = [0, 0], sizes = [64, 36], strides = [1, 1]} : vector<64x72xf32> to vector<64x36xf32>
    %cst_33 = arith.constant 0.000000e+00 : f32
    %97 = vector.broadcast %cst_33 : f32 to vector<64x36xf32>
    %98 = arith.maximumf %96, %97 : vector<64x36xf32>
    %99 = vector.extract_strided_slice %95 {offsets = [0, 36], sizes = [64, 36], strides = [1, 1]} : vector<64x72xf32> to vector<64x36xf32>
    %c2_i32_34 = arith.constant 2 : i32
    %100 = tpu.dynamic_rotate %98 by %c2_i32_34 dim 0 : vector<64x36xf32>, i32 -> vector<64x36xf32>
    %c2_i32_35 = arith.constant 2 : i32
    %101 = vector.broadcast %c2_i32_35 : i32 to vector<64x1xi32>
    %102 = arith.cmpi sge, %38, %101 : vector<64x1xi32>
    %cst_36 = arith.constant 0.000000e+00 : f32
    %103 = vector.shape_cast %102 : vector<64x1xi1> to vector<64x1xi1>
    %104 = vector.broadcast %103 : vector<64x1xi1> to vector<64x36xi1>
    %105 = vector.broadcast %cst_36 : f32 to vector<64x36xf32>
    %106 = arith.select %104, %100, %105 : vector<64x36xi1>, vector<64x36xf32>
    %107 = tpu.concatenate %106, %98 in 1 : vector<64x36xf32>, vector<64x36xf32> -> vector<64x72xf32>
    %108 = arith.truncf %107 : vector<64x72xf32> to vector<64x72xbf16>
    %cst_37 = arith.constant dense<0.000000e+00> : vector<64x36xf32>
    %109 = tpu.matmul %108, %81, %cst_37 {dimension_numbers = #tpu.dot_dimension_numbers<[1], [0], [0], [1], [0, 0, 1, 1], [], []>} : vector<64x72xbf16>, vector<72x36xbf16>, vector<64x36xf32> -> vector<64x36xf32>
    %110 = vector.broadcast %83 : vector<1x36xf32> to vector<64x36xf32>
    %111 = arith.addf %109, %110 : vector<64x36xf32>
    %cst_38 = arith.constant 0.000000e+00 : f32
    %112 = vector.broadcast %cst_38 : f32 to vector<64x36xf32>
    %113 = arith.maximumf %111, %112 : vector<64x36xf32>
    %114 = arith.addf %113, %99 : vector<64x36xf32>
    %cst_39 = arith.constant 0.000000e+00 : f32
    %115 = vector.broadcast %cst_39 : f32 to vector<64x36xf32>
    %116 = arith.maximumf %114, %115 : vector<64x36xf32>
    %c544 = arith.constant 544 : index
    %c0_40 = arith.constant 0 : index
    %117 = vector.load %arg2[%c544, %c0_40] : memref<1624x256xbf16, #tpu.memory_space<vmem>>, vector<72x48xbf16>
    %c616 = arith.constant 616 : index
    %c0_41 = arith.constant 0 : index
    %118 = vector.load %arg2[%c616, %c0_41] : memref<1624x256xbf16, #tpu.memory_space<vmem>>, vector<1x48xbf16>
    %119 = arith.extf %118 : vector<1x48xbf16> to vector<1x48xf32>
    %c624 = arith.constant 624 : index
    %c0_42 = arith.constant 0 : index
    %120 = vector.load %arg2[%c624, %c0_42] : memref<1624x256xbf16, #tpu.memory_space<vmem>>, vector<48x24xbf16>
    %c672 = arith.constant 672 : index
    %c0_43 = arith.constant 0 : index
    %121 = vector.load %arg2[%c672, %c0_43] : memref<1624x256xbf16, #tpu.memory_space<vmem>>, vector<1x24xbf16>
    %122 = arith.extf %121 : vector<1x24xbf16> to vector<1x24xf32>
    %c4_i32 = arith.constant 4 : i32
    %123 = tpu.dynamic_rotate %116 by %c4_i32 dim 0 : vector<64x36xf32>, i32 -> vector<64x36xf32>
    %c4_i32_44 = arith.constant 4 : i32
    %124 = vector.broadcast %c4_i32_44 : i32 to vector<64x1xi32>
    %125 = arith.cmpi sge, %38, %124 : vector<64x1xi32>
    %cst_45 = arith.constant 0.000000e+00 : f32
    %126 = vector.shape_cast %125 : vector<64x1xi1> to vector<64x1xi1>
    %127 = vector.broadcast %126 : vector<64x1xi1> to vector<64x36xi1>
    %128 = vector.broadcast %cst_45 : f32 to vector<64x36xf32>
    %129 = arith.select %127, %123, %128 : vector<64x36xi1>, vector<64x36xf32>
    %130 = tpu.concatenate %129, %116 in 1 : vector<64x36xf32>, vector<64x36xf32> -> vector<64x72xf32>
    %131 = arith.truncf %130 : vector<64x72xf32> to vector<64x72xbf16>
    %cst_46 = arith.constant dense<0.000000e+00> : vector<64x48xf32>
    %132 = tpu.matmul %131, %117, %cst_46 {dimension_numbers = #tpu.dot_dimension_numbers<[1], [0], [0], [1], [0, 0, 1, 1], [], []>} : vector<64x72xbf16>, vector<72x48xbf16>, vector<64x48xf32> -> vector<64x48xf32>
    %133 = vector.broadcast %119 : vector<1x48xf32> to vector<64x48xf32>
    %134 = arith.addf %132, %133 : vector<64x48xf32>
    %135 = vector.extract_strided_slice %134 {offsets = [0, 0], sizes = [64, 24], strides = [1, 1]} : vector<64x48xf32> to vector<64x24xf32>
    %cst_47 = arith.constant 0.000000e+00 : f32
    %136 = vector.broadcast %cst_47 : f32 to vector<64x24xf32>
    %137 = arith.maximumf %135, %136 : vector<64x24xf32>
    %138 = vector.extract_strided_slice %134 {offsets = [0, 24], sizes = [64, 24], strides = [1, 1]} : vector<64x48xf32> to vector<64x24xf32>
    %c4_i32_48 = arith.constant 4 : i32
    %139 = tpu.dynamic_rotate %137 by %c4_i32_48 dim 0 : vector<64x24xf32>, i32 -> vector<64x24xf32>
    %c4_i32_49 = arith.constant 4 : i32
    %140 = vector.broadcast %c4_i32_49 : i32 to vector<64x1xi32>
    %141 = arith.cmpi sge, %38, %140 : vector<64x1xi32>
    %cst_50 = arith.constant 0.000000e+00 : f32
    %142 = vector.shape_cast %141 : vector<64x1xi1> to vector<64x1xi1>
    %143 = vector.broadcast %142 : vector<64x1xi1> to vector<64x24xi1>
    %144 = vector.broadcast %cst_50 : f32 to vector<64x24xf32>
    %145 = arith.select %143, %139, %144 : vector<64x24xi1>, vector<64x24xf32>
    %146 = tpu.concatenate %145, %137 in 1 : vector<64x24xf32>, vector<64x24xf32> -> vector<64x48xf32>
    %147 = arith.truncf %146 : vector<64x48xf32> to vector<64x48xbf16>
    %cst_51 = arith.constant dense<0.000000e+00> : vector<64x24xf32>
    %148 = tpu.matmul %147, %120, %cst_51 {dimension_numbers = #tpu.dot_dimension_numbers<[1], [0], [0], [1], [0, 0, 1, 1], [], []>} : vector<64x48xbf16>, vector<48x24xbf16>, vector<64x24xf32> -> vector<64x24xf32>
    %149 = vector.broadcast %122 : vector<1x24xf32> to vector<64x24xf32>
    %150 = arith.addf %148, %149 : vector<64x24xf32>
    %cst_52 = arith.constant 0.000000e+00 : f32
    %151 = vector.broadcast %cst_52 : f32 to vector<64x24xf32>
    %152 = arith.maximumf %150, %151 : vector<64x24xf32>
    %153 = arith.addf %152, %138 : vector<64x24xf32>
    %cst_53 = arith.constant 0.000000e+00 : f32
    %154 = vector.broadcast %cst_53 : f32 to vector<64x24xf32>
    %155 = arith.maximumf %153, %154 : vector<64x24xf32>
    %c680 = arith.constant 680 : index
    %c0_54 = arith.constant 0 : index
    %156 = vector.load %arg2[%c680, %c0_54] : memref<1624x256xbf16, #tpu.memory_space<vmem>>, vector<48x24xbf16>
    %c728 = arith.constant 728 : index
    %c0_55 = arith.constant 0 : index
    %157 = vector.load %arg2[%c728, %c0_55] : memref<1624x256xbf16, #tpu.memory_space<vmem>>, vector<1x24xbf16>
    %158 = arith.extf %157 : vector<1x24xbf16> to vector<1x24xf32>
    %c736 = arith.constant 736 : index
    %c0_56 = arith.constant 0 : index
    %159 = vector.load %arg2[%c736, %c0_56] : memref<1624x256xbf16, #tpu.memory_space<vmem>>, vector<24x12xbf16>
    %c760 = arith.constant 760 : index
    %c0_57 = arith.constant 0 : index
    %160 = vector.load %arg2[%c760, %c0_57] : memref<1624x256xbf16, #tpu.memory_space<vmem>>, vector<1x12xbf16>
    %161 = arith.extf %160 : vector<1x12xbf16> to vector<1x12xf32>
    %c8_i32 = arith.constant 8 : i32
    %162 = tpu.dynamic_rotate %155 by %c8_i32 dim 0 : vector<64x24xf32>, i32 -> vector<64x24xf32>
    %c8_i32_58 = arith.constant 8 : i32
    %163 = vector.broadcast %c8_i32_58 : i32 to vector<64x1xi32>
    %164 = arith.cmpi sge, %38, %163 : vector<64x1xi32>
    %cst_59 = arith.constant 0.000000e+00 : f32
    %165 = vector.shape_cast %164 : vector<64x1xi1> to vector<64x1xi1>
    %166 = vector.broadcast %165 : vector<64x1xi1> to vector<64x24xi1>
    %167 = vector.broadcast %cst_59 : f32 to vector<64x24xf32>
    %168 = arith.select %166, %162, %167 : vector<64x24xi1>, vector<64x24xf32>
    %169 = tpu.concatenate %168, %155 in 1 : vector<64x24xf32>, vector<64x24xf32> -> vector<64x48xf32>
    %170 = arith.truncf %169 : vector<64x48xf32> to vector<64x48xbf16>
    %cst_60 = arith.constant dense<0.000000e+00> : vector<64x24xf32>
    %171 = tpu.matmul %170, %156, %cst_60 {dimension_numbers = #tpu.dot_dimension_numbers<[1], [0], [0], [1], [0, 0, 1, 1], [], []>} : vector<64x48xbf16>, vector<48x24xbf16>, vector<64x24xf32> -> vector<64x24xf32>
    %172 = vector.broadcast %158 : vector<1x24xf32> to vector<64x24xf32>
    %173 = arith.addf %171, %172 : vector<64x24xf32>
    %174 = vector.extract_strided_slice %173 {offsets = [0, 0], sizes = [64, 12], strides = [1, 1]} : vector<64x24xf32> to vector<64x12xf32>
    %cst_61 = arith.constant 0.000000e+00 : f32
    %175 = vector.broadcast %cst_61 : f32 to vector<64x12xf32>
    %176 = arith.maximumf %174, %175 : vector<64x12xf32>
    %177 = vector.extract_strided_slice %173 {offsets = [0, 12], sizes = [64, 12], strides = [1, 1]} : vector<64x24xf32> to vector<64x12xf32>
    %c8_i32_62 = arith.constant 8 : i32
    %178 = tpu.dynamic_rotate %176 by %c8_i32_62 dim 0 : vector<64x12xf32>, i32 -> vector<64x12xf32>
    %c8_i32_63 = arith.constant 8 : i32
    %179 = vector.broadcast %c8_i32_63 : i32 to vector<64x1xi32>
    %180 = arith.cmpi sge, %38, %179 : vector<64x1xi32>
    %cst_64 = arith.constant 0.000000e+00 : f32
    %181 = vector.shape_cast %180 : vector<64x1xi1> to vector<64x1xi1>
    %182 = vector.broadcast %181 : vector<64x1xi1> to vector<64x12xi1>
    %183 = vector.broadcast %cst_64 : f32 to vector<64x12xf32>
    %184 = arith.select %182, %178, %183 : vector<64x12xi1>, vector<64x12xf32>
    %185 = tpu.concatenate %184, %176 in 1 : vector<64x12xf32>, vector<64x12xf32> -> vector<64x24xf32>
    %186 = arith.truncf %185 : vector<64x24xf32> to vector<64x24xbf16>
    %cst_65 = arith.constant dense<0.000000e+00> : vector<64x12xf32>
    %187 = tpu.matmul %186, %159, %cst_65 {dimension_numbers = #tpu.dot_dimension_numbers<[1], [0], [0], [1], [0, 0, 1, 1], [], []>} : vector<64x24xbf16>, vector<24x12xbf16>, vector<64x12xf32> -> vector<64x12xf32>
    %188 = vector.broadcast %161 : vector<1x12xf32> to vector<64x12xf32>
    %189 = arith.addf %187, %188 : vector<64x12xf32>
    %cst_66 = arith.constant 0.000000e+00 : f32
    %190 = vector.broadcast %cst_66 : f32 to vector<64x12xf32>
    %191 = arith.maximumf %189, %190 : vector<64x12xf32>
    %192 = arith.addf %191, %177 : vector<64x12xf32>
    %cst_67 = arith.constant 0.000000e+00 : f32
    %193 = vector.broadcast %cst_67 : f32 to vector<64x12xf32>
    %194 = arith.maximumf %192, %193 : vector<64x12xf32>
    %c768 = arith.constant 768 : index
    %c0_68 = arith.constant 0 : index
    %195 = vector.load %arg2[%c768, %c0_68] : memref<1624x256xbf16, #tpu.memory_space<vmem>>, vector<24x12xbf16>
    %c792 = arith.constant 792 : index
    %c0_69 = arith.constant 0 : index
    %196 = vector.load %arg2[%c792, %c0_69] : memref<1624x256xbf16, #tpu.memory_space<vmem>>, vector<1x12xbf16>
    %197 = arith.extf %196 : vector<1x12xbf16> to vector<1x12xf32>
    %c800 = arith.constant 800 : index
    %c0_70 = arith.constant 0 : index
    %198 = vector.load %arg2[%c800, %c0_70] : memref<1624x256xbf16, #tpu.memory_space<vmem>>, vector<12x6xbf16>
    %c816 = arith.constant 816 : index
    %c0_71 = arith.constant 0 : index
    %199 = vector.load %arg2[%c816, %c0_71] : memref<1624x256xbf16, #tpu.memory_space<vmem>>, vector<1x6xbf16>
    %200 = arith.extf %199 : vector<1x6xbf16> to vector<1x6xf32>
    %c16_i32 = arith.constant 16 : i32
    %201 = tpu.dynamic_rotate %194 by %c16_i32 dim 0 : vector<64x12xf32>, i32 -> vector<64x12xf32>
    %c16_i32_72 = arith.constant 16 : i32
    %202 = vector.broadcast %c16_i32_72 : i32 to vector<64x1xi32>
    %203 = arith.cmpi sge, %38, %202 : vector<64x1xi32>
    %cst_73 = arith.constant 0.000000e+00 : f32
    %204 = vector.shape_cast %203 : vector<64x1xi1> to vector<64x1xi1>
    %205 = vector.broadcast %204 : vector<64x1xi1> to vector<64x12xi1>
    %206 = vector.broadcast %cst_73 : f32 to vector<64x12xf32>
    %207 = arith.select %205, %201, %206 : vector<64x12xi1>, vector<64x12xf32>
    %208 = tpu.concatenate %207, %194 in 1 : vector<64x12xf32>, vector<64x12xf32> -> vector<64x24xf32>
    %209 = arith.truncf %208 : vector<64x24xf32> to vector<64x24xbf16>
    %cst_74 = arith.constant dense<0.000000e+00> : vector<64x12xf32>
    %210 = tpu.matmul %209, %195, %cst_74 {dimension_numbers = #tpu.dot_dimension_numbers<[1], [0], [0], [1], [0, 0, 1, 1], [], []>} : vector<64x24xbf16>, vector<24x12xbf16>, vector<64x12xf32> -> vector<64x12xf32>
    %211 = vector.broadcast %197 : vector<1x12xf32> to vector<64x12xf32>
    %212 = arith.addf %210, %211 : vector<64x12xf32>
    %213 = vector.extract_strided_slice %212 {offsets = [0, 0], sizes = [64, 6], strides = [1, 1]} : vector<64x12xf32> to vector<64x6xf32>
    %cst_75 = arith.constant 0.000000e+00 : f32
    %214 = vector.broadcast %cst_75 : f32 to vector<64x6xf32>
    %215 = arith.maximumf %213, %214 : vector<64x6xf32>
    %216 = vector.extract_strided_slice %212 {offsets = [0, 6], sizes = [64, 6], strides = [1, 1]} : vector<64x12xf32> to vector<64x6xf32>
    %c16_i32_76 = arith.constant 16 : i32
    %217 = tpu.dynamic_rotate %215 by %c16_i32_76 dim 0 : vector<64x6xf32>, i32 -> vector<64x6xf32>
    %c16_i32_77 = arith.constant 16 : i32
    %218 = vector.broadcast %c16_i32_77 : i32 to vector<64x1xi32>
    %219 = arith.cmpi sge, %38, %218 : vector<64x1xi32>
    %cst_78 = arith.constant 0.000000e+00 : f32
    %220 = vector.shape_cast %219 : vector<64x1xi1> to vector<64x1xi1>
    %221 = vector.broadcast %220 : vector<64x1xi1> to vector<64x6xi1>
    %222 = vector.broadcast %cst_78 : f32 to vector<64x6xf32>
    %223 = arith.select %221, %217, %222 : vector<64x6xi1>, vector<64x6xf32>
    %224 = tpu.concatenate %223, %215 in 1 : vector<64x6xf32>, vector<64x6xf32> -> vector<64x12xf32>
    %225 = arith.truncf %224 : vector<64x12xf32> to vector<64x12xbf16>
    %cst_79 = arith.constant dense<0.000000e+00> : vector<64x6xf32>
    %226 = tpu.matmul %225, %198, %cst_79 {dimension_numbers = #tpu.dot_dimension_numbers<[1], [0], [0], [1], [0, 0, 1, 1], [], []>} : vector<64x12xbf16>, vector<12x6xbf16>, vector<64x6xf32> -> vector<64x6xf32>
    %227 = vector.broadcast %200 : vector<1x6xf32> to vector<64x6xf32>
    %228 = arith.addf %226, %227 : vector<64x6xf32>
    %cst_80 = arith.constant 0.000000e+00 : f32
    %229 = vector.broadcast %cst_80 : f32 to vector<64x6xf32>
    %230 = arith.maximumf %228, %229 : vector<64x6xf32>
    %231 = arith.addf %230, %216 : vector<64x6xf32>
    %cst_81 = arith.constant 0.000000e+00 : f32
    %232 = vector.broadcast %cst_81 : f32 to vector<64x6xf32>
    %233 = arith.maximumf %231, %232 : vector<64x6xf32>
    %c824 = arith.constant 824 : index
    %c0_82 = arith.constant 0 : index
    %234 = vector.load %arg2[%c824, %c0_82] : memref<1624x256xbf16, #tpu.memory_space<vmem>>, vector<128x144xbf16>
    %c952 = arith.constant 952 : index
    %c0_83 = arith.constant 0 : index
    %235 = vector.load %arg2[%c952, %c0_83] : memref<1624x256xbf16, #tpu.memory_space<vmem>>, vector<1x144xbf16>
    %236 = arith.extf %235 : vector<1x144xbf16> to vector<1x144xf32>
    %c960 = arith.constant 960 : index
    %c0_84 = arith.constant 0 : index
    %237 = vector.load %arg2[%c960, %c0_84] : memref<1624x256xbf16, #tpu.memory_space<vmem>>, vector<144x72xbf16>
    %c1104 = arith.constant 1104 : index
    %c0_85 = arith.constant 0 : index
    %238 = vector.load %arg2[%c1104, %c0_85] : memref<1624x256xbf16, #tpu.memory_space<vmem>>, vector<1x72xbf16>
    %239 = arith.extf %238 : vector<1x72xbf16> to vector<1x72xf32>
    %c1_i32_86 = arith.constant 1 : i32
    %240 = tpu.dynamic_rotate %21 by %c1_i32_86 dim 0 : vector<64x64xf32>, i32 -> vector<64x64xf32>
    %c1_i32_87 = arith.constant 1 : i32
    %241 = vector.broadcast %c1_i32_87 : i32 to vector<64x1xi32>
    %242 = arith.cmpi sge, %38, %241 : vector<64x1xi32>
    %cst_88 = arith.constant 0.000000e+00 : f32
    %243 = vector.shape_cast %242 : vector<64x1xi1> to vector<64x1xi1>
    %244 = vector.broadcast %243 : vector<64x1xi1> to vector<64x64xi1>
    %245 = vector.broadcast %cst_88 : f32 to vector<64x64xf32>
    %246 = arith.select %244, %240, %245 : vector<64x64xi1>, vector<64x64xf32>
    %247 = tpu.concatenate %246, %21 in 1 : vector<64x64xf32>, vector<64x64xf32> -> vector<64x128xf32>
    %248 = arith.truncf %247 : vector<64x128xf32> to vector<64x128xbf16>
    %cst_89 = arith.constant dense<0.000000e+00> : vector<64x144xf32>
    %249 = tpu.matmul %248, %234, %cst_89 {dimension_numbers = #tpu.dot_dimension_numbers<[1], [0], [0], [1], [0, 0, 1, 1], [], []>} : vector<64x128xbf16>, vector<128x144xbf16>, vector<64x144xf32> -> vector<64x144xf32>
    %250 = vector.broadcast %236 : vector<1x144xf32> to vector<64x144xf32>
    %251 = arith.addf %249, %250 : vector<64x144xf32>
    %252 = vector.extract_strided_slice %251 {offsets = [0, 0], sizes = [64, 72], strides = [1, 1]} : vector<64x144xf32> to vector<64x72xf32>
    %cst_90 = arith.constant 0.000000e+00 : f32
    %253 = vector.broadcast %cst_90 : f32 to vector<64x72xf32>
    %254 = arith.maximumf %252, %253 : vector<64x72xf32>
    %255 = vector.extract_strided_slice %251 {offsets = [0, 72], sizes = [64, 72], strides = [1, 1]} : vector<64x144xf32> to vector<64x72xf32>
    %c1_i32_91 = arith.constant 1 : i32
    %256 = tpu.dynamic_rotate %254 by %c1_i32_91 dim 0 : vector<64x72xf32>, i32 -> vector<64x72xf32>
    %c1_i32_92 = arith.constant 1 : i32
    %257 = vector.broadcast %c1_i32_92 : i32 to vector<64x1xi32>
    %258 = arith.cmpi sge, %38, %257 : vector<64x1xi32>
    %cst_93 = arith.constant 0.000000e+00 : f32
    %259 = vector.shape_cast %258 : vector<64x1xi1> to vector<64x1xi1>
    %260 = vector.broadcast %259 : vector<64x1xi1> to vector<64x72xi1>
    %261 = vector.broadcast %cst_93 : f32 to vector<64x72xf32>
    %262 = arith.select %260, %256, %261 : vector<64x72xi1>, vector<64x72xf32>
    %263 = tpu.concatenate %262, %254 in 1 : vector<64x72xf32>, vector<64x72xf32> -> vector<64x144xf32>
    %264 = arith.truncf %263 : vector<64x144xf32> to vector<64x144xbf16>
    %cst_94 = arith.constant dense<0.000000e+00> : vector<64x72xf32>
    %265 = tpu.matmul %264, %237, %cst_94 {dimension_numbers = #tpu.dot_dimension_numbers<[1], [0], [0], [1], [0, 0, 1, 1], [], []>} : vector<64x144xbf16>, vector<144x72xbf16>, vector<64x72xf32> -> vector<64x72xf32>
    %266 = vector.broadcast %239 : vector<1x72xf32> to vector<64x72xf32>
    %267 = arith.addf %265, %266 : vector<64x72xf32>
    %cst_95 = arith.constant 0.000000e+00 : f32
    %268 = vector.broadcast %cst_95 : f32 to vector<64x72xf32>
    %269 = arith.maximumf %267, %268 : vector<64x72xf32>
    %270 = arith.addf %269, %255 : vector<64x72xf32>
    %cst_96 = arith.constant 0.000000e+00 : f32
    %271 = vector.broadcast %cst_96 : f32 to vector<64x72xf32>
    %272 = arith.maximumf %270, %271 : vector<64x72xf32>
    %c1112 = arith.constant 1112 : index
    %c0_97 = arith.constant 0 : index
    %273 = vector.load %arg2[%c1112, %c0_97] : memref<1624x256xbf16, #tpu.memory_space<vmem>>, vector<144x72xbf16>
    %c1256 = arith.constant 1256 : index
    %c0_98 = arith.constant 0 : index
    %274 = vector.load %arg2[%c1256, %c0_98] : memref<1624x256xbf16, #tpu.memory_space<vmem>>, vector<1x72xbf16>
    %275 = arith.extf %274 : vector<1x72xbf16> to vector<1x72xf32>
    %c1264 = arith.constant 1264 : index
    %c0_99 = arith.constant 0 : index
    %276 = vector.load %arg2[%c1264, %c0_99] : memref<1624x256xbf16, #tpu.memory_space<vmem>>, vector<72x36xbf16>
    %c1336 = arith.constant 1336 : index
    %c0_100 = arith.constant 0 : index
    %277 = vector.load %arg2[%c1336, %c0_100] : memref<1624x256xbf16, #tpu.memory_space<vmem>>, vector<1x36xbf16>
    %278 = arith.extf %277 : vector<1x36xbf16> to vector<1x36xf32>
    %c2_i32_101 = arith.constant 2 : i32
    %279 = tpu.dynamic_rotate %272 by %c2_i32_101 dim 0 : vector<64x72xf32>, i32 -> vector<64x72xf32>
    %c2_i32_102 = arith.constant 2 : i32
    %280 = vector.broadcast %c2_i32_102 : i32 to vector<64x1xi32>
    %281 = arith.cmpi sge, %38, %280 : vector<64x1xi32>
    %cst_103 = arith.constant 0.000000e+00 : f32
    %282 = vector.shape_cast %281 : vector<64x1xi1> to vector<64x1xi1>
    %283 = vector.broadcast %282 : vector<64x1xi1> to vector<64x72xi1>
    %284 = vector.broadcast %cst_103 : f32 to vector<64x72xf32>
    %285 = arith.select %283, %279, %284 : vector<64x72xi1>, vector<64x72xf32>
    %286 = tpu.concatenate %285, %272 in 1 : vector<64x72xf32>, vector<64x72xf32> -> vector<64x144xf32>
    %287 = arith.truncf %286 : vector<64x144xf32> to vector<64x144xbf16>
    %cst_104 = arith.constant dense<0.000000e+00> : vector<64x72xf32>
    %288 = tpu.matmul %287, %273, %cst_104 {dimension_numbers = #tpu.dot_dimension_numbers<[1], [0], [0], [1], [0, 0, 1, 1], [], []>} : vector<64x144xbf16>, vector<144x72xbf16>, vector<64x72xf32> -> vector<64x72xf32>
    %289 = vector.broadcast %275 : vector<1x72xf32> to vector<64x72xf32>
    %290 = arith.addf %288, %289 : vector<64x72xf32>
    %291 = vector.extract_strided_slice %290 {offsets = [0, 0], sizes = [64, 36], strides = [1, 1]} : vector<64x72xf32> to vector<64x36xf32>
    %cst_105 = arith.constant 0.000000e+00 : f32
    %292 = vector.broadcast %cst_105 : f32 to vector<64x36xf32>
    %293 = arith.maximumf %291, %292 : vector<64x36xf32>
    %294 = vector.extract_strided_slice %290 {offsets = [0, 36], sizes = [64, 36], strides = [1, 1]} : vector<64x72xf32> to vector<64x36xf32>
    %c2_i32_106 = arith.constant 2 : i32
    %295 = tpu.dynamic_rotate %293 by %c2_i32_106 dim 0 : vector<64x36xf32>, i32 -> vector<64x36xf32>
    %c2_i32_107 = arith.constant 2 : i32
    %296 = vector.broadcast %c2_i32_107 : i32 to vector<64x1xi32>
    %297 = arith.cmpi sge, %38, %296 : vector<64x1xi32>
    %cst_108 = arith.constant 0.000000e+00 : f32
    %298 = vector.shape_cast %297 : vector<64x1xi1> to vector<64x1xi1>
    %299 = vector.broadcast %298 : vector<64x1xi1> to vector<64x36xi1>
    %300 = vector.broadcast %cst_108 : f32 to vector<64x36xf32>
    %301 = arith.select %299, %295, %300 : vector<64x36xi1>, vector<64x36xf32>
    %302 = tpu.concatenate %301, %293 in 1 : vector<64x36xf32>, vector<64x36xf32> -> vector<64x72xf32>
    %303 = arith.truncf %302 : vector<64x72xf32> to vector<64x72xbf16>
    %cst_109 = arith.constant dense<0.000000e+00> : vector<64x36xf32>
    %304 = tpu.matmul %303, %276, %cst_109 {dimension_numbers = #tpu.dot_dimension_numbers<[1], [0], [0], [1], [0, 0, 1, 1], [], []>} : vector<64x72xbf16>, vector<72x36xbf16>, vector<64x36xf32> -> vector<64x36xf32>
    %305 = vector.broadcast %278 : vector<1x36xf32> to vector<64x36xf32>
    %306 = arith.addf %304, %305 : vector<64x36xf32>
    %cst_110 = arith.constant 0.000000e+00 : f32
    %307 = vector.broadcast %cst_110 : f32 to vector<64x36xf32>
    %308 = arith.maximumf %306, %307 : vector<64x36xf32>
    %309 = arith.addf %308, %294 : vector<64x36xf32>
    %cst_111 = arith.constant 0.000000e+00 : f32
    %310 = vector.broadcast %cst_111 : f32 to vector<64x36xf32>
    %311 = arith.maximumf %309, %310 : vector<64x36xf32>
    %c1344 = arith.constant 1344 : index
    %c0_112 = arith.constant 0 : index
    %312 = vector.load %arg2[%c1344, %c0_112] : memref<1624x256xbf16, #tpu.memory_space<vmem>>, vector<72x48xbf16>
    %c1416 = arith.constant 1416 : index
    %c0_113 = arith.constant 0 : index
    %313 = vector.load %arg2[%c1416, %c0_113] : memref<1624x256xbf16, #tpu.memory_space<vmem>>, vector<1x48xbf16>
    %314 = arith.extf %313 : vector<1x48xbf16> to vector<1x48xf32>
    %c1424 = arith.constant 1424 : index
    %c0_114 = arith.constant 0 : index
    %315 = vector.load %arg2[%c1424, %c0_114] : memref<1624x256xbf16, #tpu.memory_space<vmem>>, vector<48x24xbf16>
    %c1472 = arith.constant 1472 : index
    %c0_115 = arith.constant 0 : index
    %316 = vector.load %arg2[%c1472, %c0_115] : memref<1624x256xbf16, #tpu.memory_space<vmem>>, vector<1x24xbf16>
    %317 = arith.extf %316 : vector<1x24xbf16> to vector<1x24xf32>
    %c4_i32_116 = arith.constant 4 : i32
    %318 = tpu.dynamic_rotate %311 by %c4_i32_116 dim 0 : vector<64x36xf32>, i32 -> vector<64x36xf32>
    %c4_i32_117 = arith.constant 4 : i32
    %319 = vector.broadcast %c4_i32_117 : i32 to vector<64x1xi32>
    %320 = arith.cmpi sge, %38, %319 : vector<64x1xi32>
    %cst_118 = arith.constant 0.000000e+00 : f32
    %321 = vector.shape_cast %320 : vector<64x1xi1> to vector<64x1xi1>
    %322 = vector.broadcast %321 : vector<64x1xi1> to vector<64x36xi1>
    %323 = vector.broadcast %cst_118 : f32 to vector<64x36xf32>
    %324 = arith.select %322, %318, %323 : vector<64x36xi1>, vector<64x36xf32>
    %325 = tpu.concatenate %324, %311 in 1 : vector<64x36xf32>, vector<64x36xf32> -> vector<64x72xf32>
    %326 = arith.truncf %325 : vector<64x72xf32> to vector<64x72xbf16>
    %cst_119 = arith.constant dense<0.000000e+00> : vector<64x48xf32>
    %327 = tpu.matmul %326, %312, %cst_119 {dimension_numbers = #tpu.dot_dimension_numbers<[1], [0], [0], [1], [0, 0, 1, 1], [], []>} : vector<64x72xbf16>, vector<72x48xbf16>, vector<64x48xf32> -> vector<64x48xf32>
    %328 = vector.broadcast %314 : vector<1x48xf32> to vector<64x48xf32>
    %329 = arith.addf %327, %328 : vector<64x48xf32>
    %330 = vector.extract_strided_slice %329 {offsets = [0, 0], sizes = [64, 24], strides = [1, 1]} : vector<64x48xf32> to vector<64x24xf32>
    %cst_120 = arith.constant 0.000000e+00 : f32
    %331 = vector.broadcast %cst_120 : f32 to vector<64x24xf32>
    %332 = arith.maximumf %330, %331 : vector<64x24xf32>
    %333 = vector.extract_strided_slice %329 {offsets = [0, 24], sizes = [64, 24], strides = [1, 1]} : vector<64x48xf32> to vector<64x24xf32>
    %c4_i32_121 = arith.constant 4 : i32
    %334 = tpu.dynamic_rotate %332 by %c4_i32_121 dim 0 : vector<64x24xf32>, i32 -> vector<64x24xf32>
    %c4_i32_122 = arith.constant 4 : i32
    %335 = vector.broadcast %c4_i32_122 : i32 to vector<64x1xi32>
    %336 = arith.cmpi sge, %38, %335 : vector<64x1xi32>
    %cst_123 = arith.constant 0.000000e+00 : f32
    %337 = vector.shape_cast %336 : vector<64x1xi1> to vector<64x1xi1>
    %338 = vector.broadcast %337 : vector<64x1xi1> to vector<64x24xi1>
    %339 = vector.broadcast %cst_123 : f32 to vector<64x24xf32>
    %340 = arith.select %338, %334, %339 : vector<64x24xi1>, vector<64x24xf32>
    %341 = tpu.concatenate %340, %332 in 1 : vector<64x24xf32>, vector<64x24xf32> -> vector<64x48xf32>
    %342 = arith.truncf %341 : vector<64x48xf32> to vector<64x48xbf16>
    %cst_124 = arith.constant dense<0.000000e+00> : vector<64x24xf32>
    %343 = tpu.matmul %342, %315, %cst_124 {dimension_numbers = #tpu.dot_dimension_numbers<[1], [0], [0], [1], [0, 0, 1, 1], [], []>} : vector<64x48xbf16>, vector<48x24xbf16>, vector<64x24xf32> -> vector<64x24xf32>
    %344 = vector.broadcast %317 : vector<1x24xf32> to vector<64x24xf32>
    %345 = arith.addf %343, %344 : vector<64x24xf32>
    %cst_125 = arith.constant 0.000000e+00 : f32
    %346 = vector.broadcast %cst_125 : f32 to vector<64x24xf32>
    %347 = arith.maximumf %345, %346 : vector<64x24xf32>
    %348 = arith.addf %347, %333 : vector<64x24xf32>
    %cst_126 = arith.constant 0.000000e+00 : f32
    %349 = vector.broadcast %cst_126 : f32 to vector<64x24xf32>
    %350 = arith.maximumf %348, %349 : vector<64x24xf32>
    %c1480 = arith.constant 1480 : index
    %c0_127 = arith.constant 0 : index
    %351 = vector.load %arg2[%c1480, %c0_127] : memref<1624x256xbf16, #tpu.memory_space<vmem>>, vector<48x24xbf16>
    %c1528 = arith.constant 1528 : index
    %c0_128 = arith.constant 0 : index
    %352 = vector.load %arg2[%c1528, %c0_128] : memref<1624x256xbf16, #tpu.memory_space<vmem>>, vector<1x24xbf16>
    %353 = arith.extf %352 : vector<1x24xbf16> to vector<1x24xf32>
    %c1536 = arith.constant 1536 : index
    %c0_129 = arith.constant 0 : index
    %354 = vector.load %arg2[%c1536, %c0_129] : memref<1624x256xbf16, #tpu.memory_space<vmem>>, vector<24x12xbf16>
    %c1560 = arith.constant 1560 : index
    %c0_130 = arith.constant 0 : index
    %355 = vector.load %arg2[%c1560, %c0_130] : memref<1624x256xbf16, #tpu.memory_space<vmem>>, vector<1x12xbf16>
    %356 = arith.extf %355 : vector<1x12xbf16> to vector<1x12xf32>
    %c8_i32_131 = arith.constant 8 : i32
    %357 = tpu.dynamic_rotate %350 by %c8_i32_131 dim 0 : vector<64x24xf32>, i32 -> vector<64x24xf32>
    %c8_i32_132 = arith.constant 8 : i32
    %358 = vector.broadcast %c8_i32_132 : i32 to vector<64x1xi32>
    %359 = arith.cmpi sge, %38, %358 : vector<64x1xi32>
    %cst_133 = arith.constant 0.000000e+00 : f32
    %360 = vector.shape_cast %359 : vector<64x1xi1> to vector<64x1xi1>
    %361 = vector.broadcast %360 : vector<64x1xi1> to vector<64x24xi1>
    %362 = vector.broadcast %cst_133 : f32 to vector<64x24xf32>
    %363 = arith.select %361, %357, %362 : vector<64x24xi1>, vector<64x24xf32>
    %364 = tpu.concatenate %363, %350 in 1 : vector<64x24xf32>, vector<64x24xf32> -> vector<64x48xf32>
    %365 = arith.truncf %364 : vector<64x48xf32> to vector<64x48xbf16>
    %cst_134 = arith.constant dense<0.000000e+00> : vector<64x24xf32>
    %366 = tpu.matmul %365, %351, %cst_134 {dimension_numbers = #tpu.dot_dimension_numbers<[1], [0], [0], [1], [0, 0, 1, 1], [], []>} : vector<64x48xbf16>, vector<48x24xbf16>, vector<64x24xf32> -> vector<64x24xf32>
    %367 = vector.broadcast %353 : vector<1x24xf32> to vector<64x24xf32>
    %368 = arith.addf %366, %367 : vector<64x24xf32>
    %369 = vector.extract_strided_slice %368 {offsets = [0, 0], sizes = [64, 12], strides = [1, 1]} : vector<64x24xf32> to vector<64x12xf32>
    %cst_135 = arith.constant 0.000000e+00 : f32
    %370 = vector.broadcast %cst_135 : f32 to vector<64x12xf32>
    %371 = arith.maximumf %369, %370 : vector<64x12xf32>
    %372 = vector.extract_strided_slice %368 {offsets = [0, 12], sizes = [64, 12], strides = [1, 1]} : vector<64x24xf32> to vector<64x12xf32>
    %c8_i32_136 = arith.constant 8 : i32
    %373 = tpu.dynamic_rotate %371 by %c8_i32_136 dim 0 : vector<64x12xf32>, i32 -> vector<64x12xf32>
    %c8_i32_137 = arith.constant 8 : i32
    %374 = vector.broadcast %c8_i32_137 : i32 to vector<64x1xi32>
    %375 = arith.cmpi sge, %38, %374 : vector<64x1xi32>
    %cst_138 = arith.constant 0.000000e+00 : f32
    %376 = vector.shape_cast %375 : vector<64x1xi1> to vector<64x1xi1>
    %377 = vector.broadcast %376 : vector<64x1xi1> to vector<64x12xi1>
    %378 = vector.broadcast %cst_138 : f32 to vector<64x12xf32>
    %379 = arith.select %377, %373, %378 : vector<64x12xi1>, vector<64x12xf32>
    %380 = tpu.concatenate %379, %371 in 1 : vector<64x12xf32>, vector<64x12xf32> -> vector<64x24xf32>
    %381 = arith.truncf %380 : vector<64x24xf32> to vector<64x24xbf16>
    %cst_139 = arith.constant dense<0.000000e+00> : vector<64x12xf32>
    %382 = tpu.matmul %381, %354, %cst_139 {dimension_numbers = #tpu.dot_dimension_numbers<[1], [0], [0], [1], [0, 0, 1, 1], [], []>} : vector<64x24xbf16>, vector<24x12xbf16>, vector<64x12xf32> -> vector<64x12xf32>
    %383 = vector.broadcast %356 : vector<1x12xf32> to vector<64x12xf32>
    %384 = arith.addf %382, %383 : vector<64x12xf32>
    %cst_140 = arith.constant 0.000000e+00 : f32
    %385 = vector.broadcast %cst_140 : f32 to vector<64x12xf32>
    %386 = arith.maximumf %384, %385 : vector<64x12xf32>
    %387 = arith.addf %386, %372 : vector<64x12xf32>
    %cst_141 = arith.constant 0.000000e+00 : f32
    %388 = vector.broadcast %cst_141 : f32 to vector<64x12xf32>
    %389 = arith.maximumf %387, %388 : vector<64x12xf32>
    %c1568 = arith.constant 1568 : index
    %c0_142 = arith.constant 0 : index
    %390 = vector.load %arg2[%c1568, %c0_142] : memref<1624x256xbf16, #tpu.memory_space<vmem>>, vector<24x12xbf16>
    %c1592 = arith.constant 1592 : index
    %c0_143 = arith.constant 0 : index
    %391 = vector.load %arg2[%c1592, %c0_143] : memref<1624x256xbf16, #tpu.memory_space<vmem>>, vector<1x12xbf16>
    %392 = arith.extf %391 : vector<1x12xbf16> to vector<1x12xf32>
    %c1600 = arith.constant 1600 : index
    %c0_144 = arith.constant 0 : index
    %393 = vector.load %arg2[%c1600, %c0_144] : memref<1624x256xbf16, #tpu.memory_space<vmem>>, vector<12x6xbf16>
    %c1616 = arith.constant 1616 : index
    %c0_145 = arith.constant 0 : index
    %394 = vector.load %arg2[%c1616, %c0_145] : memref<1624x256xbf16, #tpu.memory_space<vmem>>, vector<1x6xbf16>
    %395 = arith.extf %394 : vector<1x6xbf16> to vector<1x6xf32>
    %c16_i32_146 = arith.constant 16 : i32
    %396 = tpu.dynamic_rotate %389 by %c16_i32_146 dim 0 : vector<64x12xf32>, i32 -> vector<64x12xf32>
    %c16_i32_147 = arith.constant 16 : i32
    %397 = vector.broadcast %c16_i32_147 : i32 to vector<64x1xi32>
    %398 = arith.cmpi sge, %38, %397 : vector<64x1xi32>
    %cst_148 = arith.constant 0.000000e+00 : f32
    %399 = vector.shape_cast %398 : vector<64x1xi1> to vector<64x1xi1>
    %400 = vector.broadcast %399 : vector<64x1xi1> to vector<64x12xi1>
    %401 = vector.broadcast %cst_148 : f32 to vector<64x12xf32>
    %402 = arith.select %400, %396, %401 : vector<64x12xi1>, vector<64x12xf32>
    %403 = tpu.concatenate %402, %389 in 1 : vector<64x12xf32>, vector<64x12xf32> -> vector<64x24xf32>
    %404 = arith.truncf %403 : vector<64x24xf32> to vector<64x24xbf16>
    %cst_149 = arith.constant dense<0.000000e+00> : vector<64x12xf32>
    %405 = tpu.matmul %404, %390, %cst_149 {dimension_numbers = #tpu.dot_dimension_numbers<[1], [0], [0], [1], [0, 0, 1, 1], [], []>} : vector<64x24xbf16>, vector<24x12xbf16>, vector<64x12xf32> -> vector<64x12xf32>
    %406 = vector.broadcast %392 : vector<1x12xf32> to vector<64x12xf32>
    %407 = arith.addf %405, %406 : vector<64x12xf32>
    %408 = vector.extract_strided_slice %407 {offsets = [0, 0], sizes = [64, 6], strides = [1, 1]} : vector<64x12xf32> to vector<64x6xf32>
    %cst_150 = arith.constant 0.000000e+00 : f32
    %409 = vector.broadcast %cst_150 : f32 to vector<64x6xf32>
    %410 = arith.maximumf %408, %409 : vector<64x6xf32>
    %411 = vector.extract_strided_slice %407 {offsets = [0, 6], sizes = [64, 6], strides = [1, 1]} : vector<64x12xf32> to vector<64x6xf32>
    %c16_i32_151 = arith.constant 16 : i32
    %412 = tpu.dynamic_rotate %410 by %c16_i32_151 dim 0 : vector<64x6xf32>, i32 -> vector<64x6xf32>
    %c16_i32_152 = arith.constant 16 : i32
    %413 = vector.broadcast %c16_i32_152 : i32 to vector<64x1xi32>
    %414 = arith.cmpi sge, %38, %413 : vector<64x1xi32>
    %cst_153 = arith.constant 0.000000e+00 : f32
    %415 = vector.shape_cast %414 : vector<64x1xi1> to vector<64x1xi1>
    %416 = vector.broadcast %415 : vector<64x1xi1> to vector<64x6xi1>
    %417 = vector.broadcast %cst_153 : f32 to vector<64x6xf32>
    %418 = arith.select %416, %412, %417 : vector<64x6xi1>, vector<64x6xf32>
    %419 = tpu.concatenate %418, %410 in 1 : vector<64x6xf32>, vector<64x6xf32> -> vector<64x12xf32>
    %420 = arith.truncf %419 : vector<64x12xf32> to vector<64x12xbf16>
    %cst_154 = arith.constant dense<0.000000e+00> : vector<64x6xf32>
    %421 = tpu.matmul %420, %393, %cst_154 {dimension_numbers = #tpu.dot_dimension_numbers<[1], [0], [0], [1], [0, 0, 1, 1], [], []>} : vector<64x12xbf16>, vector<12x6xbf16>, vector<64x6xf32> -> vector<64x6xf32>
    %422 = vector.broadcast %395 : vector<1x6xf32> to vector<64x6xf32>
    %423 = arith.addf %421, %422 : vector<64x6xf32>
    %cst_155 = arith.constant 0.000000e+00 : f32
    %424 = vector.broadcast %cst_155 : f32 to vector<64x6xf32>
    %425 = arith.maximumf %423, %424 : vector<64x6xf32>
    %426 = arith.addf %425, %411 : vector<64x6xf32>
    %cst_156 = arith.constant 0.000000e+00 : f32
    %427 = vector.broadcast %cst_156 : f32 to vector<64x6xf32>
    %428 = arith.maximumf %426, %427 : vector<64x6xf32>
    %cst_157 = arith.constant 0.000000e+00 : f32
    %429 = vector.broadcast %cst_157 : f32 to vector<64x116xf32>
    %430 = tpu.concatenate %233, %428, %429 in 1 : vector<64x6xf32>, vector<64x6xf32>, vector<64x116xf32> -> vector<64x128xf32>
    %c0_158 = arith.constant 0 : index
    %c0_159 = arith.constant 0 : index
    %431 = vector.load %arg3[%c0_158, %c0_159] : memref<64x128xf32, #tpu.memory_space<vmem>>, vector<64x128xf32>
    tpu.vector_store %arg3[%c0_158, %c0_159], %430 {strides = array<i32>} : memref<64x128xf32, #tpu.memory_space<vmem>>, vector<64x128xf32>,
    return
  }
  func.func @transform_0(%arg0: i32) -> (i32, i32) {
    %c0_i32 = arith.constant 0 : i32
    %c0_i32_0 = arith.constant 0 : i32
    %c0_i32_1 = arith.constant 0 : i32
    return %c0_i32, %c0_i32_0 : i32, i32
  }
  func.func @transform_1(%arg0: i32) -> (i32, i32) {
    %c0_i32 = arith.constant 0 : i32
    %c0_i32_0 = arith.constant 0 : i32
    %c0_i32_1 = arith.constant 0 : i32
    return %c0_i32, %c0_i32_0 : i32, i32
  }
  func.func @transform_2(%arg0: i32) -> (i32, i32) {
    %c0_i32 = arith.constant 0 : i32
    %c0_i32_0 = arith.constant 0 : i32
    %c0_i32_1 = arith.constant 0 : i32
    return %c0_i32, %c0_i32_0 : i32, i32
  }
}

</mosaic_0001>

<llo_original>
// kernel: forward.1
$region0: #{forward.1}
  #allocation0 [shape = 'u32[]', space=smem, size = 0x4, offset = 0x4, fixed_abs, tag = 'smem constant byte address 0x4 - core index']
  #allocation1 [shape = 'u32[144,128]{1,0:T(1,128)}', space=vmem, size = 0x12000, scoped, tag = 'internal scratch']
  %s0 = inlined_call_operand.vmem [shape: bf16[2048,16], index: 0, kind: input, shape index: {}]
  %s1 = inlined_call_operand.vmem [shape: bf16[1624,256], index: 1, kind: input, shape index: {}]
  %s2 = inlined_call_operand.vmem [shape: f32[64,128], index: 2, kind: output, shape index: {}]
  %s3 = sld [smem:[#allocation0]]
  $region18: #{forward.1} parent=0
    _
  %s5 = ssub.s32 1, %s3
  %s6 = scalar_select 0, %s5, %s3
  // Predicated region
  $region2: #{forward.1} parent=0 // pred_check
    _
  $region3: #{forward.1} parent=0 // pred_check_branch
    %8 = sbr.rel (0) target = $region5
  $region4: #{forward.1} parent=0 // pred_region
    _
  $region5: #{forward.1} parent=0 // pred_fallthru
    _
  // Predicated region
  $region6: #{forward.1} parent=0 // pred_check
    _
  $region7: #{forward.1} parent=0 // pred_check_branch
    %10 = sbr.rel (0) target = $region9
  $region8: #{forward.1} parent=0 // pred_region
    _
  $region9: #{forward.1} parent=0 // pred_fallthru
    _
  %v12 = vld [vmem:[%s1] sm:$0xf]
  %v13 = vld [vmem:[%s1 + $0x8] sm:$0xf]
  %v14 = vld [vmem:[%s1 + $0x10] sm:$0x1]
  %v15 = vunpack.c.l.bf16 %v14
  %v16 = vld [vmem:[%s0] sm:$0xf]
  %v17 = vld [vmem:[%s0 + $0x4] sm:$0xf]
  %v18 = vld [vmem:[%s0 + $0x8] sm:$0xf]
  %v19 = vld [vmem:[%s0 + $0xc] sm:$0xf]
  %v20 = vld [vmem:[%s0 + $0x10] sm:$0xf]
  %v21 = vld [vmem:[%s0 + $0x14] sm:$0xf]
  %v22 = vld [vmem:[%s0 + $0x18] sm:$0xf]
  %v23 = vld [vmem:[%s0 + $0x1c] sm:$0xf]
  %v24 = vld [vmem:[%s0 + $0x20] sm:$0xf]
  %v25 = vld [vmem:[%s0 + $0x24] sm:$0xf]
  %v26 = vld [vmem:[%s0 + $0x28] sm:$0xf]
  %v27 = vld [vmem:[%s0 + $0x2c] sm:$0xf]
  %v28 = vld [vmem:[%s0 + $0x30] sm:$0xf]
  %v29 = vld [vmem:[%s0 + $0x34] sm:$0xf]
  %v30 = vld [vmem:[%s0 + $0x38] sm:$0xf]
  %v31 = vld [vmem:[%s0 + $0x3c] sm:$0xf]
  %v32 = vld [vmem:[%s0 + $0x40] sm:$0xf]
  %v33 = vld [vmem:[%s0 + $0x44] sm:$0xf]
  %v34 = vld [vmem:[%s0 + $0x48] sm:$0xf]
  %v35 = vld [vmem:[%s0 + $0x4c] sm:$0xf]
  %v36 = vld [vmem:[%s0 + $0x50] sm:$0xf]
  %v37 = vld [vmem:[%s0 + $0x54] sm:$0xf]
  %v38 = vld [vmem:[%s0 + $0x58] sm:$0xf]
  %v39 = vld [vmem:[%s0 + $0x5c] sm:$0xf]
  %v40 = vld [vmem:[%s0 + $0x60] sm:$0xf]
  %v41 = vld [vmem:[%s0 + $0x64] sm:$0xf]
  %v42 = vld [vmem:[%s0 + $0x68] sm:$0xf]
  %v43 = vld [vmem:[%s0 + $0x6c] sm:$0xf]
  %v44 = vld [vmem:[%s0 + $0x70] sm:$0xf]
  %v45 = vld [vmem:[%s0 + $0x74] sm:$0xf]
  %v46 = vld [vmem:[%s0 + $0x78] sm:$0xf]
  %v47 = vld [vmem:[%s0 + $0x7c] sm:$0xf]
  %v48 = vld [vmem:[%s0 + $0x80] sm:$0xf]
  %v49 = vld [vmem:[%s0 + $0x84] sm:$0xf]
  %v50 = vld [vmem:[%s0 + $0x88] sm:$0xf]
  %v51 = vld [vmem:[%s0 + $0x8c] sm:$0xf]
  %v52 = vld [vmem:[%s0 + $0x90] sm:$0xf]
  %v53 = vld [vmem:[%s0 + $0x94] sm:$0xf]
  %v54 = vld [vmem:[%s0 + $0x98] sm:$0xf]
  %v55 = vld [vmem:[%s0 + $0x9c] sm:$0xf]
  %v56 = vld [vmem:[%s0 + $0xa0] sm:$0xf]
  %v57 = vld [vmem:[%s0 + $0xa4] sm:$0xf]
  %v58 = vld [vmem:[%s0 + $0xa8] sm:$0xf]
  %v59 = vld [vmem:[%s0 + $0xac] sm:$0xf]
  %v60 = vld [vmem:[%s0 + $0xb0] sm:$0xf]
  %v61 = vld [vmem:[%s0 + $0xb4] sm:$0xf]
  %v62 = vld [vmem:[%s0 + $0xb8] sm:$0xf]
  %v63 = vld [vmem:[%s0 + $0xbc] sm:$0xf]
  %v64 = vld [vmem:[%s0 + $0xc0] sm:$0xf]
  %v65 = vld [vmem:[%s0 + $0xc4] sm:$0xf]
  %v66 = vld [vmem:[%s0 + $0xc8] sm:$0xf]
  %v67 = vld [vmem:[%s0 + $0xcc] sm:$0xf]
  %v68 = vld [vmem:[%s0 + $0xd0] sm:$0xf]
  %v69 = vld [vmem:[%s0 + $0xd4] sm:$0xf]
  %v70 = vld [vmem:[%s0 + $0xd8] sm:$0xf]
  %v71 = vld [vmem:[%s0 + $0xdc] sm:$0xf]
  %v72 = vld [vmem:[%s0 + $0xe0] sm:$0xf]
  %v73 = vld [vmem:[%s0 + $0xe4] sm:$0xf]
  %v74 = vld [vmem:[%s0 + $0xe8] sm:$0xf]
  %v75 = vld [vmem:[%s0 + $0xec] sm:$0xf]
  %v76 = vld [vmem:[%s0 + $0xf0] sm:$0xf]
  %v77 = vld [vmem:[%s0 + $0xf4] sm:$0xf]
  %v78 = vld [vmem:[%s0 + $0xf8] sm:$0xf]
  %v79 = vld [vmem:[%s0 + $0xfc] sm:$0xf]
  %v80 = vld [vmem:[%s0 + $0x100] sm:$0xf]
  %v81 = vld [vmem:[%s0 + $0x104] sm:$0xf]
  %v82 = vld [vmem:[%s0 + $0x108] sm:$0xf]
  %v83 = vld [vmem:[%s0 + $0x10c] sm:$0xf]
  %v84 = vld [vmem:[%s0 + $0x110] sm:$0xf]
  %v85 = vld [vmem:[%s0 + $0x114] sm:$0xf]
  %v86 = vld [vmem:[%s0 + $0x118] sm:$0xf]
  %v87 = vld [vmem:[%s0 + $0x11c] sm:$0xf]
  %v88 = vld [vmem:[%s0 + $0x120] sm:$0xf]
  %v89 = vld [vmem:[%s0 + $0x124] sm:$0xf]
  %v90 = vld [vmem:[%s0 + $0x128] sm:$0xf]
  %v91 = vld [vmem:[%s0 + $0x12c] sm:$0xf]
  %v92 = vld [vmem:[%s0 + $0x130] sm:$0xf]
  %v93 = vld [vmem:[%s0 + $0x134] sm:$0xf]
  %v94 = vld [vmem:[%s0 + $0x138] sm:$0xf]
  %v95 = vld [vmem:[%s0 + $0x13c] sm:$0xf]
  %v96 = vld [vmem:[%s0 + $0x140] sm:$0xf]
  %v97 = vld [vmem:[%s0 + $0x144] sm:$0xf]
  %v98 = vld [vmem:[%s0 + $0x148] sm:$0xf]
  %v99 = vld [vmem:[%s0 + $0x14c] sm:$0xf]
  %v100 = vld [vmem:[%s0 + $0x150] sm:$0xf]
  %v101 = vld [vmem:[%s0 + $0x154] sm:$0xf]
  %v102 = vld [vmem:[%s0 + $0x158] sm:$0xf]
  %v103 = vld [vmem:[%s0 + $0x15c] sm:$0xf]
  %v104 = vld [vmem:[%s0 + $0x160] sm:$0xf]
  %v105 = vld [vmem:[%s0 + $0x164] sm:$0xf]
  %v106 = vld [vmem:[%s0 + $0x168] sm:$0xf]
  %v107 = vld [vmem:[%s0 + $0x16c] sm:$0xf]
  %v108 = vld [vmem:[%s0 + $0x170] sm:$0xf]
  %v109 = vld [vmem:[%s0 + $0x174] sm:$0xf]
  %v110 = vld [vmem:[%s0 + $0x178] sm:$0xf]
  %v111 = vld [vmem:[%s0 + $0x17c] sm:$0xf]
  %v112 = vld [vmem:[%s0 + $0x180] sm:$0xf]
  %v113 = vld [vmem:[%s0 + $0x184] sm:$0xf]
  %v114 = vld [vmem:[%s0 + $0x188] sm:$0xf]
  %v115 = vld [vmem:[%s0 + $0x18c] sm:$0xf]
  %v116 = vld [vmem:[%s0 + $0x190] sm:$0xf]
  %v117 = vld [vmem:[%s0 + $0x194] sm:$0xf]
  %v118 = vld [vmem:[%s0 + $0x198] sm:$0xf]
  %v119 = vld [vmem:[%s0 + $0x19c] sm:$0xf]
  %v120 = vld [vmem:[%s0 + $0x1a0] sm:$0xf]
  %v121 = vld [vmem:[%s0 + $0x1a4] sm:$0xf]
  %v122 = vld [vmem:[%s0 + $0x1a8] sm:$0xf]
  %v123 = vld [vmem:[%s0 + $0x1ac] sm:$0xf]
  %v124 = vld [vmem:[%s0 + $0x1b0] sm:$0xf]
  %v125 = vld [vmem:[%s0 + $0x1b4] sm:$0xf]
  %v126 = vld [vmem:[%s0 + $0x1b8] sm:$0xf]
  %v127 = vld [vmem:[%s0 + $0x1bc] sm:$0xf]
  %v128 = vld [vmem:[%s0 + $0x1c0] sm:$0xf]
  %v129 = vld [vmem:[%s0 + $0x1c4] sm:$0xf]
  %v130 = vld [vmem:[%s0 + $0x1c8] sm:$0xf]
  %v131 = vld [vmem:[%s0 + $0x1cc] sm:$0xf]
  %v132 = vld [vmem:[%s0 + $0x1d0] sm:$0xf]
  %v133 = vld [vmem:[%s0 + $0x1d4] sm:$0xf]
  %v134 = vld [vmem:[%s0 + $0x1d8] sm:$0xf]
  %v135 = vld [vmem:[%s0 + $0x1dc] sm:$0xf]
  %v136 = vld [vmem:[%s0 + $0x1e0] sm:$0xf]
  %v137 = vld [vmem:[%s0 + $0x1e4] sm:$0xf]
  %v138 = vld [vmem:[%s0 + $0x1e8] sm:$0xf]
  %v139 = vld [vmem:[%s0 + $0x1ec] sm:$0xf]
  %v140 = vld [vmem:[%s0 + $0x1f0] sm:$0xf]
  %v141 = vld [vmem:[%s0 + $0x1f4] sm:$0xf]
  %v142 = vld [vmem:[%s0 + $0x1f8] sm:$0xf]
  %v143 = vld [vmem:[%s0 + $0x1fc] sm:$0xf]
  %v144 = vld [vmem:[%s0 + $0x200] sm:$0xf]
  %v145 = vld [vmem:[%s0 + $0x204] sm:$0xf]
  %v146 = vld [vmem:[%s0 + $0x208] sm:$0xf]
  %v147 = vld [vmem:[%s0 + $0x20c] sm:$0xf]
  %v148 = vld [vmem:[%s0 + $0x210] sm:$0xf]
  %v149 = vld [vmem:[%s0 + $0x214] sm:$0xf]
  %v150 = vld [vmem:[%s0 + $0x218] sm:$0xf]
  %v151 = vld [vmem:[%s0 + $0x21c] sm:$0xf]
  %v152 = vld [vmem:[%s0 + $0x220] sm:$0xf]
  %v153 = vld [vmem:[%s0 + $0x224] sm:$0xf]
  %v154 = vld [vmem:[%s0 + $0x228] sm:$0xf]
  %v155 = vld [vmem:[%s0 + $0x22c] sm:$0xf]
  %v156 = vld [vmem:[%s0 + $0x230] sm:$0xf]
  %v157 = vld [vmem:[%s0 + $0x234] sm:$0xf]
  %v158 = vld [vmem:[%s0 + $0x238] sm:$0xf]
  %v159 = vld [vmem:[%s0 + $0x23c] sm:$0xf]
  %v160 = vld [vmem:[%s0 + $0x240] sm:$0xf]
  %v161 = vld [vmem:[%s0 + $0x244] sm:$0xf]
  %v162 = vld [vmem:[%s0 + $0x248] sm:$0xf]
  %v163 = vld [vmem:[%s0 + $0x24c] sm:$0xf]
  %v164 = vld [vmem:[%s0 + $0x250] sm:$0xf]
  %v165 = vld [vmem:[%s0 + $0x254] sm:$0xf]
  %v166 = vld [vmem:[%s0 + $0x258] sm:$0xf]
  %v167 = vld [vmem:[%s0 + $0x25c] sm:$0xf]
  %v168 = vld [vmem:[%s0 + $0x260] sm:$0xf]
  %v169 = vld [vmem:[%s0 + $0x264] sm:$0xf]
  %v170 = vld [vmem:[%s0 + $0x268] sm:$0xf]
  %v171 = vld [vmem:[%s0 + $0x26c] sm:$0xf]
  %v172 = vld [vmem:[%s0 + $0x270] sm:$0xf]
  %v173 = vld [vmem:[%s0 + $0x274] sm:$0xf]
  %v174 = vld [vmem:[%s0 + $0x278] sm:$0xf]
  %v175 = vld [vmem:[%s0 + $0x27c] sm:$0xf]
  %v176 = vld [vmem:[%s0 + $0x280] sm:$0xf]
  %v177 = vld [vmem:[%s0 + $0x284] sm:$0xf]
  %v178 = vld [vmem:[%s0 + $0x288] sm:$0xf]
  %v179 = vld [vmem:[%s0 + $0x28c] sm:$0xf]
  %v180 = vld [vmem:[%s0 + $0x290] sm:$0xf]
  %v181 = vld [vmem:[%s0 + $0x294] sm:$0xf]
  %v182 = vld [vmem:[%s0 + $0x298] sm:$0xf]
  %v183 = vld [vmem:[%s0 + $0x29c] sm:$0xf]
  %v184 = vld [vmem:[%s0 + $0x2a0] sm:$0xf]
  %v185 = vld [vmem:[%s0 + $0x2a4] sm:$0xf]
  %v186 = vld [vmem:[%s0 + $0x2a8] sm:$0xf]
  %v187 = vld [vmem:[%s0 + $0x2ac] sm:$0xf]
  %v188 = vld [vmem:[%s0 + $0x2b0] sm:$0xf]
  %v189 = vld [vmem:[%s0 + $0x2b4] sm:$0xf]
  %v190 = vld [vmem:[%s0 + $0x2b8] sm:$0xf]
  %v191 = vld [vmem:[%s0 + $0x2bc] sm:$0xf]
  %v192 = vld [vmem:[%s0 + $0x2c0] sm:$0xf]
  %v193 = vld [vmem:[%s0 + $0x2c4] sm:$0xf]
  %v194 = vld [vmem:[%s0 + $0x2c8] sm:$0xf]
  %v195 = vld [vmem:[%s0 + $0x2cc] sm:$0xf]
  %v196 = vld [vmem:[%s0 + $0x2d0] sm:$0xf]
  %v197 = vld [vmem:[%s0 + $0x2d4] sm:$0xf]
  %v198 = vld [vmem:[%s0 + $0x2d8] sm:$0xf]
  %v199 = vld [vmem:[%s0 + $0x2dc] sm:$0xf]
  %v200 = vld [vmem:[%s0 + $0x2e0] sm:$0xf]
  %v201 = vld [vmem:[%s0 + $0x2e4] sm:$0xf]
  %v202 = vld [vmem:[%s0 + $0x2e8] sm:$0xf]
  %v203 = vld [vmem:[%s0 + $0x2ec] sm:$0xf]
  %v204 = vld [vmem:[%s0 + $0x2f0] sm:$0xf]
  %v205 = vld [vmem:[%s0 + $0x2f4] sm:$0xf]
  %v206 = vld [vmem:[%s0 + $0x2f8] sm:$0xf]
  %v207 = vld [vmem:[%s0 + $0x2fc] sm:$0xf]
  %v208 = vld [vmem:[%s0 + $0x300] sm:$0xf]
  %v209 = vld [vmem:[%s0 + $0x304] sm:$0xf]
  %v210 = vld [vmem:[%s0 + $0x308] sm:$0xf]
  %v211 = vld [vmem:[%s0 + $0x30c] sm:$0xf]
  %v212 = vld [vmem:[%s0 + $0x310] sm:$0xf]
  %v213 = vld [vmem:[%s0 + $0x314] sm:$0xf]
  %v214 = vld [vmem:[%s0 + $0x318] sm:$0xf]
  %v215 = vld [vmem:[%s0 + $0x31c] sm:$0xf]
  %v216 = vld [vmem:[%s0 + $0x320] sm:$0xf]
  %v217 = vld [vmem:[%s0 + $0x324] sm:$0xf]
  %v218 = vld [vmem:[%s0 + $0x328] sm:$0xf]
  %v219 = vld [vmem:[%s0 + $0x32c] sm:$0xf]
  %v220 = vld [vmem:[%s0 + $0x330] sm:$0xf]
  %v221 = vld [vmem:[%s0 + $0x334] sm:$0xf]
  %v222 = vld [vmem:[%s0 + $0x338] sm:$0xf]
  %v223 = vld [vmem:[%s0 + $0x33c] sm:$0xf]
  %v224 = vld [vmem:[%s0 + $0x340] sm:$0xf]
  %v225 = vld [vmem:[%s0 + $0x344] sm:$0xf]
  %v226 = vld [vmem:[%s0 + $0x348] sm:$0xf]
  %v227 = vld [vmem:[%s0 + $0x34c] sm:$0xf]
  %v228 = vld [vmem:[%s0 + $0x350] sm:$0xf]
  %v229 = vld [vmem:[%s0 + $0x354] sm:$0xf]
  %v230 = vld [vmem:[%s0 + $0x358] sm:$0xf]
  %v231 = vld [vmem:[%s0 + $0x35c] sm:$0xf]
  %v232 = vld [vmem:[%s0 + $0x360] sm:$0xf]
  %v233 = vld [vmem:[%s0 + $0x364] sm:$0xf]
  %v234 = vld [vmem:[%s0 + $0x368] sm:$0xf]
  %v235 = vld [vmem:[%s0 + $0x36c] sm:$0xf]
  %v236 = vld [vmem:[%s0 + $0x370] sm:$0xf]
  %v237 = vld [vmem:[%s0 + $0x374] sm:$0xf]
  %v238 = vld [vmem:[%s0 + $0x378] sm:$0xf]
  %v239 = vld [vmem:[%s0 + $0x37c] sm:$0xf]
  %v240 = vld [vmem:[%s0 + $0x380] sm:$0xf]
  %v241 = vld [vmem:[%s0 + $0x384] sm:$0xf]
  %v242 = vld [vmem:[%s0 + $0x388] sm:$0xf]
  %v243 = vld [vmem:[%s0 + $0x38c] sm:$0xf]
  %v244 = vld [vmem:[%s0 + $0x390] sm:$0xf]
  %v245 = vld [vmem:[%s0 + $0x394] sm:$0xf]
  %v246 = vld [vmem:[%s0 + $0x398] sm:$0xf]
  %v247 = vld [vmem:[%s0 + $0x39c] sm:$0xf]
  %v248 = vld [vmem:[%s0 + $0x3a0] sm:$0xf]
  %v249 = vld [vmem:[%s0 + $0x3a4] sm:$0xf]
  %v250 = vld [vmem:[%s0 + $0x3a8] sm:$0xf]
  %v251 = vld [vmem:[%s0 + $0x3ac] sm:$0xf]
  %v252 = vld [vmem:[%s0 + $0x3b0] sm:$0xf]
  %v253 = vld [vmem:[%s0 + $0x3b4] sm:$0xf]
  %v254 = vld [vmem:[%s0 + $0x3b8] sm:$0xf]
  %v255 = vld [vmem:[%s0 + $0x3bc] sm:$0xf]
  %v256 = vld [vmem:[%s0 + $0x3c0] sm:$0xf]
  %v257 = vld [vmem:[%s0 + $0x3c4] sm:$0xf]
  %v258 = vld [vmem:[%s0 + $0x3c8] sm:$0xf]
  %v259 = vld [vmem:[%s0 + $0x3cc] sm:$0xf]
  %v260 = vld [vmem:[%s0 + $0x3d0] sm:$0xf]
  %v261 = vld [vmem:[%s0 + $0x3d4] sm:$0xf]
  %v262 = vld [vmem:[%s0 + $0x3d8] sm:$0xf]
  %v263 = vld [vmem:[%s0 + $0x3dc] sm:$0xf]
  %v264 = vld [vmem:[%s0 + $0x3e0] sm:$0xf]
  %v265 = vld [vmem:[%s0 + $0x3e4] sm:$0xf]
  %v266 = vld [vmem:[%s0 + $0x3e8] sm:$0xf]
  %v267 = vld [vmem:[%s0 + $0x3ec] sm:$0xf]
  %v268 = vld [vmem:[%s0 + $0x3f0] sm:$0xf]
  %v269 = vld [vmem:[%s0 + $0x3f4] sm:$0xf]
  %v270 = vld [vmem:[%s0 + $0x3f8] sm:$0xf]
  %v271 = vld [vmem:[%s0 + $0x3fc] sm:$0xf]
  %v272 = vlaneseq
  %v273 = vshrl.u32 %v272, 7
  %v274 = vsub.s32 0, %v273
  %v275 = vrot.slane %v15, %v274
  %v532 = vunpack.c.l.b16 %v16
  %v533 = vunpack.c.l.b16 %v17
  %v534 = vunpack.c.l.b16 %v18
  %v535 = vunpack.c.l.b16 %v19
  %v536 = vunpack.c.l.b16 %v20
  %v537 = vunpack.c.l.b16 %v21
  %v538 = vunpack.c.l.b16 %v22
  %v539 = vunpack.c.l.b16 %v23
  %v540 = vunpack.c.l.b16 %v24
  %v541 = vunpack.c.l.b16 %v25
  %v542 = vunpack.c.l.b16 %v26
  %v543 = vunpack.c.l.b16 %v27
  %v544 = vunpack.c.l.b16 %v28
  %v545 = vunpack.c.l.b16 %v29
  %v546 = vunpack.c.l.b16 %v30
  %v547 = vunpack.c.l.b16 %v31
  %v548 = vunpack.c.l.b16 %v32
  %v549 = vunpack.c.l.b16 %v33
  %v550 = vunpack.c.l.b16 %v34
  %v551 = vunpack.c.l.b16 %v35
  %v552 = vunpack.c.l.b16 %v36
  %v553 = vunpack.c.l.b16 %v37
  %v554 = vunpack.c.l.b16 %v38
  %v555 = vunpack.c.l.b16 %v39
  %v556 = vunpack.c.l.b16 %v40
  %v557 = vunpack.c.l.b16 %v41
  %v558 = vunpack.c.l.b16 %v42
  %v559 = vunpack.c.l.b16 %v43
  %v560 = vunpack.c.l.b16 %v44
  %v561 = vunpack.c.l.b16 %v45
  %v562 = vunpack.c.l.b16 %v46
  %v563 = vunpack.c.l.b16 %v47
  %v564 = vunpack.c.l.b16 %v48
  %v565 = vunpack.c.l.b16 %v49
  %v566 = vunpack.c.l.b16 %v50
  %v567 = vunpack.c.l.b16 %v51
  %v568 = vunpack.c.l.b16 %v52
  %v569 = vunpack.c.l.b16 %v53
  %v570 = vunpack.c.l.b16 %v54
  %v571 = vunpack.c.l.b16 %v55
  %v572 = vunpack.c.l.b16 %v56
  %v573 = vunpack.c.l.b16 %v57
  %v574 = vunpack.c.l.b16 %v58
  %v575 = vunpack.c.l.b16 %v59
  %v576 = vunpack.c.l.b16 %v60
  %v577 = vunpack.c.l.b16 %v61
  %v578 = vunpack.c.l.b16 %v62
  %v579 = vunpack.c.l.b16 %v63
  %v580 = vunpack.c.l.b16 %v64
  %v581 = vunpack.c.l.b16 %v65
  %v582 = vunpack.c.l.b16 %v66
  %v583 = vunpack.c.l.b16 %v67
  %v584 = vunpack.c.l.b16 %v68
  %v585 = vunpack.c.l.b16 %v69
  %v586 = vunpack.c.l.b16 %v70
  %v587 = vunpack.c.l.b16 %v71
  %v588 = vunpack.c.l.b16 %v72
  %v589 = vunpack.c.l.b16 %v73
  %v590 = vunpack.c.l.b16 %v74
  %v591 = vunpack.c.l.b16 %v75
  %v592 = vunpack.c.l.b16 %v76
  %v593 = vunpack.c.l.b16 %v77
  %v594 = vunpack.c.l.b16 %v78
  %v595 = vunpack.c.l.b16 %v79
  %v596 = vunpack.c.l.b16 %v80
  %v597 = vunpack.c.l.b16 %v81
  %v598 = vunpack.c.l.b16 %v82
  %v599 = vunpack.c.l.b16 %v83
  %v600 = vunpack.c.l.b16 %v84
  %v601 = vunpack.c.l.b16 %v85
  %v602 = vunpack.c.l.b16 %v86
  %v603 = vunpack.c.l.b16 %v87
  %v604 = vunpack.c.l.b16 %v88
  %v605 = vunpack.c.l.b16 %v89
  %v606 = vunpack.c.l.b16 %v90
  %v607 = vunpack.c.l.b16 %v91
  %v608 = vunpack.c.l.b16 %v92
  %v609 = vunpack.c.l.b16 %v93
  %v610 = vunpack.c.l.b16 %v94
  %v611 = vunpack.c.l.b16 %v95
  %v612 = vunpack.c.l.b16 %v96
  %v613 = vunpack.c.l.b16 %v97
  %v614 = vunpack.c.l.b16 %v98
  %v615 = vunpack.c.l.b16 %v99
  %v616 = vunpack.c.l.b16 %v100
  %v617 = vunpack.c.l.b16 %v101
  %v618 = vunpack.c.l.b16 %v102
  %v619 = vunpack.c.l.b16 %v103
  %v620 = vunpack.c.l.b16 %v104
  %v621 = vunpack.c.l.b16 %v105
  %v622 = vunpack.c.l.b16 %v106
  %v623 = vunpack.c.l.b16 %v107
  %v624 = vunpack.c.l.b16 %v108
  %v625 = vunpack.c.l.b16 %v109
  %v626 = vunpack.c.l.b16 %v110
  %v627 = vunpack.c.l.b16 %v111
  %v628 = vunpack.c.l.b16 %v112
  %v629 = vunpack.c.l.b16 %v113
  %v630 = vunpack.c.l.b16 %v114
  %v631 = vunpack.c.l.b16 %v115
  %v632 = vunpack.c.l.b16 %v116
  %v633 = vunpack.c.l.b16 %v117
  %v634 = vunpack.c.l.b16 %v118
  %v635 = vunpack.c.l.b16 %v119
  %v636 = vunpack.c.l.b16 %v120
  %v637 = vunpack.c.l.b16 %v121
  %v638 = vunpack.c.l.b16 %v122
  %v639 = vunpack.c.l.b16 %v123
  %v640 = vunpack.c.l.b16 %v124
  %v641 = vunpack.c.l.b16 %v125
  %v642 = vunpack.c.l.b16 %v126
  %v643 = vunpack.c.l.b16 %v127
  %v644 = vunpack.c.l.b16 %v128
  %v645 = vunpack.c.l.b16 %v129
  %v646 = vunpack.c.l.b16 %v130
  %v647 = vunpack.c.l.b16 %v131
  %v648 = vunpack.c.l.b16 %v132
  %v649 = vunpack.c.l.b16 %v133
  %v650 = vunpack.c.l.b16 %v134
  %v651 = vunpack.c.l.b16 %v135
  %v652 = vunpack.c.l.b16 %v136
  %v653 = vunpack.c.l.b16 %v137
  %v654 = vunpack.c.l.b16 %v138
  %v655 = vunpack.c.l.b16 %v139
  %v656 = vunpack.c.l.b16 %v140
  %v657 = vunpack.c.l.b16 %v141
  %v658 = vunpack.c.l.b16 %v142
  %v659 = vunpack.c.l.b16 %v143
  %v660 = vunpack.c.l.b16 %v144
  %v661 = vunpack.c.l.b16 %v145
  %v662 = vunpack.c.l.b16 %v146
  %v663 = vunpack.c.l.b16 %v147
  %v664 = vunpack.c.l.b16 %v148
  %v665 = vunpack.c.l.b16 %v149
  %v666 = vunpack.c.l.b16 %v150
  %v667 = vunpack.c.l.b16 %v151
  %v668 = vunpack.c.l.b16 %v152
  %v669 = vunpack.c.l.b16 %v153
  %v670 = vunpack.c.l.b16 %v154
  %v671 = vunpack.c.l.b16 %v155
  %v672 = vunpack.c.l.b16 %v156
  %v673 = vunpack.c.l.b16 %v157
  %v674 = vunpack.c.l.b16 %v158
  %v675 = vunpack.c.l.b16 %v159
  %v676 = vunpack.c.l.b16 %v160
  %v677 = vunpack.c.l.b16 %v161
  %v678 = vunpack.c.l.b16 %v162
  %v679 = vunpack.c.l.b16 %v163
  %v680 = vunpack.c.l.b16 %v164
  %v681 = vunpack.c.l.b16 %v165
  %v682 = vunpack.c.l.b16 %v166
  %v683 = vunpack.c.l.b16 %v167
  %v684 = vunpack.c.l.b16 %v168
  %v685 = vunpack.c.l.b16 %v169
  %v686 = vunpack.c.l.b16 %v170
  %v687 = vunpack.c.l.b16 %v171
  %v688 = vunpack.c.l.b16 %v172
  %v689 = vunpack.c.l.b16 %v173
  %v690 = vunpack.c.l.b16 %v174
  %v691 = vunpack.c.l.b16 %v175
  %v692 = vunpack.c.l.b16 %v176
  %v693 = vunpack.c.l.b16 %v177
  %v694 = vunpack.c.l.b16 %v178
  %v695 = vunpack.c.l.b16 %v179
  %v696 = vunpack.c.l.b16 %v180
  %v697 = vunpack.c.l.b16 %v181
  %v698 = vunpack.c.l.b16 %v182
  %v699 = vunpack.c.l.b16 %v183
  %v700 = vunpack.c.l.b16 %v184
  %v701 = vunpack.c.l.b16 %v185
  %v702 = vunpack.c.l.b16 %v186
  %v703 = vunpack.c.l.b16 %v187
  %v704 = vunpack.c.l.b16 %v188
  %v705 = vunpack.c.l.b16 %v189
  %v706 = vunpack.c.l.b16 %v190
  %v707 = vunpack.c.l.b16 %v191
  %v708 = vunpack.c.l.b16 %v192
  %v709 = vunpack.c.l.b16 %v193
  %v710 = vunpack.c.l.b16 %v194
  %v711 = vunpack.c.l.b16 %v195
  %v712 = vunpack.c.l.b16 %v196
  %v713 = vunpack.c.l.b16 %v197
  %v714 = vunpack.c.l.b16 %v198
  %v715 = vunpack.c.l.b16 %v199
  %v716 = vunpack.c.l.b16 %v200
  %v717 = vunpack.c.l.b16 %v201
  %v718 = vunpack.c.l.b16 %v202
  %v719 = vunpack.c.l.b16 %v203
  %v720 = vunpack.c.l.b16 %v204
  %v721 = vunpack.c.l.b16 %v205
  %v722 = vunpack.c.l.b16 %v206
  %v723 = vunpack.c.l.b16 %v207
  %v724 = vunpack.c.l.b16 %v208
  %v725 = vunpack.c.l.b16 %v209
  %v726 = vunpack.c.l.b16 %v210
  %v727 = vunpack.c.l.b16 %v211
  %v728 = vunpack.c.l.b16 %v212
  %v729 = vunpack.c.l.b16 %v213
  %v730 = vunpack.c.l.b16 %v214
  %v731 = vunpack.c.l.b16 %v215
  %v732 = vunpack.c.l.b16 %v216
  %v733 = vunpack.c.l.b16 %v217
  %v734 = vunpack.c.l.b16 %v218
  %v735 = vunpack.c.l.b16 %v219
  %v736 = vunpack.c.l.b16 %v220
  %v737 = vunpack.c.l.b16 %v221
  %v738 = vunpack.c.l.b16 %v222
  %v739 = vunpack.c.l.b16 %v223
  %v740 = vunpack.c.l.b16 %v224
  %v741 = vunpack.c.l.b16 %v225
  %v742 = vunpack.c.l.b16 %v226
  %v743 = vunpack.c.l.b16 %v227
  %v744 = vunpack.c.l.b16 %v228
  %v745 = vunpack.c.l.b16 %v229
  %v746 = vunpack.c.l.b16 %v230
  %v747 = vunpack.c.l.b16 %v231
  %v748 = vunpack.c.l.b16 %v232
  %v749 = vunpack.c.l.b16 %v233
  %v750 = vunpack.c.l.b16 %v234
  %v751 = vunpack.c.l.b16 %v235
  %v752 = vunpack.c.l.b16 %v236
  %v753 = vunpack.c.l.b16 %v237
  %v754 = vunpack.c.l.b16 %v238
  %v755 = vunpack.c.l.b16 %v239
  %v756 = vunpack.c.l.b16 %v240
  %v757 = vunpack.c.l.b16 %v241
  %v758 = vunpack.c.l.b16 %v242
  %v759 = vunpack.c.l.b16 %v243
  %v760 = vunpack.c.l.b16 %v244
  %v761 = vunpack.c.l.b16 %v245
  %v762 = vunpack.c.l.b16 %v246
  %v763 = vunpack.c.l.b16 %v247
  %v764 = vunpack.c.l.b16 %v248
  %v765 = vunpack.c.l.b16 %v249
  %v766 = vunpack.c.l.b16 %v250
  %v767 = vunpack.c.l.b16 %v251
  %v768 = vunpack.c.l.b16 %v252
  %v769 = vunpack.c.l.b16 %v253
  %v770 = vunpack.c.l.b16 %v254
  %v771 = vunpack.c.l.b16 %v255
  %v772 = vunpack.c.l.b16 %v256
  %v773 = vunpack.c.l.b16 %v257
  %v774 = vunpack.c.l.b16 %v258
  %v775 = vunpack.c.l.b16 %v259
  %v776 = vunpack.c.l.b16 %v260
  %v777 = vunpack.c.l.b16 %v261
  %v778 = vunpack.c.l.b16 %v262
  %v779 = vunpack.c.l.b16 %v263
  %v780 = vunpack.c.l.b16 %v264
  %v781 = vunpack.c.l.b16 %v265
  %v782 = vunpack.c.l.b16 %v266
  %v783 = vunpack.c.l.b16 %v267
  %v784 = vunpack.c.l.b16 %v268
  %v785 = vunpack.c.l.b16 %v269
  %v786 = vunpack.c.l.b16 %v270
  %v787 = vunpack.c.l.b16 %v271
  %v788 = vpack.c.b16 %v533, %v532
  %v789 = vpack.c.b16 %v535, %v534
  %v790 = vpack.c.b16 %v537, %v536
  %v791 = vpack.c.b16 %v539, %v538
  %v792 = vpack.c.b16 %v541, %v540
  %v793 = vpack.c.b16 %v543, %v542
  %v794 = vpack.c.b16 %v545, %v544
  %v795 = vpack.c.b16 %v547, %v546
  %v796 = vpack.c.b16 %v549, %v548
  %v797 = vpack.c.b16 %v551, %v550
  %v798 = vpack.c.b16 %v553, %v552
  %v799 = vpack.c.b16 %v555, %v554
  %v800 = vpack.c.b16 %v557, %v556
  %v801 = vpack.c.b16 %v559, %v558
  %v802 = vpack.c.b16 %v561, %v560
  %v803 = vpack.c.b16 %v563, %v562
  %v804 = vpack.c.b16 %v565, %v564
  %v805 = vpack.c.b16 %v567, %v566
  %v806 = vpack.c.b16 %v569, %v568
  %v807 = vpack.c.b16 %v571, %v570
  %v808 = vpack.c.b16 %v573, %v572
  %v809 = vpack.c.b16 %v575, %v574
  %v810 = vpack.c.b16 %v577, %v576
  %v811 = vpack.c.b16 %v579, %v578
  %v812 = vpack.c.b16 %v581, %v580
  %v813 = vpack.c.b16 %v583, %v582
  %v814 = vpack.c.b16 %v585, %v584
  %v815 = vpack.c.b16 %v587, %v586
  %v816 = vpack.c.b16 %v589, %v588
  %v817 = vpack.c.b16 %v591, %v590
  %v818 = vpack.c.b16 %v593, %v592
  %v819 = vpack.c.b16 %v595, %v594
  %v820 = vpack.c.b16 %v597, %v596
  %v821 = vpack.c.b16 %v599, %v598
  %v822 = vpack.c.b16 %v601, %v600
  %v823 = vpack.c.b16 %v603, %v602
  %v824 = vpack.c.b16 %v605, %v604
  %v825 = vpack.c.b16 %v607, %v606
  %v826 = vpack.c.b16 %v609, %v608
  %v827 = vpack.c.b16 %v611, %v610
  %v828 = vpack.c.b16 %v613, %v612
  %v829 = vpack.c.b16 %v615, %v614
  %v830 = vpack.c.b16 %v617, %v616
  %v831 = vpack.c.b16 %v619, %v618
  %v832 = vpack.c.b16 %v621, %v620
  %v833 = vpack.c.b16 %v623, %v622
  %v834 = vpack.c.b16 %v625, %v624
  %v835 = vpack.c.b16 %v627, %v626
  %v836 = vpack.c.b16 %v629, %v628
  %v837 = vpack.c.b16 %v631, %v630
  %v838 = vpack.c.b16 %v633, %v632
  %v839 = vpack.c.b16 %v635, %v634
  %v840 = vpack.c.b16 %v637, %v636
  %v841 = vpack.c.b16 %v639, %v638
  %v842 = vpack.c.b16 %v641, %v640
  %v843 = vpack.c.b16 %v643, %v642
  %v844 = vpack.c.b16 %v645, %v644
  %v845 = vpack.c.b16 %v647, %v646
  %v846 = vpack.c.b16 %v649, %v648
  %v847 = vpack.c.b16 %v651, %v650
  %v848 = vpack.c.b16 %v653, %v652
  %v849 = vpack.c.b16 %v655, %v654
  %v850 = vpack.c.b16 %v657, %v656
  %v851 = vpack.c.b16 %v659, %v658
  %v852 = vpack.c.b16 %v661, %v660
  %v853 = vpack.c.b16 %v663, %v662
  %v854 = vpack.c.b16 %v665, %v664
  %v855 = vpack.c.b16 %v667, %v666
  %v856 = vpack.c.b16 %v669, %v668
  %v857 = vpack.c.b16 %v671, %v670
  %v858 = vpack.c.b16 %v673, %v672
  %v859 = vpack.c.b16 %v675, %v674
  %v860 = vpack.c.b16 %v677, %v676
  %v861 = vpack.c.b16 %v679, %v678
  %v862 = vpack.c.b16 %v681, %v680
  %v863 = vpack.c.b16 %v683, %v682
  %v864 = vpack.c.b16 %v685, %v684
  %v865 = vpack.c.b16 %v687, %v686
  %v866 = vpack.c.b16 %v689, %v688
  %v867 = vpack.c.b16 %v691, %v690
  %v868 = vpack.c.b16 %v693, %v692
  %v869 = vpack.c.b16 %v695, %v694
  %v870 = vpack.c.b16 %v697, %v696
  %v871 = vpack.c.b16 %v699, %v698
  %v872 = vpack.c.b16 %v701, %v700
  %v873 = vpack.c.b16 %v703, %v702
  %v874 = vpack.c.b16 %v705, %v704
  %v875 = vpack.c.b16 %v707, %v706
  %v876 = vpack.c.b16 %v709, %v708
  %v877 = vpack.c.b16 %v711, %v710
  %v878 = vpack.c.b16 %v713, %v712
  %v879 = vpack.c.b16 %v715, %v714
  %v880 = vpack.c.b16 %v717, %v716
  %v881 = vpack.c.b16 %v719, %v718
  %v882 = vpack.c.b16 %v721, %v720
  %v883 = vpack.c.b16 %v723, %v722
  %v884 = vpack.c.b16 %v725, %v724
  %v885 = vpack.c.b16 %v727, %v726
  %v886 = vpack.c.b16 %v729, %v728
  %v887 = vpack.c.b16 %v731, %v730
  %v888 = vpack.c.b16 %v733, %v732
  %v889 = vpack.c.b16 %v735, %v734
  %v890 = vpack.c.b16 %v737, %v736
  %v891 = vpack.c.b16 %v739, %v738
  %v892 = vpack.c.b16 %v741, %v740
  %v893 = vpack.c.b16 %v743, %v742
  %v894 = vpack.c.b16 %v745, %v744
  %v895 = vpack.c.b16 %v747, %v746
  %v896 = vpack.c.b16 %v749, %v748
  %v897 = vpack.c.b16 %v751, %v750
  %v898 = vpack.c.b16 %v753, %v752
  %v899 = vpack.c.b16 %v755, %v754
  %v900 = vpack.c.b16 %v757, %v756
  %v901 = vpack.c.b16 %v759, %v758
  %v902 = vpack.c.b16 %v761, %v760
  %v903 = vpack.c.b16 %v763, %v762
  %v904 = vpack.c.b16 %v765, %v764
  %v905 = vpack.c.b16 %v767, %v766
  %v906 = vpack.c.b16 %v769, %v768
  %v907 = vpack.c.b16 %v771, %v770
  %v908 = vpack.c.b16 %v773, %v772
  %v909 = vpack.c.b16 %v775, %v774
  %v910 = vpack.c.b16 %v777, %v776
  %v911 = vpack.c.b16 %v779, %v778
  %v912 = vpack.c.b16 %v781, %v780
  %v913 = vpack.c.b16 %v783, %v782
  %v914 = vpack.c.b16 %v785, %v784
  %v915 = vpack.c.b16 %v787, %v786
  %v918 = vunpack.c.l.b16 %v12
  %v919 = vunpack.c.l.b16 %v13
  %v920 = vpack.c.b16 %v919, %v918
  %vm922 = vcmask 130048
  %v924 = vsel %vm922, %v788, 0
  %v927 = vsel %vm922, %v789, 0
  %v930 = vsel %vm922, %v790, 0
  %v933 = vsel %vm922, %v791, 0
  %v936 = vsel %vm922, %v792, 0
  %v939 = vsel %vm922, %v793, 0
  %v942 = vsel %vm922, %v794, 0
  %v945 = vsel %vm922, %v795, 0
  %v948 = vsel %vm922, %v796, 0
  %v951 = vsel %vm922, %v797, 0
  %v954 = vsel %vm922, %v798, 0
  %v957 = vsel %vm922, %v799, 0
  %v960 = vsel %vm922, %v800, 0
  %v963 = vsel %vm922, %v801, 0
  %v966 = vsel %vm922, %v802, 0
  %v969 = vsel %vm922, %v803, 0
  %v972 = vsel %vm922, %v804, 0
  %v975 = vsel %vm922, %v805, 0
  %v978 = vsel %vm922, %v806, 0
  %v981 = vsel %vm922, %v807, 0
  %v984 = vsel %vm922, %v808, 0
  %v987 = vsel %vm922, %v809, 0
  %v990 = vsel %vm922, %v810, 0
  %v993 = vsel %vm922, %v811, 0
  %v996 = vsel %vm922, %v812, 0
  %v999 = vsel %vm922, %v813, 0
  %v1002 = vsel %vm922, %v814, 0
  %v1005 = vsel %vm922, %v815, 0
  %v1008 = vsel %vm922, %v816, 0
  %v1011 = vsel %vm922, %v817, 0
  %v1014 = vsel %vm922, %v818, 0
  %v1017 = vsel %vm922, %v819, 0
  %v1020 = vsel %vm922, %v820, 0
  %v1023 = vsel %vm922, %v821, 0
  %v1026 = vsel %vm922, %v822, 0
  %v1029 = vsel %vm922, %v823, 0
  %v1032 = vsel %vm922, %v824, 0
  %v1035 = vsel %vm922, %v825, 0
  %v1038 = vsel %vm922, %v826, 0
  %v1041 = vsel %vm922, %v827, 0
  %v1044 = vsel %vm922, %v828, 0
  %v1047 = vsel %vm922, %v829, 0
  %v1050 = vsel %vm922, %v830, 0
  %v1053 = vsel %vm922, %v831, 0
  %v1056 = vsel %vm922, %v832, 0
  %v1059 = vsel %vm922, %v833, 0
  %v1062 = vsel %vm922, %v834, 0
  %v1065 = vsel %vm922, %v835, 0
  %v1068 = vsel %vm922, %v836, 0
  %v1071 = vsel %vm922, %v837, 0
  %v1074 = vsel %vm922, %v838, 0
  %v1077 = vsel %vm922, %v839, 0
  %v1080 = vsel %vm922, %v840, 0
  %v1083 = vsel %vm922, %v841, 0
  %v1086 = vsel %vm922, %v842, 0
  %v1089 = vsel %vm922, %v843, 0
  %v1092 = vsel %vm922, %v844, 0
  %v1095 = vsel %vm922, %v845, 0
  %v1098 = vsel %vm922, %v846, 0
  %v1101 = vsel %vm922, %v847, 0
  %v1104 = vsel %vm922, %v848, 0
  %v1107 = vsel %vm922, %v849, 0
  %v1110 = vsel %vm922, %v850, 0
  %v1113 = vsel %vm922, %v851, 0
  %v1116 = vsel %vm922, %v852, 0
  %v1119 = vsel %vm922, %v853, 0
  %v1122 = vsel %vm922, %v854, 0
  %v1125 = vsel %vm922, %v855, 0
  %v1128 = vsel %vm922, %v856, 0
  %v1131 = vsel %vm922, %v857, 0
  %v1134 = vsel %vm922, %v858, 0
  %v1137 = vsel %vm922, %v859, 0
  %v1140 = vsel %vm922, %v860, 0
  %v1143 = vsel %vm922, %v861, 0
  %v1146 = vsel %vm922, %v862, 0
  %v1149 = vsel %vm922, %v863, 0
  %v1152 = vsel %vm922, %v864, 0
  %v1155 = vsel %vm922, %v865, 0
  %v1158 = vsel %vm922, %v866, 0
  %v1161 = vsel %vm922, %v867, 0
  %v1164 = vsel %vm922, %v868, 0
  %v1167 = vsel %vm922, %v869, 0
  %v1170 = vsel %vm922, %v870, 0
  %v1173 = vsel %vm922, %v871, 0
  %v1176 = vsel %vm922, %v872, 0
  %v1179 = vsel %vm922, %v873, 0
  %v1182 = vsel %vm922, %v874, 0
  %v1185 = vsel %vm922, %v875, 0
  %v1188 = vsel %vm922, %v876, 0
  %v1191 = vsel %vm922, %v877, 0
  %v1194 = vsel %vm922, %v878, 0
  %v1197 = vsel %vm922, %v879, 0
  %v1200 = vsel %vm922, %v880, 0
  %v1203 = vsel %vm922, %v881, 0
  %v1206 = vsel %vm922, %v882, 0
  %v1209 = vsel %vm922, %v883, 0
  %v1212 = vsel %vm922, %v884, 0
  %v1215 = vsel %vm922, %v885, 0
  %v1218 = vsel %vm922, %v886, 0
  %v1221 = vsel %vm922, %v887, 0
  %v1224 = vsel %vm922, %v888, 0
  %v1227 = vsel %vm922, %v889, 0
  %v1230 = vsel %vm922, %v890, 0
  %v1233 = vsel %vm922, %v891, 0
  %v1236 = vsel %vm922, %v892, 0
  %v1239 = vsel %vm922, %v893, 0
  %v1242 = vsel %vm922, %v894, 0
  %v1245 = vsel %vm922, %v895, 0
  %v1248 = vsel %vm922, %v896, 0
  %v1251 = vsel %vm922, %v897, 0
  %v1254 = vsel %vm922, %v898, 0
  %v1257 = vsel %vm922, %v899, 0
  %v1260 = vsel %vm922, %v900, 0
  %v1263 = vsel %vm922, %v901, 0
  %v1266 = vsel %vm922, %v902, 0
  %v1269 = vsel %vm922, %v903, 0
  %v1272 = vsel %vm922, %v904, 0
  %v1275 = vsel %vm922, %v905, 0
  %v1278 = vsel %vm922, %v906, 0
  %v1281 = vsel %vm922, %v907, 0
  %v1284 = vsel %vm922, %v908, 0
  %v1287 = vsel %vm922, %v909, 0
  %v1290 = vsel %vm922, %v910, 0
  %v1293 = vsel %vm922, %v911, 0
  %v1296 = vsel %vm922, %v912, 0
  %v1299 = vsel %vm922, %v913, 0
  %v1302 = vsel %vm922, %v914, 0
  %v1305 = vsel %vm922, %v915, 0
  %1307 = vmatprep.subr.bf16.mxu0 0
  %1308 = vmatpush1.bf16.msra.mxu0 %v920
  %1309 = vmatprep.subr.bf16.mxu0 0
  %1310 = vmatpush1.bf16.msra.mxu0 0
  %1311 = vmatprep.subr.bf16.mxu0 0
  %1312 = vmatpush1.bf16.msra.mxu0 0
  %1313 = vmatprep.subr.bf16.mxu0 0
  %1314 = vmatpush1.bf16.msra.mxu0 0
  %1315 = vmatprep.subr.bf16.mxu0 0
  %1316 = vmatpush1.bf16.msra.mxu0 0
  %1317 = vmatprep.subr.bf16.mxu0 0
  %1318 = vmatpush1.bf16.msra.mxu0 0
  %1319 = vmatprep.subr.bf16.mxu0 0
  %1320 = vmatpush1.bf16.msra.mxu0 0
  %1321 = vmatprep.subr.bf16.mxu0 0
  %1322 = vmatpush1.bf16.msra.mxu0 0
  %1323 = vmatprep.subr.bf16.mxu0 0
  %1324 = vmatpush1.bf16.msra.mxu0 0
  %1325 = vmatprep.subr.bf16.mxu0 0
  %1326 = vmatpush1.bf16.msra.mxu0 0
  %1327 = vmatprep.subr.bf16.mxu0 0
  %1328 = vmatpush1.bf16.msra.mxu0 0
  %1329 = vmatprep.subr.bf16.mxu0 0
  %1330 = vmatpush1.bf16.msra.mxu0 0
  %1331 = vmatprep.subr.bf16.mxu0 0
  %1332 = vmatpush1.bf16.msra.mxu0 0
  %1333 = vmatprep.subr.bf16.mxu0 0
  %1334 = vmatpush1.bf16.msra.mxu0 0
  %1335 = vmatprep.subr.bf16.mxu0 0
  %1336 = vmatpush1.bf16.msra.mxu0 0
  %1337 = vmatprep.subr.bf16.mxu0 0
  %1338 = vmatpush1.bf16.msra.mxu0 0
  %1339 = vmatprep.mubr.bf16.mxu0 0
  %1340 = vmatmul.mubr.bf16.gmra.mrb[0].mxu0 %v924
  %v1341 = vpop.f32.mrb[0].mxu0
  %v1342 = vadd.f32 %v275, %v1341
  %v1343 = vpop.f32.mrb[0].mxu0
  %v1344 = vpop.f32.mrb[0].mxu0
  %v1345 = vadd.f32 %v275, %v1344
  %v1346 = vpop.f32.mrb[0].mxu0
  %1347 = vmatprep.mubr.bf16.mxu0 0
  %1348 = vmatmul.mubr.bf16.gmra.mrb[0].mxu0 %v927
  %v1349 = vpop.f32.mrb[0].mxu0
  %v1350 = vadd.f32 %v275, %v1349
  %v1351 = vpop.f32.mrb[0].mxu0
  %v1352 = vpop.f32.mrb[0].mxu0
  %v1353 = vadd.f32 %v275, %v1352
  %v1354 = vpop.f32.mrb[0].mxu0
  %1355 = vmatprep.mubr.bf16.mxu0 0
  %1356 = vmatmul.mubr.bf16.gmra.mrb[0].mxu0 %v930
  %v1357 = vpop.f32.mrb[0].mxu0
  %v1358 = vadd.f32 %v275, %v1357
  %v1359 = vpop.f32.mrb[0].mxu0
  %v1360 = vpop.f32.mrb[0].mxu0
  %v1361 = vadd.f32 %v275, %v1360
  %v1362 = vpop.f32.mrb[0].mxu0
  %1363 = vmatprep.mubr.bf16.mxu0 0
  %1364 = vmatmul.mubr.bf16.gmra.mrb[0].mxu0 %v933
  %v1365 = vpop.f32.mrb[0].mxu0
  %v1366 = vadd.f32 %v275, %v1365
  %v1367 = vpop.f32.mrb[0].mxu0
  %v1368 = vpop.f32.mrb[0].mxu0
  %v1369 = vadd.f32 %v275, %v1368
  %v1370 = vpop.f32.mrb[0].mxu0
  %1371 = vmatprep.mubr.bf16.mxu0 0
  %1372 = vmatmul.mubr.bf16.gmra.mrb[0].mxu0 %v936
  %v1373 = vpop.f32.mrb[0].mxu0
  %v1374 = vadd.f32 %v275, %v1373
  %v1375 = vpop.f32.mrb[0].mxu0
  %v1376 = vpop.f32.mrb[0].mxu0
  %v1377 = vadd.f32 %v275, %v1376
  %v1378 = vpop.f32.mrb[0].mxu0
  %1379 = vmatprep.mubr.bf16.mxu0 0
  %1380 = vmatmul.mubr.bf16.gmra.mrb[0].mxu0 %v939
  %v1381 = vpop.f32.mrb[0].mxu0
  %v1382 = vadd.f32 %v275, %v1381
  %v1383 = vpop.f32.mrb[0].mxu0
  %v1384 = vpop.f32.mrb[0].mxu0
  %v1385 = vadd.f32 %v275, %v1384
  %v1386 = vpop.f32.mrb[0].mxu0
  %1387 = vmatprep.mubr.bf16.mxu0 0
  %1388 = vmatmul.mubr.bf16.gmra.mrb[0].mxu0 %v942
  %v1389 = vpop.f32.mrb[0].mxu0
  %v1390 = vadd.f32 %v275, %v1389
  %v1391 = vpop.f32.mrb[0].mxu0
  %v1392 = vpop.f32.mrb[0].mxu0
  %v1393 = vadd.f32 %v275, %v1392
  %v1394 = vpop.f32.mrb[0].mxu0
  %1395 = vmatprep.mubr.bf16.mxu0 0
  %1396 = vmatmul.mubr.bf16.gmra.mrb[0].mxu0 %v945
  %v1397 = vpop.f32.mrb[0].mxu0
  %v1398 = vadd.f32 %v275, %v1397
  %v1399 = vpop.f32.mrb[0].mxu0
  %v1400 = vpop.f32.mrb[0].mxu0
  %v1401 = vadd.f32 %v275, %v1400
  %v1402 = vpop.f32.mrb[0].mxu0
  %1403 = vmatprep.mubr.bf16.mxu0 0
  %1404 = vmatmul.mubr.bf16.gmra.mrb[0].mxu0 %v948
  %v1405 = vpop.f32.mrb[0].mxu0
  %v1406 = vadd.f32 %v275, %v1405
  %v1407 = vpop.f32.mrb[0].mxu0
  %v1408 = vpop.f32.mrb[0].mxu0
  %v1409 = vadd.f32 %v275, %v1408
  %v1410 = vpop.f32.mrb[0].mxu0
  %1411 = vmatprep.mubr.bf16.mxu0 0
  %1412 = vmatmul.mubr.bf16.gmra.mrb[0].mxu0 %v951
  %v1413 = vpop.f32.mrb[0].mxu0
  %v1414 = vadd.f32 %v275, %v1413
  %v1415 = vpop.f32.mrb[0].mxu0
  %v1416 = vpop.f32.mrb[0].mxu0
  %v1417 = vadd.f32 %v275, %v1416
  %v1418 = vpop.f32.mrb[0].mxu0
  %1419 = vmatprep.mubr.bf16.mxu0 0
  %1420 = vmatmul.mubr.bf16.gmra.mrb[0].mxu0 %v954
  %v1421 = vpop.f32.mrb[0].mxu0
  %v1422 = vadd.f32 %v275, %v1421
  %v1423 = vpop.f32.mrb[0].mxu0
  %v1424 = vpop.f32.mrb[0].mxu0
  %v1425 = vadd.f32 %v275, %v1424
  %v1426 = vpop.f32.mrb[0].mxu0
  %1427 = vmatprep.mubr.bf16.mxu0 0
  %1428 = vmatmul.mubr.bf16.gmra.mrb[0].mxu0 %v957
  %v1429 = vpop.f32.mrb[0].mxu0
  %v1430 = vadd.f32 %v275, %v1429
  %v1431 = vpop.f32.mrb[0].mxu0
  %v1432 = vpop.f32.mrb[0].mxu0
  %v1433 = vadd.f32 %v275, %v1432
  %v1434 = vpop.f32.mrb[0].mxu0
  %1435 = vmatprep.mubr.bf16.mxu0 0
  %1436 = vmatmul.mubr.bf16.gmra.mrb[0].mxu0 %v960
  %v1437 = vpop.f32.mrb[0].mxu0
  %v1438 = vadd.f32 %v275, %v1437
  %v1439 = vpop.f32.mrb[0].mxu0
  %v1440 = vpop.f32.mrb[0].mxu0
  %v1441 = vadd.f32 %v275, %v1440
  %v1442 = vpop.f32.mrb[0].mxu0
  %1443 = vmatprep.mubr.bf16.mxu0 0
  %1444 = vmatmul.mubr.bf16.gmra.mrb[0].mxu0 %v963
  %v1445 = vpop.f32.mrb[0].mxu0
  %v1446 = vadd.f32 %v275, %v1445
  %v1447 = vpop.f32.mrb[0].mxu0
  %v1448 = vpop.f32.mrb[0].mxu0
  %v1449 = vadd.f32 %v275, %v1448
  %v1450 = vpop.f32.mrb[0].mxu0
  %1451 = vmatprep.mubr.bf16.mxu0 0
  %1452 = vmatmul.mubr.bf16.gmra.mrb[0].mxu0 %v966
  %v1453 = vpop.f32.mrb[0].mxu0
  %v1454 = vadd.f32 %v275, %v1453
  %v1455 = vpop.f32.mrb[0].mxu0
  %v1456 = vpop.f32.mrb[0].mxu0
  %v1457 = vadd.f32 %v275, %v1456
  %v1458 = vpop.f32.mrb[0].mxu0
  %1459 = vmatprep.mubr.bf16.mxu0 0
  %1460 = vmatmul.mubr.bf16.gmra.mrb[0].mxu0 %v969
  %v1461 = vpop.f32.mrb[0].mxu0
  %v1462 = vadd.f32 %v275, %v1461
  %v1463 = vpop.f32.mrb[0].mxu0
  %v1464 = vpop.f32.mrb[0].mxu0
  %v1465 = vadd.f32 %v275, %v1464
  %v1466 = vpop.f32.mrb[0].mxu0
  %1467 = vmatprep.mubr.bf16.mxu0 0
  %1468 = vmatmul.mubr.bf16.gmra.mrb[0].mxu0 %v972
  %v1469 = vpop.f32.mrb[0].mxu0
  %v1470 = vadd.f32 %v275, %v1469
  %v1471 = vpop.f32.mrb[0].mxu0
  %v1472 = vpop.f32.mrb[0].mxu0
  %v1473 = vadd.f32 %v275, %v1472
  %v1474 = vpop.f32.mrb[0].mxu0
  %1475 = vmatprep.mubr.bf16.mxu0 0
  %1476 = vmatmul.mubr.bf16.gmra.mrb[0].mxu0 %v975
  %v1477 = vpop.f32.mrb[0].mxu0
  %v1478 = vadd.f32 %v275, %v1477
  %v1479 = vpop.f32.mrb[0].mxu0
  %v1480 = vpop.f32.mrb[0].mxu0
  %v1481 = vadd.f32 %v275, %v1480
  %v1482 = vpop.f32.mrb[0].mxu0
  %1483 = vmatprep.mubr.bf16.mxu0 0
  %1484 = vmatmul.mubr.bf16.gmra.mrb[0].mxu0 %v978
  %v1485 = vpop.f32.mrb[0].mxu0
  %v1486 = vadd.f32 %v275, %v1485
  %v1487 = vpop.f32.mrb[0].mxu0
  %v1488 = vpop.f32.mrb[0].mxu0
  %v1489 = vadd.f32 %v275, %v1488
  %v1490 = vpop.f32.mrb[0].mxu0
  %1491 = vmatprep.mubr.bf16.mxu0 0
  %1492 = vmatmul.mubr.bf16.gmra.mrb[0].mxu0 %v981
  %v1493 = vpop.f32.mrb[0].mxu0
  %v1494 = vadd.f32 %v275, %v1493
  %v1495 = vpop.f32.mrb[0].mxu0
  %v1496 = vpop.f32.mrb[0].mxu0
  %v1497 = vadd.f32 %v275, %v1496
  %v1498 = vpop.f32.mrb[0].mxu0
  %1499 = vmatprep.mubr.bf16.mxu0 0
  %1500 = vmatmul.mubr.bf16.gmra.mrb[0].mxu0 %v984
  %v1501 = vpop.f32.mrb[0].mxu0
  %v1502 = vadd.f32 %v275, %v1501
  %v1503 = vpop.f32.mrb[0].mxu0
  %v1504 = vpop.f32.mrb[0].mxu0
  %v1505 = vadd.f32 %v275, %v1504
  %v1506 = vpop.f32.mrb[0].mxu0
  %1507 = vmatprep.mubr.bf16.mxu0 0
  %1508 = vmatmul.mubr.bf16.gmra.mrb[0].mxu0 %v987
  %v1509 = vpop.f32.mrb[0].mxu0
  %v1510 = vadd.f32 %v275, %v1509
  %v1511 = vpop.f32.mrb[0].mxu0
  %v1512 = vpop.f32.mrb[0].mxu0
  %v1513 = vadd.f32 %v275, %v1512
  %v1514 = vpop.f32.mrb[0].mxu0
  %1515 = vmatprep.mubr.bf16.mxu0 0
  %1516 = vmatmul.mubr.bf16.gmra.mrb[0].mxu0 %v990
  %v1517 = vpop.f32.mrb[0].mxu0
  %v1518 = vadd.f32 %v275, %v1517
  %v1519 = vpop.f32.mrb[0].mxu0
  %v1520 = vpop.f32.mrb[0].mxu0
  %v1521 = vadd.f32 %v275, %v1520
  %v1522 = vpop.f32.mrb[0].mxu0
  %1523 = vmatprep.mubr.bf16.mxu0 0
  %1524 = vmatmul.mubr.bf16.gmra.mrb[0].mxu0 %v993
  %v1525 = vpop.f32.mrb[0].mxu0
  %v1526 = vadd.f32 %v275, %v1525
  %v1527 = vpop.f32.mrb[0].mxu0
  %v1528 = vpop.f32.mrb[0].mxu0
  %v1529 = vadd.f32 %v275, %v1528
  %v1530 = vpop.f32.mrb[0].mxu0
  %1531 = vmatprep.mubr.bf16.mxu0 0
  %1532 = vmatmul.mubr.bf16.gmra.mrb[0].mxu0 %v996
  %v1533 = vpop.f32.mrb[0].mxu0
  %v1534 = vadd.f32 %v275, %v1533
  %v1535 = vpop.f32.mrb[0].mxu0
  %v1536 = vpop.f32.mrb[0].mxu0
  %v1537 = vadd.f32 %v275, %v1536
  %v1538 = vpop.f32.mrb[0].mxu0
  %1539 = vmatprep.mubr.bf16.mxu0 0
  %1540 = vmatmul.mubr.bf16.gmra.mrb[0].mxu0 %v999
  %v1541 = vpop.f32.mrb[0].mxu0
  %v1542 = vadd.f32 %v275, %v1541
  %v1543 = vpop.f32.mrb[0].mxu0
  %v1544 = vpop.f32.mrb[0].mxu0
  %v1545 = vadd.f32 %v275, %v1544
  %v1546 = vpop.f32.mrb[0].mxu0
  %1547 = vmatprep.mubr.bf16.mxu0 0
  %1548 = vmatmul.mubr.bf16.gmra.mrb[0].mxu0 %v1002
  %v1549 = vpop.f32.mrb[0].mxu0
  %v1550 = vadd.f32 %v275, %v1549
  %v1551 = vpop.f32.mrb[0].mxu0
  %v1552 = vpop.f32.mrb[0].mxu0
  %v1553 = vadd.f32 %v275, %v1552
  %v1554 = vpop.f32.mrb[0].mxu0
  %1555 = vmatprep.mubr.bf16.mxu0 0
  %1556 = vmatmul.mubr.bf16.gmra.mrb[0].mxu0 %v1005
  %v1557 = vpop.f32.mrb[0].mxu0
  %v1558 = vadd.f32 %v275, %v1557
  %v1559 = vpop.f32.mrb[0].mxu0
  %v1560 = vpop.f32.mrb[0].mxu0
  %v1561 = vadd.f32 %v275, %v1560
  %v1562 = vpop.f32.mrb[0].mxu0
  %1563 = vmatprep.mubr.bf16.mxu0 0
  %1564 = vmatmul.mubr.bf16.gmra.mrb[0].mxu0 %v1008
  %v1565 = vpop.f32.mrb[0].mxu0
  %v1566 = vadd.f32 %v275, %v1565
  %v1567 = vpop.f32.mrb[0].mxu0
  %v1568 = vpop.f32.mrb[0].mxu0
  %v1569 = vadd.f32 %v275, %v1568
  %v1570 = vpop.f32.mrb[0].mxu0
  %1571 = vmatprep.mubr.bf16.mxu0 0
  %1572 = vmatmul.mubr.bf16.gmra.mrb[0].mxu0 %v1011
  %v1573 = vpop.f32.mrb[0].mxu0
  %v1574 = vadd.f32 %v275, %v1573
  %v1575 = vpop.f32.mrb[0].mxu0
  %v1576 = vpop.f32.mrb[0].mxu0
  %v1577 = vadd.f32 %v275, %v1576
  %v1578 = vpop.f32.mrb[0].mxu0
  %1579 = vmatprep.mubr.bf16.mxu0 0
  %1580 = vmatmul.mubr.bf16.gmra.mrb[0].mxu0 %v1014
  %v1581 = vpop.f32.mrb[0].mxu0
  %v1582 = vadd.f32 %v275, %v1581
  %v1583 = vpop.f32.mrb[0].mxu0
  %v1584 = vpop.f32.mrb[0].mxu0
  %v1585 = vadd.f32 %v275, %v1584
  %v1586 = vpop.f32.mrb[0].mxu0
  %1587 = vmatprep.mubr.bf16.mxu0 0
  %1588 = vmatmul.mubr.bf16.gmra.mrb[0].mxu0 %v1017
  %v1589 = vpop.f32.mrb[0].mxu0
  %v1590 = vadd.f32 %v275, %v1589
  %v1591 = vpop.f32.mrb[0].mxu0
  %v1592 = vpop.f32.mrb[0].mxu0
  %v1593 = vadd.f32 %v275, %v1592
  %v1594 = vpop.f32.mrb[0].mxu0
  %1595 = vmatprep.mubr.bf16.mxu0 0
  %1596 = vmatmul.mubr.bf16.gmra.mrb[0].mxu0 %v1020
  %v1597 = vpop.f32.mrb[0].mxu0
  %v1598 = vadd.f32 %v275, %v1597
  %v1599 = vpop.f32.mrb[0].mxu0
  %v1600 = vpop.f32.mrb[0].mxu0
  %v1601 = vadd.f32 %v275, %v1600
  %v1602 = vpop.f32.mrb[0].mxu0
  %1603 = vmatprep.mubr.bf16.mxu0 0
  %1604 = vmatmul.mubr.bf16.gmra.mrb[0].mxu0 %v1023
  %v1605 = vpop.f32.mrb[0].mxu0
  %v1606 = vadd.f32 %v275, %v1605
  %v1607 = vpop.f32.mrb[0].mxu0
  %v1608 = vpop.f32.mrb[0].mxu0
  %v1609 = vadd.f32 %v275, %v1608
  %v1610 = vpop.f32.mrb[0].mxu0
  %1611 = vmatprep.mubr.bf16.mxu0 0
  %1612 = vmatmul.mubr.bf16.gmra.mrb[0].mxu0 %v1026
  %v1613 = vpop.f32.mrb[0].mxu0
  %v1614 = vadd.f32 %v275, %v1613
  %v1615 = vpop.f32.mrb[0].mxu0
  %v1616 = vpop.f32.mrb[0].mxu0
  %v1617 = vadd.f32 %v275, %v1616
  %v1618 = vpop.f32.mrb[0].mxu0
  %1619 = vmatprep.mubr.bf16.mxu0 0
  %1620 = vmatmul.mubr.bf16.gmra.mrb[0].mxu0 %v1029
  %v1621 = vpop.f32.mrb[0].mxu0
  %v1622 = vadd.f32 %v275, %v1621
  %v1623 = vpop.f32.mrb[0].mxu0
  %v1624 = vpop.f32.mrb[0].mxu0
  %v1625 = vadd.f32 %v275, %v1624
  %v1626 = vpop.f32.mrb[0].mxu0
  %1627 = vmatprep.mubr.bf16.mxu0 0
  %1628 = vmatmul.mubr.bf16.gmra.mrb[0].mxu0 %v1032
  %v1629 = vpop.f32.mrb[0].mxu0
  %v1630 = vadd.f32 %v275, %v1629
  %v1631 = vpop.f32.mrb[0].mxu0
  %v1632 = vpop.f32.mrb[0].mxu0
  %v1633 = vadd.f32 %v275, %v1632
  %v1634 = vpop.f32.mrb[0].mxu0
  %1635 = vmatprep.mubr.bf16.mxu0 0
  %1636 = vmatmul.mubr.bf16.gmra.mrb[0].mxu0 %v1035
  %v1637 = vpop.f32.mrb[0].mxu0
  %v1638 = vadd.f32 %v275, %v1637
  %v1639 = vpop.f32.mrb[0].mxu0
  %v1640 = vpop.f32.mrb[0].mxu0
  %v1641 = vadd.f32 %v275, %v1640
  %v1642 = vpop.f32.mrb[0].mxu0
  %1643 = vmatprep.mubr.bf16.mxu0 0
  %1644 = vmatmul.mubr.bf16.gmra.mrb[0].mxu0 %v1038
  %v1645 = vpop.f32.mrb[0].mxu0
  %v1646 = vadd.f32 %v275, %v1645
  %v1647 = vpop.f32.mrb[0].mxu0
  %v1648 = vpop.f32.mrb[0].mxu0
  %v1649 = vadd.f32 %v275, %v1648
  %v1650 = vpop.f32.mrb[0].mxu0
  %1651 = vmatprep.mubr.bf16.mxu0 0
  %1652 = vmatmul.mubr.bf16.gmra.mrb[0].mxu0 %v1041
  %v1653 = vpop.f32.mrb[0].mxu0
  %v1654 = vadd.f32 %v275, %v1653
  %v1655 = vpop.f32.mrb[0].mxu0
  %v1656 = vpop.f32.mrb[0].mxu0
  %v1657 = vadd.f32 %v275, %v1656
  %v1658 = vpop.f32.mrb[0].mxu0
  %1659 = vmatprep.mubr.bf16.mxu0 0
  %1660 = vmatmul.mubr.bf16.gmra.mrb[0].mxu0 %v1044
  %v1661 = vpop.f32.mrb[0].mxu0
  %v1662 = vadd.f32 %v275, %v1661
  %v1663 = vpop.f32.mrb[0].mxu0
  %v1664 = vpop.f32.mrb[0].mxu0
  %v1665 = vadd.f32 %v275, %v1664
  %v1666 = vpop.f32.mrb[0].mxu0
  %1667 = vmatprep.mubr.bf16.mxu0 0
  %1668 = vmatmul.mubr.bf16.gmra.mrb[0].mxu0 %v1047
  %v1669 = vpop.f32.mrb[0].mxu0
  %v1670 = vadd.f32 %v275, %v1669
  %v1671 = vpop.f32.mrb[0].mxu0
  %v1672 = vpop.f32.mrb[0].mxu0
  %v1673 = vadd.f32 %v275, %v1672
  %v1674 = vpop.f32.mrb[0].mxu0
  %1675 = vmatprep.mubr.bf16.mxu0 0
  %1676 = vmatmul.mubr.bf16.gmra.mrb[0].mxu0 %v1050
  %v1677 = vpop.f32.mrb[0].mxu0
  %v1678 = vadd.f32 %v275, %v1677
  %v1679 = vpop.f32.mrb[0].mxu0
  %v1680 = vpop.f32.mrb[0].mxu0
  %v1681 = vadd.f32 %v275, %v1680
  %v1682 = vpop.f32.mrb[0].mxu0
  %1683 = vmatprep.mubr.bf16.mxu0 0
  %1684 = vmatmul.mubr.bf16.gmra.mrb[0].mxu0 %v1053
  %v1685 = vpop.f32.mrb[0].mxu0
  %v1686 = vadd.f32 %v275, %v1685
  %v1687 = vpop.f32.mrb[0].mxu0
  %v1688 = vpop.f32.mrb[0].mxu0
  %v1689 = vadd.f32 %v275, %v1688
  %v1690 = vpop.f32.mrb[0].mxu0
  %1691 = vmatprep.mubr.bf16.mxu0 0
  %1692 = vmatmul.mubr.bf16.gmra.mrb[0].mxu0 %v1056
  %v1693 = vpop.f32.mrb[0].mxu0
  %v1694 = vadd.f32 %v275, %v1693
  %v1695 = vpop.f32.mrb[0].mxu0
  %v1696 = vpop.f32.mrb[0].mxu0
  %v1697 = vadd.f32 %v275, %v1696
  %v1698 = vpop.f32.mrb[0].mxu0
  %1699 = vmatprep.mubr.bf16.mxu0 0
  %1700 = vmatmul.mubr.bf16.gmra.mrb[0].mxu0 %v1059
  %v1701 = vpop.f32.mrb[0].mxu0
  %v1702 = vadd.f32 %v275, %v1701
  %v1703 = vpop.f32.mrb[0].mxu0
  %v1704 = vpop.f32.mrb[0].mxu0
  %v1705 = vadd.f32 %v275, %v1704
  %v1706 = vpop.f32.mrb[0].mxu0
  %1707 = vmatprep.mubr.bf16.mxu0 0
  %1708 = vmatmul.mubr.bf16.gmra.mrb[0].mxu0 %v1062
  %v1709 = vpop.f32.mrb[0].mxu0
  %v1710 = vadd.f32 %v275, %v1709
  %v1711 = vpop.f32.mrb[0].mxu0
  %v1712 = vpop.f32.mrb[0].mxu0
  %v1713 = vadd.f32 %v275, %v1712
  %v1714 = vpop.f32.mrb[0].mxu0
  %1715 = vmatprep.mubr.bf16.mxu0 0
  %1716 = vmatmul.mubr.bf16.gmra.mrb[0].mxu0 %v1065
  %v1717 = vpop.f32.mrb[0].mxu0
  %v1718 = vadd.f32 %v275, %v1717
  %v1719 = vpop.f32.mrb[0].mxu0
  %v1720 = vpop.f32.mrb[0].mxu0
  %v1721 = vadd.f32 %v275, %v1720
  %v1722 = vpop.f32.mrb[0].mxu0
  %1723 = vmatprep.mubr.bf16.mxu0 0
  %1724 = vmatmul.mubr.bf16.gmra.mrb[0].mxu0 %v1068
  %v1725 = vpop.f32.mrb[0].mxu0
  %v1726 = vadd.f32 %v275, %v1725
  %v1727 = vpop.f32.mrb[0].mxu0
  %v1728 = vpop.f32.mrb[0].mxu0
  %v1729 = vadd.f32 %v275, %v1728
  %v1730 = vpop.f32.mrb[0].mxu0
  %1731 = vmatprep.mubr.bf16.mxu0 0
  %1732 = vmatmul.mubr.bf16.gmra.mrb[0].mxu0 %v1071
  %v1733 = vpop.f32.mrb[0].mxu0
  %v1734 = vadd.f32 %v275, %v1733
  %v1735 = vpop.f32.mrb[0].mxu0
  %v1736 = vpop.f32.mrb[0].mxu0
  %v1737 = vadd.f32 %v275, %v1736
  %v1738 = vpop.f32.mrb[0].mxu0
  %1739 = vmatprep.mubr.bf16.mxu0 0
  %1740 = vmatmul.mubr.bf16.gmra.mrb[0].mxu0 %v1074
  %v1741 = vpop.f32.mrb[0].mxu0
  %v1742 = vadd.f32 %v275, %v1741
  %v1743 = vpop.f32.mrb[0].mxu0
  %v1744 = vpop.f32.mrb[0].mxu0
  %v1745 = vadd.f32 %v275, %v1744
  %v1746 = vpop.f32.mrb[0].mxu0
  %1747 = vmatprep.mubr.bf16.mxu0 0
  %1748 = vmatmul.mubr.bf16.gmra.mrb[0].mxu0 %v1077
  %v1749 = vpop.f32.mrb[0].mxu0
  %v1750 = vadd.f32 %v275, %v1749
  %v1751 = vpop.f32.mrb[0].mxu0
  %v1752 = vpop.f32.mrb[0].mxu0
  %v1753 = vadd.f32 %v275, %v1752
  %v1754 = vpop.f32.mrb[0].mxu0
  %1755 = vmatprep.mubr.bf16.mxu0 0
  %1756 = vmatmul.mubr.bf16.gmra.mrb[0].mxu0 %v1080
  %v1757 = vpop.f32.mrb[0].mxu0
  %v1758 = vadd.f32 %v275, %v1757
  %v1759 = vpop.f32.mrb[0].mxu0
  %v1760 = vpop.f32.mrb[0].mxu0
  %v1761 = vadd.f32 %v275, %v1760
  %v1762 = vpop.f32.mrb[0].mxu0
  %1763 = vmatprep.mubr.bf16.mxu0 0
  %1764 = vmatmul.mubr.bf16.gmra.mrb[0].mxu0 %v1083
  %v1765 = vpop.f32.mrb[0].mxu0
  %v1766 = vadd.f32 %v275, %v1765
  %v1767 = vpop.f32.mrb[0].mxu0
  %v1768 = vpop.f32.mrb[0].mxu0
  %v1769 = vadd.f32 %v275, %v1768
  %v1770 = vpop.f32.mrb[0].mxu0
  %1771 = vmatprep.mubr.bf16.mxu0 0
  %1772 = vmatmul.mubr.bf16.gmra.mrb[0].mxu0 %v1086
  %v1773 = vpop.f32.mrb[0].mxu0
  %v1774 = vadd.f32 %v275, %v1773
  %v1775 = vpop.f32.mrb[0].mxu0
  %v1776 = vpop.f32.mrb[0].mxu0
  %v1777 = vadd.f32 %v275, %v1776
  %v1778 = vpop.f32.mrb[0].mxu0
  %1779 = vmatprep.mubr.bf16.mxu0 0
  %1780 = vmatmul.mubr.bf16.gmra.mrb[0].mxu0 %v1089
  %v1781 = vpop.f32.mrb[0].mxu0
  %v1782 = vadd.f32 %v275, %v1781
  %v1783 = vpop.f32.mrb[0].mxu0
  %v1784 = vpop.f32.mrb[0].mxu0
  %v1785 = vadd.f32 %v275, %v1784
  %v1786 = vpop.f32.mrb[0].mxu0
  %1787 = vmatprep.mubr.bf16.mxu0 0
  %1788 = vmatmul.mubr.bf16.gmra.mrb[0].mxu0 %v1092
  %v1789 = vpop.f32.mrb[0].mxu0
  %v1790 = vadd.f32 %v275, %v1789
  %v1791 = vpop.f32.mrb[0].mxu0
  %v1792 = vpop.f32.mrb[0].mxu0
  %v1793 = vadd.f32 %v275, %v1792
  %v1794 = vpop.f32.mrb[0].mxu0
  %1795 = vmatprep.mubr.bf16.mxu0 0
  %1796 = vmatmul.mubr.bf16.gmra.mrb[0].mxu0 %v1095
  %v1797 = vpop.f32.mrb[0].mxu0
  %v1798 = vadd.f32 %v275, %v1797
  %v1799 = vpop.f32.mrb[0].mxu0
  %v1800 = vpop.f32.mrb[0].mxu0
  %v1801 = vadd.f32 %v275, %v1800
  %v1802 = vpop.f32.mrb[0].mxu0
  %1803 = vmatprep.mubr.bf16.mxu0 0
  %1804 = vmatmul.mubr.bf16.gmra.mrb[0].mxu0 %v1098
  %v1805 = vpop.f32.mrb[0].mxu0
  %v1806 = vadd.f32 %v275, %v1805
  %v1807 = vpop.f32.mrb[0].mxu0
  %v1808 = vpop.f32.mrb[0].mxu0
  %v1809 = vadd.f32 %v275, %v1808
  %v1810 = vpop.f32.mrb[0].mxu0
  %1811 = vmatprep.mubr.bf16.mxu0 0
  %1812 = vmatmul.mubr.bf16.gmra.mrb[0].mxu0 %v1101
  %v1813 = vpop.f32.mrb[0].mxu0
  %v1814 = vadd.f32 %v275, %v1813
  %v1815 = vpop.f32.mrb[0].mxu0
  %v1816 = vpop.f32.mrb[0].mxu0
  %v1817 = vadd.f32 %v275, %v1816
  %v1818 = vpop.f32.mrb[0].mxu0
  %1819 = vmatprep.mubr.bf16.mxu0 0
  %1820 = vmatmul.mubr.bf16.gmra.mrb[0].mxu0 %v1104
  %v1821 = vpop.f32.mrb[0].mxu0
  %v1822 = vadd.f32 %v275, %v1821
  %v1823 = vpop.f32.mrb[0].mxu0
  %v1824 = vpop.f32.mrb[0].mxu0
  %v1825 = vadd.f32 %v275, %v1824
  %v1826 = vpop.f32.mrb[0].mxu0
  %1827 = vmatprep.mubr.bf16.mxu0 0
  %1828 = vmatmul.mubr.bf16.gmra.mrb[0].mxu0 %v1107
  %v1829 = vpop.f32.mrb[0].mxu0
  %v1830 = vadd.f32 %v275, %v1829
  %v1831 = vpop.f32.mrb[0].mxu0
  %v1832 = vpop.f32.mrb[0].mxu0
  %v1833 = vadd.f32 %v275, %v1832
  %v1834 = vpop.f32.mrb[0].mxu0
  %1835 = vmatprep.mubr.bf16.mxu0 0
  %1836 = vmatmul.mubr.bf16.gmra.mrb[0].mxu0 %v1110
  %v1837 = vpop.f32.mrb[0].mxu0
  %v1838 = vadd.f32 %v275, %v1837
  %v1839 = vpop.f32.mrb[0].mxu0
  %v1840 = vpop.f32.mrb[0].mxu0
  %v1841 = vadd.f32 %v275, %v1840
  %v1842 = vpop.f32.mrb[0].mxu0
  %1843 = vmatprep.mubr.bf16.mxu0 0
  %1844 = vmatmul.mubr.bf16.gmra.mrb[0].mxu0 %v1113
  %v1845 = vpop.f32.mrb[0].mxu0
  %v1846 = vadd.f32 %v275, %v1845
  %v1847 = vpop.f32.mrb[0].mxu0
  %v1848 = vpop.f32.mrb[0].mxu0
  %v1849 = vadd.f32 %v275, %v1848
  %v1850 = vpop.f32.mrb[0].mxu0
  %1851 = vmatprep.mubr.bf16.mxu0 0
  %1852 = vmatmul.mubr.bf16.gmra.mrb[0].mxu0 %v1116
  %v1853 = vpop.f32.mrb[0].mxu0
  %v1854 = vadd.f32 %v275, %v1853
  %v1855 = vpop.f32.mrb[0].mxu0
  %v1856 = vpop.f32.mrb[0].mxu0
  %v1857 = vadd.f32 %v275, %v1856
  %v1858 = vpop.f32.mrb[0].mxu0
  %1859 = vmatprep.mubr.bf16.mxu0 0
  %1860 = vmatmul.mubr.bf16.gmra.mrb[0].mxu0 %v1119
  %v1861 = vpop.f32.mrb[0].mxu0
  %v1862 = vadd.f32 %v275, %v1861
  %v1863 = vpop.f32.mrb[0].mxu0
  %v1864 = vpop.f32.mrb[0].mxu0
  %v1865 = vadd.f32 %v275, %v1864
  %v1866 = vpop.f32.mrb[0].mxu0
  %1867 = vmatprep.mubr.bf16.mxu0 0
  %1868 = vmatmul.mubr.bf16.gmra.mrb[0].mxu0 %v1122
  %v1869 = vpop.f32.mrb[0].mxu0
  %v1870 = vadd.f32 %v275, %v1869
  %v1871 = vpop.f32.mrb[0].mxu0
  %v1872 = vpop.f32.mrb[0].mxu0
  %v1873 = vadd.f32 %v275, %v1872
  %v1874 = vpop.f32.mrb[0].mxu0
  %1875 = vmatprep.mubr.bf16.mxu0 0
  %1876 = vmatmul.mubr.bf16.gmra.mrb[0].mxu0 %v1125
  %v1877 = vpop.f32.mrb[0].mxu0
  %v1878 = vadd.f32 %v275, %v1877
  %v1879 = vpop.f32.mrb[0].mxu0
  %v1880 = vpop.f32.mrb[0].mxu0
  %v1881 = vadd.f32 %v275, %v1880
  %v1882 = vpop.f32.mrb[0].mxu0
  %1883 = vmatprep.mubr.bf16.mxu0 0
  %1884 = vmatmul.mubr.bf16.gmra.mrb[0].mxu0 %v1128
  %v1885 = vpop.f32.mrb[0].mxu0
  %v1886 = vadd.f32 %v275, %v1885
  %v1887 = vpop.f32.mrb[0].mxu0
  %v1888 = vpop.f32.mrb[0].mxu0
  %v1889 = vadd.f32 %v275, %v1888
  %v1890 = vpop.f32.mrb[0].mxu0
  %1891 = vmatprep.mubr.bf16.mxu0 0
  %1892 = vmatmul.mubr.bf16.gmra.mrb[0].mxu0 %v1131
  %v1893 = vpop.f32.mrb[0].mxu0
  %v1894 = vadd.f32 %v275, %v1893
  %v1895 = vpop.f32.mrb[0].mxu0
  %v1896 = vpop.f32.mrb[0].mxu0
  %v1897 = vadd.f32 %v275, %v1896
  %v1898 = vpop.f32.mrb[0].mxu0
  %1899 = vmatprep.mubr.bf16.mxu0 0
  %1900 = vmatmul.mubr.bf16.gmra.mrb[0].mxu0 %v1134
  %v1901 = vpop.f32.mrb[0].mxu0
  %v1902 = vadd.f32 %v275, %v1901
  %v1903 = vpop.f32.mrb[0].mxu0
  %v1904 = vpop.f32.mrb[0].mxu0
  %v1905 = vadd.f32 %v275, %v1904
  %v1906 = vpop.f32.mrb[0].mxu0
  %1907 = vmatprep.mubr.bf16.mxu0 0
  %1908 = vmatmul.mubr.bf16.gmra.mrb[0].mxu0 %v1137
  %v1909 = vpop.f32.mrb[0].mxu0
  %v1910 = vadd.f32 %v275, %v1909
  %v1911 = vpop.f32.mrb[0].mxu0
  %v1912 = vpop.f32.mrb[0].mxu0
  %v1913 = vadd.f32 %v275, %v1912
  %v1914 = vpop.f32.mrb[0].mxu0
  %1915 = vmatprep.mubr.bf16.mxu0 0
  %1916 = vmatmul.mubr.bf16.gmra.mrb[0].mxu0 %v1140
  %v1917 = vpop.f32.mrb[0].mxu0
  %v1918 = vadd.f32 %v275, %v1917
  %v1919 = vpop.f32.mrb[0].mxu0
  %v1920 = vpop.f32.mrb[0].mxu0
  %v1921 = vadd.f32 %v275, %v1920
  %v1922 = vpop.f32.mrb[0].mxu0
  %1923 = vmatprep.mubr.bf16.mxu0 0
  %1924 = vmatmul.mubr.bf16.gmra.mrb[0].mxu0 %v1143
  %v1925 = vpop.f32.mrb[0].mxu0
  %v1926 = vadd.f32 %v275, %v1925
  %v1927 = vpop.f32.mrb[0].mxu0
  %v1928 = vpop.f32.mrb[0].mxu0
  %v1929 = vadd.f32 %v275, %v1928
  %v1930 = vpop.f32.mrb[0].mxu0
  %1931 = vmatprep.mubr.bf16.mxu0 0
  %1932 = vmatmul.mubr.bf16.gmra.mrb[0].mxu0 %v1146
  %v1933 = vpop.f32.mrb[0].mxu0
  %v1934 = vadd.f32 %v275, %v1933
  %v1935 = vpop.f32.mrb[0].mxu0
  %v1936 = vpop.f32.mrb[0].mxu0
  %v1937 = vadd.f32 %v275, %v1936
  %v1938 = vpop.f32.mrb[0].mxu0
  %1939 = vmatprep.mubr.bf16.mxu0 0
  %1940 = vmatmul.mubr.bf16.gmra.mrb[0].mxu0 %v1149
  %v1941 = vpop.f32.mrb[0].mxu0
  %v1942 = vadd.f32 %v275, %v1941
  %v1943 = vpop.f32.mrb[0].mxu0
  %v1944 = vpop.f32.mrb[0].mxu0
  %v1945 = vadd.f32 %v275, %v1944
  %v1946 = vpop.f32.mrb[0].mxu0
  %1947 = vmatprep.mubr.bf16.mxu0 0
  %1948 = vmatmul.mubr.bf16.gmra.mrb[0].mxu0 %v1152
  %v1949 = vpop.f32.mrb[0].mxu0
  %v1950 = vadd.f32 %v275, %v1949
  %v1951 = vpop.f32.mrb[0].mxu0
  %v1952 = vpop.f32.mrb[0].mxu0
  %v1953 = vadd.f32 %v275, %v1952
  %v1954 = vpop.f32.mrb[0].mxu0
  %1955 = vmatprep.mubr.bf16.mxu0 0
  %1956 = vmatmul.mubr.bf16.gmra.mrb[0].mxu0 %v1155
  %v1957 = vpop.f32.mrb[0].mxu0
  %v1958 = vadd.f32 %v275, %v1957
  %v1959 = vpop.f32.mrb[0].mxu0
  %v1960 = vpop.f32.mrb[0].mxu0
  %v1961 = vadd.f32 %v275, %v1960
  %v1962 = vpop.f32.mrb[0].mxu0
  %1963 = vmatprep.mubr.bf16.mxu0 0
  %1964 = vmatmul.mubr.bf16.gmra.mrb[0].mxu0 %v1158
  %v1965 = vpop.f32.mrb[0].mxu0
  %v1966 = vadd.f32 %v275, %v1965
  %v1967 = vpop.f32.mrb[0].mxu0
  %v1968 = vpop.f32.mrb[0].mxu0
  %v1969 = vadd.f32 %v275, %v1968
  %v1970 = vpop.f32.mrb[0].mxu0
  %1971 = vmatprep.mubr.bf16.mxu0 0
  %1972 = vmatmul.mubr.bf16.gmra.mrb[0].mxu0 %v1161
  %v1973 = vpop.f32.mrb[0].mxu0
  %v1974 = vadd.f32 %v275, %v1973
  %v1975 = vpop.f32.mrb[0].mxu0
  %v1976 = vpop.f32.mrb[0].mxu0
  %v1977 = vadd.f32 %v275, %v1976
  %v1978 = vpop.f32.mrb[0].mxu0
  %1979 = vmatprep.mubr.bf16.mxu0 0
  %1980 = vmatmul.mubr.bf16.gmra.mrb[0].mxu0 %v1164
  %v1981 = vpop.f32.mrb[0].mxu0
  %v1982 = vadd.f32 %v275, %v1981
  %v1983 = vpop.f32.mrb[0].mxu0
  %v1984 = vpop.f32.mrb[0].mxu0
  %v1985 = vadd.f32 %v275, %v1984
  %v1986 = vpop.f32.mrb[0].mxu0
  %1987 = vmatprep.mubr.bf16.mxu0 0
  %1988 = vmatmul.mubr.bf16.gmra.mrb[0].mxu0 %v1167
  %v1989 = vpop.f32.mrb[0].mxu0
  %v1990 = vadd.f32 %v275, %v1989
  %v1991 = vpop.f32.mrb[0].mxu0
  %v1992 = vpop.f32.mrb[0].mxu0
  %v1993 = vadd.f32 %v275, %v1992
  %v1994 = vpop.f32.mrb[0].mxu0
  %1995 = vmatprep.mubr.bf16.mxu0 0
  %1996 = vmatmul.mubr.bf16.gmra.mrb[0].mxu0 %v1170
  %v1997 = vpop.f32.mrb[0].mxu0
  %v1998 = vadd.f32 %v275, %v1997
  %v1999 = vpop.f32.mrb[0].mxu0
  %v2000 = vpop.f32.mrb[0].mxu0
  %v2001 = vadd.f32 %v275, %v2000
  %v2002 = vpop.f32.mrb[0].mxu0
  %2003 = vmatprep.mubr.bf16.mxu0 0
  %2004 = vmatmul.mubr.bf16.gmra.mrb[0].mxu0 %v1173
  %v2005 = vpop.f32.mrb[0].mxu0
  %v2006 = vadd.f32 %v275, %v2005
  %v2007 = vpop.f32.mrb[0].mxu0
  %v2008 = vpop.f32.mrb[0].mxu0
  %v2009 = vadd.f32 %v275, %v2008
  %v2010 = vpop.f32.mrb[0].mxu0
  %2011 = vmatprep.mubr.bf16.mxu0 0
  %2012 = vmatmul.mubr.bf16.gmra.mrb[0].mxu0 %v1176
  %v2013 = vpop.f32.mrb[0].mxu0
  %v2014 = vadd.f32 %v275, %v2013
  %v2015 = vpop.f32.mrb[0].mxu0
  %v2016 = vpop.f32.mrb[0].mxu0
  %v2017 = vadd.f32 %v275, %v2016
  %v2018 = vpop.f32.mrb[0].mxu0
  %2019 = vmatprep.mubr.bf16.mxu0 0
  %2020 = vmatmul.mubr.bf16.gmra.mrb[0].mxu0 %v1179
  %v2021 = vpop.f32.mrb[0].mxu0
  %v2022 = vadd.f32 %v275, %v2021
  %v2023 = vpop.f32.mrb[0].mxu0
  %v2024 = vpop.f32.mrb[0].mxu0
  %v2025 = vadd.f32 %v275, %v2024
  %v2026 = vpop.f32.mrb[0].mxu0
  %2027 = vmatprep.mubr.bf16.mxu0 0
  %2028 = vmatmul.mubr.bf16.gmra.mrb[0].mxu0 %v1182
  %v2029 = vpop.f32.mrb[0].mxu0
  %v2030 = vadd.f32 %v275, %v2029
  %v2031 = vpop.f32.mrb[0].mxu0
  %v2032 = vpop.f32.mrb[0].mxu0
  %v2033 = vadd.f32 %v275, %v2032
  %v2034 = vpop.f32.mrb[0].mxu0
  %2035 = vmatprep.mubr.bf16.mxu0 0
  %2036 = vmatmul.mubr.bf16.gmra.mrb[0].mxu0 %v1185
  %v2037 = vpop.f32.mrb[0].mxu0
  %v2038 = vadd.f32 %v275, %v2037
  %v2039 = vpop.f32.mrb[0].mxu0
  %v2040 = vpop.f32.mrb[0].mxu0
  %v2041 = vadd.f32 %v275, %v2040
  %v2042 = vpop.f32.mrb[0].mxu0
  %2043 = vmatprep.mubr.bf16.mxu0 0
  %2044 = vmatmul.mubr.bf16.gmra.mrb[0].mxu0 %v1188
  %v2045 = vpop.f32.mrb[0].mxu0
  %v2046 = vadd.f32 %v275, %v2045
  %v2047 = vpop.f32.mrb[0].mxu0
  %v2048 = vpop.f32.mrb[0].mxu0
  %v2049 = vadd.f32 %v275, %v2048
  %v2050 = vpop.f32.mrb[0].mxu0
  %2051 = vmatprep.mubr.bf16.mxu0 0
  %2052 = vmatmul.mubr.bf16.gmra.mrb[0].mxu0 %v1191
  %v2053 = vpop.f32.mrb[0].mxu0
  %v2054 = vadd.f32 %v275, %v2053
  %v2055 = vpop.f32.mrb[0].mxu0
  %v2056 = vpop.f32.mrb[0].mxu0
  %v2057 = vadd.f32 %v275, %v2056
  %v2058 = vpop.f32.mrb[0].mxu0
  %2059 = vmatprep.mubr.bf16.mxu0 0
  %2060 = vmatmul.mubr.bf16.gmra.mrb[0].mxu0 %v1194
  %v2061 = vpop.f32.mrb[0].mxu0
  %v2062 = vadd.f32 %v275, %v2061
  %v2063 = vpop.f32.mrb[0].mxu0
  %v2064 = vpop.f32.mrb[0].mxu0
  %v2065 = vadd.f32 %v275, %v2064
  %v2066 = vpop.f32.mrb[0].mxu0
  %2067 = vmatprep.mubr.bf16.mxu0 0
  %2068 = vmatmul.mubr.bf16.gmra.mrb[0].mxu0 %v1197
  %v2069 = vpop.f32.mrb[0].mxu0
  %v2070 = vadd.f32 %v275, %v2069
  %v2071 = vpop.f32.mrb[0].mxu0
  %v2072 = vpop.f32.mrb[0].mxu0
  %v2073 = vadd.f32 %v275, %v2072
  %v2074 = vpop.f32.mrb[0].mxu0
  %2075 = vmatprep.mubr.bf16.mxu0 0
  %2076 = vmatmul.mubr.bf16.gmra.mrb[0].mxu0 %v1200
  %v2077 = vpop.f32.mrb[0].mxu0
  %v2078 = vadd.f32 %v275, %v2077
  %v2079 = vpop.f32.mrb[0].mxu0
  %v2080 = vpop.f32.mrb[0].mxu0
  %v2081 = vadd.f32 %v275, %v2080
  %v2082 = vpop.f32.mrb[0].mxu0
  %2083 = vmatprep.mubr.bf16.mxu0 0
  %2084 = vmatmul.mubr.bf16.gmra.mrb[0].mxu0 %v1203
  %v2085 = vpop.f32.mrb[0].mxu0
  %v2086 = vadd.f32 %v275, %v2085
  %v2087 = vpop.f32.mrb[0].mxu0
  %v2088 = vpop.f32.mrb[0].mxu0
  %v2089 = vadd.f32 %v275, %v2088
  %v2090 = vpop.f32.mrb[0].mxu0
  %2091 = vmatprep.mubr.bf16.mxu0 0
  %2092 = vmatmul.mubr.bf16.gmra.mrb[0].mxu0 %v1206
  %v2093 = vpop.f32.mrb[0].mxu0
  %v2094 = vadd.f32 %v275, %v2093
  %v2095 = vpop.f32.mrb[0].mxu0
  %v2096 = vpop.f32.mrb[0].mxu0
  %v2097 = vadd.f32 %v275, %v2096
  %v2098 = vpop.f32.mrb[0].mxu0
  %2099 = vmatprep.mubr.bf16.mxu0 0
  %2100 = vmatmul.mubr.bf16.gmra.mrb[0].mxu0 %v1209
  %v2101 = vpop.f32.mrb[0].mxu0
  %v2102 = vadd.f32 %v275, %v2101
  %v2103 = vpop.f32.mrb[0].mxu0
  %v2104 = vpop.f32.mrb[0].mxu0
  %v2105 = vadd.f32 %v275, %v2104
  %v2106 = vpop.f32.mrb[0].mxu0
  %2107 = vmatprep.mubr.bf16.mxu0 0
  %2108 = vmatmul.mubr.bf16.gmra.mrb[0].mxu0 %v1212
  %v2109 = vpop.f32.mrb[0].mxu0
  %v2110 = vadd.f32 %v275, %v2109
  %v2111 = vpop.f32.mrb[0].mxu0
  %v2112 = vpop.f32.mrb[0].mxu0
  %v2113 = vadd.f32 %v275, %v2112
  %v2114 = vpop.f32.mrb[0].mxu0
  %2115 = vmatprep.mubr.bf16.mxu0 0
  %2116 = vmatmul.mubr.bf16.gmra.mrb[0].mxu0 %v1215
  %v2117 = vpop.f32.mrb[0].mxu0
  %v2118 = vadd.f32 %v275, %v2117
  %v2119 = vpop.f32.mrb[0].mxu0
  %v2120 = vpop.f32.mrb[0].mxu0
  %v2121 = vadd.f32 %v275, %v2120
  %v2122 = vpop.f32.mrb[0].mxu0
  %2123 = vmatprep.mubr.bf16.mxu0 0
  %2124 = vmatmul.mubr.bf16.gmra.mrb[0].mxu0 %v1218
  %v2125 = vpop.f32.mrb[0].mxu0
  %v2126 = vadd.f32 %v275, %v2125
  %v2127 = vpop.f32.mrb[0].mxu0
  %v2128 = vpop.f32.mrb[0].mxu0
  %v2129 = vadd.f32 %v275, %v2128
  %v2130 = vpop.f32.mrb[0].mxu0
  %2131 = vmatprep.mubr.bf16.mxu0 0
  %2132 = vmatmul.mubr.bf16.gmra.mrb[0].mxu0 %v1221
  %v2133 = vpop.f32.mrb[0].mxu0
  %v2134 = vadd.f32 %v275, %v2133
  %v2135 = vpop.f32.mrb[0].mxu0
  %v2136 = vpop.f32.mrb[0].mxu0
  %v2137 = vadd.f32 %v275, %v2136
  %v2138 = vpop.f32.mrb[0].mxu0
  %2139 = vmatprep.mubr.bf16.mxu0 0
  %2140 = vmatmul.mubr.bf16.gmra.mrb[0].mxu0 %v1224
  %v2141 = vpop.f32.mrb[0].mxu0
  %v2142 = vadd.f32 %v275, %v2141
  %v2143 = vpop.f32.mrb[0].mxu0
  %v2144 = vpop.f32.mrb[0].mxu0
  %v2145 = vadd.f32 %v275, %v2144
  %v2146 = vpop.f32.mrb[0].mxu0
  %2147 = vmatprep.mubr.bf16.mxu0 0
  %2148 = vmatmul.mubr.bf16.gmra.mrb[0].mxu0 %v1227
  %v2149 = vpop.f32.mrb[0].mxu0
  %v2150 = vadd.f32 %v275, %v2149
  %v2151 = vpop.f32.mrb[0].mxu0
  %v2152 = vpop.f32.mrb[0].mxu0
  %v2153 = vadd.f32 %v275, %v2152
  %v2154 = vpop.f32.mrb[0].mxu0
  %2155 = vmatprep.mubr.bf16.mxu0 0
  %2156 = vmatmul.mubr.bf16.gmra.mrb[0].mxu0 %v1230
  %v2157 = vpop.f32.mrb[0].mxu0
  %v2158 = vadd.f32 %v275, %v2157
  %v2159 = vpop.f32.mrb[0].mxu0
  %v2160 = vpop.f32.mrb[0].mxu0
  %v2161 = vadd.f32 %v275, %v2160
  %v2162 = vpop.f32.mrb[0].mxu0
  %2163 = vmatprep.mubr.bf16.mxu0 0
  %2164 = vmatmul.mubr.bf16.gmra.mrb[0].mxu0 %v1233
  %v2165 = vpop.f32.mrb[0].mxu0
  %v2166 = vadd.f32 %v275, %v2165
  %v2167 = vpop.f32.mrb[0].mxu0
  %v2168 = vpop.f32.mrb[0].mxu0
  %v2169 = vadd.f32 %v275, %v2168
  %v2170 = vpop.f32.mrb[0].mxu0
  %2171 = vmatprep.mubr.bf16.mxu0 0
  %2172 = vmatmul.mubr.bf16.gmra.mrb[0].mxu0 %v1236
  %v2173 = vpop.f32.mrb[0].mxu0
  %v2174 = vadd.f32 %v275, %v2173
  %v2175 = vpop.f32.mrb[0].mxu0
  %v2176 = vpop.f32.mrb[0].mxu0
  %v2177 = vadd.f32 %v275, %v2176
  %v2178 = vpop.f32.mrb[0].mxu0
  %2179 = vmatprep.mubr.bf16.mxu0 0
  %2180 = vmatmul.mubr.bf16.gmra.mrb[0].mxu0 %v1239
  %v2181 = vpop.f32.mrb[0].mxu0
  %v2182 = vadd.f32 %v275, %v2181
  %v2183 = vpop.f32.mrb[0].mxu0
  %v2184 = vpop.f32.mrb[0].mxu0
  %v2185 = vadd.f32 %v275, %v2184
  %v2186 = vpop.f32.mrb[0].mxu0
  %2187 = vmatprep.mubr.bf16.mxu0 0
  %2188 = vmatmul.mubr.bf16.gmra.mrb[0].mxu0 %v1242
  %v2189 = vpop.f32.mrb[0].mxu0
  %v2190 = vadd.f32 %v275, %v2189
  %v2191 = vpop.f32.mrb[0].mxu0
  %v2192 = vpop.f32.mrb[0].mxu0
  %v2193 = vadd.f32 %v275, %v2192
  %v2194 = vpop.f32.mrb[0].mxu0
  %2195 = vmatprep.mubr.bf16.mxu0 0
  %2196 = vmatmul.mubr.bf16.gmra.mrb[0].mxu0 %v1245
  %v2197 = vpop.f32.mrb[0].mxu0
  %v2198 = vadd.f32 %v275, %v2197
  %v2199 = vpop.f32.mrb[0].mxu0
  %v2200 = vpop.f32.mrb[0].mxu0
  %v2201 = vadd.f32 %v275, %v2200
  %v2202 = vpop.f32.mrb[0].mxu0
  %2203 = vmatprep.mubr.bf16.mxu0 0
  %2204 = vmatmul.mubr.bf16.gmra.mrb[0].mxu0 %v1248
  %v2205 = vpop.f32.mrb[0].mxu0
  %v2206 = vadd.f32 %v275, %v2205
  %v2207 = vpop.f32.mrb[0].mxu0
  %v2208 = vpop.f32.mrb[0].mxu0
  %v2209 = vadd.f32 %v275, %v2208
  %v2210 = vpop.f32.mrb[0].mxu0
  %2211 = vmatprep.mubr.bf16.mxu0 0
  %2212 = vmatmul.mubr.bf16.gmra.mrb[0].mxu0 %v1251
  %v2213 = vpop.f32.mrb[0].mxu0
  %v2214 = vadd.f32 %v275, %v2213
  %v2215 = vpop.f32.mrb[0].mxu0
  %v2216 = vpop.f32.mrb[0].mxu0
  %v2217 = vadd.f32 %v275, %v2216
  %v2218 = vpop.f32.mrb[0].mxu0
  %2219 = vmatprep.mubr.bf16.mxu0 0
  %2220 = vmatmul.mubr.bf16.gmra.mrb[0].mxu0 %v1254
  %v2221 = vpop.f32.mrb[0].mxu0
  %v2222 = vadd.f32 %v275, %v2221
  %v2223 = vpop.f32.mrb[0].mxu0
  %v2224 = vpop.f32.mrb[0].mxu0
  %v2225 = vadd.f32 %v275, %v2224
  %v2226 = vpop.f32.mrb[0].mxu0
  %2227 = vmatprep.mubr.bf16.mxu0 0
  %2228 = vmatmul.mubr.bf16.gmra.mrb[0].mxu0 %v1257
  %v2229 = vpop.f32.mrb[0].mxu0
  %v2230 = vadd.f32 %v275, %v2229
  %v2231 = vpop.f32.mrb[0].mxu0
  %v2232 = vpop.f32.mrb[0].mxu0
  %v2233 = vadd.f32 %v275, %v2232
  %v2234 = vpop.f32.mrb[0].mxu0
  %2235 = vmatprep.mubr.bf16.mxu0 0
  %2236 = vmatmul.mubr.bf16.gmra.mrb[0].mxu0 %v1260
  %v2237 = vpop.f32.mrb[0].mxu0
  %v2238 = vadd.f32 %v275, %v2237
  %v2239 = vpop.f32.mrb[0].mxu0
  %v2240 = vpop.f32.mrb[0].mxu0
  %v2241 = vadd.f32 %v275, %v2240
  %v2242 = vpop.f32.mrb[0].mxu0
  %2243 = vmatprep.mubr.bf16.mxu0 0
  %2244 = vmatmul.mubr.bf16.gmra.mrb[0].mxu0 %v1263
  %v2245 = vpop.f32.mrb[0].mxu0
  %v2246 = vadd.f32 %v275, %v2245
  %v2247 = vpop.f32.mrb[0].mxu0
  %v2248 = vpop.f32.mrb[0].mxu0
  %v2249 = vadd.f32 %v275, %v2248
  %v2250 = vpop.f32.mrb[0].mxu0
  %2251 = vmatprep.mubr.bf16.mxu0 0
  %2252 = vmatmul.mubr.bf16.gmra.mrb[0].mxu0 %v1266
  %v2253 = vpop.f32.mrb[0].mxu0
  %v2254 = vadd.f32 %v275, %v2253
  %v2255 = vpop.f32.mrb[0].mxu0
  %v2256 = vpop.f32.mrb[0].mxu0
  %v2257 = vadd.f32 %v275, %v2256
  %v2258 = vpop.f32.mrb[0].mxu0
  %2259 = vmatprep.mubr.bf16.mxu0 0
  %2260 = vmatmul.mubr.bf16.gmra.mrb[0].mxu0 %v1269
  %v2261 = vpop.f32.mrb[0].mxu0
  %v2262 = vadd.f32 %v275, %v2261
  %v2263 = vpop.f32.mrb[0].mxu0
  %v2264 = vpop.f32.mrb[0].mxu0
  %v2265 = vadd.f32 %v275, %v2264
  %v2266 = vpop.f32.mrb[0].mxu0
  %2267 = vmatprep.mubr.bf16.mxu0 0
  %2268 = vmatmul.mubr.bf16.gmra.mrb[0].mxu0 %v1272
  %v2269 = vpop.f32.mrb[0].mxu0
  %v2270 = vadd.f32 %v275, %v2269
  %v2271 = vpop.f32.mrb[0].mxu0
  %v2272 = vpop.f32.mrb[0].mxu0
  %v2273 = vadd.f32 %v275, %v2272
  %v2274 = vpop.f32.mrb[0].mxu0
  %2275 = vmatprep.mubr.bf16.mxu0 0
  %2276 = vmatmul.mubr.bf16.gmra.mrb[0].mxu0 %v1275
  %v2277 = vpop.f32.mrb[0].mxu0
  %v2278 = vadd.f32 %v275, %v2277
  %v2279 = vpop.f32.mrb[0].mxu0
  %v2280 = vpop.f32.mrb[0].mxu0
  %v2281 = vadd.f32 %v275, %v2280
  %v2282 = vpop.f32.mrb[0].mxu0
  %2283 = vmatprep.mubr.bf16.mxu0 0
  %2284 = vmatmul.mubr.bf16.gmra.mrb[0].mxu0 %v1278
  %v2285 = vpop.f32.mrb[0].mxu0
  %v2286 = vadd.f32 %v275, %v2285
  %v2287 = vpop.f32.mrb[0].mxu0
  %v2288 = vpop.f32.mrb[0].mxu0
  %v2289 = vadd.f32 %v275, %v2288
  %v2290 = vpop.f32.mrb[0].mxu0
  %2291 = vmatprep.mubr.bf16.mxu0 0
  %2292 = vmatmul.mubr.bf16.gmra.mrb[0].mxu0 %v1281
  %v2293 = vpop.f32.mrb[0].mxu0
  %v2294 = vadd.f32 %v275, %v2293
  %v2295 = vpop.f32.mrb[0].mxu0
  %v2296 = vpop.f32.mrb[0].mxu0
  %v2297 = vadd.f32 %v275, %v2296
  %v2298 = vpop.f32.mrb[0].mxu0
  %2299 = vmatprep.mubr.bf16.mxu0 0
  %2300 = vmatmul.mubr.bf16.gmra.mrb[0].mxu0 %v1284
  %v2301 = vpop.f32.mrb[0].mxu0
  %v2302 = vadd.f32 %v275, %v2301
  %v2303 = vpop.f32.mrb[0].mxu0
  %v2304 = vpop.f32.mrb[0].mxu0
  %v2305 = vadd.f32 %v275, %v2304
  %v2306 = vpop.f32.mrb[0].mxu0
  %2307 = vmatprep.mubr.bf16.mxu0 0
  %2308 = vmatmul.mubr.bf16.gmra.mrb[0].mxu0 %v1287
  %v2309 = vpop.f32.mrb[0].mxu0
  %v2310 = vadd.f32 %v275, %v2309
  %v2311 = vpop.f32.mrb[0].mxu0
  %v2312 = vpop.f32.mrb[0].mxu0
  %v2313 = vadd.f32 %v275, %v2312
  %v2314 = vpop.f32.mrb[0].mxu0
  %2315 = vmatprep.mubr.bf16.mxu0 0
  %2316 = vmatmul.mubr.bf16.gmra.mrb[0].mxu0 %v1290
  %v2317 = vpop.f32.mrb[0].mxu0
  %v2318 = vadd.f32 %v275, %v2317
  %v2319 = vpop.f32.mrb[0].mxu0
  %v2320 = vpop.f32.mrb[0].mxu0
  %v2321 = vadd.f32 %v275, %v2320
  %v2322 = vpop.f32.mrb[0].mxu0
  %2323 = vmatprep.mubr.bf16.mxu0 0
  %2324 = vmatmul.mubr.bf16.gmra.mrb[0].mxu0 %v1293
  %v2325 = vpop.f32.mrb[0].mxu0
  %v2326 = vadd.f32 %v275, %v2325
  %v2327 = vpop.f32.mrb[0].mxu0
  %v2328 = vpop.f32.mrb[0].mxu0
  %v2329 = vadd.f32 %v275, %v2328
  %v2330 = vpop.f32.mrb[0].mxu0
  %2331 = vmatprep.mubr.bf16.mxu0 0
  %2332 = vmatmul.mubr.bf16.gmra.mrb[0].mxu0 %v1296
  %v2333 = vpop.f32.mrb[0].mxu0
  %v2334 = vadd.f32 %v275, %v2333
  %v2335 = vpop.f32.mrb[0].mxu0
  %v2336 = vpop.f32.mrb[0].mxu0
  %v2337 = vadd.f32 %v275, %v2336
  %v2338 = vpop.f32.mrb[0].mxu0
  %2339 = vmatprep.mubr.bf16.mxu0 0
  %2340 = vmatmul.mubr.bf16.gmra.mrb[0].mxu0 %v1299
  %v2341 = vpop.f32.mrb[0].mxu0
  %v2342 = vadd.f32 %v275, %v2341
  %v2343 = vpop.f32.mrb[0].mxu0
  %v2344 = vpop.f32.mrb[0].mxu0
  %v2345 = vadd.f32 %v275, %v2344
  %v2346 = vpop.f32.mrb[0].mxu0
  %2347 = vmatprep.mubr.bf16.mxu0 0
  %2348 = vmatmul.mubr.bf16.gmra.mrb[0].mxu0 %v1302
  %v2349 = vpop.f32.mrb[0].mxu0
  %v2350 = vadd.f32 %v275, %v2349
  %v2351 = vpop.f32.mrb[0].mxu0
  %v2352 = vpop.f32.mrb[0].mxu0
  %v2353 = vadd.f32 %v275, %v2352
  %v2354 = vpop.f32.mrb[0].mxu0
  %2355 = vmatprep.mubr.bf16.mxu0 0
  %2356 = vmatmul.mubr.bf16.gmra.mrb[0].mxu0 %v1305
  %v2357 = vpop.f32.mrb[0].mxu0
  %v2358 = vadd.f32 %v275, %v2357
  %v2359 = vpop.f32.mrb[0].mxu0
  %v2360 = vpop.f32.mrb[0].mxu0
  %v2361 = vadd.f32 %v275, %v2360
  %v2362 = vpop.f32.mrb[0].mxu0
  %2363 = vdwg.mxu0
  %v2364 = vmax.f32 %v1342, 0.0
  %v2365 = vmax.f32 %v1345, 0.0
  %v2366 = vmax.f32 %v1350, 0.0
  %v2367 = vmax.f32 %v1353, 0.0
  %v2368 = vmax.f32 %v1358, 0.0
  %v2369 = vmax.f32 %v1361, 0.0
  %v2370 = vmax.f32 %v1366, 0.0
  %v2371 = vmax.f32 %v1369, 0.0
  %v2372 = vmax.f32 %v1374, 0.0
  %v2373 = vmax.f32 %v1377, 0.0
  %v2374 = vmax.f32 %v1382, 0.0
  %v2375 = vmax.f32 %v1385, 0.0
  %v2376 = vmax.f32 %v1390, 0.0
  %v2377 = vmax.f32 %v1393, 0.0
  %v2378 = vmax.f32 %v1398, 0.0
  %v2379 = vmax.f32 %v1401, 0.0
  %v2380 = vmax.f32 %v1406, 0.0
  %v2381 = vmax.f32 %v1409, 0.0
  %v2382 = vmax.f32 %v1414, 0.0
  %v2383 = vmax.f32 %v1417, 0.0
  %v2384 = vmax.f32 %v1422, 0.0
  %v2385 = vmax.f32 %v1425, 0.0
  %v2386 = vmax.f32 %v1430, 0.0
  %v2387 = vmax.f32 %v1433, 0.0
  %v2388 = vmax.f32 %v1438, 0.0
  %v2389 = vmax.f32 %v1441, 0.0
  %v2390 = vmax.f32 %v1446, 0.0
  %v2391 = vmax.f32 %v1449, 0.0
  %v2392 = vmax.f32 %v1454, 0.0
  %v2393 = vmax.f32 %v1457, 0.0
  %v2394 = vmax.f32 %v1462, 0.0
  %v2395 = vmax.f32 %v1465, 0.0
  %v2396 = vmax.f32 %v1470, 0.0
  %v2397 = vmax.f32 %v1473, 0.0
  %v2398 = vmax.f32 %v1478, 0.0
  %v2399 = vmax.f32 %v1481, 0.0
  %v2400 = vmax.f32 %v1486, 0.0
  %v2401 = vmax.f32 %v1489, 0.0
  %v2402 = vmax.f32 %v1494, 0.0
  %v2403 = vmax.f32 %v1497, 0.0
  %v2404 = vmax.f32 %v1502, 0.0
  %v2405 = vmax.f32 %v1505, 0.0
  %v2406 = vmax.f32 %v1510, 0.0
  %v2407 = vmax.f32 %v1513, 0.0
  %v2408 = vmax.f32 %v1518, 0.0
  %v2409 = vmax.f32 %v1521, 0.0
  %v2410 = vmax.f32 %v1526, 0.0
  %v2411 = vmax.f32 %v1529, 0.0
  %v2412 = vmax.f32 %v1534, 0.0
  %v2413 = vmax.f32 %v1537, 0.0
  %v2414 = vmax.f32 %v1542, 0.0
  %v2415 = vmax.f32 %v1545, 0.0
  %v2416 = vmax.f32 %v1550, 0.0
  %v2417 = vmax.f32 %v1553, 0.0
  %v2418 = vmax.f32 %v1558, 0.0
  %v2419 = vmax.f32 %v1561, 0.0
  %v2420 = vmax.f32 %v1566, 0.0
  %v2421 = vmax.f32 %v1569, 0.0
  %v2422 = vmax.f32 %v1574, 0.0
  %v2423 = vmax.f32 %v1577, 0.0
  %v2424 = vmax.f32 %v1582, 0.0
  %v2425 = vmax.f32 %v1585, 0.0
  %v2426 = vmax.f32 %v1590, 0.0
  %v2427 = vmax.f32 %v1593, 0.0
  %v2428 = vmax.f32 %v1598, 0.0
  %v2429 = vmax.f32 %v1601, 0.0
  %v2430 = vmax.f32 %v1606, 0.0
  %v2431 = vmax.f32 %v1609, 0.0
  %v2432 = vmax.f32 %v1614, 0.0
  %v2433 = vmax.f32 %v1617, 0.0
  %v2434 = vmax.f32 %v1622, 0.0
  %v2435 = vmax.f32 %v1625, 0.0
  %v2436 = vmax.f32 %v1630, 0.0
  %v2437 = vmax.f32 %v1633, 0.0
  %v2438 = vmax.f32 %v1638, 0.0
  %v2439 = vmax.f32 %v1641, 0.0
  %v2440 = vmax.f32 %v1646, 0.0
  %v2441 = vmax.f32 %v1649, 0.0
  %v2442 = vmax.f32 %v1654, 0.0
  %v2443 = vmax.f32 %v1657, 0.0
  %v2444 = vmax.f32 %v1662, 0.0
  %v2445 = vmax.f32 %v1665, 0.0
  %v2446 = vmax.f32 %v1670, 0.0
  %v2447 = vmax.f32 %v1673, 0.0
  %v2448 = vmax.f32 %v1678, 0.0
  %v2449 = vmax.f32 %v1681, 0.0
  %v2450 = vmax.f32 %v1686, 0.0
  %v2451 = vmax.f32 %v1689, 0.0
  %v2452 = vmax.f32 %v1694, 0.0
  %v2453 = vmax.f32 %v1697, 0.0
  %v2454 = vmax.f32 %v1702, 0.0
  %v2455 = vmax.f32 %v1705, 0.0
  %v2456 = vmax.f32 %v1710, 0.0
  %v2457 = vmax.f32 %v1713, 0.0
  %v2458 = vmax.f32 %v1718, 0.0
  %v2459 = vmax.f32 %v1721, 0.0
  %v2460 = vmax.f32 %v1726, 0.0
  %v2461 = vmax.f32 %v1729, 0.0
  %v2462 = vmax.f32 %v1734, 0.0
  %v2463 = vmax.f32 %v1737, 0.0
  %v2464 = vmax.f32 %v1742, 0.0
  %v2465 = vmax.f32 %v1745, 0.0
  %v2466 = vmax.f32 %v1750, 0.0
  %v2467 = vmax.f32 %v1753, 0.0
  %v2468 = vmax.f32 %v1758, 0.0
  %v2469 = vmax.f32 %v1761, 0.0
  %v2470 = vmax.f32 %v1766, 0.0
  %v2471 = vmax.f32 %v1769, 0.0
  %v2472 = vmax.f32 %v1774, 0.0
  %v2473 = vmax.f32 %v1777, 0.0
  %v2474 = vmax.f32 %v1782, 0.0
  %v2475 = vmax.f32 %v1785, 0.0
  %v2476 = vmax.f32 %v1790, 0.0
  %v2477 = vmax.f32 %v1793, 0.0
  %v2478 = vmax.f32 %v1798, 0.0
  %v2479 = vmax.f32 %v1801, 0.0
  %v2480 = vmax.f32 %v1806, 0.0
  %v2481 = vmax.f32 %v1809, 0.0
  %v2482 = vmax.f32 %v1814, 0.0
  %v2483 = vmax.f32 %v1817, 0.0
  %v2484 = vmax.f32 %v1822, 0.0
  %v2485 = vmax.f32 %v1825, 0.0
  %v2486 = vmax.f32 %v1830, 0.0
  %v2487 = vmax.f32 %v1833, 0.0
  %v2488 = vmax.f32 %v1838, 0.0
  %v2489 = vmax.f32 %v1841, 0.0
  %v2490 = vmax.f32 %v1846, 0.0
  %v2491 = vmax.f32 %v1849, 0.0
  %v2492 = vmax.f32 %v1854, 0.0
  %v2493 = vmax.f32 %v1857, 0.0
  %v2494 = vmax.f32 %v1862, 0.0
  %v2495 = vmax.f32 %v1865, 0.0
  %v2496 = vmax.f32 %v1870, 0.0
  %v2497 = vmax.f32 %v1873, 0.0
  %v2498 = vmax.f32 %v1878, 0.0
  %v2499 = vmax.f32 %v1881, 0.0
  %v2500 = vmax.f32 %v1886, 0.0
  %v2501 = vmax.f32 %v1889, 0.0
  %v2502 = vmax.f32 %v1894, 0.0
  %v2503 = vmax.f32 %v1897, 0.0
  %v2504 = vmax.f32 %v1902, 0.0
  %v2505 = vmax.f32 %v1905, 0.0
  %v2506 = vmax.f32 %v1910, 0.0
  %v2507 = vmax.f32 %v1913, 0.0
  %v2508 = vmax.f32 %v1918, 0.0
  %v2509 = vmax.f32 %v1921, 0.0
  %v2510 = vmax.f32 %v1926, 0.0
  %v2511 = vmax.f32 %v1929, 0.0
  %v2512 = vmax.f32 %v1934, 0.0
  %v2513 = vmax.f32 %v1937, 0.0
  %v2514 = vmax.f32 %v1942, 0.0
  %v2515 = vmax.f32 %v1945, 0.0
  %v2516 = vmax.f32 %v1950, 0.0
  %v2517 = vmax.f32 %v1953, 0.0
  %v2518 = vmax.f32 %v1958, 0.0
  %v2519 = vmax.f32 %v1961, 0.0
  %v2520 = vmax.f32 %v1966, 0.0
  %v2521 = vmax.f32 %v1969, 0.0
  %v2522 = vmax.f32 %v1974, 0.0
  %v2523 = vmax.f32 %v1977, 0.0
  %v2524 = vmax.f32 %v1982, 0.0
  %v2525 = vmax.f32 %v1985, 0.0
  %v2526 = vmax.f32 %v1990, 0.0
  %v2527 = vmax.f32 %v1993, 0.0
  %v2528 = vmax.f32 %v1998, 0.0
  %v2529 = vmax.f32 %v2001, 0.0
  %v2530 = vmax.f32 %v2006, 0.0
  %v2531 = vmax.f32 %v2009, 0.0
  %v2532 = vmax.f32 %v2014, 0.0
  %v2533 = vmax.f32 %v2017, 0.0
  %v2534 = vmax.f32 %v2022, 0.0
  %v2535 = vmax.f32 %v2025, 0.0
  %v2536 = vmax.f32 %v2030, 0.0
  %v2537 = vmax.f32 %v2033, 0.0
  %v2538 = vmax.f32 %v2038, 0.0
  %v2539 = vmax.f32 %v2041, 0.0
  %v2540 = vmax.f32 %v2046, 0.0
  %v2541 = vmax.f32 %v2049, 0.0
  %v2542 = vmax.f32 %v2054, 0.0
  %v2543 = vmax.f32 %v2057, 0.0
  %v2544 = vmax.f32 %v2062, 0.0
  %v2545 = vmax.f32 %v2065, 0.0
  %v2546 = vmax.f32 %v2070, 0.0
  %v2547 = vmax.f32 %v2073, 0.0
  %v2548 = vmax.f32 %v2078, 0.0
  %v2549 = vmax.f32 %v2081, 0.0
  %v2550 = vmax.f32 %v2086, 0.0
  %v2551 = vmax.f32 %v2089, 0.0
  %v2552 = vmax.f32 %v2094, 0.0
  %v2553 = vmax.f32 %v2097, 0.0
  %v2554 = vmax.f32 %v2102, 0.0
  %v2555 = vmax.f32 %v2105, 0.0
  %v2556 = vmax.f32 %v2110, 0.0
  %v2557 = vmax.f32 %v2113, 0.0
  %v2558 = vmax.f32 %v2118, 0.0
  %v2559 = vmax.f32 %v2121, 0.0
  %v2560 = vmax.f32 %v2126, 0.0
  %v2561 = vmax.f32 %v2129, 0.0
  %v2562 = vmax.f32 %v2134, 0.0
  %v2563 = vmax.f32 %v2137, 0.0
  %v2564 = vmax.f32 %v2142, 0.0
  %v2565 = vmax.f32 %v2145, 0.0
  %v2566 = vmax.f32 %v2150, 0.0
  %v2567 = vmax.f32 %v2153, 0.0
  %v2568 = vmax.f32 %v2158, 0.0
  %v2569 = vmax.f32 %v2161, 0.0
  %v2570 = vmax.f32 %v2166, 0.0
  %v2571 = vmax.f32 %v2169, 0.0
  %v2572 = vmax.f32 %v2174, 0.0
  %v2573 = vmax.f32 %v2177, 0.0
  %v2574 = vmax.f32 %v2182, 0.0
  %v2575 = vmax.f32 %v2185, 0.0
  %v2576 = vmax.f32 %v2190, 0.0
  %v2577 = vmax.f32 %v2193, 0.0
  %v2578 = vmax.f32 %v2198, 0.0
  %v2579 = vmax.f32 %v2201, 0.0
  %v2580 = vmax.f32 %v2206, 0.0
  %v2581 = vmax.f32 %v2209, 0.0
  %v2582 = vmax.f32 %v2214, 0.0
  %v2583 = vmax.f32 %v2217, 0.0
  %v2584 = vmax.f32 %v2222, 0.0
  %v2585 = vmax.f32 %v2225, 0.0
  %v2586 = vmax.f32 %v2230, 0.0
  %v2587 = vmax.f32 %v2233, 0.0
  %v2588 = vmax.f32 %v2238, 0.0
  %v2589 = vmax.f32 %v2241, 0.0
  %v2590 = vmax.f32 %v2246, 0.0
  %v2591 = vmax.f32 %v2249, 0.0
  %v2592 = vmax.f32 %v2254, 0.0
  %v2593 = vmax.f32 %v2257, 0.0
  %v2594 = vmax.f32 %v2262, 0.0
  %v2595 = vmax.f32 %v2265, 0.0
  %v2596 = vmax.f32 %v2270, 0.0
  %v2597 = vmax.f32 %v2273, 0.0
  %v2598 = vmax.f32 %v2278, 0.0
  %v2599 = vmax.f32 %v2281, 0.0
  %v2600 = vmax.f32 %v2286, 0.0
  %v2601 = vmax.f32 %v2289, 0.0
  %v2602 = vmax.f32 %v2294, 0.0
  %v2603 = vmax.f32 %v2297, 0.0
  %v2604 = vmax.f32 %v2302, 0.0
  %v2605 = vmax.f32 %v2305, 0.0
  %v2606 = vmax.f32 %v2310, 0.0
  %v2607 = vmax.f32 %v2313, 0.0
  %v2608 = vmax.f32 %v2318, 0.0
  %v2609 = vmax.f32 %v2321, 0.0
  %v2610 = vmax.f32 %v2326, 0.0
  %v2611 = vmax.f32 %v2329, 0.0
  %v2612 = vmax.f32 %v2334, 0.0
  %v2613 = vmax.f32 %v2337, 0.0
  %v2614 = vmax.f32 %v2342, 0.0
  %v2615 = vmax.f32 %v2345, 0.0
  %v2616 = vmax.f32 %v2350, 0.0
  %v2617 = vmax.f32 %v2353, 0.0
  %v2618 = vmax.f32 %v2358, 0.0
  %v2619 = vmax.f32 %v2361, 0.0
  %v2620 = vlaneseq
  %v2621 = vshrl.u32 %v2620, 7
  %v2622 = vadd.s32 %v2621, 8
  %v2623 = vadd.s32 %v2621, 16
  %v2624 = vadd.s32 %v2621, 24
  %vm2625 = vcmp.lt.s32.totalorder %v2621, 29
  %vm2626 = vcmp.lt.s32.totalorder %v2622, 29
  %vm2627 = vcmp.lt.s32.totalorder %v2623, 29
  %vm2628 = vcmp.lt.s32.totalorder %v2624, 29
  %v2629 = vsel %vm2625, 1, 0
  %v2630 = vsel %vm2626, 1, 0
  %v2631 = vsel %vm2627, 1, 0
  %v2632 = vsel %vm2628, 1, 0
  %vm2633 = vcmp.eq.s32.totalorder %v2629, 1
  %vm2634 = vcmp.eq.s32.totalorder %v2630, 1
  %vm2635 = vcmp.eq.s32.totalorder %v2631, 1
  %vm2636 = vcmp.eq.s32.totalorder %v2632, 1
  %v2637 = vsel %vm2633, %v2364, -1e+30
  %v2638 = vsel %vm2634, %v2365, -1e+30
  %v2639 = vsel %vm2635, %v2366, -1e+30
  %v2640 = vsel %vm2636, %v2367, -1e+30
  %v2641 = vsel %vm2633, %v2368, -1e+30
  %v2642 = vsel %vm2634, %v2369, -1e+30
  %v2643 = vsel %vm2635, %v2370, -1e+30
  %v2644 = vsel %vm2636, %v2371, -1e+30
  %v2645 = vsel %vm2633, %v2372, -1e+30
  %v2646 = vsel %vm2634, %v2373, -1e+30
  %v2647 = vsel %vm2635, %v2374, -1e+30
  %v2648 = vsel %vm2636, %v2375, -1e+30
  %v2649 = vsel %vm2633, %v2376, -1e+30
  %v2650 = vsel %vm2634, %v2377, -1e+30
  %v2651 = vsel %vm2635, %v2378, -1e+30
  %v2652 = vsel %vm2636, %v2379, -1e+30
  %v2653 = vsel %vm2633, %v2380, -1e+30
  %v2654 = vsel %vm2634, %v2381, -1e+30
  %v2655 = vsel %vm2635, %v2382, -1e+30
  %v2656 = vsel %vm2636, %v2383, -1e+30
  %v2657 = vsel %vm2633, %v2384, -1e+30
  %v2658 = vsel %vm2634, %v2385, -1e+30
  %v2659 = vsel %vm2635, %v2386, -1e+30
  %v2660 = vsel %vm2636, %v2387, -1e+30
  %v2661 = vsel %vm2633, %v2388, -1e+30
  %v2662 = vsel %vm2634, %v2389, -1e+30
  %v2663 = vsel %vm2635, %v2390, -1e+30
  %v2664 = vsel %vm2636, %v2391, -1e+30
  %v2665 = vsel %vm2633, %v2392, -1e+30
  %v2666 = vsel %vm2634, %v2393, -1e+30
  %v2667 = vsel %vm2635, %v2394, -1e+30
  %v2668 = vsel %vm2636, %v2395, -1e+30
  %v2669 = vsel %vm2633, %v2396, -1e+30
  %v2670 = vsel %vm2634, %v2397, -1e+30
  %v2671 = vsel %vm2635, %v2398, -1e+30
  %v2672 = vsel %vm2636, %v2399, -1e+30
  %v2673 = vsel %vm2633, %v2400, -1e+30
  %v2674 = vsel %vm2634, %v2401, -1e+30
  %v2675 = vsel %vm2635, %v2402, -1e+30
  %v2676 = vsel %vm2636, %v2403, -1e+30
  %v2677 = vsel %vm2633, %v2404, -1e+30
  %v2678 = vsel %vm2634, %v2405, -1e+30
  %v2679 = vsel %vm2635, %v2406, -1e+30
  %v2680 = vsel %vm2636, %v2407, -1e+30
  %v2681 = vsel %vm2633, %v2408, -1e+30
  %v2682 = vsel %vm2634, %v2409, -1e+30
  %v2683 = vsel %vm2635, %v2410, -1e+30
  %v2684 = vsel %vm2636, %v2411, -1e+30
  %v2685 = vsel %vm2633, %v2412, -1e+30
  %v2686 = vsel %vm2634, %v2413, -1e+30
  %v2687 = vsel %vm2635, %v2414, -1e+30
  %v2688 = vsel %vm2636, %v2415, -1e+30
  %v2689 = vsel %vm2633, %v2416, -1e+30
  %v2690 = vsel %vm2634, %v2417, -1e+30
  %v2691 = vsel %vm2635, %v2418, -1e+30
  %v2692 = vsel %vm2636, %v2419, -1e+30
  %v2693 = vsel %vm2633, %v2420, -1e+30
  %v2694 = vsel %vm2634, %v2421, -1e+30
  %v2695 = vsel %vm2635, %v2422, -1e+30
  %v2696 = vsel %vm2636, %v2423, -1e+30
  %v2697 = vsel %vm2633, %v2424, -1e+30
  %v2698 = vsel %vm2634, %v2425, -1e+30
  %v2699 = vsel %vm2635, %v2426, -1e+30
  %v2700 = vsel %vm2636, %v2427, -1e+30
  %v2701 = vsel %vm2633, %v2428, -1e+30
  %v2702 = vsel %vm2634, %v2429, -1e+30
  %v2703 = vsel %vm2635, %v2430, -1e+30
  %v2704 = vsel %vm2636, %v2431, -1e+30
  %v2705 = vsel %vm2633, %v2432, -1e+30
  %v2706 = vsel %vm2634, %v2433, -1e+30
  %v2707 = vsel %vm2635, %v2434, -1e+30
  %v2708 = vsel %vm2636, %v2435, -1e+30
  %v2709 = vsel %vm2633, %v2436, -1e+30
  %v2710 = vsel %vm2634, %v2437, -1e+30
  %v2711 = vsel %vm2635, %v2438, -1e+30
  %v2712 = vsel %vm2636, %v2439, -1e+30
  %v2713 = vsel %vm2633, %v2440, -1e+30
  %v2714 = vsel %vm2634, %v2441, -1e+30
  %v2715 = vsel %vm2635, %v2442, -1e+30
  %v2716 = vsel %vm2636, %v2443, -1e+30
  %v2717 = vsel %vm2633, %v2444, -1e+30
  %v2718 = vsel %vm2634, %v2445, -1e+30
  %v2719 = vsel %vm2635, %v2446, -1e+30
  %v2720 = vsel %vm2636, %v2447, -1e+30
  %v2721 = vsel %vm2633, %v2448, -1e+30
  %v2722 = vsel %vm2634, %v2449, -1e+30
  %v2723 = vsel %vm2635, %v2450, -1e+30
  %v2724 = vsel %vm2636, %v2451, -1e+30
  %v2725 = vsel %vm2633, %v2452, -1e+30
  %v2726 = vsel %vm2634, %v2453, -1e+30
  %v2727 = vsel %vm2635, %v2454, -1e+30
  %v2728 = vsel %vm2636, %v2455, -1e+30
  %v2729 = vsel %vm2633, %v2456, -1e+30
  %v2730 = vsel %vm2634, %v2457, -1e+30
  %v2731 = vsel %vm2635, %v2458, -1e+30
  %v2732 = vsel %vm2636, %v2459, -1e+30
  %v2733 = vsel %vm2633, %v2460, -1e+30
  %v2734 = vsel %vm2634, %v2461, -1e+30
  %v2735 = vsel %vm2635, %v2462, -1e+30
  %v2736 = vsel %vm2636, %v2463, -1e+30
  %v2737 = vsel %vm2633, %v2464, -1e+30
  %v2738 = vsel %vm2634, %v2465, -1e+30
  %v2739 = vsel %vm2635, %v2466, -1e+30
  %v2740 = vsel %vm2636, %v2467, -1e+30
  %v2741 = vsel %vm2633, %v2468, -1e+30
  %v2742 = vsel %vm2634, %v2469, -1e+30
  %v2743 = vsel %vm2635, %v2470, -1e+30
  %v2744 = vsel %vm2636, %v2471, -1e+30
  %v2745 = vsel %vm2633, %v2472, -1e+30
  %v2746 = vsel %vm2634, %v2473, -1e+30
  %v2747 = vsel %vm2635, %v2474, -1e+30
  %v2748 = vsel %vm2636, %v2475, -1e+30
  %v2749 = vsel %vm2633, %v2476, -1e+30
  %v2750 = vsel %vm2634, %v2477, -1e+30
  %v2751 = vsel %vm2635, %v2478, -1e+30
  %v2752 = vsel %vm2636, %v2479, -1e+30
  %v2753 = vsel %vm2633, %v2480, -1e+30
  %v2754 = vsel %vm2634, %v2481, -1e+30
  %v2755 = vsel %vm2635, %v2482, -1e+30
  %v2756 = vsel %vm2636, %v2483, -1e+30
  %v2757 = vsel %vm2633, %v2484, -1e+30
  %v2758 = vsel %vm2634, %v2485, -1e+30
  %v2759 = vsel %vm2635, %v2486, -1e+30
  %v2760 = vsel %vm2636, %v2487, -1e+30
  %v2761 = vsel %vm2633, %v2488, -1e+30
  %v2762 = vsel %vm2634, %v2489, -1e+30
  %v2763 = vsel %vm2635, %v2490, -1e+30
  %v2764 = vsel %vm2636, %v2491, -1e+30
  %v2765 = vsel %vm2633, %v2492, -1e+30
  %v2766 = vsel %vm2634, %v2493, -1e+30
  %v2767 = vsel %vm2635, %v2494, -1e+30
  %v2768 = vsel %vm2636, %v2495, -1e+30
  %v2769 = vsel %vm2633, %v2496, -1e+30
  %v2770 = vsel %vm2634, %v2497, -1e+30
  %v2771 = vsel %vm2635, %v2498, -1e+30
  %v2772 = vsel %vm2636, %v2499, -1e+30
  %v2773 = vsel %vm2633, %v2500, -1e+30
  %v2774 = vsel %vm2634, %v2501, -1e+30
  %v2775 = vsel %vm2635, %v2502, -1e+30
  %v2776 = vsel %vm2636, %v2503, -1e+30
  %v2777 = vsel %vm2633, %v2504, -1e+30
  %v2778 = vsel %vm2634, %v2505, -1e+30
  %v2779 = vsel %vm2635, %v2506, -1e+30
  %v2780 = vsel %vm2636, %v2507, -1e+30
  %v2781 = vsel %vm2633, %v2508, -1e+30
  %v2782 = vsel %vm2634, %v2509, -1e+30
  %v2783 = vsel %vm2635, %v2510, -1e+30
  %v2784 = vsel %vm2636, %v2511, -1e+30
  %v2785 = vsel %vm2633, %v2512, -1e+30
  %v2786 = vsel %vm2634, %v2513, -1e+30
  %v2787 = vsel %vm2635, %v2514, -1e+30
  %v2788 = vsel %vm2636, %v2515, -1e+30
  %v2789 = vsel %vm2633, %v2516, -1e+30
  %v2790 = vsel %vm2634, %v2517, -1e+30
  %v2791 = vsel %vm2635, %v2518, -1e+30
  %v2792 = vsel %vm2636, %v2519, -1e+30
  %v2793 = vsel %vm2633, %v2520, -1e+30
  %v2794 = vsel %vm2634, %v2521, -1e+30
  %v2795 = vsel %vm2635, %v2522, -1e+30
  %v2796 = vsel %vm2636, %v2523, -1e+30
  %v2797 = vsel %vm2633, %v2524, -1e+30
  %v2798 = vsel %vm2634, %v2525, -1e+30
  %v2799 = vsel %vm2635, %v2526, -1e+30
  %v2800 = vsel %vm2636, %v2527, -1e+30
  %v2801 = vsel %vm2633, %v2528, -1e+30
  %v2802 = vsel %vm2634, %v2529, -1e+30
  %v2803 = vsel %vm2635, %v2530, -1e+30
  %v2804 = vsel %vm2636, %v2531, -1e+30
  %v2805 = vsel %vm2633, %v2532, -1e+30
  %v2806 = vsel %vm2634, %v2533, -1e+30
  %v2807 = vsel %vm2635, %v2534, -1e+30
  %v2808 = vsel %vm2636, %v2535, -1e+30
  %v2809 = vsel %vm2633, %v2536, -1e+30
  %v2810 = vsel %vm2634, %v2537, -1e+30
  %v2811 = vsel %vm2635, %v2538, -1e+30
  %v2812 = vsel %vm2636, %v2539, -1e+30
  %v2813 = vsel %vm2633, %v2540, -1e+30
  %v2814 = vsel %vm2634, %v2541, -1e+30
  %v2815 = vsel %vm2635, %v2542, -1e+30
  %v2816 = vsel %vm2636, %v2543, -1e+30
  %v2817 = vsel %vm2633, %v2544, -1e+30
  %v2818 = vsel %vm2634, %v2545, -1e+30
  %v2819 = vsel %vm2635, %v2546, -1e+30
  %v2820 = vsel %vm2636, %v2547, -1e+30
  %v2821 = vsel %vm2633, %v2548, -1e+30
  %v2822 = vsel %vm2634, %v2549, -1e+30
  %v2823 = vsel %vm2635, %v2550, -1e+30
  %v2824 = vsel %vm2636, %v2551, -1e+30
  %v2825 = vsel %vm2633, %v2552, -1e+30
  %v2826 = vsel %vm2634, %v2553, -1e+30
  %v2827 = vsel %vm2635, %v2554, -1e+30
  %v2828 = vsel %vm2636, %v2555, -1e+30
  %v2829 = vsel %vm2633, %v2556, -1e+30
  %v2830 = vsel %vm2634, %v2557, -1e+30
  %v2831 = vsel %vm2635, %v2558, -1e+30
  %v2832 = vsel %vm2636, %v2559, -1e+30
  %v2833 = vsel %vm2633, %v2560, -1e+30
  %v2834 = vsel %vm2634, %v2561, -1e+30
  %v2835 = vsel %vm2635, %v2562, -1e+30
  %v2836 = vsel %vm2636, %v2563, -1e+30
  %v2837 = vsel %vm2633, %v2564, -1e+30
  %v2838 = vsel %vm2634, %v2565, -1e+30
  %v2839 = vsel %vm2635, %v2566, -1e+30
  %v2840 = vsel %vm2636, %v2567, -1e+30
  %v2841 = vsel %vm2633, %v2568, -1e+30
  %v2842 = vsel %vm2634, %v2569, -1e+30
  %v2843 = vsel %vm2635, %v2570, -1e+30
  %v2844 = vsel %vm2636, %v2571, -1e+30
  %v2845 = vsel %vm2633, %v2572, -1e+30
  %v2846 = vsel %vm2634, %v2573, -1e+30
  %v2847 = vsel %vm2635, %v2574, -1e+30
  %v2848 = vsel %vm2636, %v2575, -1e+30
  %v2849 = vsel %vm2633, %v2576, -1e+30
  %v2850 = vsel %vm2634, %v2577, -1e+30
  %v2851 = vsel %vm2635, %v2578, -1e+30
  %v2852 = vsel %vm2636, %v2579, -1e+30
  %v2853 = vsel %vm2633, %v2580, -1e+30
  %v2854 = vsel %vm2634, %v2581, -1e+30
  %v2855 = vsel %vm2635, %v2582, -1e+30
  %v2856 = vsel %vm2636, %v2583, -1e+30
  %v2857 = vsel %vm2633, %v2584, -1e+30
  %v2858 = vsel %vm2634, %v2585, -1e+30
  %v2859 = vsel %vm2635, %v2586, -1e+30
  %v2860 = vsel %vm2636, %v2587, -1e+30
  %v2861 = vsel %vm2633, %v2588, -1e+30
  %v2862 = vsel %vm2634, %v2589, -1e+30
  %v2863 = vsel %vm2635, %v2590, -1e+30
  %v2864 = vsel %vm2636, %v2591, -1e+30
  %v2865 = vsel %vm2633, %v2592, -1e+30
  %v2866 = vsel %vm2634, %v2593, -1e+30
  %v2867 = vsel %vm2635, %v2594, -1e+30
  %v2868 = vsel %vm2636, %v2595, -1e+30
  %v2869 = vsel %vm2633, %v2596, -1e+30
  %v2870 = vsel %vm2634, %v2597, -1e+30
  %v2871 = vsel %vm2635, %v2598, -1e+30
  %v2872 = vsel %vm2636, %v2599, -1e+30
  %v2873 = vsel %vm2633, %v2600, -1e+30
  %v2874 = vsel %vm2634, %v2601, -1e+30
  %v2875 = vsel %vm2635, %v2602, -1e+30
  %v2876 = vsel %vm2636, %v2603, -1e+30
  %v2877 = vsel %vm2633, %v2604, -1e+30
  %v2878 = vsel %vm2634, %v2605, -1e+30
  %v2879 = vsel %vm2635, %v2606, -1e+30
  %v2880 = vsel %vm2636, %v2607, -1e+30
  %v2881 = vsel %vm2633, %v2608, -1e+30
  %v2882 = vsel %vm2634, %v2609, -1e+30
  %v2883 = vsel %vm2635, %v2610, -1e+30
  %v2884 = vsel %vm2636, %v2611, -1e+30
  %v2885 = vsel %vm2633, %v2612, -1e+30
  %v2886 = vsel %vm2634, %v2613, -1e+30
  %v2887 = vsel %vm2635, %v2614, -1e+30
  %v2888 = vsel %vm2636, %v2615, -1e+30
  %v2889 = vsel %vm2633, %v2616, -1e+30
  %v2890 = vsel %vm2634, %v2617, -1e+30
  %v2891 = vsel %vm2635, %v2618, -1e+30
  %v2892 = vsel %vm2636, %v2619, -1e+30
  %vm2893 = vcmask 523264
  %v2894 = vsel %vm2893, %v2637, -inf
  %v2895 = vsel %vm2893, %v2638, -inf
  %v2896 = vmax.f32 %v2894, %v2895
  %v2897 = vsel %vm2893, %v2639, -inf
  %v2898 = vmax.f32 %v2896, %v2897
  %v2899 = vsel %vm2893, %v2640, -inf
  %v2900 = vmax.f32 %v2898, %v2899
  %v2901 = vrot.slane %v2900, 4
  %v2902 = vmax.f32 %v2900, %v2901
  %v2903 = vrot.slane %v2902, 2
  %v2904 = vmax.f32 %v2902, %v2903
  %v2905 = vrot.slane %v2904, 1
  %v2906 = vmax.f32 %v2904, %v2905
  %v2907 = vsel %vm2893, %v2641, -inf
  %v2908 = vsel %vm2893, %v2642, -inf
  %v2909 = vmax.f32 %v2907, %v2908
  %v2910 = vsel %vm2893, %v2643, -inf
  %v2911 = vmax.f32 %v2909, %v2910
  %v2912 = vsel %vm2893, %v2644, -inf
  %v2913 = vmax.f32 %v2911, %v2912
  %v2914 = vrot.slane %v2913, 4
  %v2915 = vmax.f32 %v2913, %v2914
  %v2916 = vrot.slane %v2915, 2
  %v2917 = vmax.f32 %v2915, %v2916
  %v2918 = vrot.slane %v2917, 1
  %v2919 = vmax.f32 %v2917, %v2918
  %v2920 = vsel %vm2893, %v2645, -inf
  %v2921 = vsel %vm2893, %v2646, -inf
  %v2922 = vmax.f32 %v2920, %v2921
  %v2923 = vsel %vm2893, %v2647, -inf
  %v2924 = vmax.f32 %v2922, %v2923
  %v2925 = vsel %vm2893, %v2648, -inf
  %v2926 = vmax.f32 %v2924, %v2925
  %v2927 = vrot.slane %v2926, 4
  %v2928 = vmax.f32 %v2926, %v2927
  %v2929 = vrot.slane %v2928, 2
  %v2930 = vmax.f32 %v2928, %v2929
  %v2931 = vrot.slane %v2930, 1
  %v2932 = vmax.f32 %v2930, %v2931
  %v2933 = vsel %vm2893, %v2649, -inf
  %v2934 = vsel %vm2893, %v2650, -inf
  %v2935 = vmax.f32 %v2933, %v2934
  %v2936 = vsel %vm2893, %v2651, -inf
  %v2937 = vmax.f32 %v2935, %v2936
  %v2938 = vsel %vm2893, %v2652, -inf
  %v2939 = vmax.f32 %v2937, %v2938
  %v2940 = vrot.slane %v2939, 4
  %v2941 = vmax.f32 %v2939, %v2940
  %v2942 = vrot.slane %v2941, 2
  %v2943 = vmax.f32 %v2941, %v2942
  %v2944 = vrot.slane %v2943, 1
  %v2945 = vmax.f32 %v2943, %v2944
  %v2946 = vsel %vm2893, %v2653, -inf
  %v2947 = vsel %vm2893, %v2654, -inf
  %v2948 = vmax.f32 %v2946, %v2947
  %v2949 = vsel %vm2893, %v2655, -inf
  %v2950 = vmax.f32 %v2948, %v2949
  %v2951 = vsel %vm2893, %v2656, -inf
  %v2952 = vmax.f32 %v2950, %v2951
  %v2953 = vrot.slane %v2952, 4
  %v2954 = vmax.f32 %v2952, %v2953
  %v2955 = vrot.slane %v2954, 2
  %v2956 = vmax.f32 %v2954, %v2955
  %v2957 = vrot.slane %v2956, 1
  %v2958 = vmax.f32 %v2956, %v2957
  %v2959 = vsel %vm2893, %v2657, -inf
  %v2960 = vsel %vm2893, %v2658, -inf
  %v2961 = vmax.f32 %v2959, %v2960
  %v2962 = vsel %vm2893, %v2659, -inf
  %v2963 = vmax.f32 %v2961, %v2962
  %v2964 = vsel %vm2893, %v2660, -inf
  %v2965 = vmax.f32 %v2963, %v2964
  %v2966 = vrot.slane %v2965, 4
  %v2967 = vmax.f32 %v2965, %v2966
  %v2968 = vrot.slane %v2967, 2
  %v2969 = vmax.f32 %v2967, %v2968
  %v2970 = vrot.slane %v2969, 1
  %v2971 = vmax.f32 %v2969, %v2970
  %v2972 = vsel %vm2893, %v2661, -inf
  %v2973 = vsel %vm2893, %v2662, -inf
  %v2974 = vmax.f32 %v2972, %v2973
  %v2975 = vsel %vm2893, %v2663, -inf
  %v2976 = vmax.f32 %v2974, %v2975
  %v2977 = vsel %vm2893, %v2664, -inf
  %v2978 = vmax.f32 %v2976, %v2977
  %v2979 = vrot.slane %v2978, 4
  %v2980 = vmax.f32 %v2978, %v2979
  %v2981 = vrot.slane %v2980, 2
  %v2982 = vmax.f32 %v2980, %v2981
  %v2983 = vrot.slane %v2982, 1
  %v2984 = vmax.f32 %v2982, %v2983
  %v2985 = vsel %vm2893, %v2665, -inf
  %v2986 = vsel %vm2893, %v2666, -inf
  %v2987 = vmax.f32 %v2985, %v2986
  %v2988 = vsel %vm2893, %v2667, -inf
  %v2989 = vmax.f32 %v2987, %v2988
  %v2990 = vsel %vm2893, %v2668, -inf
  %v2991 = vmax.f32 %v2989, %v2990
  %v2992 = vrot.slane %v2991, 4
  %v2993 = vmax.f32 %v2991, %v2992
  %v2994 = vrot.slane %v2993, 2
  %v2995 = vmax.f32 %v2993, %v2994
  %v2996 = vrot.slane %v2995, 1
  %v2997 = vmax.f32 %v2995, %v2996
  %v2998 = vsel %vm2893, %v2669, -inf
  %v2999 = vsel %vm2893, %v2670, -inf
  %v3000 = vmax.f32 %v2998, %v2999
  %v3001 = vsel %vm2893, %v2671, -inf
  %v3002 = vmax.f32 %v3000, %v3001
  %v3003 = vsel %vm2893, %v2672, -inf
  %v3004 = vmax.f32 %v3002, %v3003
  %v3005 = vrot.slane %v3004, 4
  %v3006 = vmax.f32 %v3004, %v3005
  %v3007 = vrot.slane %v3006, 2
  %v3008 = vmax.f32 %v3006, %v3007
  %v3009 = vrot.slane %v3008, 1
  %v3010 = vmax.f32 %v3008, %v3009
  %v3011 = vsel %vm2893, %v2673, -inf
  %v3012 = vsel %vm2893, %v2674, -inf
  %v3013 = vmax.f32 %v3011, %v3012
  %v3014 = vsel %vm2893, %v2675, -inf
  %v3015 = vmax.f32 %v3013, %v3014
  %v3016 = vsel %vm2893, %v2676, -inf
  %v3017 = vmax.f32 %v3015, %v3016
  %v3018 = vrot.slane %v3017, 4
  %v3019 = vmax.f32 %v3017, %v3018
  %v3020 = vrot.slane %v3019, 2
  %v3021 = vmax.f32 %v3019, %v3020
  %v3022 = vrot.slane %v3021, 1
  %v3023 = vmax.f32 %v3021, %v3022
  %v3024 = vsel %vm2893, %v2677, -inf
  %v3025 = vsel %vm2893, %v2678, -inf
  %v3026 = vmax.f32 %v3024, %v3025
  %v3027 = vsel %vm2893, %v2679, -inf
  %v3028 = vmax.f32 %v3026, %v3027
  %v3029 = vsel %vm2893, %v2680, -inf
  %v3030 = vmax.f32 %v3028, %v3029
  %v3031 = vrot.slane %v3030, 4
  %v3032 = vmax.f32 %v3030, %v3031
  %v3033 = vrot.slane %v3032, 2
  %v3034 = vmax.f32 %v3032, %v3033
  %v3035 = vrot.slane %v3034, 1
  %v3036 = vmax.f32 %v3034, %v3035
  %v3037 = vsel %vm2893, %v2681, -inf
  %v3038 = vsel %vm2893, %v2682, -inf
  %v3039 = vmax.f32 %v3037, %v3038
  %v3040 = vsel %vm2893, %v2683, -inf
  %v3041 = vmax.f32 %v3039, %v3040
  %v3042 = vsel %vm2893, %v2684, -inf
  %v3043 = vmax.f32 %v3041, %v3042
  %v3044 = vrot.slane %v3043, 4
  %v3045 = vmax.f32 %v3043, %v3044
  %v3046 = vrot.slane %v3045, 2
  %v3047 = vmax.f32 %v3045, %v3046
  %v3048 = vrot.slane %v3047, 1
  %v3049 = vmax.f32 %v3047, %v3048
  %v3050 = vsel %vm2893, %v2685, -inf
  %v3051 = vsel %vm2893, %v2686, -inf
  %v3052 = vmax.f32 %v3050, %v3051
  %v3053 = vsel %vm2893, %v2687, -inf
  %v3054 = vmax.f32 %v3052, %v3053
  %v3055 = vsel %vm2893, %v2688, -inf
  %v3056 = vmax.f32 %v3054, %v3055
  %v3057 = vrot.slane %v3056, 4
  %v3058 = vmax.f32 %v3056, %v3057
  %v3059 = vrot.slane %v3058, 2
  %v3060 = vmax.f32 %v3058, %v3059
  %v3061 = vrot.slane %v3060, 1
  %v3062 = vmax.f32 %v3060, %v3061
  %v3063 = vsel %vm2893, %v2689, -inf
  %v3064 = vsel %vm2893, %v2690, -inf
  %v3065 = vmax.f32 %v3063, %v3064
  %v3066 = vsel %vm2893, %v2691, -inf
  %v3067 = vmax.f32 %v3065, %v3066
  %v3068 = vsel %vm2893, %v2692, -inf
  %v3069 = vmax.f32 %v3067, %v3068
  %v3070 = vrot.slane %v3069, 4
  %v3071 = vmax.f32 %v3069, %v3070
  %v3072 = vrot.slane %v3071, 2
  %v3073 = vmax.f32 %v3071, %v3072
  %v3074 = vrot.slane %v3073, 1
  %v3075 = vmax.f32 %v3073, %v3074
  %v3076 = vsel %vm2893, %v2693, -inf
  %v3077 = vsel %vm2893, %v2694, -inf
  %v3078 = vmax.f32 %v3076, %v3077
  %v3079 = vsel %vm2893, %v2695, -inf
  %v3080 = vmax.f32 %v3078, %v3079
  %v3081 = vsel %vm2893, %v2696, -inf
  %v3082 = vmax.f32 %v3080, %v3081
  %v3083 = vrot.slane %v3082, 4
  %v3084 = vmax.f32 %v3082, %v3083
  %v3085 = vrot.slane %v3084, 2
  %v3086 = vmax.f32 %v3084, %v3085
  %v3087 = vrot.slane %v3086, 1
  %v3088 = vmax.f32 %v3086, %v3087
  %v3089 = vsel %vm2893, %v2697, -inf
  %v3090 = vsel %vm2893, %v2698, -inf
  %v3091 = vmax.f32 %v3089, %v3090
  %v3092 = vsel %vm2893, %v2699, -inf
  %v3093 = vmax.f32 %v3091, %v3092
  %v3094 = vsel %vm2893, %v2700, -inf
  %v3095 = vmax.f32 %v3093, %v3094
  %v3096 = vrot.slane %v3095, 4
  %v3097 = vmax.f32 %v3095, %v3096
  %v3098 = vrot.slane %v3097, 2
  %v3099 = vmax.f32 %v3097, %v3098
  %v3100 = vrot.slane %v3099, 1
  %v3101 = vmax.f32 %v3099, %v3100
  %v3102 = vsel %vm2893, %v2701, -inf
  %v3103 = vsel %vm2893, %v2702, -inf
  %v3104 = vmax.f32 %v3102, %v3103
  %v3105 = vsel %vm2893, %v2703, -inf
  %v3106 = vmax.f32 %v3104, %v3105
  %v3107 = vsel %vm2893, %v2704, -inf
  %v3108 = vmax.f32 %v3106, %v3107
  %v3109 = vrot.slane %v3108, 4
  %v3110 = vmax.f32 %v3108, %v3109
  %v3111 = vrot.slane %v3110, 2
  %v3112 = vmax.f32 %v3110, %v3111
  %v3113 = vrot.slane %v3112, 1
  %v3114 = vmax.f32 %v3112, %v3113
  %v3115 = vsel %vm2893, %v2705, -inf
  %v3116 = vsel %vm2893, %v2706, -inf
  %v3117 = vmax.f32 %v3115, %v3116
  %v3118 = vsel %vm2893, %v2707, -inf
  %v3119 = vmax.f32 %v3117, %v3118
  %v3120 = vsel %vm2893, %v2708, -inf
  %v3121 = vmax.f32 %v3119, %v3120
  %v3122 = vrot.slane %v3121, 4
  %v3123 = vmax.f32 %v3121, %v3122
  %v3124 = vrot.slane %v3123, 2
  %v3125 = vmax.f32 %v3123, %v3124
  %v3126 = vrot.slane %v3125, 1
  %v3127 = vmax.f32 %v3125, %v3126
  %v3128 = vsel %vm2893, %v2709, -inf
  %v3129 = vsel %vm2893, %v2710, -inf
  %v3130 = vmax.f32 %v3128, %v3129
  %v3131 = vsel %vm2893, %v2711, -inf
  %v3132 = vmax.f32 %v3130, %v3131
  %v3133 = vsel %vm2893, %v2712, -inf
  %v3134 = vmax.f32 %v3132, %v3133
  %v3135 = vrot.slane %v3134, 4
  %v3136 = vmax.f32 %v3134, %v3135
  %v3137 = vrot.slane %v3136, 2
  %v3138 = vmax.f32 %v3136, %v3137
  %v3139 = vrot.slane %v3138, 1
  %v3140 = vmax.f32 %v3138, %v3139
  %v3141 = vsel %vm2893, %v2713, -inf
  %v3142 = vsel %vm2893, %v2714, -inf
  %v3143 = vmax.f32 %v3141, %v3142
  %v3144 = vsel %vm2893, %v2715, -inf
  %v3145 = vmax.f32 %v3143, %v3144
  %v3146 = vsel %vm2893, %v2716, -inf
  %v3147 = vmax.f32 %v3145, %v3146
  %v3148 = vrot.slane %v3147, 4
  %v3149 = vmax.f32 %v3147, %v3148
  %v3150 = vrot.slane %v3149, 2
  %v3151 = vmax.f32 %v3149, %v3150
  %v3152 = vrot.slane %v3151, 1
  %v3153 = vmax.f32 %v3151, %v3152
  %v3154 = vsel %vm2893, %v2717, -inf
  %v3155 = vsel %vm2893, %v2718, -inf
  %v3156 = vmax.f32 %v3154, %v3155
  %v3157 = vsel %vm2893, %v2719, -inf
  %v3158 = vmax.f32 %v3156, %v3157
  %v3159 = vsel %vm2893, %v2720, -inf
  %v3160 = vmax.f32 %v3158, %v3159
  %v3161 = vrot.slane %v3160, 4
  %v3162 = vmax.f32 %v3160, %v3161
  %v3163 = vrot.slane %v3162, 2
  %v3164 = vmax.f32 %v3162, %v3163
  %v3165 = vrot.slane %v3164, 1
  %v3166 = vmax.f32 %v3164, %v3165
  %v3167 = vsel %vm2893, %v2721, -inf
  %v3168 = vsel %vm2893, %v2722, -inf
  %v3169 = vmax.f32 %v3167, %v3168
  %v3170 = vsel %vm2893, %v2723, -inf
  %v3171 = vmax.f32 %v3169, %v3170
  %v3172 = vsel %vm2893, %v2724, -inf
  %v3173 = vmax.f32 %v3171, %v3172
  %v3174 = vrot.slane %v3173, 4
  %v3175 = vmax.f32 %v3173, %v3174
  %v3176 = vrot.slane %v3175, 2
  %v3177 = vmax.f32 %v3175, %v3176
  %v3178 = vrot.slane %v3177, 1
  %v3179 = vmax.f32 %v3177, %v3178
  %v3180 = vsel %vm2893, %v2725, -inf
  %v3181 = vsel %vm2893, %v2726, -inf
  %v3182 = vmax.f32 %v3180, %v3181
  %v3183 = vsel %vm2893, %v2727, -inf
  %v3184 = vmax.f32 %v3182, %v3183
  %v3185 = vsel %vm2893, %v2728, -inf
  %v3186 = vmax.f32 %v3184, %v3185
  %v3187 = vrot.slane %v3186, 4
  %v3188 = vmax.f32 %v3186, %v3187
  %v3189 = vrot.slane %v3188, 2
  %v3190 = vmax.f32 %v3188, %v3189
  %v3191 = vrot.slane %v3190, 1
  %v3192 = vmax.f32 %v3190, %v3191
  %v3193 = vsel %vm2893, %v2729, -inf
  %v3194 = vsel %vm2893, %v2730, -inf
  %v3195 = vmax.f32 %v3193, %v3194
  %v3196 = vsel %vm2893, %v2731, -inf
  %v3197 = vmax.f32 %v3195, %v3196
  %v3198 = vsel %vm2893, %v2732, -inf
  %v3199 = vmax.f32 %v3197, %v3198
  %v3200 = vrot.slane %v3199, 4
  %v3201 = vmax.f32 %v3199, %v3200
  %v3202 = vrot.slane %v3201, 2
  %v3203 = vmax.f32 %v3201, %v3202
  %v3204 = vrot.slane %v3203, 1
  %v3205 = vmax.f32 %v3203, %v3204
  %v3206 = vsel %vm2893, %v2733, -inf
  %v3207 = vsel %vm2893, %v2734, -inf
  %v3208 = vmax.f32 %v3206, %v3207
  %v3209 = vsel %vm2893, %v2735, -inf
  %v3210 = vmax.f32 %v3208, %v3209
  %v3211 = vsel %vm2893, %v2736, -inf
  %v3212 = vmax.f32 %v3210, %v3211
  %v3213 = vrot.slane %v3212, 4
  %v3214 = vmax.f32 %v3212, %v3213
  %v3215 = vrot.slane %v3214, 2
  %v3216 = vmax.f32 %v3214, %v3215
  %v3217 = vrot.slane %v3216, 1
  %v3218 = vmax.f32 %v3216, %v3217
  %v3219 = vsel %vm2893, %v2737, -inf
  %v3220 = vsel %vm2893, %v2738, -inf
  %v3221 = vmax.f32 %v3219, %v3220
  %v3222 = vsel %vm2893, %v2739, -inf
  %v3223 = vmax.f32 %v3221, %v3222
  %v3224 = vsel %vm2893, %v2740, -inf
  %v3225 = vmax.f32 %v3223, %v3224
  %v3226 = vrot.slane %v3225, 4
  %v3227 = vmax.f32 %v3225, %v3226
  %v3228 = vrot.slane %v3227, 2
  %v3229 = vmax.f32 %v3227, %v3228
  %v3230 = vrot.slane %v3229, 1
  %v3231 = vmax.f32 %v3229, %v3230
  %v3232 = vsel %vm2893, %v2741, -inf
  %v3233 = vsel %vm2893, %v2742, -inf
  %v3234 = vmax.f32 %v3232, %v3233
  %v3235 = vsel %vm2893, %v2743, -inf
  %v3236 = vmax.f32 %v3234, %v3235
  %v3237 = vsel %vm2893, %v2744, -inf
  %v3238 = vmax.f32 %v3236, %v3237
  %v3239 = vrot.slane %v3238, 4
  %v3240 = vmax.f32 %v3238, %v3239
  %v3241 = vrot.slane %v3240, 2
  %v3242 = vmax.f32 %v3240, %v3241
  %v3243 = vrot.slane %v3242, 1
  %v3244 = vmax.f32 %v3242, %v3243
  %v3245 = vsel %vm2893, %v2745, -inf
  %v3246 = vsel %vm2893, %v2746, -inf
  %v3247 = vmax.f32 %v3245, %v3246
  %v3248 = vsel %vm2893, %v2747, -inf
  %v3249 = vmax.f32 %v3247, %v3248
  %v3250 = vsel %vm2893, %v2748, -inf
  %v3251 = vmax.f32 %v3249, %v3250
  %v3252 = vrot.slane %v3251, 4
  %v3253 = vmax.f32 %v3251, %v3252
  %v3254 = vrot.slane %v3253, 2
  %v3255 = vmax.f32 %v3253, %v3254
  %v3256 = vrot.slane %v3255, 1
  %v3257 = vmax.f32 %v3255, %v3256
  %v3258 = vsel %vm2893, %v2749, -inf
  %v3259 = vsel %vm2893, %v2750, -inf
  %v3260 = vmax.f32 %v3258, %v3259
  %v3261 = vsel %vm2893, %v2751, -inf
  %v3262 = vmax.f32 %v3260, %v3261
  %v3263 = vsel %vm2893, %v2752, -inf
  %v3264 = vmax.f32 %v3262, %v3263
  %v3265 = vrot.slane %v3264, 4
  %v3266 = vmax.f32 %v3264, %v3265
  %v3267 = vrot.slane %v3266, 2
  %v3268 = vmax.f32 %v3266, %v3267
  %v3269 = vrot.slane %v3268, 1
  %v3270 = vmax.f32 %v3268, %v3269
  %v3271 = vsel %vm2893, %v2753, -inf
  %v3272 = vsel %vm2893, %v2754, -inf
  %v3273 = vmax.f32 %v3271, %v3272
  %v3274 = vsel %vm2893, %v2755, -inf
  %v3275 = vmax.f32 %v3273, %v3274
  %v3276 = vsel %vm2893, %v2756, -inf
  %v3277 = vmax.f32 %v3275, %v3276
  %v3278 = vrot.slane %v3277, 4
  %v3279 = vmax.f32 %v3277, %v3278
  %v3280 = vrot.slane %v3279, 2
  %v3281 = vmax.f32 %v3279, %v3280
  %v3282 = vrot.slane %v3281, 1
  %v3283 = vmax.f32 %v3281, %v3282
  %v3284 = vsel %vm2893, %v2757, -inf
  %v3285 = vsel %vm2893, %v2758, -inf
  %v3286 = vmax.f32 %v3284, %v3285
  %v3287 = vsel %vm2893, %v2759, -inf
  %v3288 = vmax.f32 %v3286, %v3287
  %v3289 = vsel %vm2893, %v2760, -inf
  %v3290 = vmax.f32 %v3288, %v3289
  %v3291 = vrot.slane %v3290, 4
  %v3292 = vmax.f32 %v3290, %v3291
  %v3293 = vrot.slane %v3292, 2
  %v3294 = vmax.f32 %v3292, %v3293
  %v3295 = vrot.slane %v3294, 1
  %v3296 = vmax.f32 %v3294, %v3295
  %v3297 = vsel %vm2893, %v2761, -inf
  %v3298 = vsel %vm2893, %v2762, -inf
  %v3299 = vmax.f32 %v3297, %v3298
  %v3300 = vsel %vm2893, %v2763, -inf
  %v3301 = vmax.f32 %v3299, %v3300
  %v3302 = vsel %vm2893, %v2764, -inf
  %v3303 = vmax.f32 %v3301, %v3302
  %v3304 = vrot.slane %v3303, 4
  %v3305 = vmax.f32 %v3303, %v3304
  %v3306 = vrot.slane %v3305, 2
  %v3307 = vmax.f32 %v3305, %v3306
  %v3308 = vrot.slane %v3307, 1
  %v3309 = vmax.f32 %v3307, %v3308
  %v3310 = vsel %vm2893, %v2765, -inf
  %v3311 = vsel %vm2893, %v2766, -inf
  %v3312 = vmax.f32 %v3310, %v3311
  %v3313 = vsel %vm2893, %v2767, -inf
  %v3314 = vmax.f32 %v3312, %v3313
  %v3315 = vsel %vm2893, %v2768, -inf
  %v3316 = vmax.f32 %v3314, %v3315
  %v3317 = vrot.slane %v3316, 4
  %v3318 = vmax.f32 %v3316, %v3317
  %v3319 = vrot.slane %v3318, 2
  %v3320 = vmax.f32 %v3318, %v3319
  %v3321 = vrot.slane %v3320, 1
  %v3322 = vmax.f32 %v3320, %v3321
  %v3323 = vsel %vm2893, %v2769, -inf
  %v3324 = vsel %vm2893, %v2770, -inf
  %v3325 = vmax.f32 %v3323, %v3324
  %v3326 = vsel %vm2893, %v2771, -inf
  %v3327 = vmax.f32 %v3325, %v3326
  %v3328 = vsel %vm2893, %v2772, -inf
  %v3329 = vmax.f32 %v3327, %v3328
  %v3330 = vrot.slane %v3329, 4
  %v3331 = vmax.f32 %v3329, %v3330
  %v3332 = vrot.slane %v3331, 2
  %v3333 = vmax.f32 %v3331, %v3332
  %v3334 = vrot.slane %v3333, 1
  %v3335 = vmax.f32 %v3333, %v3334
  %v3336 = vsel %vm2893, %v2773, -inf
  %v3337 = vsel %vm2893, %v2774, -inf
  %v3338 = vmax.f32 %v3336, %v3337
  %v3339 = vsel %vm2893, %v2775, -inf
  %v3340 = vmax.f32 %v3338, %v3339
  %v3341 = vsel %vm2893, %v2776, -inf
  %v3342 = vmax.f32 %v3340, %v3341
  %v3343 = vrot.slane %v3342, 4
  %v3344 = vmax.f32 %v3342, %v3343
  %v3345 = vrot.slane %v3344, 2
  %v3346 = vmax.f32 %v3344, %v3345
  %v3347 = vrot.slane %v3346, 1
  %v3348 = vmax.f32 %v3346, %v3347
  %v3349 = vsel %vm2893, %v2777, -inf
  %v3350 = vsel %vm2893, %v2778, -inf
  %v3351 = vmax.f32 %v3349, %v3350
  %v3352 = vsel %vm2893, %v2779, -inf
  %v3353 = vmax.f32 %v3351, %v3352
  %v3354 = vsel %vm2893, %v2780, -inf
  %v3355 = vmax.f32 %v3353, %v3354
  %v3356 = vrot.slane %v3355, 4
  %v3357 = vmax.f32 %v3355, %v3356
  %v3358 = vrot.slane %v3357, 2
  %v3359 = vmax.f32 %v3357, %v3358
  %v3360 = vrot.slane %v3359, 1
  %v3361 = vmax.f32 %v3359, %v3360
  %v3362 = vsel %vm2893, %v2781, -inf
  %v3363 = vsel %vm2893, %v2782, -inf
  %v3364 = vmax.f32 %v3362, %v3363
  %v3365 = vsel %vm2893, %v2783, -inf
  %v3366 = vmax.f32 %v3364, %v3365
  %v3367 = vsel %vm2893, %v2784, -inf
  %v3368 = vmax.f32 %v3366, %v3367
  %v3369 = vrot.slane %v3368, 4
  %v3370 = vmax.f32 %v3368, %v3369
  %v3371 = vrot.slane %v3370, 2
  %v3372 = vmax.f32 %v3370, %v3371
  %v3373 = vrot.slane %v3372, 1
  %v3374 = vmax.f32 %v3372, %v3373
  %v3375 = vsel %vm2893, %v2785, -inf
  %v3376 = vsel %vm2893, %v2786, -inf
  %v3377 = vmax.f32 %v3375, %v3376
  %v3378 = vsel %vm2893, %v2787, -inf
  %v3379 = vmax.f32 %v3377, %v3378
  %v3380 = vsel %vm2893, %v2788, -inf
  %v3381 = vmax.f32 %v3379, %v3380
  %v3382 = vrot.slane %v3381, 4
  %v3383 = vmax.f32 %v3381, %v3382
  %v3384 = vrot.slane %v3383, 2
  %v3385 = vmax.f32 %v3383, %v3384
  %v3386 = vrot.slane %v3385, 1
  %v3387 = vmax.f32 %v3385, %v3386
  %v3388 = vsel %vm2893, %v2789, -inf
  %v3389 = vsel %vm2893, %v2790, -inf
  %v3390 = vmax.f32 %v3388, %v3389
  %v3391 = vsel %vm2893, %v2791, -inf
  %v3392 = vmax.f32 %v3390, %v3391
  %v3393 = vsel %vm2893, %v2792, -inf
  %v3394 = vmax.f32 %v3392, %v3393
  %v3395 = vrot.slane %v3394, 4
  %v3396 = vmax.f32 %v3394, %v3395
  %v3397 = vrot.slane %v3396, 2
  %v3398 = vmax.f32 %v3396, %v3397
  %v3399 = vrot.slane %v3398, 1
  %v3400 = vmax.f32 %v3398, %v3399
  %v3401 = vsel %vm2893, %v2793, -inf
  %v3402 = vsel %vm2893, %v2794, -inf
  %v3403 = vmax.f32 %v3401, %v3402
  %v3404 = vsel %vm2893, %v2795, -inf
  %v3405 = vmax.f32 %v3403, %v3404
  %v3406 = vsel %vm2893, %v2796, -inf
  %v3407 = vmax.f32 %v3405, %v3406
  %v3408 = vrot.slane %v3407, 4
  %v3409 = vmax.f32 %v3407, %v3408
  %v3410 = vrot.slane %v3409, 2
  %v3411 = vmax.f32 %v3409, %v3410
  %v3412 = vrot.slane %v3411, 1
  %v3413 = vmax.f32 %v3411, %v3412
  %v3414 = vsel %vm2893, %v2797, -inf
  %v3415 = vsel %vm2893, %v2798, -inf
  %v3416 = vmax.f32 %v3414, %v3415
  %v3417 = vsel %vm2893, %v2799, -inf
  %v3418 = vmax.f32 %v3416, %v3417
  %v3419 = vsel %vm2893, %v2800, -inf
  %v3420 = vmax.f32 %v3418, %v3419
  %v3421 = vrot.slane %v3420, 4
  %v3422 = vmax.f32 %v3420, %v3421
  %v3423 = vrot.slane %v3422, 2
  %v3424 = vmax.f32 %v3422, %v3423
  %v3425 = vrot.slane %v3424, 1
  %v3426 = vmax.f32 %v3424, %v3425
  %v3427 = vsel %vm2893, %v2801, -inf
  %v3428 = vsel %vm2893, %v2802, -inf
  %v3429 = vmax.f32 %v3427, %v3428
  %v3430 = vsel %vm2893, %v2803, -inf
  %v3431 = vmax.f32 %v3429, %v3430
  %v3432 = vsel %vm2893, %v2804, -inf
  %v3433 = vmax.f32 %v3431, %v3432
  %v3434 = vrot.slane %v3433, 4
  %v3435 = vmax.f32 %v3433, %v3434
  %v3436 = vrot.slane %v3435, 2
  %v3437 = vmax.f32 %v3435, %v3436
  %v3438 = vrot.slane %v3437, 1
  %v3439 = vmax.f32 %v3437, %v3438
  %v3440 = vsel %vm2893, %v2805, -inf
  %v3441 = vsel %vm2893, %v2806, -inf
  %v3442 = vmax.f32 %v3440, %v3441
  %v3443 = vsel %vm2893, %v2807, -inf
  %v3444 = vmax.f32 %v3442, %v3443
  %v3445 = vsel %vm2893, %v2808, -inf
  %v3446 = vmax.f32 %v3444, %v3445
  %v3447 = vrot.slane %v3446, 4
  %v3448 = vmax.f32 %v3446, %v3447
  %v3449 = vrot.slane %v3448, 2
  %v3450 = vmax.f32 %v3448, %v3449
  %v3451 = vrot.slane %v3450, 1
  %v3452 = vmax.f32 %v3450, %v3451
  %v3453 = vsel %vm2893, %v2809, -inf
  %v3454 = vsel %vm2893, %v2810, -inf
  %v3455 = vmax.f32 %v3453, %v3454
  %v3456 = vsel %vm2893, %v2811, -inf
  %v3457 = vmax.f32 %v3455, %v3456
  %v3458 = vsel %vm2893, %v2812, -inf
  %v3459 = vmax.f32 %v3457, %v3458
  %v3460 = vrot.slane %v3459, 4
  %v3461 = vmax.f32 %v3459, %v3460
  %v3462 = vrot.slane %v3461, 2
  %v3463 = vmax.f32 %v3461, %v3462
  %v3464 = vrot.slane %v3463, 1
  %v3465 = vmax.f32 %v3463, %v3464
  %v3466 = vsel %vm2893, %v2813, -inf
  %v3467 = vsel %vm2893, %v2814, -inf
  %v3468 = vmax.f32 %v3466, %v3467
  %v3469 = vsel %vm2893, %v2815, -inf
  %v3470 = vmax.f32 %v3468, %v3469
  %v3471 = vsel %vm2893, %v2816, -inf
  %v3472 = vmax.f32 %v3470, %v3471
  %v3473 = vrot.slane %v3472, 4
  %v3474 = vmax.f32 %v3472, %v3473
  %v3475 = vrot.slane %v3474, 2
  %v3476 = vmax.f32 %v3474, %v3475
  %v3477 = vrot.slane %v3476, 1
  %v3478 = vmax.f32 %v3476, %v3477
  %v3479 = vsel %vm2893, %v2817, -inf
  %v3480 = vsel %vm2893, %v2818, -inf
  %v3481 = vmax.f32 %v3479, %v3480
  %v3482 = vsel %vm2893, %v2819, -inf
  %v3483 = vmax.f32 %v3481, %v3482
  %v3484 = vsel %vm2893, %v2820, -inf
  %v3485 = vmax.f32 %v3483, %v3484
  %v3486 = vrot.slane %v3485, 4
  %v3487 = vmax.f32 %v3485, %v3486
  %v3488 = vrot.slane %v3487, 2
  %v3489 = vmax.f32 %v3487, %v3488
  %v3490 = vrot.slane %v3489, 1
  %v3491 = vmax.f32 %v3489, %v3490
  %v3492 = vsel %vm2893, %v2821, -inf
  %v3493 = vsel %vm2893, %v2822, -inf
  %v3494 = vmax.f32 %v3492, %v3493
  %v3495 = vsel %vm2893, %v2823, -inf
  %v3496 = vmax.f32 %v3494, %v3495
  %v3497 = vsel %vm2893, %v2824, -inf
  %v3498 = vmax.f32 %v3496, %v3497
  %v3499 = vrot.slane %v3498, 4
  %v3500 = vmax.f32 %v3498, %v3499
  %v3501 = vrot.slane %v3500, 2
  %v3502 = vmax.f32 %v3500, %v3501
  %v3503 = vrot.slane %v3502, 1
  %v3504 = vmax.f32 %v3502, %v3503
  %v3505 = vsel %vm2893, %v2825, -inf
  %v3506 = vsel %vm2893, %v2826, -inf
  %v3507 = vmax.f32 %v3505, %v3506
  %v3508 = vsel %vm2893, %v2827, -inf
  %v3509 = vmax.f32 %v3507, %v3508
  %v3510 = vsel %vm2893, %v2828, -inf
  %v3511 = vmax.f32 %v3509, %v3510
  %v3512 = vrot.slane %v3511, 4
  %v3513 = vmax.f32 %v3511, %v3512
  %v3514 = vrot.slane %v3513, 2
  %v3515 = vmax.f32 %v3513, %v3514
  %v3516 = vrot.slane %v3515, 1
  %v3517 = vmax.f32 %v3515, %v3516
  %v3518 = vsel %vm2893, %v2829, -inf
  %v3519 = vsel %vm2893, %v2830, -inf
  %v3520 = vmax.f32 %v3518, %v3519
  %v3521 = vsel %vm2893, %v2831, -inf
  %v3522 = vmax.f32 %v3520, %v3521
  %v3523 = vsel %vm2893, %v2832, -inf
  %v3524 = vmax.f32 %v3522, %v3523
  %v3525 = vrot.slane %v3524, 4
  %v3526 = vmax.f32 %v3524, %v3525
  %v3527 = vrot.slane %v3526, 2
  %v3528 = vmax.f32 %v3526, %v3527
  %v3529 = vrot.slane %v3528, 1
  %v3530 = vmax.f32 %v3528, %v3529
  %v3531 = vsel %vm2893, %v2833, -inf
  %v3532 = vsel %vm2893, %v2834, -inf
  %v3533 = vmax.f32 %v3531, %v3532
  %v3534 = vsel %vm2893, %v2835, -inf
  %v3535 = vmax.f32 %v3533, %v3534
  %v3536 = vsel %vm2893, %v2836, -inf
  %v3537 = vmax.f32 %v3535, %v3536
  %v3538 = vrot.slane %v3537, 4
  %v3539 = vmax.f32 %v3537, %v3538
  %v3540 = vrot.slane %v3539, 2
  %v3541 = vmax.f32 %v3539, %v3540
  %v3542 = vrot.slane %v3541, 1
  %v3543 = vmax.f32 %v3541, %v3542
  %v3544 = vsel %vm2893, %v2837, -inf
  %v3545 = vsel %vm2893, %v2838, -inf
  %v3546 = vmax.f32 %v3544, %v3545
  %v3547 = vsel %vm2893, %v2839, -inf
  %v3548 = vmax.f32 %v3546, %v3547
  %v3549 = vsel %vm2893, %v2840, -inf
  %v3550 = vmax.f32 %v3548, %v3549
  %v3551 = vrot.slane %v3550, 4
  %v3552 = vmax.f32 %v3550, %v3551
  %v3553 = vrot.slane %v3552, 2
  %v3554 = vmax.f32 %v3552, %v3553
  %v3555 = vrot.slane %v3554, 1
  %v3556 = vmax.f32 %v3554, %v3555
  %v3557 = vsel %vm2893, %v2841, -inf
  %v3558 = vsel %vm2893, %v2842, -inf
  %v3559 = vmax.f32 %v3557, %v3558
  %v3560 = vsel %vm2893, %v2843, -inf
  %v3561 = vmax.f32 %v3559, %v3560
  %v3562 = vsel %vm2893, %v2844, -inf
  %v3563 = vmax.f32 %v3561, %v3562
  %v3564 = vrot.slane %v3563, 4
  %v3565 = vmax.f32 %v3563, %v3564
  %v3566 = vrot.slane %v3565, 2
  %v3567 = vmax.f32 %v3565, %v3566
  %v3568 = vrot.slane %v3567, 1
  %v3569 = vmax.f32 %v3567, %v3568
  %v3570 = vsel %vm2893, %v2845, -inf
  %v3571 = vsel %vm2893, %v2846, -inf
  %v3572 = vmax.f32 %v3570, %v3571
  %v3573 = vsel %vm2893, %v2847, -inf
  %v3574 = vmax.f32 %v3572, %v3573
  %v3575 = vsel %vm2893, %v2848, -inf
  %v3576 = vmax.f32 %v3574, %v3575
  %v3577 = vrot.slane %v3576, 4
  %v3578 = vmax.f32 %v3576, %v3577
  %v3579 = vrot.slane %v3578, 2
  %v3580 = vmax.f32 %v3578, %v3579
  %v3581 = vrot.slane %v3580, 1
  %v3582 = vmax.f32 %v3580, %v3581
  %v3583 = vsel %vm2893, %v2849, -inf
  %v3584 = vsel %vm2893, %v2850, -inf
  %v3585 = vmax.f32 %v3583, %v3584
  %v3586 = vsel %vm2893, %v2851, -inf
  %v3587 = vmax.f32 %v3585, %v3586
  %v3588 = vsel %vm2893, %v2852, -inf
  %v3589 = vmax.f32 %v3587, %v3588
  %v3590 = vrot.slane %v3589, 4
  %v3591 = vmax.f32 %v3589, %v3590
  %v3592 = vrot.slane %v3591, 2
  %v3593 = vmax.f32 %v3591, %v3592
  %v3594 = vrot.slane %v3593, 1
  %v3595 = vmax.f32 %v3593, %v3594
  %v3596 = vsel %vm2893, %v2853, -inf
  %v3597 = vsel %vm2893, %v2854, -inf
  %v3598 = vmax.f32 %v3596, %v3597
  %v3599 = vsel %vm2893, %v2855, -inf
  %v3600 = vmax.f32 %v3598, %v3599
  %v3601 = vsel %vm2893, %v2856, -inf
  %v3602 = vmax.f32 %v3600, %v3601
  %v3603 = vrot.slane %v3602, 4
  %v3604 = vmax.f32 %v3602, %v3603
  %v3605 = vrot.slane %v3604, 2
  %v3606 = vmax.f32 %v3604, %v3605
  %v3607 = vrot.slane %v3606, 1
  %v3608 = vmax.f32 %v3606, %v3607
  %v3609 = vsel %vm2893, %v2857, -inf
  %v3610 = vsel %vm2893, %v2858, -inf
  %v3611 = vmax.f32 %v3609, %v3610
  %v3612 = vsel %vm2893, %v2859, -inf
  %v3613 = vmax.f32 %v3611, %v3612
  %v3614 = vsel %vm2893, %v2860, -inf
  %v3615 = vmax.f32 %v3613, %v3614
  %v3616 = vrot.slane %v3615, 4
  %v3617 = vmax.f32 %v3615, %v3616
  %v3618 = vrot.slane %v3617, 2
  %v3619 = vmax.f32 %v3617, %v3618
  %v3620 = vrot.slane %v3619, 1
  %v3621 = vmax.f32 %v3619, %v3620
  %v3622 = vsel %vm2893, %v2861, -inf
  %v3623 = vsel %vm2893, %v2862, -inf
  %v3624 = vmax.f32 %v3622, %v3623
  %v3625 = vsel %vm2893, %v2863, -inf
  %v3626 = vmax.f32 %v3624, %v3625
  %v3627 = vsel %vm2893, %v2864, -inf
  %v3628 = vmax.f32 %v3626, %v3627
  %v3629 = vrot.slane %v3628, 4
  %v3630 = vmax.f32 %v3628, %v3629
  %v3631 = vrot.slane %v3630, 2
  %v3632 = vmax.f32 %v3630, %v3631
  %v3633 = vrot.slane %v3632, 1
  %v3634 = vmax.f32 %v3632, %v3633
  %v3635 = vsel %vm2893, %v2865, -inf
  %v3636 = vsel %vm2893, %v2866, -inf
  %v3637 = vmax.f32 %v3635, %v3636
  %v3638 = vsel %vm2893, %v2867, -inf
  %v3639 = vmax.f32 %v3637, %v3638
  %v3640 = vsel %vm2893, %v2868, -inf
  %v3641 = vmax.f32 %v3639, %v3640
  %v3642 = vrot.slane %v3641, 4
  %v3643 = vmax.f32 %v3641, %v3642
  %v3644 = vrot.slane %v3643, 2
  %v3645 = vmax.f32 %v3643, %v3644
  %v3646 = vrot.slane %v3645, 1
  %v3647 = vmax.f32 %v3645, %v3646
  %v3648 = vsel %vm2893, %v2869, -inf
  %v3649 = vsel %vm2893, %v2870, -inf
  %v3650 = vmax.f32 %v3648, %v3649
  %v3651 = vsel %vm2893, %v2871, -inf
  %v3652 = vmax.f32 %v3650, %v3651
  %v3653 = vsel %vm2893, %v2872, -inf
  %v3654 = vmax.f32 %v3652, %v3653
  %v3655 = vrot.slane %v3654, 4
  %v3656 = vmax.f32 %v3654, %v3655
  %v3657 = vrot.slane %v3656, 2
  %v3658 = vmax.f32 %v3656, %v3657
  %v3659 = vrot.slane %v3658, 1
  %v3660 = vmax.f32 %v3658, %v3659
  %v3661 = vsel %vm2893, %v2873, -inf
  %v3662 = vsel %vm2893, %v2874, -inf
  %v3663 = vmax.f32 %v3661, %v3662
  %v3664 = vsel %vm2893, %v2875, -inf
  %v3665 = vmax.f32 %v3663, %v3664
  %v3666 = vsel %vm2893, %v2876, -inf
  %v3667 = vmax.f32 %v3665, %v3666
  %v3668 = vrot.slane %v3667, 4
  %v3669 = vmax.f32 %v3667, %v3668
  %v3670 = vrot.slane %v3669, 2
  %v3671 = vmax.f32 %v3669, %v3670
  %v3672 = vrot.slane %v3671, 1
  %v3673 = vmax.f32 %v3671, %v3672
  %v3674 = vsel %vm2893, %v2877, -inf
  %v3675 = vsel %vm2893, %v2878, -inf
  %v3676 = vmax.f32 %v3674, %v3675
  %v3677 = vsel %vm2893, %v2879, -inf
  %v3678 = vmax.f32 %v3676, %v3677
  %v3679 = vsel %vm2893, %v2880, -inf
  %v3680 = vmax.f32 %v3678, %v3679
  %v3681 = vrot.slane %v3680, 4
  %v3682 = vmax.f32 %v3680, %v3681
  %v3683 = vrot.slane %v3682, 2
  %v3684 = vmax.f32 %v3682, %v3683
  %v3685 = vrot.slane %v3684, 1
  %v3686 = vmax.f32 %v3684, %v3685
  %v3687 = vsel %vm2893, %v2881, -inf
  %v3688 = vsel %vm2893, %v2882, -inf
  %v3689 = vmax.f32 %v3687, %v3688
  %v3690 = vsel %vm2893, %v2883, -inf
  %v3691 = vmax.f32 %v3689, %v3690
  %v3692 = vsel %vm2893, %v2884, -inf
  %v3693 = vmax.f32 %v3691, %v3692
  %v3694 = vrot.slane %v3693, 4
  %v3695 = vmax.f32 %v3693, %v3694
  %v3696 = vrot.slane %v3695, 2
  %v3697 = vmax.f32 %v3695, %v3696
  %v3698 = vrot.slane %v3697, 1
  %v3699 = vmax.f32 %v3697, %v3698
  %v3700 = vsel %vm2893, %v2885, -inf
  %v3701 = vsel %vm2893, %v2886, -inf
  %v3702 = vmax.f32 %v3700, %v3701
  %v3703 = vsel %vm2893, %v2887, -inf
  %v3704 = vmax.f32 %v3702, %v3703
  %v3705 = vsel %vm2893, %v2888, -inf
  %v3706 = vmax.f32 %v3704, %v3705
  %v3707 = vrot.slane %v3706, 4
  %v3708 = vmax.f32 %v3706, %v3707
  %v3709 = vrot.slane %v3708, 2
  %v3710 = vmax.f32 %v3708, %v3709
  %v3711 = vrot.slane %v3710, 1
  %v3712 = vmax.f32 %v3710, %v3711
  %v3713 = vsel %vm2893, %v2889, -inf
  %v3714 = vsel %vm2893, %v2890, -inf
  %v3715 = vmax.f32 %v3713, %v3714
  %v3716 = vsel %vm2893, %v2891, -inf
  %v3717 = vmax.f32 %v3715, %v3716
  %v3718 = vsel %vm2893, %v2892, -inf
  %v3719 = vmax.f32 %v3717, %v3718
  %v3720 = vrot.slane %v3719, 4
  %v3721 = vmax.f32 %v3719, %v3720
  %v3722 = vrot.slane %v3721, 2
  %v3723 = vmax.f32 %v3721, %v3722
  %v3724 = vrot.slane %v3723, 1
  %v3725 = vmax.f32 %v3723, %v3724
  %v3726 = vsel %vm2893, %v2364, -inf
  %v3727 = vsel %vm2893, %v2368, -inf
  %v3728 = vmax.f32 %v3726, %v3727
  %v3729 = vsel %vm2893, %v2372, -inf
  %v3730 = vmax.f32 %v3728, %v3729
  %v3731 = vsel %vm2893, %v2376, -inf
  %v3732 = vmax.f32 %v3730, %v3731
  %v3733 = vsel %vm2893, %v2380, -inf
  %v3734 = vmax.f32 %v3732, %v3733
  %v3735 = vsel %vm2893, %v2384, -inf
  %v3736 = vmax.f32 %v3734, %v3735
  %v3737 = vsel %vm2893, %v2388, -inf
  %v3738 = vmax.f32 %v3736, %v3737
  %v3739 = vsel %vm2893, %v2392, -inf
  %v3740 = vmax.f32 %v3738, %v3739
  %v3741 = vsel %vm2893, %v2396, -inf
  %v3742 = vmax.f32 %v3740, %v3741
  %v3743 = vsel %vm2893, %v2400, -inf
  %v3744 = vmax.f32 %v3742, %v3743
  %v3745 = vsel %vm2893, %v2404, -inf
  %v3746 = vmax.f32 %v3744, %v3745
  %v3747 = vsel %vm2893, %v2408, -inf
  %v3748 = vmax.f32 %v3746, %v3747
  %v3749 = vsel %vm2893, %v2412, -inf
  %v3750 = vmax.f32 %v3748, %v3749
  %v3751 = vsel %vm2893, %v2416, -inf
  %v3752 = vmax.f32 %v3750, %v3751
  %v3753 = vsel %vm2893, %v2420, -inf
  %v3754 = vmax.f32 %v3752, %v3753
  %v3755 = vsel %vm2893, %v2424, -inf
  %v3756 = vmax.f32 %v3754, %v3755
  %v3757 = vsel %vm2893, %v2428, -inf
  %v3758 = vmax.f32 %v3756, %v3757
  %v3759 = vsel %vm2893, %v2432, -inf
  %v3760 = vmax.f32 %v3758, %v3759
  %v3761 = vsel %vm2893, %v2436, -inf
  %v3762 = vmax.f32 %v3760, %v3761
  %v3763 = vsel %vm2893, %v2440, -inf
  %v3764 = vmax.f32 %v3762, %v3763
  %v3765 = vsel %vm2893, %v2444, -inf
  %v3766 = vmax.f32 %v3764, %v3765
  %v3767 = vsel %vm2893, %v2448, -inf
  %v3768 = vmax.f32 %v3766, %v3767
  %v3769 = vsel %vm2893, %v2452, -inf
  %v3770 = vmax.f32 %v3768, %v3769
  %v3771 = vsel %vm2893, %v2365, -inf
  %v3772 = vsel %vm2893, %v2369, -inf
  %v3773 = vmax.f32 %v3771, %v3772
  %v3774 = vsel %vm2893, %v2373, -inf
  %v3775 = vmax.f32 %v3773, %v3774
  %v3776 = vsel %vm2893, %v2377, -inf
  %v3777 = vmax.f32 %v3775, %v3776
  %v3778 = vsel %vm2893, %v2381, -inf
  %v3779 = vmax.f32 %v3777, %v3778
  %v3780 = vsel %vm2893, %v2385, -inf
  %v3781 = vmax.f32 %v3779, %v3780
  %v3782 = vsel %vm2893, %v2389, -inf
  %v3783 = vmax.f32 %v3781, %v3782
  %v3784 = vsel %vm2893, %v2393, -inf
  %v3785 = vmax.f32 %v3783, %v3784
  %v3786 = vsel %vm2893, %v2397, -inf
  %v3787 = vmax.f32 %v3785, %v3786
  %v3788 = vsel %vm2893, %v2401, -inf
  %v3789 = vmax.f32 %v3787, %v3788
  %v3790 = vsel %vm2893, %v2405, -inf
  %v3791 = vmax.f32 %v3789, %v3790
  %v3792 = vsel %vm2893, %v2409, -inf
  %v3793 = vmax.f32 %v3791, %v3792
  %v3794 = vsel %vm2893, %v2413, -inf
  %v3795 = vmax.f32 %v3793, %v3794
  %v3796 = vsel %vm2893, %v2417, -inf
  %v3797 = vmax.f32 %v3795, %v3796
  %v3798 = vsel %vm2893, %v2421, -inf
  %v3799 = vmax.f32 %v3797, %v3798
  %v3800 = vsel %vm2893, %v2425, -inf
  %v3801 = vmax.f32 %v3799, %v3800
  %v3802 = vsel %vm2893, %v2429, -inf
  %v3803 = vmax.f32 %v3801, %v3802
  %v3804 = vsel %vm2893, %v2433, -inf
  %v3805 = vmax.f32 %v3803, %v3804
  %v3806 = vsel %vm2893, %v2437, -inf
  %v3807 = vmax.f32 %v3805, %v3806
  %v3808 = vsel %vm2893, %v2441, -inf
  %v3809 = vmax.f32 %v3807, %v3808
  %v3810 = vsel %vm2893, %v2445, -inf
  %v3811 = vmax.f32 %v3809, %v3810
  %v3812 = vsel %vm2893, %v2449, -inf
  %v3813 = vmax.f32 %v3811, %v3812
  %v3814 = vsel %vm2893, %v2453, -inf
  %v3815 = vmax.f32 %v3813, %v3814
  %v3816 = vsel %vm2893, %v2366, -inf
  %v3817 = vsel %vm2893, %v2370, -inf
  %v3818 = vmax.f32 %v3816, %v3817
  %v3819 = vsel %vm2893, %v2374, -inf
  %v3820 = vmax.f32 %v3818, %v3819
  %v3821 = vsel %vm2893, %v2378, -inf
  %v3822 = vmax.f32 %v3820, %v3821
  %v3823 = vsel %vm2893, %v2382, -inf
  %v3824 = vmax.f32 %v3822, %v3823
  %v3825 = vsel %vm2893, %v2386, -inf
  %v3826 = vmax.f32 %v3824, %v3825
  %v3827 = vsel %vm2893, %v2390, -inf
  %v3828 = vmax.f32 %v3826, %v3827
  %v3829 = vsel %vm2893, %v2394, -inf
  %v3830 = vmax.f32 %v3828, %v3829
  %v3831 = vsel %vm2893, %v2398, -inf
  %v3832 = vmax.f32 %v3830, %v3831
  %v3833 = vsel %vm2893, %v2402, -inf
  %v3834 = vmax.f32 %v3832, %v3833
  %v3835 = vsel %vm2893, %v2406, -inf
  %v3836 = vmax.f32 %v3834, %v3835
  %v3837 = vsel %vm2893, %v2410, -inf
  %v3838 = vmax.f32 %v3836, %v3837
  %v3839 = vsel %vm2893, %v2414, -inf
  %v3840 = vmax.f32 %v3838, %v3839
  %v3841 = vsel %vm2893, %v2418, -inf
  %v3842 = vmax.f32 %v3840, %v3841
  %v3843 = vsel %vm2893, %v2422, -inf
  %v3844 = vmax.f32 %v3842, %v3843
  %v3845 = vsel %vm2893, %v2426, -inf
  %v3846 = vmax.f32 %v3844, %v3845
  %v3847 = vsel %vm2893, %v2430, -inf
  %v3848 = vmax.f32 %v3846, %v3847
  %v3849 = vsel %vm2893, %v2434, -inf
  %v3850 = vmax.f32 %v3848, %v3849
  %v3851 = vsel %vm2893, %v2438, -inf
  %v3852 = vmax.f32 %v3850, %v3851
  %v3853 = vsel %vm2893, %v2442, -inf
  %v3854 = vmax.f32 %v3852, %v3853
  %v3855 = vsel %vm2893, %v2446, -inf
  %v3856 = vmax.f32 %v3854, %v3855
  %v3857 = vsel %vm2893, %v2450, -inf
  %v3858 = vmax.f32 %v3856, %v3857
  %v3859 = vsel %vm2893, %v2454, -inf
  %v3860 = vmax.f32 %v3858, %v3859
  %v3861 = vsel %vm2893, %v2367, -inf
  %v3862 = vsel %vm2893, %v2371, -inf
  %v3863 = vmax.f32 %v3861, %v3862
  %v3864 = vsel %vm2893, %v2375, -inf
  %v3865 = vmax.f32 %v3863, %v3864
  %v3866 = vsel %vm2893, %v2379, -inf
  %v3867 = vmax.f32 %v3865, %v3866
  %v3868 = vsel %vm2893, %v2383, -inf
  %v3869 = vmax.f32 %v3867, %v3868
  %v3870 = vsel %vm2893, %v2387, -inf
  %v3871 = vmax.f32 %v3869, %v3870
  %v3872 = vsel %vm2893, %v2391, -inf
  %v3873 = vmax.f32 %v3871, %v3872
  %v3874 = vsel %vm2893, %v2395, -inf
  %v3875 = vmax.f32 %v3873, %v3874
  %v3876 = vsel %vm2893, %v2399, -inf
  %v3877 = vmax.f32 %v3875, %v3876
  %v3878 = vsel %vm2893, %v2403, -inf
  %v3879 = vmax.f32 %v3877, %v3878
  %v3880 = vsel %vm2893, %v2407, -inf
  %v3881 = vmax.f32 %v3879, %v3880
  %v3882 = vsel %vm2893, %v2411, -inf
  %v3883 = vmax.f32 %v3881, %v3882
  %v3884 = vsel %vm2893, %v2415, -inf
  %v3885 = vmax.f32 %v3883, %v3884
  %v3886 = vsel %vm2893, %v2419, -inf
  %v3887 = vmax.f32 %v3885, %v3886
  %v3888 = vsel %vm2893, %v2423, -inf
  %v3889 = vmax.f32 %v3887, %v3888
  %v3890 = vsel %vm2893, %v2427, -inf
  %v3891 = vmax.f32 %v3889, %v3890
  %v3892 = vsel %vm2893, %v2431, -inf
  %v3893 = vmax.f32 %v3891, %v3892
  %v3894 = vsel %vm2893, %v2435, -inf
  %v3895 = vmax.f32 %v3893, %v3894
  %v3896 = vsel %vm2893, %v2439, -inf
  %v3897 = vmax.f32 %v3895, %v3896
  %v3898 = vsel %vm2893, %v2443, -inf
  %v3899 = vmax.f32 %v3897, %v3898
  %v3900 = vsel %vm2893, %v2447, -inf
  %v3901 = vmax.f32 %v3899, %v3900
  %v3902 = vsel %vm2893, %v2451, -inf
  %v3903 = vmax.f32 %v3901, %v3902
  %v3904 = vsel %vm2893, %v2455, -inf
  %v3905 = vmax.f32 %v3903, %v3904
  %v3906 = vsel %vm2893, %v2492, -inf
  %v3907 = vsel %vm2893, %v2496, -inf
  %v3908 = vmax.f32 %v3906, %v3907
  %v3909 = vsel %vm2893, %v2500, -inf
  %v3910 = vmax.f32 %v3908, %v3909
  %v3911 = vsel %vm2893, %v2504, -inf
  %v3912 = vmax.f32 %v3910, %v3911
  %v3913 = vsel %vm2893, %v2508, -inf
  %v3914 = vmax.f32 %v3912, %v3913
  %v3915 = vsel %vm2893, %v2512, -inf
  %v3916 = vmax.f32 %v3914, %v3915
  %v3917 = vsel %vm2893, %v2516, -inf
  %v3918 = vmax.f32 %v3916, %v3917
  %v3919 = vsel %vm2893, %v2520, -inf
  %v3920 = vmax.f32 %v3918, %v3919
  %v3921 = vsel %vm2893, %v2524, -inf
  %v3922 = vmax.f32 %v3920, %v3921
  %v3923 = vsel %vm2893, %v2528, -inf
  %v3924 = vmax.f32 %v3922, %v3923
  %v3925 = vsel %vm2893, %v2532, -inf
  %v3926 = vmax.f32 %v3924, %v3925
  %v3927 = vsel %vm2893, %v2536, -inf
  %v3928 = vmax.f32 %v3926, %v3927
  %v3929 = vsel %vm2893, %v2540, -inf
  %v3930 = vmax.f32 %v3928, %v3929
  %v3931 = vsel %vm2893, %v2544, -inf
  %v3932 = vmax.f32 %v3930, %v3931
  %v3933 = vsel %vm2893, %v2548, -inf
  %v3934 = vmax.f32 %v3932, %v3933
  %v3935 = vsel %vm2893, %v2552, -inf
  %v3936 = vmax.f32 %v3934, %v3935
  %v3937 = vsel %vm2893, %v2556, -inf
  %v3938 = vmax.f32 %v3936, %v3937
  %v3939 = vsel %vm2893, %v2560, -inf
  %v3940 = vmax.f32 %v3938, %v3939
  %v3941 = vsel %vm2893, %v2564, -inf
  %v3942 = vmax.f32 %v3940, %v3941
  %v3943 = vsel %vm2893, %v2568, -inf
  %v3944 = vmax.f32 %v3942, %v3943
  %v3945 = vsel %vm2893, %v2572, -inf
  %v3946 = vmax.f32 %v3944, %v3945
  %v3947 = vsel %vm2893, %v2576, -inf
  %v3948 = vmax.f32 %v3946, %v3947
  %v3949 = vsel %vm2893, %v2580, -inf
  %v3950 = vmax.f32 %v3948, %v3949
  %v3951 = vsel %vm2893, %v2493, -inf
  %v3952 = vsel %vm2893, %v2497, -inf
  %v3953 = vmax.f32 %v3951, %v3952
  %v3954 = vsel %vm2893, %v2501, -inf
  %v3955 = vmax.f32 %v3953, %v3954
  %v3956 = vsel %vm2893, %v2505, -inf
  %v3957 = vmax.f32 %v3955, %v3956
  %v3958 = vsel %vm2893, %v2509, -inf
  %v3959 = vmax.f32 %v3957, %v3958
  %v3960 = vsel %vm2893, %v2513, -inf
  %v3961 = vmax.f32 %v3959, %v3960
  %v3962 = vsel %vm2893, %v2517, -inf
  %v3963 = vmax.f32 %v3961, %v3962
  %v3964 = vsel %vm2893, %v2521, -inf
  %v3965 = vmax.f32 %v3963, %v3964
  %v3966 = vsel %vm2893, %v2525, -inf
  %v3967 = vmax.f32 %v3965, %v3966
  %v3968 = vsel %vm2893, %v2529, -inf
  %v3969 = vmax.f32 %v3967, %v3968
  %v3970 = vsel %vm2893, %v2533, -inf
  %v3971 = vmax.f32 %v3969, %v3970
  %v3972 = vsel %vm2893, %v2537, -inf
  %v3973 = vmax.f32 %v3971, %v3972
  %v3974 = vsel %vm2893, %v2541, -inf
  %v3975 = vmax.f32 %v3973, %v3974
  %v3976 = vsel %vm2893, %v2545, -inf
  %v3977 = vmax.f32 %v3975, %v3976
  %v3978 = vsel %vm2893, %v2549, -inf
  %v3979 = vmax.f32 %v3977, %v3978
  %v3980 = vsel %vm2893, %v2553, -inf
  %v3981 = vmax.f32 %v3979, %v3980
  %v3982 = vsel %vm2893, %v2557, -inf
  %v3983 = vmax.f32 %v3981, %v3982
  %v3984 = vsel %vm2893, %v2561, -inf
  %v3985 = vmax.f32 %v3983, %v3984
  %v3986 = vsel %vm2893, %v2565, -inf
  %v3987 = vmax.f32 %v3985, %v3986
  %v3988 = vsel %vm2893, %v2569, -inf
  %v3989 = vmax.f32 %v3987, %v3988
  %v3990 = vsel %vm2893, %v2573, -inf
  %v3991 = vmax.f32 %v3989, %v3990
  %v3992 = vsel %vm2893, %v2577, -inf
  %v3993 = vmax.f32 %v3991, %v3992
  %v3994 = vsel %vm2893, %v2581, -inf
  %v3995 = vmax.f32 %v3993, %v3994
  %v3996 = vsel %vm2893, %v2494, -inf
  %v3997 = vsel %vm2893, %v2498, -inf
  %v3998 = vmax.f32 %v3996, %v3997
  %v3999 = vsel %vm2893, %v2502, -inf
  %v4000 = vmax.f32 %v3998, %v3999
  %v4001 = vsel %vm2893, %v2506, -inf
  %v4002 = vmax.f32 %v4000, %v4001
  %v4003 = vsel %vm2893, %v2510, -inf
  %v4004 = vmax.f32 %v4002, %v4003
  %v4005 = vsel %vm2893, %v2514, -inf
  %v4006 = vmax.f32 %v4004, %v4005
  %v4007 = vsel %vm2893, %v2518, -inf
  %v4008 = vmax.f32 %v4006, %v4007
  %v4009 = vsel %vm2893, %v2522, -inf
  %v4010 = vmax.f32 %v4008, %v4009
  %v4011 = vsel %vm2893, %v2526, -inf
  %v4012 = vmax.f32 %v4010, %v4011
  %v4013 = vsel %vm2893, %v2530, -inf
  %v4014 = vmax.f32 %v4012, %v4013
  %v4015 = vsel %vm2893, %v2534, -inf
  %v4016 = vmax.f32 %v4014, %v4015
  %v4017 = vsel %vm2893, %v2538, -inf
  %v4018 = vmax.f32 %v4016, %v4017
  %v4019 = vsel %vm2893, %v2542, -inf
  %v4020 = vmax.f32 %v4018, %v4019
  %v4021 = vsel %vm2893, %v2546, -inf
  %v4022 = vmax.f32 %v4020, %v4021
  %v4023 = vsel %vm2893, %v2550, -inf
  %v4024 = vmax.f32 %v4022, %v4023
  %v4025 = vsel %vm2893, %v2554, -inf
  %v4026 = vmax.f32 %v4024, %v4025
  %v4027 = vsel %vm2893, %v2558, -inf
  %v4028 = vmax.f32 %v4026, %v4027
  %v4029 = vsel %vm2893, %v2562, -inf
  %v4030 = vmax.f32 %v4028, %v4029
  %v4031 = vsel %vm2893, %v2566, -inf
  %v4032 = vmax.f32 %v4030, %v4031
  %v4033 = vsel %vm2893, %v2570, -inf
  %v4034 = vmax.f32 %v4032, %v4033
  %v4035 = vsel %vm2893, %v2574, -inf
  %v4036 = vmax.f32 %v4034, %v4035
  %v4037 = vsel %vm2893, %v2578, -inf
  %v4038 = vmax.f32 %v4036, %v4037
  %v4039 = vsel %vm2893, %v2582, -inf
  %v4040 = vmax.f32 %v4038, %v4039
  %v4041 = vsel %vm2893, %v2495, -inf
  %v4042 = vsel %vm2893, %v2499, -inf
  %v4043 = vmax.f32 %v4041, %v4042
  %v4044 = vsel %vm2893, %v2503, -inf
  %v4045 = vmax.f32 %v4043, %v4044
  %v4046 = vsel %vm2893, %v2507, -inf
  %v4047 = vmax.f32 %v4045, %v4046
  %v4048 = vsel %vm2893, %v2511, -inf
  %v4049 = vmax.f32 %v4047, %v4048
  %v4050 = vsel %vm2893, %v2515, -inf
  %v4051 = vmax.f32 %v4049, %v4050
  %v4052 = vsel %vm2893, %v2519, -inf
  %v4053 = vmax.f32 %v4051, %v4052
  %v4054 = vsel %vm2893, %v2523, -inf
  %v4055 = vmax.f32 %v4053, %v4054
  %v4056 = vsel %vm2893, %v2527, -inf
  %v4057 = vmax.f32 %v4055, %v4056
  %v4058 = vsel %vm2893, %v2531, -inf
  %v4059 = vmax.f32 %v4057, %v4058
  %v4060 = vsel %vm2893, %v2535, -inf
  %v4061 = vmax.f32 %v4059, %v4060
  %v4062 = vsel %vm2893, %v2539, -inf
  %v4063 = vmax.f32 %v4061, %v4062
  %v4064 = vsel %vm2893, %v2543, -inf
  %v4065 = vmax.f32 %v4063, %v4064
  %v4066 = vsel %vm2893, %v2547, -inf
  %v4067 = vmax.f32 %v4065, %v4066
  %v4068 = vsel %vm2893, %v2551, -inf
  %v4069 = vmax.f32 %v4067, %v4068
  %v4070 = vsel %vm2893, %v2555, -inf
  %v4071 = vmax.f32 %v4069, %v4070
  %v4072 = vsel %vm2893, %v2559, -inf
  %v4073 = vmax.f32 %v4071, %v4072
  %v4074 = vsel %vm2893, %v2563, -inf
  %v4075 = vmax.f32 %v4073, %v4074
  %v4076 = vsel %vm2893, %v2567, -inf
  %v4077 = vmax.f32 %v4075, %v4076
  %v4078 = vsel %vm2893, %v2571, -inf
  %v4079 = vmax.f32 %v4077, %v4078
  %v4080 = vsel %vm2893, %v2575, -inf
  %v4081 = vmax.f32 %v4079, %v4080
  %v4082 = vsel %vm2893, %v2579, -inf
  %v4083 = vmax.f32 %v4081, %v4082
  %v4084 = vsel %vm2893, %v2583, -inf
  %v4085 = vmax.f32 %v4083, %v4084
  %v4086 = vadd.s32 %v2621, 32
  %v4087 = vadd.s32 %v2621, 40
  %v4088 = vadd.s32 %v2621, 48
  %v4089 = vadd.s32 %v2621, 56
  %vm4090 = vcmp.lt.s32.totalorder %v2621, 0
  %v4091 = vsub.s32 0, %v2621
  %v4092 = vsel %vm4090, %v4091, %v2621
  %v4093 = vshrl.u32 %v4092, 5
  %v4094 = vand.u32 %v4092, 31
  %v4095 = vsub.s32 0, %v4094
  %v4096 = vsel %vm4090, %v4095, %v4094
  %vm4097 = vcmp.lt.s32.totalorder %v2622, 0
  %v4098 = vsub.s32 0, %v2622
  %v4099 = vsel %vm4097, %v4098, %v2622
  %v4100 = vshrl.u32 %v4099, 5
  %v4101 = vand.u32 %v4099, 31
  %v4102 = vsub.s32 0, %v4101
  %v4103 = vsel %vm4097, %v4102, %v4101
  %vm4104 = vcmp.lt.s32.totalorder %v2623, 0
  %v4105 = vsub.s32 0, %v2623
  %v4106 = vsel %vm4104, %v4105, %v2623
  %v4107 = vshrl.u32 %v4106, 5
  %v4108 = vand.u32 %v4106, 31
  %v4109 = vsub.s32 0, %v4108
  %v4110 = vsel %vm4104, %v4109, %v4108
  %vm4111 = vcmp.lt.s32.totalorder %v2624, 0
  %v4112 = vsub.s32 0, %v2624
  %v4113 = vsel %vm4111, %v4112, %v2624
  %v4114 = vshrl.u32 %v4113, 5
  %v4115 = vand.u32 %v4113, 31
  %v4116 = vsub.s32 0, %v4115
  %v4117 = vsel %vm4111, %v4116, %v4115
  %vm4118 = vcmp.lt.s32.totalorder %v4086, 0
  %v4119 = vsub.s32 0, %v4086
  %v4120 = vsel %vm4118, %v4119, %v4086
  %v4121 = vshrl.u32 %v4120, 5
  %v4122 = vand.u32 %v4120, 31
  %v4123 = vsub.s32 0, %v4122
  %v4124 = vsel %vm4118, %v4123, %v4122
  %vm4125 = vcmp.lt.s32.totalorder %v4087, 0
  %v4126 = vsub.s32 0, %v4087
  %v4127 = vsel %vm4125, %v4126, %v4087
  %v4128 = vshrl.u32 %v4127, 5
  %v4129 = vand.u32 %v4127, 31
  %v4130 = vsub.s32 0, %v4129
  %v4131 = vsel %vm4125, %v4130, %v4129
  %vm4132 = vcmp.lt.s32.totalorder %v4088, 0
  %v4133 = vsub.s32 0, %v4088
  %v4134 = vsel %vm4132, %v4133, %v4088
  %v4135 = vshrl.u32 %v4134, 5
  %v4136 = vand.u32 %v4134, 31
  %v4137 = vsub.s32 0, %v4136
  %v4138 = vsel %vm4132, %v4137, %v4136
  %vm4139 = vcmp.lt.s32.totalorder %v4089, 0
  %v4140 = vsub.s32 0, %v4089
  %v4141 = vsel %vm4139, %v4140, %v4089
  %v4142 = vshrl.u32 %v4141, 5
  %v4143 = vand.u32 %v4141, 31
  %v4144 = vsub.s32 0, %v4143
  %v4145 = vsel %vm4139, %v4144, %v4143
  %vm4146 = vcmp.ne.s32.totalorder %v4096, 0
  %vm4147 = vcmp.ne.s32.totalorder %v4103, 0
  %vm4148 = vcmp.ne.s32.totalorder %v4110, 0
  %vm4149 = vcmp.ne.s32.totalorder %v4117, 0
  %vm4150 = vcmp.ne.s32.totalorder %v4124, 0
  %vm4151 = vcmp.ne.s32.totalorder %v4131, 0
  %vm4152 = vcmp.ne.s32.totalorder %v4138, 0
  %vm4153 = vcmp.ne.s32.totalorder %v4145, 0
  %vm4154 = vcmp.lt.s32.totalorder %v4096, 0
  %vm4155 = vcmp.lt.s32.totalorder %v4103, 0
  %vm4156 = vcmp.lt.s32.totalorder %v4110, 0
  %vm4157 = vcmp.lt.s32.totalorder %v4117, 0
  %vm4158 = vcmp.lt.s32.totalorder %v4124, 0
  %vm4159 = vcmp.lt.s32.totalorder %v4131, 0
  %vm4160 = vcmp.lt.s32.totalorder %v4138, 0
  %vm4161 = vcmp.lt.s32.totalorder %v4145, 0
  %vm4162 = vmand %vm4154, %vm4146
  %vm4163 = vmand %vm4155, %vm4147
  %vm4164 = vmand %vm4156, %vm4148
  %vm4165 = vmand %vm4157, %vm4149
  %vm4166 = vmand %vm4158, %vm4150
  %vm4167 = vmand %vm4159, %vm4151
  %vm4168 = vmand %vm4160, %vm4152
  %vm4169 = vmand %vm4161, %vm4153
  %v4170 = vadd.s32 %v4096, 32
  %v4171 = vadd.s32 %v4103, 32
  %v4172 = vadd.s32 %v4110, 32
  %v4173 = vadd.s32 %v4117, 32
  %v4174 = vadd.s32 %v4124, 32
  %v4175 = vadd.s32 %v4131, 32
  %v4176 = vadd.s32 %v4138, 32
  %v4177 = vadd.s32 %v4145, 32
  %v4178 = vsel %vm4162, %v4170, %v4096
  %v4179 = vsel %vm4163, %v4171, %v4103
  %v4180 = vsel %vm4164, %v4172, %v4110
  %v4181 = vsel %vm4165, %v4173, %v4117
  %v4182 = vsel %vm4166, %v4174, %v4124
  %v4183 = vsel %vm4167, %v4175, %v4131
  %v4184 = vsel %vm4168, %v4176, %v4138
  %v4185 = vsel %vm4169, %v4177, %v4145
  %v4186 = vld [vmem:[%s1 + $0x18] sm:$0xff]
  %v4187 = vld [vmem:[%s1 + $0x20] sm:$0xff]
  %v4188 = vld [vmem:[%s1 + $0x28] sm:$0xff]
  %v4189 = vld [vmem:[%s1 + $0x30] sm:$0xff]
  %v4190 = vld [vmem:[%s1 + $0x38] sm:$0xff]
  %v4191 = vld [vmem:[%s1 + $0x40] sm:$0xff]
  %v4192 = vld [vmem:[%s1 + $0x48] sm:$0xff]
  %v4193 = vld [vmem:[%s1 + $0x50] sm:$0xff]
  %v4194 = vld [vmem:[%s1 + $0x58] sm:$0xff]
  %v4195 = vld [vmem:[%s1 + $0x60] sm:$0xff]
  %v4196 = vld [vmem:[%s1 + $0x68] sm:$0xff]
  %v4197 = vld [vmem:[%s1 + $0x70] sm:$0xff]
  %v4198 = vld [vmem:[%s1 + $0x78] sm:$0xff]
  %v4199 = vld [vmem:[%s1 + $0x80] sm:$0xff]
  %v4200 = vld [vmem:[%s1 + $0x88] sm:$0xff]
  %v4201 = vld [vmem:[%s1 + $0x90] sm:$0xff]
  %v4202 = vld [vmem:[%s1 + $0x98] sm:$0x11]
  %v4203 = vunpack.c.l.bf16 %v4202
  %v4204 = vunpack.c.h.bf16 %v4202
  %v4205 = vld [vmem:[%s1 + $0xa0] sm:$0xf]
  %v4206 = vld [vmem:[%s1 + $0xa8] sm:$0xf]
  %v4207 = vld [vmem:[%s1 + $0xb0] sm:$0xf]
  %v4208 = vld [vmem:[%s1 + $0xb8] sm:$0xf]
  %v4209 = vld [vmem:[%s1 + $0xc0] sm:$0xf]
  %v4210 = vld [vmem:[%s1 + $0xc8] sm:$0xf]
  %v4211 = vld [vmem:[%s1 + $0xd0] sm:$0xf]
  %v4212 = vld [vmem:[%s1 + $0xd8] sm:$0xf]
  %v4213 = vld [vmem:[%s1 + $0xe0] sm:$0xf]
  %v4214 = vld [vmem:[%s1 + $0xe8] sm:$0xf]
  %v4215 = vld [vmem:[%s1 + $0xf0] sm:$0xf]
  %v4216 = vld [vmem:[%s1 + $0xf8] sm:$0xf]
  %v4217 = vld [vmem:[%s1 + $0x100] sm:$0xf]
  %v4218 = vld [vmem:[%s1 + $0x108] sm:$0xf]
  %v4219 = vld [vmem:[%s1 + $0x110] sm:$0xf]
  %v4220 = vld [vmem:[%s1 + $0x118] sm:$0xf]
  %v4221 = vld [vmem:[%s1 + $0x120] sm:$0xf]
  %v4222 = vld [vmem:[%s1 + $0x128] sm:$0xf]
  %v4223 = vld [vmem:[%s1 + $0x130] sm:$0x1]
  %v4224 = vunpack.c.l.bf16 %v4223
  %vm4289 = vcmask 1041409
  %v4290 = vsel %vm4289, %v2919, %v2906
  %vm4291 = vcmask 1042434
  %v4292 = vsel %vm4291, %v2932, %v4290
  %vm4293 = vcmask 1043459
  %v4294 = vsel %vm4293, %v2945, %v4292
  %vm4295 = vcmask 1044484
  %v4296 = vsel %vm4295, %v2958, %v4294
  %vm4297 = vcmask 1045509
  %v4298 = vsel %vm4297, %v2971, %v4296
  %vm4299 = vcmask 1046534
  %v4300 = vsel %vm4299, %v2984, %v4298
  %vm4301 = vcmask 1047559
  %v4302 = vsel %vm4301, %v2997, %v4300
  %v4303 = vsel %vm4289, %v3023, %v3010
  %v4304 = vsel %vm4291, %v3036, %v4303
  %v4305 = vsel %vm4293, %v3049, %v4304
  %v4306 = vsel %vm4295, %v3062, %v4305
  %v4307 = vsel %vm4297, %v3075, %v4306
  %v4308 = vsel %vm4299, %v3088, %v4307
  %v4309 = vsel %vm4301, %v3101, %v4308
  %v4310 = vsel %vm4289, %v3127, %v3114
  %v4311 = vsel %vm4291, %v3140, %v4310
  %v4312 = vsel %vm4293, %v3153, %v4311
  %v4313 = vsel %vm4295, %v3166, %v4312
  %v4314 = vsel %vm4297, %v3179, %v4313
  %v4315 = vsel %vm4299, %v3192, %v4314
  %v4316 = vsel %vm4301, %v3205, %v4315
  %v4317 = vsel %vm4289, %v3231, %v3218
  %v4318 = vsel %vm4291, %v3244, %v4317
  %v4319 = vsel %vm4293, %v3257, %v4318
  %v4320 = vsel %vm4295, %v3270, %v4319
  %v4321 = vsel %vm4297, %v3283, %v4320
  %v4322 = vsel %vm4299, %v3296, %v4321
  %v4323 = vsel %vm4301, %v3309, %v4322
  %v4324 = vsel %vm4289, %v3335, %v3322
  %v4325 = vsel %vm4291, %v3348, %v4324
  %v4326 = vsel %vm4293, %v3361, %v4325
  %v4327 = vsel %vm4295, %v3374, %v4326
  %v4328 = vsel %vm4297, %v3387, %v4327
  %v4329 = vsel %vm4299, %v3400, %v4328
  %v4330 = vsel %vm4301, %v3413, %v4329
  %v4331 = vsel %vm4289, %v3439, %v3426
  %v4332 = vsel %vm4291, %v3452, %v4331
  %v4333 = vsel %vm4293, %v3465, %v4332
  %v4334 = vsel %vm4295, %v3478, %v4333
  %v4335 = vsel %vm4297, %v3491, %v4334
  %v4336 = vsel %vm4299, %v3504, %v4335
  %v4337 = vsel %vm4301, %v3517, %v4336
  %v4338 = vsel %vm4289, %v3543, %v3530
  %v4339 = vsel %vm4291, %v3556, %v4338
  %v4340 = vsel %vm4293, %v3569, %v4339
  %v4341 = vsel %vm4295, %v3582, %v4340
  %v4342 = vsel %vm4297, %v3595, %v4341
  %v4343 = vsel %vm4299, %v3608, %v4342
  %v4344 = vsel %vm4301, %v3621, %v4343
  %v4345 = vsel %vm4289, %v3647, %v3634
  %v4346 = vsel %vm4291, %v3660, %v4345
  %v4347 = vsel %vm4293, %v3673, %v4346
  %v4348 = vsel %vm4295, %v3686, %v4347
  %v4349 = vsel %vm4297, %v3699, %v4348
  %v4350 = vsel %vm4299, %v3712, %v4349
  %v4351 = vsel %vm4301, %v3725, %v4350
  %v4360 = vrot.slane %v4302, 7
  %v4361 = vrot.slane %v4309, 7
  %v4362 = vrot.slane %v4316, 7
  %v4363 = vrot.slane %v4323, 7
  %v4364 = vrot.slane %v4330, 7
  %v4365 = vrot.slane %v4337, 7
  %v4366 = vrot.slane %v4344, 7
  %v4367 = vrot.slane %v4351, 7
  %vm4368 = vcmp.lt.s32.totalorder %v2621, 1
  %v4369 = vsel %vm4368, %v4366, %v4367
  %v4370 = vsel %vm4368, %v4365, %v4366
  %v4371 = vsel %vm4368, %v4364, %v4365
  %v4372 = vsel %vm4368, %v4363, %v4364
  %v4373 = vsel %vm4368, %v4362, %v4363
  %v4374 = vsel %vm4368, %v4361, %v4362
  %v4375 = vsel %vm4368, %v4360, %v4361
  %v4376 = vsel %vm4368, %v4367, %v4360
  %vm4377 = vcmp.ge.s32.totalorder %v4178, 1
  %vm4378 = vcmp.ge.s32.totalorder %v4179, 1
  %vm4379 = vcmp.ge.s32.totalorder %v4180, 1
  %vm4380 = vcmp.ge.s32.totalorder %v4181, 1
  %vm4381 = vcmp.ge.s32.totalorder %v4182, 1
  %vm4382 = vcmp.ge.s32.totalorder %v4183, 1
  %vm4383 = vcmp.ge.s32.totalorder %v4184, 1
  %vm4384 = vcmp.ge.s32.totalorder %v4185, 1
  %v4385 = vsel %vm4377, 1, 0
  %v4386 = vsel %vm4378, 1, 0
  %v4387 = vsel %vm4379, 1, 0
  %v4388 = vsel %vm4380, 1, 0
  %v4389 = vsel %vm4381, 1, 0
  %v4390 = vsel %vm4382, 1, 0
  %v4391 = vsel %vm4383, 1, 0
  %v4392 = vsel %vm4384, 1, 0
  %vm4393 = vcmp.eq.s32.totalorder %v4385, 1
  %vm4394 = vcmp.eq.s32.totalorder %v4386, 1
  %vm4395 = vcmp.eq.s32.totalorder %v4387, 1
  %vm4396 = vcmp.eq.s32.totalorder %v4388, 1
  %vm4397 = vcmp.eq.s32.totalorder %v4389, 1
  %vm4398 = vcmp.eq.s32.totalorder %v4390, 1
  %vm4399 = vcmp.eq.s32.totalorder %v4391, 1
  %vm4400 = vcmp.eq.s32.totalorder %v4392, 1
  %v4401 = vsel %vm4393, %v4376, 0.0
  %v4402 = vsel %vm4394, %v4375, 0.0
  %v4403 = vsel %vm4395, %v4374, 0.0
  %v4404 = vsel %vm4396, %v4373, 0.0
  %v4405 = vsel %vm4397, %v4372, 0.0
  %v4406 = vsel %vm4398, %v4371, 0.0
  %v4407 = vsel %vm4399, %v4370, 0.0
  %v4408 = vsel %vm4400, %v4369, 0.0
  %4409 = vrot.lane.b32.xlu0 %v4302, 64
  %v4410 = vpop.permute.xlu0 %4409
  %4411 = vrot.lane.b32.xlu0 %v4309, 64
  %v4412 = vpop.permute.xlu0 %4411
  %4413 = vrot.lane.b32.xlu0 %v4316, 64
  %v4414 = vpop.permute.xlu0 %4413
  %4415 = vrot.lane.b32.xlu0 %v4323, 64
  %v4416 = vpop.permute.xlu0 %4415
  %4417 = vrot.lane.b32.xlu0 %v4330, 64
  %v4418 = vpop.permute.xlu0 %4417
  %4419 = vrot.lane.b32.xlu0 %v4337, 64
  %v4420 = vpop.permute.xlu0 %4419
  %4421 = vrot.lane.b32.xlu0 %v4344, 64
  %v4422 = vpop.permute.xlu0 %4421
  %4423 = vrot.lane.b32.xlu0 %v4351, 64
  %v4424 = vpop.permute.xlu0 %4423
  %v4433 = vsel %vm2893, %v4401, %v4410
  %v4434 = vsel %vm2893, %v4402, %v4412
  %v4435 = vsel %vm2893, %v4403, %v4414
  %v4436 = vsel %vm2893, %v4404, %v4416
  %v4437 = vsel %vm2893, %v4405, %v4418
  %v4438 = vsel %vm2893, %v4406, %v4420
  %v4439 = vsel %vm2893, %v4407, %v4422
  %v4440 = vsel %vm2893, %v4408, %v4424
  %v4441 = vpack.c.bf16 %v4434, %v4433
  %v4442 = vpack.c.bf16 %v4436, %v4435
  %v4443 = vpack.c.bf16 %v4438, %v4437
  %v4444 = vpack.c.bf16 %v4440, %v4439
  %v4445 = vlaneseq
  %v4446 = vshrl.u32 %v4445, 7
  %v4447 = vsub.s32 0, %v4446
  %v4448 = vrot.slane %v4203, %v4447
  %v4449 = vlaneseq
  %v4450 = vshrl.u32 %v4449, 7
  %v4451 = vsub.s32 0, %v4450
  %v4452 = vrot.slane %v4204, %v4451
  %v4469 = vunpack.c.l.b16 %v4186
  %v4470 = vunpack.c.h.b16 %v4186
  %v4471 = vunpack.c.l.b16 %v4187
  %v4472 = vunpack.c.h.b16 %v4187
  %v4473 = vunpack.c.l.b16 %v4188
  %v4474 = vunpack.c.h.b16 %v4188
  %v4475 = vunpack.c.l.b16 %v4189
  %v4476 = vunpack.c.h.b16 %v4189
  %v4477 = vunpack.c.l.b16 %v4190
  %v4478 = vunpack.c.h.b16 %v4190
  %v4479 = vunpack.c.l.b16 %v4191
  %v4480 = vunpack.c.h.b16 %v4191
  %v4481 = vunpack.c.l.b16 %v4192
  %v4482 = vunpack.c.h.b16 %v4192
  %v4483 = vunpack.c.l.b16 %v4193
  %v4484 = vunpack.c.h.b16 %v4193
  %v4485 = vunpack.c.l.b16 %v4194
  %v4486 = vunpack.c.h.b16 %v4194
  %v4487 = vunpack.c.l.b16 %v4195
  %v4488 = vunpack.c.h.b16 %v4195
  %v4489 = vunpack.c.l.b16 %v4196
  %v4490 = vunpack.c.h.b16 %v4196
  %v4491 = vunpack.c.l.b16 %v4197
  %v4492 = vunpack.c.h.b16 %v4197
  %v4493 = vunpack.c.l.b16 %v4198
  %v4494 = vunpack.c.h.b16 %v4198
  %v4495 = vunpack.c.l.b16 %v4199
  %v4496 = vunpack.c.h.b16 %v4199
  %v4497 = vunpack.c.l.b16 %v4200
  %v4498 = vunpack.c.h.b16 %v4200
  %v4499 = vunpack.c.l.b16 %v4201
  %v4500 = vunpack.c.h.b16 %v4201
  %v4501 = vpack.c.b16 %v4471, %v4469
  %v4502 = vpack.c.b16 %v4472, %v4470
  %v4503 = vpack.c.b16 %v4475, %v4473
  %v4504 = vpack.c.b16 %v4476, %v4474
  %v4505 = vpack.c.b16 %v4479, %v4477
  %v4506 = vpack.c.b16 %v4480, %v4478
  %v4507 = vpack.c.b16 %v4483, %v4481
  %v4508 = vpack.c.b16 %v4484, %v4482
  %v4509 = vpack.c.b16 %v4487, %v4485
  %v4510 = vpack.c.b16 %v4488, %v4486
  %v4511 = vpack.c.b16 %v4491, %v4489
  %v4512 = vpack.c.b16 %v4492, %v4490
  %v4513 = vpack.c.b16 %v4495, %v4493
  %v4514 = vpack.c.b16 %v4496, %v4494
  %v4515 = vpack.c.b16 %v4499, %v4497
  %v4516 = vpack.c.b16 %v4500, %v4498
  %4533 = vmatprep.subr.bf16.mxu0 %v4502
  %4534 = vmatpush1.bf16.msra.mxu0 %v4501
  %4535 = vmatprep.subr.bf16.mxu0 %v4504
  %4536 = vmatpush1.bf16.msra.mxu0 %v4503
  %4537 = vmatprep.subr.bf16.mxu0 %v4506
  %4538 = vmatpush1.bf16.msra.mxu0 %v4505
  %4539 = vmatprep.subr.bf16.mxu0 %v4508
  %4540 = vmatpush1.bf16.msra.mxu0 %v4507
  %4541 = vmatprep.subr.bf16.mxu0 %v4510
  %4542 = vmatpush1.bf16.msra.mxu0 %v4509
  %4543 = vmatprep.subr.bf16.mxu0 %v4512
  %4544 = vmatpush1.bf16.msra.mxu0 %v4511
  %4545 = vmatprep.subr.bf16.mxu0 %v4514
  %4546 = vmatpush1.bf16.msra.mxu0 %v4513
  %4547 = vmatprep.subr.bf16.mxu0 %v4516
  %4548 = vmatpush1.bf16.msra.mxu0 %v4515
  %4549 = vmatprep.subr.bf16.mxu0 0
  %4550 = vmatpush1.bf16.msra.mxu0 0
  %4551 = vmatprep.subr.bf16.mxu0 0
  %4552 = vmatpush1.bf16.msra.mxu0 0
  %4553 = vmatprep.subr.bf16.mxu0 0
  %4554 = vmatpush1.bf16.msra.mxu0 0
  %4555 = vmatprep.subr.bf16.mxu0 0
  %4556 = vmatpush1.bf16.msra.mxu0 0
  %4557 = vmatprep.subr.bf16.mxu0 0
  %4558 = vmatpush1.bf16.msra.mxu0 0
  %4559 = vmatprep.subr.bf16.mxu0 0
  %4560 = vmatpush1.bf16.msra.mxu0 0
  %4561 = vmatprep.subr.bf16.mxu0 0
  %4562 = vmatpush1.bf16.msra.mxu0 0
  %4563 = vmatprep.subr.bf16.mxu0 0
  %4564 = vmatpush1.bf16.msra.mxu0 0
  %4565 = vmatprep.mubr.bf16.mxu0 0
  %4566 = vmatmul.mubr.bf16.gmra.mrb[0].mxu0 %v4441
  %v4567 = vpop.f32.mrb[0].mxu0
  %v4568 = vadd.f32 %v4448, %v4567
  %v4569 = vpop.f32.mrb[0].mxu0
  %v4570 = vadd.f32 %v4452, %v4569
  %v4571 = vpop.f32.mrb[0].mxu0
  %v4572 = vadd.f32 %v4448, %v4571
  %v4573 = vpop.f32.mrb[0].mxu0
  %v4574 = vadd.f32 %v4452, %v4573
  %4575 = vmatprep.mubr.bf16.mxu0 0
  %4576 = vmatmul.mubr.bf16.gmra.mrb[0].mxu0 %v4442
  %v4577 = vpop.f32.mrb[0].mxu0
  %v4578 = vadd.f32 %v4448, %v4577
  %v4579 = vpop.f32.mrb[0].mxu0
  %v4580 = vadd.f32 %v4452, %v4579
  %v4581 = vpop.f32.mrb[0].mxu0
  %v4582 = vadd.f32 %v4448, %v4581
  %v4583 = vpop.f32.mrb[0].mxu0
  %v4584 = vadd.f32 %v4452, %v4583
  %4585 = vmatprep.mubr.bf16.mxu0 0
  %4586 = vmatmul.mubr.bf16.gmra.mrb[0].mxu0 %v4443
  %v4587 = vpop.f32.mrb[0].mxu0
  %v4588 = vadd.f32 %v4448, %v4587
  %v4589 = vpop.f32.mrb[0].mxu0
  %v4590 = vadd.f32 %v4452, %v4589
  %v4591 = vpop.f32.mrb[0].mxu0
  %v4592 = vadd.f32 %v4448, %v4591
  %v4593 = vpop.f32.mrb[0].mxu0
  %v4594 = vadd.f32 %v4452, %v4593
  %4595 = vmatprep.mubr.bf16.mxu0 0
  %4596 = vmatmul.mubr.bf16.gmra.mrb[0].mxu0 %v4444
  %v4597 = vpop.f32.mrb[0].mxu0
  %v4598 = vadd.f32 %v4448, %v4597
  %v4599 = vpop.f32.mrb[0].mxu0
  %v4600 = vadd.f32 %v4452, %v4599
  %v4601 = vpop.f32.mrb[0].mxu0
  %v4602 = vadd.f32 %v4448, %v4601
  %v4603 = vpop.f32.mrb[0].mxu0
  %v4604 = vadd.f32 %v4452, %v4603
  %4605 = vdwg.mxu0
  %v4606 = vmax.f32 %v4568, 0.0
  %v4607 = vmax.f32 %v4572, 0.0
  %v4608 = vmax.f32 %v4578, 0.0
  %v4609 = vmax.f32 %v4582, 0.0
  %v4610 = vmax.f32 %v4588, 0.0
  %v4611 = vmax.f32 %v4592, 0.0
  %v4612 = vmax.f32 %v4598, 0.0
  %v4613 = vmax.f32 %v4602, 0.0
  %v4614 = vrot.slane %v4606, 7
  %v4615 = vrot.slane %v4607, 7
  %v4616 = vrot.slane %v4608, 7
  %v4617 = vrot.slane %v4609, 7
  %v4618 = vrot.slane %v4610, 7
  %v4619 = vrot.slane %v4611, 7
  %v4620 = vrot.slane %v4612, 7
  %v4621 = vrot.slane %v4613, 7
  %v4622 = vsel %vm4368, %v4620, %v4621
  %v4623 = vsel %vm4368, %v4619, %v4620
  %v4624 = vsel %vm4368, %v4618, %v4619
  %v4625 = vsel %vm4368, %v4617, %v4618
  %v4626 = vsel %vm4368, %v4616, %v4617
  %v4627 = vsel %vm4368, %v4615, %v4616
  %v4628 = vsel %vm4368, %v4614, %v4615
  %v4629 = vsel %vm4368, %v4621, %v4614
  %v4630 = vsel %vm4393, %v4629, 0.0
  %v4631 = vsel %vm4394, %v4628, 0.0
  %v4632 = vsel %vm4395, %v4627, 0.0
  %v4633 = vsel %vm4396, %v4626, 0.0
  %v4634 = vsel %vm4397, %v4625, 0.0
  %v4635 = vsel %vm4398, %v4624, 0.0
  %v4636 = vsel %vm4399, %v4623, 0.0
  %v4637 = vsel %vm4400, %v4622, 0.0
  %4646 = vrot.lane.b32.xlu0 %v4606, 72
  %v4647 = vpop.permute.xlu0 %4646
  %4648 = vrot.lane.b32.xlu0 %v4607, 72
  %v4649 = vpop.permute.xlu0 %4648
  %4650 = vrot.lane.b32.xlu0 %v4608, 72
  %v4651 = vpop.permute.xlu0 %4650
  %4652 = vrot.lane.b32.xlu0 %v4609, 72
  %v4653 = vpop.permute.xlu0 %4652
  %4654 = vrot.lane.b32.xlu0 %v4610, 72
  %v4655 = vpop.permute.xlu0 %4654
  %4656 = vrot.lane.b32.xlu0 %v4611, 72
  %v4657 = vpop.permute.xlu0 %4656
  %4658 = vrot.lane.b32.xlu0 %v4612, 72
  %v4659 = vpop.permute.xlu0 %4658
  %4660 = vrot.lane.b32.xlu0 %v4613, 72
  %v4661 = vpop.permute.xlu0 %4660
  %vm4670 = vcmask 588800
  %v4671 = vsel %vm4670, %v4630, %v4647
  %v4672 = vsel %vm4670, %v4631, %v4649
  %v4673 = vsel %vm4670, %v4632, %v4651
  %v4674 = vsel %vm4670, %v4633, %v4653
  %v4675 = vsel %vm4670, %v4634, %v4655
  %v4676 = vsel %vm4670, %v4635, %v4657
  %v4677 = vsel %vm4670, %v4636, %v4659
  %v4678 = vsel %vm4670, %v4637, %v4661
  %v4679 = vpack.c.bf16 %v4672, %v4671
  %v4680 = vpack.c.bf16 %v4649, %v4647
  %v4681 = vpack.c.bf16 %v4674, %v4673
  %v4682 = vpack.c.bf16 %v4653, %v4651
  %v4683 = vpack.c.bf16 %v4676, %v4675
  %v4684 = vpack.c.bf16 %v4657, %v4655
  %v4685 = vpack.c.bf16 %v4678, %v4677
  %v4686 = vpack.c.bf16 %v4661, %v4659
  %v4687 = vlaneseq
  %v4688 = vshrl.u32 %v4687, 7
  %v4689 = vsub.s32 0, %v4688
  %v4690 = vrot.slane %v4224, %v4689
  %v4709 = vunpack.c.l.b16 %v4205
  %v4710 = vunpack.c.l.b16 %v4206
  %v4711 = vunpack.c.l.b16 %v4207
  %v4712 = vunpack.c.l.b16 %v4208
  %v4713 = vunpack.c.l.b16 %v4209
  %v4714 = vunpack.c.l.b16 %v4210
  %v4715 = vunpack.c.l.b16 %v4211
  %v4716 = vunpack.c.l.b16 %v4212
  %v4717 = vunpack.c.l.b16 %v4213
  %v4718 = vunpack.c.l.b16 %v4214
  %v4719 = vunpack.c.l.b16 %v4215
  %v4720 = vunpack.c.l.b16 %v4216
  %v4721 = vunpack.c.l.b16 %v4217
  %v4722 = vunpack.c.l.b16 %v4218
  %v4723 = vunpack.c.l.b16 %v4219
  %v4724 = vunpack.c.l.b16 %v4220
  %v4725 = vunpack.c.l.b16 %v4221
  %v4726 = vunpack.c.l.b16 %v4222
  %v4727 = vpack.c.b16 %v4710, %v4709
  %v4728 = vpack.c.b16 %v4712, %v4711
  %v4729 = vpack.c.b16 %v4714, %v4713
  %v4730 = vpack.c.b16 %v4716, %v4715
  %v4731 = vpack.c.b16 %v4718, %v4717
  %v4732 = vpack.c.b16 %v4720, %v4719
  %v4733 = vpack.c.b16 %v4722, %v4721
  %v4734 = vpack.c.b16 %v4724, %v4723
  %v4735 = vpack.c.b16 %v4726, %v4725
  %v4746 = vsel %vm922, %v4680, 0
  %v4749 = vsel %vm922, %v4682, 0
  %v4752 = vsel %vm922, %v4684, 0
  %v4755 = vsel %vm922, %v4686, 0
  %4757 = vmatprep.subr.bf16.mxu0 0
  %4758 = vmatpush1.bf16.msra.mxu0 %v4727
  %4759 = vmatprep.subr.bf16.mxu0 0
  %4760 = vmatpush1.bf16.msra.mxu0 %v4728
  %4761 = vmatprep.subr.bf16.mxu0 0
  %4762 = vmatpush1.bf16.msra.mxu0 %v4729
  %4763 = vmatprep.subr.bf16.mxu0 0
  %4764 = vmatpush1.bf16.msra.mxu0 %v4730
  %4765 = vmatprep.subr.bf16.mxu0 0
  %4766 = vmatpush1.bf16.msra.mxu0 %v4731
  %4767 = vmatprep.subr.bf16.mxu0 0
  %4768 = vmatpush1.bf16.msra.mxu0 %v4732
  %4769 = vmatprep.subr.bf16.mxu0 0
  %4770 = vmatpush1.bf16.msra.mxu0 %v4733
  %4771 = vmatprep.subr.bf16.mxu0 0
  %4772 = vmatpush1.bf16.msra.mxu0 %v4734
  %4773 = vmatprep.subr.bf16.mxu0 0
  %4774 = vmatpush1.bf16.msra.mxu0 %v4735
  %4775 = vmatprep.subr.bf16.mxu0 0
  %4776 = vmatpush1.bf16.msra.mxu0 0
  %4777 = vmatprep.subr.bf16.mxu0 0
  %4778 = vmatpush1.bf16.msra.mxu0 0
  %4779 = vmatprep.subr.bf16.mxu0 0
  %4780 = vmatpush1.bf16.msra.mxu0 0
  %4781 = vmatprep.subr.bf16.mxu0 0
  %4782 = vmatpush1.bf16.msra.mxu0 0
  %4783 = vmatprep.subr.bf16.mxu0 0
  %4784 = vmatpush1.bf16.msra.mxu0 0
  %4785 = vmatprep.subr.bf16.mxu0 0
  %4786 = vmatpush1.bf16.msra.mxu0 0
  %4787 = vmatprep.subr.bf16.mxu0 0
  %4788 = vmatpush1.bf16.msra.mxu0 0
  %4789 = vmatprep.mubr.bf16.mxu0 %v4746
  %4790 = vmatmul.mubr.bf16.gmra.mrb[0].mxu0 %v4679
  %v4791 = vpop.f32.mrb[0].mxu0
  %v4792 = vadd.f32 %v4690, %v4791
  %v4793 = vpop.f32.mrb[0].mxu0
  %v4794 = vpop.f32.mrb[0].mxu0
  %v4795 = vadd.f32 %v4690, %v4794
  %v4796 = vpop.f32.mrb[0].mxu0
  %4797 = vmatprep.mubr.bf16.mxu0 %v4749
  %4798 = vmatmul.mubr.bf16.gmra.mrb[0].mxu0 %v4681
  %v4799 = vpop.f32.mrb[0].mxu0
  %v4800 = vadd.f32 %v4690, %v4799
  %v4801 = vpop.f32.mrb[0].mxu0
  %v4802 = vpop.f32.mrb[0].mxu0
  %v4803 = vadd.f32 %v4690, %v4802
  %v4804 = vpop.f32.mrb[0].mxu0
  %4805 = vmatprep.mubr.bf16.mxu0 %v4752
  %4806 = vmatmul.mubr.bf16.gmra.mrb[0].mxu0 %v4683
  %v4807 = vpop.f32.mrb[0].mxu0
  %v4808 = vadd.f32 %v4690, %v4807
  %v4809 = vpop.f32.mrb[0].mxu0
  %v4810 = vpop.f32.mrb[0].mxu0
  %v4811 = vadd.f32 %v4690, %v4810
  %v4812 = vpop.f32.mrb[0].mxu0
  %4813 = vmatprep.mubr.bf16.mxu0 %v4755
  %4814 = vmatmul.mubr.bf16.gmra.mrb[0].mxu0 %v4685
  %v4815 = vpop.f32.mrb[0].mxu0
  %v4816 = vadd.f32 %v4690, %v4815
  %v4817 = vpop.f32.mrb[0].mxu0
  %v4818 = vpop.f32.mrb[0].mxu0
  %v4819 = vadd.f32 %v4690, %v4818
  %v4820 = vpop.f32.mrb[0].mxu0
  %4821 = vdwg.mxu0
  %v4822 = vmax.f32 %v4792, 0.0
  %v4823 = vmax.f32 %v4795, 0.0
  %v4824 = vmax.f32 %v4800, 0.0
  %v4825 = vmax.f32 %v4803, 0.0
  %v4826 = vmax.f32 %v4808, 0.0
  %v4827 = vmax.f32 %v4811, 0.0
  %v4828 = vmax.f32 %v4816, 0.0
  %v4829 = vmax.f32 %v4819, 0.0
  %4846 = vrot.lane.b32.xlu0 %v4568, 56
  %v4847 = vpop.permute.xlu0 %4846
  %4848 = vrot.lane.b32.xlu0 %v4570, 56
  %v4849 = vpop.permute.xlu0 %4848
  %4850 = vrot.lane.b32.xlu0 %v4572, 56
  %v4851 = vpop.permute.xlu0 %4850
  %4852 = vrot.lane.b32.xlu0 %v4574, 56
  %v4853 = vpop.permute.xlu0 %4852
  %4854 = vrot.lane.b32.xlu0 %v4578, 56
  %v4855 = vpop.permute.xlu0 %4854
  %4856 = vrot.lane.b32.xlu0 %v4580, 56
  %v4857 = vpop.permute.xlu0 %4856
  %4858 = vrot.lane.b32.xlu0 %v4582, 56
  %v4859 = vpop.permute.xlu0 %4858
  %4860 = vrot.lane.b32.xlu0 %v4584, 56
  %v4861 = vpop.permute.xlu0 %4860
  %4862 = vrot.lane.b32.xlu0 %v4588, 56
  %v4863 = vpop.permute.xlu0 %4862
  %4864 = vrot.lane.b32.xlu0 %v4590, 56
  %v4865 = vpop.permute.xlu0 %4864
  %4866 = vrot.lane.b32.xlu0 %v4592, 56
  %v4867 = vpop.permute.xlu0 %4866
  %4868 = vrot.lane.b32.xlu0 %v4594, 56
  %v4869 = vpop.permute.xlu0 %4868
  %4870 = vrot.lane.b32.xlu0 %v4598, 56
  %v4871 = vpop.permute.xlu0 %4870
  %4872 = vrot.lane.b32.xlu0 %v4600, 56
  %v4873 = vpop.permute.xlu0 %4872
  %4874 = vrot.lane.b32.xlu0 %v4602, 56
  %v4875 = vpop.permute.xlu0 %4874
  %4876 = vrot.lane.b32.xlu0 %v4604, 56
  %v4877 = vpop.permute.xlu0 %4876
  %vm4878 = vcmask 457728
  %v4879 = vsel %vm4878, %v4847, %v4849
  %v4880 = vsel %vm4878, %v4851, %v4853
  %v4881 = vsel %vm4878, %v4855, %v4857
  %v4882 = vsel %vm4878, %v4859, %v4861
  %v4883 = vsel %vm4878, %v4863, %v4865
  %v4884 = vsel %vm4878, %v4867, %v4869
  %v4885 = vsel %vm4878, %v4871, %v4873
  %v4886 = vsel %vm4878, %v4875, %v4877
  %v4895 = vadd.f32 %v4822, %v4879
  %v4896 = vadd.f32 %v4823, %v4880
  %v4897 = vadd.f32 %v4824, %v4881
  %v4898 = vadd.f32 %v4825, %v4882
  %v4899 = vadd.f32 %v4826, %v4883
  %v4900 = vadd.f32 %v4827, %v4884
  %v4901 = vadd.f32 %v4828, %v4885
  %v4902 = vadd.f32 %v4829, %v4886
  %v4903 = vmax.f32 %v4895, 0.0
  %v4904 = vmax.f32 %v4896, 0.0
  %v4905 = vmax.f32 %v4897, 0.0
  %v4906 = vmax.f32 %v4898, 0.0
  %v4907 = vmax.f32 %v4899, 0.0
  %v4908 = vmax.f32 %v4900, 0.0
  %v4909 = vmax.f32 %v4901, 0.0
  %v4910 = vmax.f32 %v4902, 0.0
  %v4911 = vld [vmem:[%s1 + $0x138] sm:$0xf]
  %v4912 = vld [vmem:[%s1 + $0x140] sm:$0xf]
  %v4913 = vld [vmem:[%s1 + $0x148] sm:$0xf]
  %v4914 = vld [vmem:[%s1 + $0x150] sm:$0xf]
  %v4915 = vld [vmem:[%s1 + $0x158] sm:$0xf]
  %v4916 = vld [vmem:[%s1 + $0x160] sm:$0xf]
  %v4917 = vld [vmem:[%s1 + $0x168] sm:$0xf]
  %v4918 = vld [vmem:[%s1 + $0x170] sm:$0xf]
  %v4919 = vld [vmem:[%s1 + $0x178] sm:$0xf]
  %v4920 = vld [vmem:[%s1 + $0x180] sm:$0xf]
  %v4921 = vld [vmem:[%s1 + $0x188] sm:$0xf]
  %v4922 = vld [vmem:[%s1 + $0x190] sm:$0xf]
  %v4923 = vld [vmem:[%s1 + $0x198] sm:$0xf]
  %v4924 = vld [vmem:[%s1 + $0x1a0] sm:$0xf]
  %v4925 = vld [vmem:[%s1 + $0x1a8] sm:$0xf]
  %v4926 = vld [vmem:[%s1 + $0x1b0] sm:$0xf]
  %v4927 = vld [vmem:[%s1 + $0x1b8] sm:$0xf]
  %v4928 = vld [vmem:[%s1 + $0x1c0] sm:$0xf]
  %v4929 = vld [vmem:[%s1 + $0x1c8] sm:$0x1]
  %v4930 = vunpack.c.l.bf16 %v4929
  %v4931 = vld [vmem:[%s1 + $0x1d0] sm:$0xf]
  %v4932 = vld [vmem:[%s1 + $0x1d8] sm:$0xf]
  %v4933 = vld [vmem:[%s1 + $0x1e0] sm:$0xf]
  %v4934 = vld [vmem:[%s1 + $0x1e8] sm:$0xf]
  %v4935 = vld [vmem:[%s1 + $0x1f0] sm:$0xf]
  %v4936 = vld [vmem:[%s1 + $0x1f8] sm:$0xf]
  %v4937 = vld [vmem:[%s1 + $0x200] sm:$0xf]
  %v4938 = vld [vmem:[%s1 + $0x208] sm:$0xf]
  %v4939 = vld [vmem:[%s1 + $0x210] sm:$0xf]
  %v4940 = vld [vmem:[%s1 + $0x218] sm:$0x1]
  %v4941 = vunpack.c.l.bf16 %v4940
  %v4942 = vrot.slane %v4903, 6
  %v4943 = vrot.slane %v4904, 6
  %v4944 = vrot.slane %v4905, 6
  %v4945 = vrot.slane %v4906, 6
  %v4946 = vrot.slane %v4907, 6
  %v4947 = vrot.slane %v4908, 6
  %v4948 = vrot.slane %v4909, 6
  %v4949 = vrot.slane %v4910, 6
  %vm4950 = vcmp.lt.s32.totalorder %v2621, 2
  %v4951 = vsel %vm4950, %v4948, %v4949
  %v4952 = vsel %vm4950, %v4947, %v4948
  %v4953 = vsel %vm4950, %v4946, %v4947
  %v4954 = vsel %vm4950, %v4945, %v4946
  %v4955 = vsel %vm4950, %v4944, %v4945
  %v4956 = vsel %vm4950, %v4943, %v4944
  %v4957 = vsel %vm4950, %v4942, %v4943
  %v4958 = vsel %vm4950, %v4949, %v4942
  %vm4959 = vcmp.ge.s32.totalorder %v4178, 2
  %vm4960 = vcmp.ge.s32.totalorder %v4179, 2
  %vm4961 = vcmp.ge.s32.totalorder %v4180, 2
  %vm4962 = vcmp.ge.s32.totalorder %v4181, 2
  %vm4963 = vcmp.ge.s32.totalorder %v4182, 2
  %vm4964 = vcmp.ge.s32.totalorder %v4183, 2
  %vm4965 = vcmp.ge.s32.totalorder %v4184, 2
  %vm4966 = vcmp.ge.s32.totalorder %v4185, 2
  %v4967 = vsel %vm4959, 1, 0
  %v4968 = vsel %vm4960, 1, 0
  %v4969 = vsel %vm4961, 1, 0
  %v4970 = vsel %vm4962, 1, 0
  %v4971 = vsel %vm4963, 1, 0
  %v4972 = vsel %vm4964, 1, 0
  %v4973 = vsel %vm4965, 1, 0
  %v4974 = vsel %vm4966, 1, 0
  %vm4975 = vcmp.eq.s32.totalorder %v4967, 1
  %vm4976 = vcmp.eq.s32.totalorder %v4968, 1
  %vm4977 = vcmp.eq.s32.totalorder %v4969, 1
  %vm4978 = vcmp.eq.s32.totalorder %v4970, 1
  %vm4979 = vcmp.eq.s32.totalorder %v4971, 1
  %vm4980 = vcmp.eq.s32.totalorder %v4972, 1
  %vm4981 = vcmp.eq.s32.totalorder %v4973, 1
  %vm4982 = vcmp.eq.s32.totalorder %v4974, 1
  %v4983 = vsel %vm4975, %v4958, 0.0
  %v4984 = vsel %vm4976, %v4957, 0.0
  %v4985 = vsel %vm4977, %v4956, 0.0
  %v4986 = vsel %vm4978, %v4955, 0.0
  %v4987 = vsel %vm4979, %v4954, 0.0
  %v4988 = vsel %vm4980, %v4953, 0.0
  %v4989 = vsel %vm4981, %v4952, 0.0
  %v4990 = vsel %vm4982, %v4951, 0.0
  %4999 = vrot.lane.b32.xlu0 %v4903, 72
  %v5000 = vpop.permute.xlu0 %4999
  %5001 = vrot.lane.b32.xlu0 %v4904, 72
  %v5002 = vpop.permute.xlu0 %5001
  %5003 = vrot.lane.b32.xlu0 %v4905, 72
  %v5004 = vpop.permute.xlu0 %5003
  %5005 = vrot.lane.b32.xlu0 %v4906, 72
  %v5006 = vpop.permute.xlu0 %5005
  %5007 = vrot.lane.b32.xlu0 %v4907, 72
  %v5008 = vpop.permute.xlu0 %5007
  %5009 = vrot.lane.b32.xlu0 %v4908, 72
  %v5010 = vpop.permute.xlu0 %5009
  %5011 = vrot.lane.b32.xlu0 %v4909, 72
  %v5012 = vpop.permute.xlu0 %5011
  %5013 = vrot.lane.b32.xlu0 %v4910, 72
  %v5014 = vpop.permute.xlu0 %5013
  %v5023 = vsel %vm4670, %v4983, %v5000
  %v5024 = vsel %vm4670, %v4984, %v5002
  %v5025 = vsel %vm4670, %v4985, %v5004
  %v5026 = vsel %vm4670, %v4986, %v5006
  %v5027 = vsel %vm4670, %v4987, %v5008
  %v5028 = vsel %vm4670, %v4988, %v5010
  %v5029 = vsel %vm4670, %v4989, %v5012
  %v5030 = vsel %vm4670, %v4990, %v5014
  %v5031 = vpack.c.bf16 %v5024, %v5023
  %v5032 = vpack.c.bf16 %v5002, %v5000
  %v5033 = vpack.c.bf16 %v5026, %v5025
  %v5034 = vpack.c.bf16 %v5006, %v5004
  %v5035 = vpack.c.bf16 %v5028, %v5027
  %v5036 = vpack.c.bf16 %v5010, %v5008
  %v5037 = vpack.c.bf16 %v5030, %v5029
  %v5038 = vpack.c.bf16 %v5014, %v5012
  %v5039 = vlaneseq
  %v5040 = vshrl.u32 %v5039, 7
  %v5041 = vsub.s32 0, %v5040
  %v5042 = vrot.slane %v4930, %v5041
  %v5061 = vunpack.c.l.b16 %v4911
  %v5062 = vunpack.c.l.b16 %v4912
  %v5063 = vunpack.c.l.b16 %v4913
  %v5064 = vunpack.c.l.b16 %v4914
  %v5065 = vunpack.c.l.b16 %v4915
  %v5066 = vunpack.c.l.b16 %v4916
  %v5067 = vunpack.c.l.b16 %v4917
  %v5068 = vunpack.c.l.b16 %v4918
  %v5069 = vunpack.c.l.b16 %v4919
  %v5070 = vunpack.c.l.b16 %v4920
  %v5071 = vunpack.c.l.b16 %v4921
  %v5072 = vunpack.c.l.b16 %v4922
  %v5073 = vunpack.c.l.b16 %v4923
  %v5074 = vunpack.c.l.b16 %v4924
  %v5075 = vunpack.c.l.b16 %v4925
  %v5076 = vunpack.c.l.b16 %v4926
  %v5077 = vunpack.c.l.b16 %v4927
  %v5078 = vunpack.c.l.b16 %v4928
  %v5079 = vpack.c.b16 %v5062, %v5061
  %v5080 = vpack.c.b16 %v5064, %v5063
  %v5081 = vpack.c.b16 %v5066, %v5065
  %v5082 = vpack.c.b16 %v5068, %v5067
  %v5083 = vpack.c.b16 %v5070, %v5069
  %v5084 = vpack.c.b16 %v5072, %v5071
  %v5085 = vpack.c.b16 %v5074, %v5073
  %v5086 = vpack.c.b16 %v5076, %v5075
  %v5087 = vpack.c.b16 %v5078, %v5077
  %v5098 = vsel %vm922, %v5032, 0
  %v5101 = vsel %vm922, %v5034, 0
  %v5104 = vsel %vm922, %v5036, 0
  %v5107 = vsel %vm922, %v5038, 0
  %5109 = vmatprep.subr.bf16.mxu0 0
  %5110 = vmatpush1.bf16.msra.mxu0 %v5079
  %5111 = vmatprep.subr.bf16.mxu0 0
  %5112 = vmatpush1.bf16.msra.mxu0 %v5080
  %5113 = vmatprep.subr.bf16.mxu0 0
  %5114 = vmatpush1.bf16.msra.mxu0 %v5081
  %5115 = vmatprep.subr.bf16.mxu0 0
  %5116 = vmatpush1.bf16.msra.mxu0 %v5082
  %5117 = vmatprep.subr.bf16.mxu0 0
  %5118 = vmatpush1.bf16.msra.mxu0 %v5083
  %5119 = vmatprep.subr.bf16.mxu0 0
  %5120 = vmatpush1.bf16.msra.mxu0 %v5084
  %5121 = vmatprep.subr.bf16.mxu0 0
  %5122 = vmatpush1.bf16.msra.mxu0 %v5085
  %5123 = vmatprep.subr.bf16.mxu0 0
  %5124 = vmatpush1.bf16.msra.mxu0 %v5086
  %5125 = vmatprep.subr.bf16.mxu0 0
  %5126 = vmatpush1.bf16.msra.mxu0 %v5087
  %5127 = vmatprep.subr.bf16.mxu0 0
  %5128 = vmatpush1.bf16.msra.mxu0 0
  %5129 = vmatprep.subr.bf16.mxu0 0
  %5130 = vmatpush1.bf16.msra.mxu0 0
  %5131 = vmatprep.subr.bf16.mxu0 0
  %5132 = vmatpush1.bf16.msra.mxu0 0
  %5133 = vmatprep.subr.bf16.mxu0 0
  %5134 = vmatpush1.bf16.msra.mxu0 0
  %5135 = vmatprep.subr.bf16.mxu0 0
  %5136 = vmatpush1.bf16.msra.mxu0 0
  %5137 = vmatprep.subr.bf16.mxu0 0
  %5138 = vmatpush1.bf16.msra.mxu0 0
  %5139 = vmatprep.subr.bf16.mxu0 0
  %5140 = vmatpush1.bf16.msra.mxu0 0
  %5141 = vmatprep.mubr.bf16.mxu0 %v5098
  %5142 = vmatmul.mubr.bf16.gmra.mrb[0].mxu0 %v5031
  %v5143 = vpop.f32.mrb[0].mxu0
  %v5144 = vadd.f32 %v5042, %v5143
  %v5145 = vpop.f32.mrb[0].mxu0
  %v5146 = vpop.f32.mrb[0].mxu0
  %v5147 = vadd.f32 %v5042, %v5146
  %v5148 = vpop.f32.mrb[0].mxu0
  %5149 = vmatprep.mubr.bf16.mxu0 %v5101
  %5150 = vmatmul.mubr.bf16.gmra.mrb[0].mxu0 %v5033
  %v5151 = vpop.f32.mrb[0].mxu0
  %v5152 = vadd.f32 %v5042, %v5151
  %v5153 = vpop.f32.mrb[0].mxu0
  %v5154 = vpop.f32.mrb[0].mxu0
  %v5155 = vadd.f32 %v5042, %v5154
  %v5156 = vpop.f32.mrb[0].mxu0
  %5157 = vmatprep.mubr.bf16.mxu0 %v5104
  %5158 = vmatmul.mubr.bf16.gmra.mrb[0].mxu0 %v5035
  %v5159 = vpop.f32.mrb[0].mxu0
  %v5160 = vadd.f32 %v5042, %v5159
  %v5161 = vpop.f32.mrb[0].mxu0
  %v5162 = vpop.f32.mrb[0].mxu0
  %v5163 = vadd.f32 %v5042, %v5162
  %v5164 = vpop.f32.mrb[0].mxu0
  %5165 = vmatprep.mubr.bf16.mxu0 %v5107
  %5166 = vmatmul.mubr.bf16.gmra.mrb[0].mxu0 %v5037
  %v5167 = vpop.f32.mrb[0].mxu0
  %v5168 = vadd.f32 %v5042, %v5167
  %v5169 = vpop.f32.mrb[0].mxu0
  %v5170 = vpop.f32.mrb[0].mxu0
  %v5171 = vadd.f32 %v5042, %v5170
  %v5172 = vpop.f32.mrb[0].mxu0
  %5173 = vdwg.mxu0
  %v5174 = vmax.f32 %v5144, 0.0
  %v5175 = vmax.f32 %v5147, 0.0
  %v5176 = vmax.f32 %v5152, 0.0
  %v5177 = vmax.f32 %v5155, 0.0
  %v5178 = vmax.f32 %v5160, 0.0
  %v5179 = vmax.f32 %v5163, 0.0
  %v5180 = vmax.f32 %v5168, 0.0
  %v5181 = vmax.f32 %v5171, 0.0
  %v5182 = vrot.slane %v5174, 6
  %v5183 = vrot.slane %v5175, 6
  %v5184 = vrot.slane %v5176, 6
  %v5185 = vrot.slane %v5177, 6
  %v5186 = vrot.slane %v5178, 6
  %v5187 = vrot.slane %v5179, 6
  %v5188 = vrot.slane %v5180, 6
  %v5189 = vrot.slane %v5181, 6
  %v5190 = vsel %vm4950, %v5188, %v5189
  %v5191 = vsel %vm4950, %v5187, %v5188
  %v5192 = vsel %vm4950, %v5186, %v5187
  %v5193 = vsel %vm4950, %v5185, %v5186
  %v5194 = vsel %vm4950, %v5184, %v5185
  %v5195 = vsel %vm4950, %v5183, %v5184
  %v5196 = vsel %vm4950, %v5182, %v5183
  %v5197 = vsel %vm4950, %v5189, %v5182
  %v5198 = vsel %vm4975, %v5197, 0.0
  %v5199 = vsel %vm4976, %v5196, 0.0
  %v5200 = vsel %vm4977, %v5195, 0.0
  %v5201 = vsel %vm4978, %v5194, 0.0
  %v5202 = vsel %vm4979, %v5193, 0.0
  %v5203 = vsel %vm4980, %v5192, 0.0
  %v5204 = vsel %vm4981, %v5191, 0.0
  %v5205 = vsel %vm4982, %v5190, 0.0
  %5214 = vrot.lane.b32.xlu0 %v5174, 36
  %v5215 = vpop.permute.xlu0 %5214
  %5216 = vrot.lane.b32.xlu0 %v5175, 36
  %v5217 = vpop.permute.xlu0 %5216
  %5218 = vrot.lane.b32.xlu0 %v5176, 36
  %v5219 = vpop.permute.xlu0 %5218
  %5220 = vrot.lane.b32.xlu0 %v5177, 36
  %v5221 = vpop.permute.xlu0 %5220
  %5222 = vrot.lane.b32.xlu0 %v5178, 36
  %v5223 = vpop.permute.xlu0 %5222
  %5224 = vrot.lane.b32.xlu0 %v5179, 36
  %v5225 = vpop.permute.xlu0 %5224
  %5226 = vrot.lane.b32.xlu0 %v5180, 36
  %v5227 = vpop.permute.xlu0 %5226
  %5228 = vrot.lane.b32.xlu0 %v5181, 36
  %v5229 = vpop.permute.xlu0 %5228
  %vm5238 = vcmask 293888
  %v5239 = vsel %vm5238, %v5198, %v5215
  %v5240 = vsel %vm5238, %v5199, %v5217
  %v5241 = vsel %vm5238, %v5200, %v5219
  %v5242 = vsel %vm5238, %v5201, %v5221
  %v5243 = vsel %vm5238, %v5202, %v5223
  %v5244 = vsel %vm5238, %v5203, %v5225
  %v5245 = vsel %vm5238, %v5204, %v5227
  %v5246 = vsel %vm5238, %v5205, %v5229
  %v5247 = vpack.c.bf16 %v5240, %v5239
  %v5248 = vpack.c.bf16 %v5242, %v5241
  %v5249 = vpack.c.bf16 %v5244, %v5243
  %v5250 = vpack.c.bf16 %v5246, %v5245
  %v5251 = vlaneseq
  %v5252 = vshrl.u32 %v5251, 7
  %v5253 = vsub.s32 0, %v5252
  %v5254 = vrot.slane %v4941, %v5253
  %v5264 = vunpack.c.l.b16 %v4931
  %v5265 = vunpack.c.l.b16 %v4932
  %v5266 = vunpack.c.l.b16 %v4933
  %v5267 = vunpack.c.l.b16 %v4934
  %v5268 = vunpack.c.l.b16 %v4935
  %v5269 = vunpack.c.l.b16 %v4936
  %v5270 = vunpack.c.l.b16 %v4937
  %v5271 = vunpack.c.l.b16 %v4938
  %v5272 = vunpack.c.l.b16 %v4939
  %v5273 = vpack.c.b16 %v5265, %v5264
  %v5274 = vpack.c.b16 %v5267, %v5266
  %v5275 = vpack.c.b16 %v5269, %v5268
  %v5276 = vpack.c.b16 %v5271, %v5270
  %v5277 = vpack.c.b16 %v5272, %v5272
  %v5283 = vsel %vm4670, %v5247, 0
  %v5286 = vsel %vm4670, %v5248, 0
  %v5289 = vsel %vm4670, %v5249, 0
  %v5292 = vsel %vm4670, %v5250, 0
  %vm5294 = vcmask 1043456
  %v5296 = vsel %vm5294, %v5277, 0
  %5298 = vmatprep.subr.bf16.mxu0 0
  %5299 = vmatpush1.bf16.msra.mxu0 %v5273
  %5300 = vmatprep.subr.bf16.mxu0 0
  %5301 = vmatpush1.bf16.msra.mxu0 %v5274
  %5302 = vmatprep.subr.bf16.mxu0 0
  %5303 = vmatpush1.bf16.msra.mxu0 %v5275
  %5304 = vmatprep.subr.bf16.mxu0 0
  %5305 = vmatpush1.bf16.msra.mxu0 %v5276
  %5306 = vmatprep.subr.bf16.mxu0 0
  %5307 = vmatpush1.bf16.msra.mxu0 %v5296
  %5308 = vmatprep.subr.bf16.mxu0 0
  %5309 = vmatpush1.bf16.msra.mxu0 0
  %5310 = vmatprep.subr.bf16.mxu0 0
  %5311 = vmatpush1.bf16.msra.mxu0 0
  %5312 = vmatprep.subr.bf16.mxu0 0
  %5313 = vmatpush1.bf16.msra.mxu0 0
  %5314 = vmatprep.subr.bf16.mxu0 0
  %5315 = vmatpush1.bf16.msra.mxu0 0
  %5316 = vmatprep.subr.bf16.mxu0 0
  %5317 = vmatpush1.bf16.msra.mxu0 0
  %5318 = vmatprep.subr.bf16.mxu0 0
  %5319 = vmatpush1.bf16.msra.mxu0 0
  %5320 = vmatprep.subr.bf16.mxu0 0
  %5321 = vmatpush1.bf16.msra.mxu0 0
  %5322 = vmatprep.subr.bf16.mxu0 0
  %5323 = vmatpush1.bf16.msra.mxu0 0
  %5324 = vmatprep.subr.bf16.mxu0 0
  %5325 = vmatpush1.bf16.msra.mxu0 0
  %5326 = vmatprep.subr.bf16.mxu0 0
  %5327 = vmatpush1.bf16.msra.mxu0 0
  %5328 = vmatprep.subr.bf16.mxu0 0
  %5329 = vmatpush1.bf16.msra.mxu0 0
  %5330 = vmatprep.mubr.bf16.mxu0 0
  %5331 = vmatmul.mubr.bf16.gmra.mrb[0].mxu0 %v5283
  %v5332 = vpop.f32.mrb[0].mxu0
  %v5333 = vadd.f32 %v5254, %v5332
  %v5334 = vpop.f32.mrb[0].mxu0
  %v5335 = vpop.f32.mrb[0].mxu0
  %v5336 = vadd.f32 %v5254, %v5335
  %v5337 = vpop.f32.mrb[0].mxu0
  %5338 = vmatprep.mubr.bf16.mxu0 0
  %5339 = vmatmul.mubr.bf16.gmra.mrb[0].mxu0 %v5286
  %v5340 = vpop.f32.mrb[0].mxu0
  %v5341 = vadd.f32 %v5254, %v5340
  %v5342 = vpop.f32.mrb[0].mxu0
  %v5343 = vpop.f32.mrb[0].mxu0
  %v5344 = vadd.f32 %v5254, %v5343
  %v5345 = vpop.f32.mrb[0].mxu0
  %5346 = vmatprep.mubr.bf16.mxu0 0
  %5347 = vmatmul.mubr.bf16.gmra.mrb[0].mxu0 %v5289
  %v5348 = vpop.f32.mrb[0].mxu0
  %v5349 = vadd.f32 %v5254, %v5348
  %v5350 = vpop.f32.mrb[0].mxu0
  %v5351 = vpop.f32.mrb[0].mxu0
  %v5352 = vadd.f32 %v5254, %v5351
  %v5353 = vpop.f32.mrb[0].mxu0
  %5354 = vmatprep.mubr.bf16.mxu0 0
  %5355 = vmatmul.mubr.bf16.gmra.mrb[0].mxu0 %v5292
  %v5356 = vpop.f32.mrb[0].mxu0
  %v5357 = vadd.f32 %v5254, %v5356
  %v5358 = vpop.f32.mrb[0].mxu0
  %v5359 = vpop.f32.mrb[0].mxu0
  %v5360 = vadd.f32 %v5254, %v5359
  %v5361 = vpop.f32.mrb[0].mxu0
  %5362 = vdwg.mxu0
  %v5363 = vmax.f32 %v5333, 0.0
  %v5364 = vmax.f32 %v5336, 0.0
  %v5365 = vmax.f32 %v5341, 0.0
  %v5366 = vmax.f32 %v5344, 0.0
  %v5367 = vmax.f32 %v5349, 0.0
  %v5368 = vmax.f32 %v5352, 0.0
  %v5369 = vmax.f32 %v5357, 0.0
  %v5370 = vmax.f32 %v5360, 0.0
  %5379 = vrot.lane.b32.xlu0 %v5144, 92
  %v5380 = vpop.permute.xlu0 %5379
  %5381 = vrot.lane.b32.xlu0 %v5147, 92
  %v5382 = vpop.permute.xlu0 %5381
  %5383 = vrot.lane.b32.xlu0 %v5152, 92
  %v5384 = vpop.permute.xlu0 %5383
  %5385 = vrot.lane.b32.xlu0 %v5155, 92
  %v5386 = vpop.permute.xlu0 %5385
  %5387 = vrot.lane.b32.xlu0 %v5160, 92
  %v5388 = vpop.permute.xlu0 %5387
  %5389 = vrot.lane.b32.xlu0 %v5163, 92
  %v5390 = vpop.permute.xlu0 %5389
  %5391 = vrot.lane.b32.xlu0 %v5168, 92
  %v5392 = vpop.permute.xlu0 %5391
  %5393 = vrot.lane.b32.xlu0 %v5171, 92
  %v5394 = vpop.permute.xlu0 %5393
  %v5403 = vadd.f32 %v5363, %v5380
  %v5404 = vadd.f32 %v5364, %v5382
  %v5405 = vadd.f32 %v5365, %v5384
  %v5406 = vadd.f32 %v5366, %v5386
  %v5407 = vadd.f32 %v5367, %v5388
  %v5408 = vadd.f32 %v5368, %v5390
  %v5409 = vadd.f32 %v5369, %v5392
  %v5410 = vadd.f32 %v5370, %v5394
  %v5411 = vmax.f32 %v5403, 0.0
  %v5412 = vmax.f32 %v5404, 0.0
  %v5413 = vmax.f32 %v5405, 0.0
  %v5414 = vmax.f32 %v5406, 0.0
  %v5415 = vmax.f32 %v5407, 0.0
  %v5416 = vmax.f32 %v5408, 0.0
  %v5417 = vmax.f32 %v5409, 0.0
  %v5418 = vmax.f32 %v5410, 0.0
  %v5419 = vld [vmem:[%s1 + $0x220] sm:$0xf]
  %v5420 = vld [vmem:[%s1 + $0x228] sm:$0xf]
  %v5421 = vld [vmem:[%s1 + $0x230] sm:$0xf]
  %v5422 = vld [vmem:[%s1 + $0x238] sm:$0xf]
  %v5423 = vld [vmem:[%s1 + $0x240] sm:$0xf]
  %v5424 = vld [vmem:[%s1 + $0x248] sm:$0xf]
  %v5425 = vld [vmem:[%s1 + $0x250] sm:$0xf]
  %v5426 = vld [vmem:[%s1 + $0x258] sm:$0xf]
  %v5427 = vld [vmem:[%s1 + $0x260] sm:$0xf]
  %v5428 = vld [vmem:[%s1 + $0x268] sm:$0x1]
  %v5429 = vunpack.c.l.bf16 %v5428
  %v5430 = vld [vmem:[%s1 + $0x270] sm:$0xf]
  %v5431 = vld [vmem:[%s1 + $0x278] sm:$0xf]
  %v5432 = vld [vmem:[%s1 + $0x280] sm:$0xf]
  %v5433 = vld [vmem:[%s1 + $0x288] sm:$0xf]
  %v5434 = vld [vmem:[%s1 + $0x290] sm:$0xf]
  %v5435 = vld [vmem:[%s1 + $0x298] sm:$0xf]
  %v5436 = vld [vmem:[%s1 + $0x2a0] sm:$0x1]
  %v5437 = vunpack.c.l.bf16 %v5436
  %v5438 = vrot.slane %v5411, 4
  %v5439 = vrot.slane %v5412, 4
  %v5440 = vrot.slane %v5413, 4
  %v5441 = vrot.slane %v5414, 4
  %v5442 = vrot.slane %v5415, 4
  %v5443 = vrot.slane %v5416, 4
  %v5444 = vrot.slane %v5417, 4
  %v5445 = vrot.slane %v5418, 4
  %vm5446 = vcmp.lt.s32.totalorder %v2621, 4
  %v5447 = vsel %vm5446, %v5444, %v5445
  %v5448 = vsel %vm5446, %v5443, %v5444
  %v5449 = vsel %vm5446, %v5442, %v5443
  %v5450 = vsel %vm5446, %v5441, %v5442
  %v5451 = vsel %vm5446, %v5440, %v5441
  %v5452 = vsel %vm5446, %v5439, %v5440
  %v5453 = vsel %vm5446, %v5438, %v5439
  %v5454 = vsel %vm5446, %v5445, %v5438
  %vm5455 = vcmp.ge.s32.totalorder %v4178, 4
  %vm5456 = vcmp.ge.s32.totalorder %v4179, 4
  %vm5457 = vcmp.ge.s32.totalorder %v4180, 4
  %vm5458 = vcmp.ge.s32.totalorder %v4181, 4
  %vm5459 = vcmp.ge.s32.totalorder %v4182, 4
  %vm5460 = vcmp.ge.s32.totalorder %v4183, 4
  %vm5461 = vcmp.ge.s32.totalorder %v4184, 4
  %vm5462 = vcmp.ge.s32.totalorder %v4185, 4
  %v5463 = vsel %vm5455, 1, 0
  %v5464 = vsel %vm5456, 1, 0
  %v5465 = vsel %vm5457, 1, 0
  %v5466 = vsel %vm5458, 1, 0
  %v5467 = vsel %vm5459, 1, 0
  %v5468 = vsel %vm5460, 1, 0
  %v5469 = vsel %vm5461, 1, 0
  %v5470 = vsel %vm5462, 1, 0
  %vm5471 = vcmp.eq.s32.totalorder %v5463, 1
  %vm5472 = vcmp.eq.s32.totalorder %v5464, 1
  %vm5473 = vcmp.eq.s32.totalorder %v5465, 1
  %vm5474 = vcmp.eq.s32.totalorder %v5466, 1
  %vm5475 = vcmp.eq.s32.totalorder %v5467, 1
  %vm5476 = vcmp.eq.s32.totalorder %v5468, 1
  %vm5477 = vcmp.eq.s32.totalorder %v5469, 1
  %vm5478 = vcmp.eq.s32.totalorder %v5470, 1
  %v5479 = vsel %vm5471, %v5454, 0.0
  %v5480 = vsel %vm5472, %v5453, 0.0
  %v5481 = vsel %vm5473, %v5452, 0.0
  %v5482 = vsel %vm5474, %v5451, 0.0
  %v5483 = vsel %vm5475, %v5450, 0.0
  %v5484 = vsel %vm5476, %v5449, 0.0
  %v5485 = vsel %vm5477, %v5448, 0.0
  %v5486 = vsel %vm5478, %v5447, 0.0
  %5495 = vrot.lane.b32.xlu0 %v5411, 36
  %v5496 = vpop.permute.xlu0 %5495
  %5497 = vrot.lane.b32.xlu0 %v5412, 36
  %v5498 = vpop.permute.xlu0 %5497
  %5499 = vrot.lane.b32.xlu0 %v5413, 36
  %v5500 = vpop.permute.xlu0 %5499
  %5501 = vrot.lane.b32.xlu0 %v5414, 36
  %v5502 = vpop.permute.xlu0 %5501
  %5503 = vrot.lane.b32.xlu0 %v5415, 36
  %v5504 = vpop.permute.xlu0 %5503
  %5505 = vrot.lane.b32.xlu0 %v5416, 36
  %v5506 = vpop.permute.xlu0 %5505
  %5507 = vrot.lane.b32.xlu0 %v5417, 36
  %v5508 = vpop.permute.xlu0 %5507
  %5509 = vrot.lane.b32.xlu0 %v5418, 36
  %v5510 = vpop.permute.xlu0 %5509
  %v5519 = vsel %vm5238, %v5479, %v5496
  %v5520 = vsel %vm5238, %v5480, %v5498
  %v5521 = vsel %vm5238, %v5481, %v5500
  %v5522 = vsel %vm5238, %v5482, %v5502
  %v5523 = vsel %vm5238, %v5483, %v5504
  %v5524 = vsel %vm5238, %v5484, %v5506
  %v5525 = vsel %vm5238, %v5485, %v5508
  %v5526 = vsel %vm5238, %v5486, %v5510
  %v5527 = vpack.c.bf16 %v5520, %v5519
  %v5528 = vpack.c.bf16 %v5522, %v5521
  %v5529 = vpack.c.bf16 %v5524, %v5523
  %v5530 = vpack.c.bf16 %v5526, %v5525
  %v5531 = vlaneseq
  %v5532 = vshrl.u32 %v5531, 7
  %v5533 = vsub.s32 0, %v5532
  %v5534 = vrot.slane %v5429, %v5533
  %v5544 = vunpack.c.l.b16 %v5419
  %v5545 = vunpack.c.l.b16 %v5420
  %v5546 = vunpack.c.l.b16 %v5421
  %v5547 = vunpack.c.l.b16 %v5422
  %v5548 = vunpack.c.l.b16 %v5423
  %v5549 = vunpack.c.l.b16 %v5424
  %v5550 = vunpack.c.l.b16 %v5425
  %v5551 = vunpack.c.l.b16 %v5426
  %v5552 = vunpack.c.l.b16 %v5427
  %v5553 = vpack.c.b16 %v5545, %v5544
  %v5554 = vpack.c.b16 %v5547, %v5546
  %v5555 = vpack.c.b16 %v5549, %v5548
  %v5556 = vpack.c.b16 %v5551, %v5550
  %v5557 = vpack.c.b16 %v5552, %v5552
  %v5563 = vsel %vm4670, %v5527, 0
  %v5566 = vsel %vm4670, %v5528, 0
  %v5569 = vsel %vm4670, %v5529, 0
  %v5572 = vsel %vm4670, %v5530, 0
  %v5575 = vsel %vm5294, %v5557, 0
  %5577 = vmatprep.subr.bf16.mxu0 0
  %5578 = vmatpush1.bf16.msra.mxu0 %v5553
  %5579 = vmatprep.subr.bf16.mxu0 0
  %5580 = vmatpush1.bf16.msra.mxu0 %v5554
  %5581 = vmatprep.subr.bf16.mxu0 0
  %5582 = vmatpush1.bf16.msra.mxu0 %v5555
  %5583 = vmatprep.subr.bf16.mxu0 0
  %5584 = vmatpush1.bf16.msra.mxu0 %v5556
  %5585 = vmatprep.subr.bf16.mxu0 0
  %5586 = vmatpush1.bf16.msra.mxu0 %v5575
  %5587 = vmatprep.subr.bf16.mxu0 0
  %5588 = vmatpush1.bf16.msra.mxu0 0
  %5589 = vmatprep.subr.bf16.mxu0 0
  %5590 = vmatpush1.bf16.msra.mxu0 0
  %5591 = vmatprep.subr.bf16.mxu0 0
  %5592 = vmatpush1.bf16.msra.mxu0 0
  %5593 = vmatprep.subr.bf16.mxu0 0
  %5594 = vmatpush1.bf16.msra.mxu0 0
  %5595 = vmatprep.subr.bf16.mxu0 0
  %5596 = vmatpush1.bf16.msra.mxu0 0
  %5597 = vmatprep.subr.bf16.mxu0 0
  %5598 = vmatpush1.bf16.msra.mxu0 0
  %5599 = vmatprep.subr.bf16.mxu0 0
  %5600 = vmatpush1.bf16.msra.mxu0 0
  %5601 = vmatprep.subr.bf16.mxu0 0
  %5602 = vmatpush1.bf16.msra.mxu0 0
  %5603 = vmatprep.subr.bf16.mxu0 0
  %5604 = vmatpush1.bf16.msra.mxu0 0
  %5605 = vmatprep.subr.bf16.mxu0 0
  %5606 = vmatpush1.bf16.msra.mxu0 0
  %5607 = vmatprep.subr.bf16.mxu0 0
  %5608 = vmatpush1.bf16.msra.mxu0 0
  %5609 = vmatprep.mubr.bf16.mxu0 0
  %5610 = vmatmul.mubr.bf16.gmra.mrb[0].mxu0 %v5563
  %v5611 = vpop.f32.mrb[0].mxu0
  %v5612 = vadd.f32 %v5534, %v5611
  %v5613 = vpop.f32.mrb[0].mxu0
  %v5614 = vpop.f32.mrb[0].mxu0
  %v5615 = vadd.f32 %v5534, %v5614
  %v5616 = vpop.f32.mrb[0].mxu0
  %5617 = vmatprep.mubr.bf16.mxu0 0
  %5618 = vmatmul.mubr.bf16.gmra.mrb[0].mxu0 %v5566
  %v5619 = vpop.f32.mrb[0].mxu0
  %v5620 = vadd.f32 %v5534, %v5619
  %v5621 = vpop.f32.mrb[0].mxu0
  %v5622 = vpop.f32.mrb[0].mxu0
  %v5623 = vadd.f32 %v5534, %v5622
  %v5624 = vpop.f32.mrb[0].mxu0
  %5625 = vmatprep.mubr.bf16.mxu0 0
  %5626 = vmatmul.mubr.bf16.gmra.mrb[0].mxu0 %v5569
  %v5627 = vpop.f32.mrb[0].mxu0
  %v5628 = vadd.f32 %v5534, %v5627
  %v5629 = vpop.f32.mrb[0].mxu0
  %v5630 = vpop.f32.mrb[0].mxu0
  %v5631 = vadd.f32 %v5534, %v5630
  %v5632 = vpop.f32.mrb[0].mxu0
  %5633 = vmatprep.mubr.bf16.mxu0 0
  %5634 = vmatmul.mubr.bf16.gmra.mrb[0].mxu0 %v5572
  %v5635 = vpop.f32.mrb[0].mxu0
  %v5636 = vadd.f32 %v5534, %v5635
  %v5637 = vpop.f32.mrb[0].mxu0
  %v5638 = vpop.f32.mrb[0].mxu0
  %v5639 = vadd.f32 %v5534, %v5638
  %v5640 = vpop.f32.mrb[0].mxu0
  %5641 = vdwg.mxu0
  %v5642 = vmax.f32 %v5612, 0.0
  %v5643 = vmax.f32 %v5615, 0.0
  %v5644 = vmax.f32 %v5620, 0.0
  %v5645 = vmax.f32 %v5623, 0.0
  %v5646 = vmax.f32 %v5628, 0.0
  %v5647 = vmax.f32 %v5631, 0.0
  %v5648 = vmax.f32 %v5636, 0.0
  %v5649 = vmax.f32 %v5639, 0.0
  %v5650 = vrot.slane %v5642, 4
  %v5651 = vrot.slane %v5643, 4
  %v5652 = vrot.slane %v5644, 4
  %v5653 = vrot.slane %v5645, 4
  %v5654 = vrot.slane %v5646, 4
  %v5655 = vrot.slane %v5647, 4
  %v5656 = vrot.slane %v5648, 4
  %v5657 = vrot.slane %v5649, 4
  %v5658 = vsel %vm5446, %v5656, %v5657
  %v5659 = vsel %vm5446, %v5655, %v5656
  %v5660 = vsel %vm5446, %v5654, %v5655
  %v5661 = vsel %vm5446, %v5653, %v5654
  %v5662 = vsel %vm5446, %v5652, %v5653
  %v5663 = vsel %vm5446, %v5651, %v5652
  %v5664 = vsel %vm5446, %v5650, %v5651
  %v5665 = vsel %vm5446, %v5657, %v5650
  %v5666 = vsel %vm5471, %v5665, 0.0
  %v5667 = vsel %vm5472, %v5664, 0.0
  %v5668 = vsel %vm5473, %v5663, 0.0
  %v5669 = vsel %vm5474, %v5662, 0.0
  %v5670 = vsel %vm5475, %v5661, 0.0
  %v5671 = vsel %vm5476, %v5660, 0.0
  %v5672 = vsel %vm5477, %v5659, 0.0
  %v5673 = vsel %vm5478, %v5658, 0.0
  %5682 = vrot.lane.b32.xlu0 %v5642, 24
  %v5683 = vpop.permute.xlu0 %5682
  %5684 = vrot.lane.b32.xlu0 %v5643, 24
  %v5685 = vpop.permute.xlu0 %5684
  %5686 = vrot.lane.b32.xlu0 %v5644, 24
  %v5687 = vpop.permute.xlu0 %5686
  %5688 = vrot.lane.b32.xlu0 %v5645, 24
  %v5689 = vpop.permute.xlu0 %5688
  %5690 = vrot.lane.b32.xlu0 %v5646, 24
  %v5691 = vpop.permute.xlu0 %5690
  %5692 = vrot.lane.b32.xlu0 %v5647, 24
  %v5693 = vpop.permute.xlu0 %5692
  %5694 = vrot.lane.b32.xlu0 %v5648, 24
  %v5695 = vpop.permute.xlu0 %5694
  %5696 = vrot.lane.b32.xlu0 %v5649, 24
  %v5697 = vpop.permute.xlu0 %5696
  %vm5706 = vcmask 195584
  %v5707 = vsel %vm5706, %v5666, %v5683
  %v5708 = vsel %vm5706, %v5667, %v5685
  %v5709 = vsel %vm5706, %v5668, %v5687
  %v5710 = vsel %vm5706, %v5669, %v5689
  %v5711 = vsel %vm5706, %v5670, %v5691
  %v5712 = vsel %vm5706, %v5671, %v5693
  %v5713 = vsel %vm5706, %v5672, %v5695
  %v5714 = vsel %vm5706, %v5673, %v5697
  %v5715 = vpack.c.bf16 %v5708, %v5707
  %v5716 = vpack.c.bf16 %v5710, %v5709
  %v5717 = vpack.c.bf16 %v5712, %v5711
  %v5718 = vpack.c.bf16 %v5714, %v5713
  %v5719 = vlaneseq
  %v5720 = vshrl.u32 %v5719, 7
  %v5721 = vsub.s32 0, %v5720
  %v5722 = vrot.slane %v5437, %v5721
  %v5729 = vunpack.c.l.b16 %v5430
  %v5730 = vunpack.c.l.b16 %v5431
  %v5731 = vunpack.c.l.b16 %v5432
  %v5732 = vunpack.c.l.b16 %v5433
  %v5733 = vunpack.c.l.b16 %v5434
  %v5734 = vunpack.c.l.b16 %v5435
  %v5735 = vpack.c.b16 %v5730, %v5729
  %v5736 = vpack.c.b16 %v5732, %v5731
  %v5737 = vpack.c.b16 %v5734, %v5733
  %vm5741 = vcmask 392192
  %v5743 = vsel %vm5741, %v5715, 0
  %v5746 = vsel %vm5741, %v5716, 0
  %v5749 = vsel %vm5741, %v5717, 0
  %v5752 = vsel %vm5741, %v5718, 0
  %5754 = vmatprep.subr.bf16.mxu0 0
  %5755 = vmatpush1.bf16.msra.mxu0 %v5735
  %5756 = vmatprep.subr.bf16.mxu0 0
  %5757 = vmatpush1.bf16.msra.mxu0 %v5736
  %5758 = vmatprep.subr.bf16.mxu0 0
  %5759 = vmatpush1.bf16.msra.mxu0 %v5737
  %5760 = vmatprep.subr.bf16.mxu0 0
  %5761 = vmatpush1.bf16.msra.mxu0 0
  %5762 = vmatprep.subr.bf16.mxu0 0
  %5763 = vmatpush1.bf16.msra.mxu0 0
  %5764 = vmatprep.subr.bf16.mxu0 0
  %5765 = vmatpush1.bf16.msra.mxu0 0
  %5766 = vmatprep.subr.bf16.mxu0 0
  %5767 = vmatpush1.bf16.msra.mxu0 0
  %5768 = vmatprep.subr.bf16.mxu0 0
  %5769 = vmatpush1.bf16.msra.mxu0 0
  %5770 = vmatprep.subr.bf16.mxu0 0
  %5771 = vmatpush1.bf16.msra.mxu0 0
  %5772 = vmatprep.subr.bf16.mxu0 0
  %5773 = vmatpush1.bf16.msra.mxu0 0
  %5774 = vmatprep.subr.bf16.mxu0 0
  %5775 = vmatpush1.bf16.msra.mxu0 0
  %5776 = vmatprep.subr.bf16.mxu0 0
  %5777 = vmatpush1.bf16.msra.mxu0 0
  %5778 = vmatprep.subr.bf16.mxu0 0
  %5779 = vmatpush1.bf16.msra.mxu0 0
  %5780 = vmatprep.subr.bf16.mxu0 0
  %5781 = vmatpush1.bf16.msra.mxu0 0
  %5782 = vmatprep.subr.bf16.mxu0 0
  %5783 = vmatpush1.bf16.msra.mxu0 0
  %5784 = vmatprep.subr.bf16.mxu0 0
  %5785 = vmatpush1.bf16.msra.mxu0 0
  %5786 = vmatprep.mubr.bf16.mxu0 0
  %5787 = vmatmul.mubr.bf16.gmra.mrb[0].mxu0 %v5743
  %v5788 = vpop.f32.mrb[0].mxu0
  %v5789 = vadd.f32 %v5722, %v5788
  %v5790 = vpop.f32.mrb[0].mxu0
  %v5791 = vpop.f32.mrb[0].mxu0
  %v5792 = vadd.f32 %v5722, %v5791
  %v5793 = vpop.f32.mrb[0].mxu0
  %5794 = vmatprep.mubr.bf16.mxu0 0
  %5795 = vmatmul.mubr.bf16.gmra.mrb[0].mxu0 %v5746
  %v5796 = vpop.f32.mrb[0].mxu0
  %v5797 = vadd.f32 %v5722, %v5796
  %v5798 = vpop.f32.mrb[0].mxu0
  %v5799 = vpop.f32.mrb[0].mxu0
  %v5800 = vadd.f32 %v5722, %v5799
  %v5801 = vpop.f32.mrb[0].mxu0
  %5802 = vmatprep.mubr.bf16.mxu0 0
  %5803 = vmatmul.mubr.bf16.gmra.mrb[0].mxu0 %v5749
  %v5804 = vpop.f32.mrb[0].mxu0
  %v5805 = vadd.f32 %v5722, %v5804
  %v5806 = vpop.f32.mrb[0].mxu0
  %v5807 = vpop.f32.mrb[0].mxu0
  %v5808 = vadd.f32 %v5722, %v5807
  %v5809 = vpop.f32.mrb[0].mxu0
  %5810 = vmatprep.mubr.bf16.mxu0 0
  %5811 = vmatmul.mubr.bf16.gmra.mrb[0].mxu0 %v5752
  %v5812 = vpop.f32.mrb[0].mxu0
  %v5813 = vadd.f32 %v5722, %v5812
  %v5814 = vpop.f32.mrb[0].mxu0
  %v5815 = vpop.f32.mrb[0].mxu0
  %v5816 = vadd.f32 %v5722, %v5815
  %v5817 = vpop.f32.mrb[0].mxu0
  %5818 = vdwg.mxu0
  %v5819 = vmax.f32 %v5789, 0.0
  %v5820 = vmax.f32 %v5792, 0.0
  %v5821 = vmax.f32 %v5797, 0.0
  %v5822 = vmax.f32 %v5800, 0.0
  %v5823 = vmax.f32 %v5805, 0.0
  %v5824 = vmax.f32 %v5808, 0.0
  %v5825 = vmax.f32 %v5813, 0.0
  %v5826 = vmax.f32 %v5816, 0.0
  %5835 = vrot.lane.b32.xlu0 %v5612, 104
  %v5836 = vpop.permute.xlu0 %5835
  %5837 = vrot.lane.b32.xlu0 %v5615, 104
  %v5838 = vpop.permute.xlu0 %5837
  %5839 = vrot.lane.b32.xlu0 %v5620, 104
  %v5840 = vpop.permute.xlu0 %5839
  %5841 = vrot.lane.b32.xlu0 %v5623, 104
  %v5842 = vpop.permute.xlu0 %5841
  %5843 = vrot.lane.b32.xlu0 %v5628, 104
  %v5844 = vpop.permute.xlu0 %5843
  %5845 = vrot.lane.b32.xlu0 %v5631, 104
  %v5846 = vpop.permute.xlu0 %5845
  %5847 = vrot.lane.b32.xlu0 %v5636, 104
  %v5848 = vpop.permute.xlu0 %5847
  %5849 = vrot.lane.b32.xlu0 %v5639, 104
  %v5850 = vpop.permute.xlu0 %5849
  %v5859 = vadd.f32 %v5819, %v5836
  %v5860 = vadd.f32 %v5820, %v5838
  %v5861 = vadd.f32 %v5821, %v5840
  %v5862 = vadd.f32 %v5822, %v5842
  %v5863 = vadd.f32 %v5823, %v5844
  %v5864 = vadd.f32 %v5824, %v5846
  %v5865 = vadd.f32 %v5825, %v5848
  %v5866 = vadd.f32 %v5826, %v5850
  %v5867 = vmax.f32 %v5859, 0.0
  %v5868 = vmax.f32 %v5860, 0.0
  %v5869 = vmax.f32 %v5861, 0.0
  %v5870 = vmax.f32 %v5862, 0.0
  %v5871 = vmax.f32 %v5863, 0.0
  %v5872 = vmax.f32 %v5864, 0.0
  %v5873 = vmax.f32 %v5865, 0.0
  %v5874 = vmax.f32 %v5866, 0.0
  %v5875 = vld [vmem:[%s1 + $0x2a8] sm:$0xf]
  %v5876 = vld [vmem:[%s1 + $0x2b0] sm:$0xf]
  %v5877 = vld [vmem:[%s1 + $0x2b8] sm:$0xf]
  %v5878 = vld [vmem:[%s1 + $0x2c0] sm:$0xf]
  %v5879 = vld [vmem:[%s1 + $0x2c8] sm:$0xf]
  %v5880 = vld [vmem:[%s1 + $0x2d0] sm:$0xf]
  %v5881 = vld [vmem:[%s1 + $0x2d8] sm:$0x1]
  %v5882 = vunpack.c.l.bf16 %v5881
  %v5883 = vld [vmem:[%s1 + $0x2e0] sm:$0xf]
  %v5884 = vld [vmem:[%s1 + $0x2e8] sm:$0xf]
  %v5885 = vld [vmem:[%s1 + $0x2f0] sm:$0xf]
  %v5886 = vld [vmem:[%s1 + $0x2f8] sm:$0x1]
  %v5887 = vunpack.c.l.bf16 %v5886
  %vm5888 = vcmp.ge.s32.totalorder %v4178, 8
  %vm5889 = vcmp.ge.s32.totalorder %v4179, 8
  %vm5890 = vcmp.ge.s32.totalorder %v4180, 8
  %vm5891 = vcmp.ge.s32.totalorder %v4181, 8
  %vm5892 = vcmp.ge.s32.totalorder %v4182, 8
  %vm5893 = vcmp.ge.s32.totalorder %v4183, 8
  %vm5894 = vcmp.ge.s32.totalorder %v4184, 8
  %vm5895 = vcmp.ge.s32.totalorder %v4185, 8
  %v5896 = vsel %vm5888, 1, 0
  %v5897 = vsel %vm5889, 1, 0
  %v5898 = vsel %vm5890, 1, 0
  %v5899 = vsel %vm5891, 1, 0
  %v5900 = vsel %vm5892, 1, 0
  %v5901 = vsel %vm5893, 1, 0
  %v5902 = vsel %vm5894, 1, 0
  %v5903 = vsel %vm5895, 1, 0
  %vm5904 = vcmp.eq.s32.totalorder %v5896, 1
  %vm5905 = vcmp.eq.s32.totalorder %v5897, 1
  %vm5906 = vcmp.eq.s32.totalorder %v5898, 1
  %vm5907 = vcmp.eq.s32.totalorder %v5899, 1
  %vm5908 = vcmp.eq.s32.totalorder %v5900, 1
  %vm5909 = vcmp.eq.s32.totalorder %v5901, 1
  %vm5910 = vcmp.eq.s32.totalorder %v5902, 1
  %vm5911 = vcmp.eq.s32.totalorder %v5903, 1
  %v5912 = vsel %vm5904, %v5874, 0.0
  %v5913 = vsel %vm5905, %v5867, 0.0
  %v5914 = vsel %vm5906, %v5868, 0.0
  %v5915 = vsel %vm5907, %v5869, 0.0
  %v5916 = vsel %vm5908, %v5870, 0.0
  %v5917 = vsel %vm5909, %v5871, 0.0
  %v5918 = vsel %vm5910, %v5872, 0.0
  %v5919 = vsel %vm5911, %v5873, 0.0
  %5928 = vrot.lane.b32.xlu0 %v5867, 24
  %v5929 = vpop.permute.xlu0 %5928
  %5930 = vrot.lane.b32.xlu0 %v5868, 24
  %v5931 = vpop.permute.xlu0 %5930
  %5932 = vrot.lane.b32.xlu0 %v5869, 24
  %v5933 = vpop.permute.xlu0 %5932
  %5934 = vrot.lane.b32.xlu0 %v5870, 24
  %v5935 = vpop.permute.xlu0 %5934
  %5936 = vrot.lane.b32.xlu0 %v5871, 24
  %v5937 = vpop.permute.xlu0 %5936
  %5938 = vrot.lane.b32.xlu0 %v5872, 24
  %v5939 = vpop.permute.xlu0 %5938
  %5940 = vrot.lane.b32.xlu0 %v5873, 24
  %v5941 = vpop.permute.xlu0 %5940
  %5942 = vrot.lane.b32.xlu0 %v5874, 24
  %v5943 = vpop.permute.xlu0 %5942
  %v5952 = vsel %vm5706, %v5912, %v5929
  %v5953 = vsel %vm5706, %v5913, %v5931
  %v5954 = vsel %vm5706, %v5914, %v5933
  %v5955 = vsel %vm5706, %v5915, %v5935
  %v5956 = vsel %vm5706, %v5916, %v5937
  %v5957 = vsel %vm5706, %v5917, %v5939
  %v5958 = vsel %vm5706, %v5918, %v5941
  %v5959 = vsel %vm5706, %v5919, %v5943
  %v5960 = vpack.c.bf16 %v5953, %v5952
  %v5961 = vpack.c.bf16 %v5955, %v5954
  %v5962 = vpack.c.bf16 %v5957, %v5956
  %v5963 = vpack.c.bf16 %v5959, %v5958
  %v5964 = vlaneseq
  %v5965 = vshrl.u32 %v5964, 7
  %v5966 = vsub.s32 0, %v5965
  %v5967 = vrot.slane %v5882, %v5966
  %v5974 = vunpack.c.l.b16 %v5875
  %v5975 = vunpack.c.l.b16 %v5876
  %v5976 = vunpack.c.l.b16 %v5877
  %v5977 = vunpack.c.l.b16 %v5878
  %v5978 = vunpack.c.l.b16 %v5879
  %v5979 = vunpack.c.l.b16 %v5880
  %v5980 = vpack.c.b16 %v5975, %v5974
  %v5981 = vpack.c.b16 %v5977, %v5976
  %v5982 = vpack.c.b16 %v5979, %v5978
  %v5987 = vsel %vm5741, %v5960, 0
  %v5990 = vsel %vm5741, %v5961, 0
  %v5993 = vsel %vm5741, %v5962, 0
  %v5996 = vsel %vm5741, %v5963, 0
  %5998 = vmatprep.subr.bf16.mxu0 0
  %5999 = vmatpush1.bf16.msra.mxu0 %v5980
  %6000 = vmatprep.subr.bf16.mxu0 0
  %6001 = vmatpush1.bf16.msra.mxu0 %v5981
  %6002 = vmatprep.subr.bf16.mxu0 0
  %6003 = vmatpush1.bf16.msra.mxu0 %v5982
  %6004 = vmatprep.subr.bf16.mxu0 0
  %6005 = vmatpush1.bf16.msra.mxu0 0
  %6006 = vmatprep.subr.bf16.mxu0 0
  %6007 = vmatpush1.bf16.msra.mxu0 0
  %6008 = vmatprep.subr.bf16.mxu0 0
  %6009 = vmatpush1.bf16.msra.mxu0 0
  %6010 = vmatprep.subr.bf16.mxu0 0
  %6011 = vmatpush1.bf16.msra.mxu0 0
  %6012 = vmatprep.subr.bf16.mxu0 0
  %6013 = vmatpush1.bf16.msra.mxu0 0
  %6014 = vmatprep.subr.bf16.mxu0 0
  %6015 = vmatpush1.bf16.msra.mxu0 0
  %6016 = vmatprep.subr.bf16.mxu0 0
  %6017 = vmatpush1.bf16.msra.mxu0 0
  %6018 = vmatprep.subr.bf16.mxu0 0
  %6019 = vmatpush1.bf16.msra.mxu0 0
  %6020 = vmatprep.subr.bf16.mxu0 0
  %6021 = vmatpush1.bf16.msra.mxu0 0
  %6022 = vmatprep.subr.bf16.mxu0 0
  %6023 = vmatpush1.bf16.msra.mxu0 0
  %6024 = vmatprep.subr.bf16.mxu0 0
  %6025 = vmatpush1.bf16.msra.mxu0 0
  %6026 = vmatprep.subr.bf16.mxu0 0
  %6027 = vmatpush1.bf16.msra.mxu0 0
  %6028 = vmatprep.subr.bf16.mxu0 0
  %6029 = vmatpush1.bf16.msra.mxu0 0
  %6030 = vmatprep.mubr.bf16.mxu0 0
  %6031 = vmatmul.mubr.bf16.gmra.mrb[0].mxu0 %v5987
  %v6032 = vpop.f32.mrb[0].mxu0
  %v6033 = vadd.f32 %v5967, %v6032
  %v6034 = vpop.f32.mrb[0].mxu0
  %v6035 = vpop.f32.mrb[0].mxu0
  %v6036 = vadd.f32 %v5967, %v6035
  %v6037 = vpop.f32.mrb[0].mxu0
  %6038 = vmatprep.mubr.bf16.mxu0 0
  %6039 = vmatmul.mubr.bf16.gmra.mrb[0].mxu0 %v5990
  %v6040 = vpop.f32.mrb[0].mxu0
  %v6041 = vadd.f32 %v5967, %v6040
  %v6042 = vpop.f32.mrb[0].mxu0
  %v6043 = vpop.f32.mrb[0].mxu0
  %v6044 = vadd.f32 %v5967, %v6043
  %v6045 = vpop.f32.mrb[0].mxu0
  %6046 = vmatprep.mubr.bf16.mxu0 0
  %6047 = vmatmul.mubr.bf16.gmra.mrb[0].mxu0 %v5993
  %v6048 = vpop.f32.mrb[0].mxu0
  %v6049 = vadd.f32 %v5967, %v6048
  %v6050 = vpop.f32.mrb[0].mxu0
  %v6051 = vpop.f32.mrb[0].mxu0
  %v6052 = vadd.f32 %v5967, %v6051
  %v6053 = vpop.f32.mrb[0].mxu0
  %6054 = vmatprep.mubr.bf16.mxu0 0
  %6055 = vmatmul.mubr.bf16.gmra.mrb[0].mxu0 %v5996
  %v6056 = vpop.f32.mrb[0].mxu0
  %v6057 = vadd.f32 %v5967, %v6056
  %v6058 = vpop.f32.mrb[0].mxu0
  %v6059 = vpop.f32.mrb[0].mxu0
  %v6060 = vadd.f32 %v5967, %v6059
  %v6061 = vpop.f32.mrb[0].mxu0
  %6062 = vdwg.mxu0
  %v6063 = vmax.f32 %v6033, 0.0
  %v6064 = vmax.f32 %v6036, 0.0
  %v6065 = vmax.f32 %v6041, 0.0
  %v6066 = vmax.f32 %v6044, 0.0
  %v6067 = vmax.f32 %v6049, 0.0
  %v6068 = vmax.f32 %v6052, 0.0
  %v6069 = vmax.f32 %v6057, 0.0
  %v6070 = vmax.f32 %v6060, 0.0
  %v6071 = vsel %vm5904, %v6070, 0.0
  %v6072 = vsel %vm5905, %v6063, 0.0
  %v6073 = vsel %vm5906, %v6064, 0.0
  %v6074 = vsel %vm5907, %v6065, 0.0
  %v6075 = vsel %vm5908, %v6066, 0.0
  %v6076 = vsel %vm5909, %v6067, 0.0
  %v6077 = vsel %vm5910, %v6068, 0.0
  %v6078 = vsel %vm5911, %v6069, 0.0
  %6087 = vrot.lane.b32.xlu0 %v6063, 12
  %v6088 = vpop.permute.xlu0 %6087
  %6089 = vrot.lane.b32.xlu0 %v6064, 12
  %v6090 = vpop.permute.xlu0 %6089
  %6091 = vrot.lane.b32.xlu0 %v6065, 12
  %v6092 = vpop.permute.xlu0 %6091
  %6093 = vrot.lane.b32.xlu0 %v6066, 12
  %v6094 = vpop.permute.xlu0 %6093
  %6095 = vrot.lane.b32.xlu0 %v6067, 12
  %v6096 = vpop.permute.xlu0 %6095
  %6097 = vrot.lane.b32.xlu0 %v6068, 12
  %v6098 = vpop.permute.xlu0 %6097
  %6099 = vrot.lane.b32.xlu0 %v6069, 12
  %v6100 = vpop.permute.xlu0 %6099
  %6101 = vrot.lane.b32.xlu0 %v6070, 12
  %v6102 = vpop.permute.xlu0 %6101
  %vm6111 = vcmask 97280
  %v6112 = vsel %vm6111, %v6071, %v6088
  %v6113 = vsel %vm6111, %v6072, %v6090
  %v6114 = vsel %vm6111, %v6073, %v6092
  %v6115 = vsel %vm6111, %v6074, %v6094
  %v6116 = vsel %vm6111, %v6075, %v6096
  %v6117 = vsel %vm6111, %v6076, %v6098
  %v6118 = vsel %vm6111, %v6077, %v6100
  %v6119 = vsel %vm6111, %v6078, %v6102
  %v6120 = vpack.c.bf16 %v6113, %v6112
  %v6121 = vpack.c.bf16 %v6115, %v6114
  %v6122 = vpack.c.bf16 %v6117, %v6116
  %v6123 = vpack.c.bf16 %v6119, %v6118
  %v6124 = vlaneseq
  %v6125 = vshrl.u32 %v6124, 7
  %v6126 = vsub.s32 0, %v6125
  %v6127 = vrot.slane %v5887, %v6126
  %v6131 = vunpack.c.l.b16 %v5883
  %v6132 = vunpack.c.l.b16 %v5884
  %v6133 = vunpack.c.l.b16 %v5885
  %v6134 = vpack.c.b16 %v6132, %v6131
  %v6135 = vpack.c.b16 %v6133, %v6133
  %v6138 = vsel %vm5706, %v6120, 0
  %v6141 = vsel %vm5706, %v6121, 0
  %v6144 = vsel %vm5706, %v6122, 0
  %v6147 = vsel %vm5706, %v6123, 0
  %v6150 = vsel %vm5294, %v6135, 0
  %6152 = vmatprep.subr.bf16.mxu0 0
  %6153 = vmatpush1.bf16.msra.mxu0 %v6134
  %6154 = vmatprep.subr.bf16.mxu0 0
  %6155 = vmatpush1.bf16.msra.mxu0 %v6150
  %6156 = vmatprep.subr.bf16.mxu0 0
  %6157 = vmatpush1.bf16.msra.mxu0 0
  %6158 = vmatprep.subr.bf16.mxu0 0
  %6159 = vmatpush1.bf16.msra.mxu0 0
  %6160 = vmatprep.subr.bf16.mxu0 0
  %6161 = vmatpush1.bf16.msra.mxu0 0
  %6162 = vmatprep.subr.bf16.mxu0 0
  %6163 = vmatpush1.bf16.msra.mxu0 0
  %6164 = vmatprep.subr.bf16.mxu0 0
  %6165 = vmatpush1.bf16.msra.mxu0 0
  %6166 = vmatprep.subr.bf16.mxu0 0
  %6167 = vmatpush1.bf16.msra.mxu0 0
  %6168 = vmatprep.subr.bf16.mxu0 0
  %6169 = vmatpush1.bf16.msra.mxu0 0
  %6170 = vmatprep.subr.bf16.mxu0 0
  %6171 = vmatpush1.bf16.msra.mxu0 0
  %6172 = vmatprep.subr.bf16.mxu0 0
  %6173 = vmatpush1.bf16.msra.mxu0 0
  %6174 = vmatprep.subr.bf16.mxu0 0
  %6175 = vmatpush1.bf16.msra.mxu0 0
  %6176 = vmatprep.subr.bf16.mxu0 0
  %6177 = vmatpush1.bf16.msra.mxu0 0
  %6178 = vmatprep.subr.bf16.mxu0 0
  %6179 = vmatpush1.bf16.msra.mxu0 0
  %6180 = vmatprep.subr.bf16.mxu0 0
  %6181 = vmatpush1.bf16.msra.mxu0 0
  %6182 = vmatprep.subr.bf16.mxu0 0
  %6183 = vmatpush1.bf16.msra.mxu0 0
  %6184 = vmatprep.mubr.bf16.mxu0 0
  %6185 = vmatmul.mubr.bf16.gmra.mrb[0].mxu0 %v6138
  %v6186 = vpop.f32.mrb[0].mxu0
  %v6187 = vadd.f32 %v6127, %v6186
  %v6188 = vpop.f32.mrb[0].mxu0
  %v6189 = vpop.f32.mrb[0].mxu0
  %v6190 = vadd.f32 %v6127, %v6189
  %v6191 = vpop.f32.mrb[0].mxu0
  %6192 = vmatprep.mubr.bf16.mxu0 0
  %6193 = vmatmul.mubr.bf16.gmra.mrb[0].mxu0 %v6141
  %v6194 = vpop.f32.mrb[0].mxu0
  %v6195 = vadd.f32 %v6127, %v6194
  %v6196 = vpop.f32.mrb[0].mxu0
  %v6197 = vpop.f32.mrb[0].mxu0
  %v6198 = vadd.f32 %v6127, %v6197
  %v6199 = vpop.f32.mrb[0].mxu0
  %6200 = vmatprep.mubr.bf16.mxu0 0
  %6201 = vmatmul.mubr.bf16.gmra.mrb[0].mxu0 %v6144
  %v6202 = vpop.f32.mrb[0].mxu0
  %v6203 = vadd.f32 %v6127, %v6202
  %v6204 = vpop.f32.mrb[0].mxu0
  %v6205 = vpop.f32.mrb[0].mxu0
  %v6206 = vadd.f32 %v6127, %v6205
  %v6207 = vpop.f32.mrb[0].mxu0
  %6208 = vmatprep.mubr.bf16.mxu0 0
  %6209 = vmatmul.mubr.bf16.gmra.mrb[0].mxu0 %v6147
  %v6210 = vpop.f32.mrb[0].mxu0
  %v6211 = vadd.f32 %v6127, %v6210
  %v6212 = vpop.f32.mrb[0].mxu0
  %v6213 = vpop.f32.mrb[0].mxu0
  %v6214 = vadd.f32 %v6127, %v6213
  %v6215 = vpop.f32.mrb[0].mxu0
  %6216 = vdwg.mxu0
  %v6217 = vmax.f32 %v6187, 0.0
  %v6218 = vmax.f32 %v6190, 0.0
  %v6219 = vmax.f32 %v6195, 0.0
  %v6220 = vmax.f32 %v6198, 0.0
  %v6221 = vmax.f32 %v6203, 0.0
  %v6222 = vmax.f32 %v6206, 0.0
  %v6223 = vmax.f32 %v6211, 0.0
  %v6224 = vmax.f32 %v6214, 0.0
  %6233 = vrot.lane.b32.xlu0 %v6033, 116
  %v6234 = vpop.permute.xlu0 %6233
  %6235 = vrot.lane.b32.xlu0 %v6036, 116
  %v6236 = vpop.permute.xlu0 %6235
  %6237 = vrot.lane.b32.xlu0 %v6041, 116
  %v6238 = vpop.permute.xlu0 %6237
  %6239 = vrot.lane.b32.xlu0 %v6044, 116
  %v6240 = vpop.permute.xlu0 %6239
  %6241 = vrot.lane.b32.xlu0 %v6049, 116
  %v6242 = vpop.permute.xlu0 %6241
  %6243 = vrot.lane.b32.xlu0 %v6052, 116
  %v6244 = vpop.permute.xlu0 %6243
  %6245 = vrot.lane.b32.xlu0 %v6057, 116
  %v6246 = vpop.permute.xlu0 %6245
  %6247 = vrot.lane.b32.xlu0 %v6060, 116
  %v6248 = vpop.permute.xlu0 %6247
  %v6257 = vadd.f32 %v6217, %v6234
  %v6258 = vadd.f32 %v6218, %v6236
  %v6259 = vadd.f32 %v6219, %v6238
  %v6260 = vadd.f32 %v6220, %v6240
  %v6261 = vadd.f32 %v6221, %v6242
  %v6262 = vadd.f32 %v6222, %v6244
  %v6263 = vadd.f32 %v6223, %v6246
  %v6264 = vadd.f32 %v6224, %v6248
  %v6265 = vmax.f32 %v6257, 0.0
  %v6266 = vmax.f32 %v6258, 0.0
  %v6267 = vmax.f32 %v6259, 0.0
  %v6268 = vmax.f32 %v6260, 0.0
  %v6269 = vmax.f32 %v6261, 0.0
  %v6270 = vmax.f32 %v6262, 0.0
  %v6271 = vmax.f32 %v6263, 0.0
  %v6272 = vmax.f32 %v6264, 0.0
  %v6273 = vld [vmem:[%s1 + $0x300] sm:$0xf]
  %v6274 = vld [vmem:[%s1 + $0x308] sm:$0xf]
  %v6275 = vld [vmem:[%s1 + $0x310] sm:$0xf]
  %v6276 = vld [vmem:[%s1 + $0x318] sm:$0x1]
  %v6277 = vunpack.c.l.bf16 %v6276
  %v6278 = vld [vmem:[%s1 + $0x320] sm:$0xf]
  %v6279 = vld [vmem:[%s1 + $0x328] sm:$0x3]
  %v6280 = vld [vmem:[%s1 + $0x330] sm:$0x1]
  %v6281 = vunpack.c.l.bf16 %v6280
  %vm6282 = vcmp.ge.s32.totalorder %v4178, 16
  %vm6283 = vcmp.ge.s32.totalorder %v4179, 16
  %vm6284 = vcmp.ge.s32.totalorder %v4180, 16
  %vm6285 = vcmp.ge.s32.totalorder %v4181, 16
  %vm6286 = vcmp.ge.s32.totalorder %v4182, 16
  %vm6287 = vcmp.ge.s32.totalorder %v4183, 16
  %vm6288 = vcmp.ge.s32.totalorder %v4184, 16
  %vm6289 = vcmp.ge.s32.totalorder %v4185, 16
  %v6290 = vsel %vm6282, 1, 0
  %v6291 = vsel %vm6283, 1, 0
  %v6292 = vsel %vm6284, 1, 0
  %v6293 = vsel %vm6285, 1, 0
  %v6294 = vsel %vm6286, 1, 0
  %v6295 = vsel %vm6287, 1, 0
  %v6296 = vsel %vm6288, 1, 0
  %v6297 = vsel %vm6289, 1, 0
  %vm6298 = vcmp.eq.s32.totalorder %v6290, 1
  %vm6299 = vcmp.eq.s32.totalorder %v6291, 1
  %vm6300 = vcmp.eq.s32.totalorder %v6292, 1
  %vm6301 = vcmp.eq.s32.totalorder %v6293, 1
  %vm6302 = vcmp.eq.s32.totalorder %v6294, 1
  %vm6303 = vcmp.eq.s32.totalorder %v6295, 1
  %vm6304 = vcmp.eq.s32.totalorder %v6296, 1
  %vm6305 = vcmp.eq.s32.totalorder %v6297, 1
  %v6306 = vsel %vm6298, %v6271, 0.0
  %v6307 = vsel %vm6299, %v6272, 0.0
  %v6308 = vsel %vm6300, %v6265, 0.0
  %v6309 = vsel %vm6301, %v6266, 0.0
  %v6310 = vsel %vm6302, %v6267, 0.0
  %v6311 = vsel %vm6303, %v6268, 0.0
  %v6312 = vsel %vm6304, %v6269, 0.0
  %v6313 = vsel %vm6305, %v6270, 0.0
  %6322 = vrot.lane.b32.xlu0 %v6265, 12
  %v6323 = vpop.permute.xlu0 %6322
  %6324 = vrot.lane.b32.xlu0 %v6266, 12
  %v6325 = vpop.permute.xlu0 %6324
  %6326 = vrot.lane.b32.xlu0 %v6267, 12
  %v6327 = vpop.permute.xlu0 %6326
  %6328 = vrot.lane.b32.xlu0 %v6268, 12
  %v6329 = vpop.permute.xlu0 %6328
  %6330 = vrot.lane.b32.xlu0 %v6269, 12
  %v6331 = vpop.permute.xlu0 %6330
  %6332 = vrot.lane.b32.xlu0 %v6270, 12
  %v6333 = vpop.permute.xlu0 %6332
  %6334 = vrot.lane.b32.xlu0 %v6271, 12
  %v6335 = vpop.permute.xlu0 %6334
  %6336 = vrot.lane.b32.xlu0 %v6272, 12
  %v6337 = vpop.permute.xlu0 %6336
  %v6346 = vsel %vm6111, %v6306, %v6323
  %v6347 = vsel %vm6111, %v6307, %v6325
  %v6348 = vsel %vm6111, %v6308, %v6327
  %v6349 = vsel %vm6111, %v6309, %v6329
  %v6350 = vsel %vm6111, %v6310, %v6331
  %v6351 = vsel %vm6111, %v6311, %v6333
  %v6352 = vsel %vm6111, %v6312, %v6335
  %v6353 = vsel %vm6111, %v6313, %v6337
  %v6354 = vpack.c.bf16 %v6347, %v6346
  %v6355 = vpack.c.bf16 %v6349, %v6348
  %v6356 = vpack.c.bf16 %v6351, %v6350
  %v6357 = vpack.c.bf16 %v6353, %v6352
  %v6358 = vlaneseq
  %v6359 = vshrl.u32 %v6358, 7
  %v6360 = vsub.s32 0, %v6359
  %v6361 = vrot.slane %v6277, %v6360
  %v6365 = vunpack.c.l.b16 %v6273
  %v6366 = vunpack.c.l.b16 %v6274
  %v6367 = vunpack.c.l.b16 %v6275
  %v6368 = vpack.c.b16 %v6366, %v6365
  %v6369 = vpack.c.b16 %v6367, %v6367
  %v6372 = vsel %vm5706, %v6354, 0
  %v6375 = vsel %vm5706, %v6355, 0
  %v6378 = vsel %vm5706, %v6356, 0
  %v6381 = vsel %vm5706, %v6357, 0
  %v6384 = vsel %vm5294, %v6369, 0
  %6386 = vmatprep.subr.bf16.mxu0 0
  %6387 = vmatpush1.bf16.msra.mxu0 %v6368
  %6388 = vmatprep.subr.bf16.mxu0 0
  %6389 = vmatpush1.bf16.msra.mxu0 %v6384
  %6390 = vmatprep.subr.bf16.mxu0 0
  %6391 = vmatpush1.bf16.msra.mxu0 0
  %6392 = vmatprep.subr.bf16.mxu0 0
  %6393 = vmatpush1.bf16.msra.mxu0 0
  %6394 = vmatprep.subr.bf16.mxu0 0
  %6395 = vmatpush1.bf16.msra.mxu0 0
  %6396 = vmatprep.subr.bf16.mxu0 0
  %6397 = vmatpush1.bf16.msra.mxu0 0
  %6398 = vmatprep.subr.bf16.mxu0 0
  %6399 = vmatpush1.bf16.msra.mxu0 0
  %6400 = vmatprep.subr.bf16.mxu0 0
  %6401 = vmatpush1.bf16.msra.mxu0 0
  %6402 = vmatprep.subr.bf16.mxu0 0
  %6403 = vmatpush1.bf16.msra.mxu0 0
  %6404 = vmatprep.subr.bf16.mxu0 0
  %6405 = vmatpush1.bf16.msra.mxu0 0
  %6406 = vmatprep.subr.bf16.mxu0 0
  %6407 = vmatpush1.bf16.msra.mxu0 0
  %6408 = vmatprep.subr.bf16.mxu0 0
  %6409 = vmatpush1.bf16.msra.mxu0 0
  %6410 = vmatprep.subr.bf16.mxu0 0
  %6411 = vmatpush1.bf16.msra.mxu0 0
  %6412 = vmatprep.subr.bf16.mxu0 0
  %6413 = vmatpush1.bf16.msra.mxu0 0
  %6414 = vmatprep.subr.bf16.mxu0 0
  %6415 = vmatpush1.bf16.msra.mxu0 0
  %6416 = vmatprep.subr.bf16.mxu0 0
  %6417 = vmatpush1.bf16.msra.mxu0 0
  %6418 = vmatprep.mubr.bf16.mxu0 0
  %6419 = vmatmul.mubr.bf16.gmra.mrb[0].mxu0 %v6372
  %v6420 = vpop.f32.mrb[0].mxu0
  %v6421 = vadd.f32 %v6361, %v6420
  %v6422 = vpop.f32.mrb[0].mxu0
  %v6423 = vpop.f32.mrb[0].mxu0
  %v6424 = vadd.f32 %v6361, %v6423
  %v6425 = vpop.f32.mrb[0].mxu0
  %6426 = vmatprep.mubr.bf16.mxu0 0
  %6427 = vmatmul.mubr.bf16.gmra.mrb[0].mxu0 %v6375
  %v6428 = vpop.f32.mrb[0].mxu0
  %v6429 = vadd.f32 %v6361, %v6428
  %v6430 = vpop.f32.mrb[0].mxu0
  %v6431 = vpop.f32.mrb[0].mxu0
  %v6432 = vadd.f32 %v6361, %v6431
  %v6433 = vpop.f32.mrb[0].mxu0
  %6434 = vmatprep.mubr.bf16.mxu0 0
  %6435 = vmatmul.mubr.bf16.gmra.mrb[0].mxu0 %v6378
  %v6436 = vpop.f32.mrb[0].mxu0
  %v6437 = vadd.f32 %v6361, %v6436
  %v6438 = vpop.f32.mrb[0].mxu0
  %v6439 = vpop.f32.mrb[0].mxu0
  %v6440 = vadd.f32 %v6361, %v6439
  %v6441 = vpop.f32.mrb[0].mxu0
  %6442 = vmatprep.mubr.bf16.mxu0 0
  %6443 = vmatmul.mubr.bf16.gmra.mrb[0].mxu0 %v6381
  %v6444 = vpop.f32.mrb[0].mxu0
  %v6445 = vadd.f32 %v6361, %v6444
  %v6446 = vpop.f32.mrb[0].mxu0
  %v6447 = vpop.f32.mrb[0].mxu0
  %v6448 = vadd.f32 %v6361, %v6447
  %v6449 = vpop.f32.mrb[0].mxu0
  %6450 = vdwg.mxu0
  %v6451 = vmax.f32 %v6421, 0.0
  %v6452 = vmax.f32 %v6424, 0.0
  %v6453 = vmax.f32 %v6429, 0.0
  %v6454 = vmax.f32 %v6432, 0.0
  %v6455 = vmax.f32 %v6437, 0.0
  %v6456 = vmax.f32 %v6440, 0.0
  %v6457 = vmax.f32 %v6445, 0.0
  %v6458 = vmax.f32 %v6448, 0.0
  %v6459 = vsel %vm6298, %v6457, 0.0
  %v6460 = vsel %vm6299, %v6458, 0.0
  %v6461 = vsel %vm6300, %v6451, 0.0
  %v6462 = vsel %vm6301, %v6452, 0.0
  %v6463 = vsel %vm6302, %v6453, 0.0
  %v6464 = vsel %vm6303, %v6454, 0.0
  %v6465 = vsel %vm6304, %v6455, 0.0
  %v6466 = vsel %vm6305, %v6456, 0.0
  %6475 = vrot.lane.b32.xlu0 %v6451, 6
  %v6476 = vpop.permute.xlu0 %6475
  %6477 = vrot.lane.b32.xlu0 %v6452, 6
  %v6478 = vpop.permute.xlu0 %6477
  %6479 = vrot.lane.b32.xlu0 %v6453, 6
  %v6480 = vpop.permute.xlu0 %6479
  %6481 = vrot.lane.b32.xlu0 %v6454, 6
  %v6482 = vpop.permute.xlu0 %6481
  %6483 = vrot.lane.b32.xlu0 %v6455, 6
  %v6484 = vpop.permute.xlu0 %6483
  %6485 = vrot.lane.b32.xlu0 %v6456, 6
  %v6486 = vpop.permute.xlu0 %6485
  %6487 = vrot.lane.b32.xlu0 %v6457, 6
  %v6488 = vpop.permute.xlu0 %6487
  %6489 = vrot.lane.b32.xlu0 %v6458, 6
  %v6490 = vpop.permute.xlu0 %6489
  %vm6499 = vcmask 48128
  %v6500 = vsel %vm6499, %v6459, %v6476
  %v6501 = vsel %vm6499, %v6460, %v6478
  %v6502 = vsel %vm6499, %v6461, %v6480
  %v6503 = vsel %vm6499, %v6462, %v6482
  %v6504 = vsel %vm6499, %v6463, %v6484
  %v6505 = vsel %vm6499, %v6464, %v6486
  %v6506 = vsel %vm6499, %v6465, %v6488
  %v6507 = vsel %vm6499, %v6466, %v6490
  %v6508 = vpack.c.bf16 %v6501, %v6500
  %v6509 = vpack.c.bf16 %v6503, %v6502
  %v6510 = vpack.c.bf16 %v6505, %v6504
  %v6511 = vpack.c.bf16 %v6507, %v6506
  %v6512 = vlaneseq
  %v6513 = vshrl.u32 %v6512, 7
  %v6514 = vsub.s32 0, %v6513
  %v6515 = vrot.slane %v6281, %v6514
  %v6518 = vunpack.c.l.b16 %v6278
  %v6519 = vunpack.c.l.b16 %v6279
  %v6520 = vpack.c.b16 %v6519, %v6518
  %v6522 = vsel %vm6111, %v6508, 0
  %v6525 = vsel %vm6111, %v6509, 0
  %v6528 = vsel %vm6111, %v6510, 0
  %v6531 = vsel %vm6111, %v6511, 0
  %vm6533 = vcmask 1045504
  %v6535 = vsel %vm6533, %v6520, 0
  %6537 = vmatprep.subr.bf16.mxu0 0
  %6538 = vmatpush1.bf16.msra.mxu0 %v6535
  %6539 = vmatprep.subr.bf16.mxu0 0
  %6540 = vmatpush1.bf16.msra.mxu0 0
  %6541 = vmatprep.subr.bf16.mxu0 0
  %6542 = vmatpush1.bf16.msra.mxu0 0
  %6543 = vmatprep.subr.bf16.mxu0 0
  %6544 = vmatpush1.bf16.msra.mxu0 0
  %6545 = vmatprep.subr.bf16.mxu0 0
  %6546 = vmatpush1.bf16.msra.mxu0 0
  %6547 = vmatprep.subr.bf16.mxu0 0
  %6548 = vmatpush1.bf16.msra.mxu0 0
  %6549 = vmatprep.subr.bf16.mxu0 0
  %6550 = vmatpush1.bf16.msra.mxu0 0
  %6551 = vmatprep.subr.bf16.mxu0 0
  %6552 = vmatpush1.bf16.msra.mxu0 0
  %6553 = vmatprep.subr.bf16.mxu0 0
  %6554 = vmatpush1.bf16.msra.mxu0 0
  %6555 = vmatprep.subr.bf16.mxu0 0
  %6556 = vmatpush1.bf16.msra.mxu0 0
  %6557 = vmatprep.subr.bf16.mxu0 0
  %6558 = vmatpush1.bf16.msra.mxu0 0
  %6559 = vmatprep.subr.bf16.mxu0 0
  %6560 = vmatpush1.bf16.msra.mxu0 0
  %6561 = vmatprep.subr.bf16.mxu0 0
  %6562 = vmatpush1.bf16.msra.mxu0 0
  %6563 = vmatprep.subr.bf16.mxu0 0
  %6564 = vmatpush1.bf16.msra.mxu0 0
  %6565 = vmatprep.subr.bf16.mxu0 0
  %6566 = vmatpush1.bf16.msra.mxu0 0
  %6567 = vmatprep.subr.bf16.mxu0 0
  %6568 = vmatpush1.bf16.msra.mxu0 0
  %6569 = vmatprep.mubr.bf16.mxu0 0
  %6570 = vmatmul.mubr.bf16.gmra.mrb[0].mxu0 %v6522
  %v6571 = vpop.f32.mrb[0].mxu0
  %v6572 = vadd.f32 %v6515, %v6571
  %v6573 = vpop.f32.mrb[0].mxu0
  %v6574 = vpop.f32.mrb[0].mxu0
  %v6575 = vadd.f32 %v6515, %v6574
  %v6576 = vpop.f32.mrb[0].mxu0
  %6577 = vmatprep.mubr.bf16.mxu0 0
  %6578 = vmatmul.mubr.bf16.gmra.mrb[0].mxu0 %v6525
  %v6579 = vpop.f32.mrb[0].mxu0
  %v6580 = vadd.f32 %v6515, %v6579
  %v6581 = vpop.f32.mrb[0].mxu0
  %v6582 = vpop.f32.mrb[0].mxu0
  %v6583 = vadd.f32 %v6515, %v6582
  %v6584 = vpop.f32.mrb[0].mxu0
  %6585 = vmatprep.mubr.bf16.mxu0 0
  %6586 = vmatmul.mubr.bf16.gmra.mrb[0].mxu0 %v6528
  %v6587 = vpop.f32.mrb[0].mxu0
  %v6588 = vadd.f32 %v6515, %v6587
  %v6589 = vpop.f32.mrb[0].mxu0
  %v6590 = vpop.f32.mrb[0].mxu0
  %v6591 = vadd.f32 %v6515, %v6590
  %v6592 = vpop.f32.mrb[0].mxu0
  %6593 = vmatprep.mubr.bf16.mxu0 0
  %6594 = vmatmul.mubr.bf16.gmra.mrb[0].mxu0 %v6531
  %v6595 = vpop.f32.mrb[0].mxu0
  %v6596 = vadd.f32 %v6515, %v6595
  %v6597 = vpop.f32.mrb[0].mxu0
  %v6598 = vpop.f32.mrb[0].mxu0
  %v6599 = vadd.f32 %v6515, %v6598
  %v6600 = vpop.f32.mrb[0].mxu0
  %6601 = vdwg.mxu0
  %v6602 = vmax.f32 %v6572, 0.0
  %v6603 = vmax.f32 %v6575, 0.0
  %v6604 = vmax.f32 %v6580, 0.0
  %v6605 = vmax.f32 %v6583, 0.0
  %v6606 = vmax.f32 %v6588, 0.0
  %v6607 = vmax.f32 %v6591, 0.0
  %v6608 = vmax.f32 %v6596, 0.0
  %v6609 = vmax.f32 %v6599, 0.0
  %6618 = vrot.lane.b32.xlu0 %v6421, 122
  %v6619 = vpop.permute.xlu0 %6618
  %6620 = vrot.lane.b32.xlu0 %v6424, 122
  %v6621 = vpop.permute.xlu0 %6620
  %6622 = vrot.lane.b32.xlu0 %v6429, 122
  %v6623 = vpop.permute.xlu0 %6622
  %6624 = vrot.lane.b32.xlu0 %v6432, 122
  %v6625 = vpop.permute.xlu0 %6624
  %6626 = vrot.lane.b32.xlu0 %v6437, 122
  %v6627 = vpop.permute.xlu0 %6626
  %6628 = vrot.lane.b32.xlu0 %v6440, 122
  %v6629 = vpop.permute.xlu0 %6628
  %6630 = vrot.lane.b32.xlu0 %v6445, 122
  %v6631 = vpop.permute.xlu0 %6630
  %6632 = vrot.lane.b32.xlu0 %v6448, 122
  %v6633 = vpop.permute.xlu0 %6632
  %v6642 = vadd.f32 %v6602, %v6619
  %v6643 = vadd.f32 %v6603, %v6621
  %v6644 = vadd.f32 %v6604, %v6623
  %v6645 = vadd.f32 %v6605, %v6625
  %v6646 = vadd.f32 %v6606, %v6627
  %v6647 = vadd.f32 %v6607, %v6629
  %v6648 = vadd.f32 %v6608, %v6631
  %v6649 = vadd.f32 %v6609, %v6633
  %v6650 = vmax.f32 %v6642, 0.0
  %v6651 = vmax.f32 %v6643, 0.0
  %v6652 = vmax.f32 %v6644, 0.0
  %v6653 = vmax.f32 %v6645, 0.0
  %v6654 = vmax.f32 %v6646, 0.0
  %v6655 = vmax.f32 %v6647, 0.0
  %v6656 = vmax.f32 %v6648, 0.0
  %v6657 = vmax.f32 %v6649, 0.0
  %v6658 = vld [vmem:[%s1 + $0x338] sm:$0xff]
  %v6659 = vld [vmem:[%s1 + $0x340] sm:$0xff]
  %v6660 = vld [vmem:[%s1 + $0x348] sm:$0xff]
  %v6661 = vld [vmem:[%s1 + $0x350] sm:$0xff]
  %v6662 = vld [vmem:[%s1 + $0x358] sm:$0xff]
  %v6663 = vld [vmem:[%s1 + $0x360] sm:$0xff]
  %v6664 = vld [vmem:[%s1 + $0x368] sm:$0xff]
  %v6665 = vld [vmem:[%s1 + $0x370] sm:$0xff]
  %v6666 = vld [vmem:[%s1 + $0x378] sm:$0xff]
  %v6667 = vld [vmem:[%s1 + $0x380] sm:$0xff]
  %v6668 = vld [vmem:[%s1 + $0x388] sm:$0xff]
  %v6669 = vld [vmem:[%s1 + $0x390] sm:$0xff]
  %v6670 = vld [vmem:[%s1 + $0x398] sm:$0xff]
  %v6671 = vld [vmem:[%s1 + $0x3a0] sm:$0xff]
  %v6672 = vld [vmem:[%s1 + $0x3a8] sm:$0xff]
  %v6673 = vld [vmem:[%s1 + $0x3b0] sm:$0xff]
  %v6674 = vld [vmem:[%s1 + $0x3b8] sm:$0x11]
  %v6675 = vunpack.c.l.bf16 %v6674
  %v6676 = vunpack.c.h.bf16 %v6674
  %v6677 = vld [vmem:[%s1 + $0x3c0] sm:$0xf]
  %v6678 = vld [vmem:[%s1 + $0x3c8] sm:$0xf]
  %v6679 = vld [vmem:[%s1 + $0x3d0] sm:$0xf]
  %v6680 = vld [vmem:[%s1 + $0x3d8] sm:$0xf]
  %v6681 = vld [vmem:[%s1 + $0x3e0] sm:$0xf]
  %v6682 = vld [vmem:[%s1 + $0x3e8] sm:$0xf]
  %v6683 = vld [vmem:[%s1 + $0x3f0] sm:$0xf]
  %v6684 = vld [vmem:[%s1 + $0x3f8] sm:$0xf]
  %v6685 = vld [vmem:[%s1 + $0x400] sm:$0xf]
  %v6686 = vld [vmem:[%s1 + $0x408] sm:$0xf]
  %v6687 = vld [vmem:[%s1 + $0x410] sm:$0xf]
  %v6688 = vld [vmem:[%s1 + $0x418] sm:$0xf]
  %v6689 = vld [vmem:[%s1 + $0x420] sm:$0xf]
  %v6690 = vld [vmem:[%s1 + $0x428] sm:$0xf]
  %v6691 = vld [vmem:[%s1 + $0x430] sm:$0xf]
  %v6692 = vld [vmem:[%s1 + $0x438] sm:$0xf]
  %v6693 = vld [vmem:[%s1 + $0x440] sm:$0xf]
  %v6694 = vld [vmem:[%s1 + $0x448] sm:$0xf]
  %v6695 = vld [vmem:[%s1 + $0x450] sm:$0x1]
  %v6696 = vunpack.c.l.bf16 %v6695
  %v6697 = vrot.slane %v3770, 7
  %v6698 = vrot.slane %v3815, 7
  %v6699 = vrot.slane %v3860, 7
  %v6700 = vrot.slane %v3905, 7
  %v6701 = vrot.slane %v3950, 7
  %v6702 = vrot.slane %v3995, 7
  %v6703 = vrot.slane %v4040, 7
  %v6704 = vrot.slane %v4085, 7
  %v6705 = vsel %vm4368, %v6703, %v6704
  %v6706 = vsel %vm4368, %v6702, %v6703
  %v6707 = vsel %vm4368, %v6701, %v6702
  %v6708 = vsel %vm4368, %v6700, %v6701
  %v6709 = vsel %vm4368, %v6699, %v6700
  %v6710 = vsel %vm4368, %v6698, %v6699
  %v6711 = vsel %vm4368, %v6697, %v6698
  %v6712 = vsel %vm4368, %v6704, %v6697
  %v6713 = vsel %vm4393, %v6712, 0.0
  %v6714 = vsel %vm4394, %v6711, 0.0
  %v6715 = vsel %vm4395, %v6710, 0.0
  %v6716 = vsel %vm4396, %v6709, 0.0
  %v6717 = vsel %vm4397, %v6708, 0.0
  %v6718 = vsel %vm4398, %v6707, 0.0
  %v6719 = vsel %vm4399, %v6706, 0.0
  %v6720 = vsel %vm4400, %v6705, 0.0
  %6729 = vrot.lane.b32.xlu0 %v3770, 64
  %v6730 = vpop.permute.xlu0 %6729
  %6731 = vrot.lane.b32.xlu0 %v3815, 64
  %v6732 = vpop.permute.xlu0 %6731
  %6733 = vrot.lane.b32.xlu0 %v3860, 64
  %v6734 = vpop.permute.xlu0 %6733
  %6735 = vrot.lane.b32.xlu0 %v3905, 64
  %v6736 = vpop.permute.xlu0 %6735
  %6737 = vrot.lane.b32.xlu0 %v3950, 64
  %v6738 = vpop.permute.xlu0 %6737
  %6739 = vrot.lane.b32.xlu0 %v3995, 64
  %v6740 = vpop.permute.xlu0 %6739
  %6741 = vrot.lane.b32.xlu0 %v4040, 64
  %v6742 = vpop.permute.xlu0 %6741
  %6743 = vrot.lane.b32.xlu0 %v4085, 64
  %v6744 = vpop.permute.xlu0 %6743
  %v6753 = vsel %vm2893, %v6713, %v6730
  %v6754 = vsel %vm2893, %v6714, %v6732
  %v6755 = vsel %vm2893, %v6715, %v6734
  %v6756 = vsel %vm2893, %v6716, %v6736
  %v6757 = vsel %vm2893, %v6717, %v6738
  %v6758 = vsel %vm2893, %v6718, %v6740
  %v6759 = vsel %vm2893, %v6719, %v6742
  %v6760 = vsel %vm2893, %v6720, %v6744
  %v6761 = vpack.c.bf16 %v6754, %v6753
  %v6762 = vpack.c.bf16 %v6756, %v6755
  %v6763 = vpack.c.bf16 %v6758, %v6757
  %v6764 = vpack.c.bf16 %v6760, %v6759
  %v6765 = vlaneseq
  %v6766 = vshrl.u32 %v6765, 7
  %v6767 = vsub.s32 0, %v6766
  %v6768 = vrot.slane %v6675, %v6767
  %v6769 = vlaneseq
  %v6770 = vshrl.u32 %v6769, 7
  %v6771 = vsub.s32 0, %v6770
  %v6772 = vrot.slane %v6676, %v6771
  %v6789 = vunpack.c.l.b16 %v6658
  %v6790 = vunpack.c.h.b16 %v6658
  %v6791 = vunpack.c.l.b16 %v6659
  %v6792 = vunpack.c.h.b16 %v6659
  %v6793 = vunpack.c.l.b16 %v6660
  %v6794 = vunpack.c.h.b16 %v6660
  %v6795 = vunpack.c.l.b16 %v6661
  %v6796 = vunpack.c.h.b16 %v6661
  %v6797 = vunpack.c.l.b16 %v6662
  %v6798 = vunpack.c.h.b16 %v6662
  %v6799 = vunpack.c.l.b16 %v6663
  %v6800 = vunpack.c.h.b16 %v6663
  %v6801 = vunpack.c.l.b16 %v6664
  %v6802 = vunpack.c.h.b16 %v6664
  %v6803 = vunpack.c.l.b16 %v6665
  %v6804 = vunpack.c.h.b16 %v6665
  %v6805 = vunpack.c.l.b16 %v6666
  %v6806 = vunpack.c.h.b16 %v6666
  %v6807 = vunpack.c.l.b16 %v6667
  %v6808 = vunpack.c.h.b16 %v6667
  %v6809 = vunpack.c.l.b16 %v6668
  %v6810 = vunpack.c.h.b16 %v6668
  %v6811 = vunpack.c.l.b16 %v6669
  %v6812 = vunpack.c.h.b16 %v6669
  %v6813 = vunpack.c.l.b16 %v6670
  %v6814 = vunpack.c.h.b16 %v6670
  %v6815 = vunpack.c.l.b16 %v6671
  %v6816 = vunpack.c.h.b16 %v6671
  %v6817 = vunpack.c.l.b16 %v6672
  %v6818 = vunpack.c.h.b16 %v6672
  %v6819 = vunpack.c.l.b16 %v6673
  %v6820 = vunpack.c.h.b16 %v6673
  %v6821 = vpack.c.b16 %v6791, %v6789
  %v6822 = vpack.c.b16 %v6792, %v6790
  %v6823 = vpack.c.b16 %v6795, %v6793
  %v6824 = vpack.c.b16 %v6796, %v6794
  %v6825 = vpack.c.b16 %v6799, %v6797
  %v6826 = vpack.c.b16 %v6800, %v6798
  %v6827 = vpack.c.b16 %v6803, %v6801
  %v6828 = vpack.c.b16 %v6804, %v6802
  %v6829 = vpack.c.b16 %v6807, %v6805
  %v6830 = vpack.c.b16 %v6808, %v6806
  %v6831 = vpack.c.b16 %v6811, %v6809
  %v6832 = vpack.c.b16 %v6812, %v6810
  %v6833 = vpack.c.b16 %v6815, %v6813
  %v6834 = vpack.c.b16 %v6816, %v6814
  %v6835 = vpack.c.b16 %v6819, %v6817
  %v6836 = vpack.c.b16 %v6820, %v6818
  %6853 = vmatprep.subr.bf16.mxu0 %v6822
  %6854 = vmatpush1.bf16.msra.mxu0 %v6821
  %6855 = vmatprep.subr.bf16.mxu0 %v6824
  %6856 = vmatpush1.bf16.msra.mxu0 %v6823
  %6857 = vmatprep.subr.bf16.mxu0 %v6826
  %6858 = vmatpush1.bf16.msra.mxu0 %v6825
  %6859 = vmatprep.subr.bf16.mxu0 %v6828
  %6860 = vmatpush1.bf16.msra.mxu0 %v6827
  %6861 = vmatprep.subr.bf16.mxu0 %v6830
  %6862 = vmatpush1.bf16.msra.mxu0 %v6829
  %6863 = vmatprep.subr.bf16.mxu0 %v6832
  %6864 = vmatpush1.bf16.msra.mxu0 %v6831
  %6865 = vmatprep.subr.bf16.mxu0 %v6834
  %6866 = vmatpush1.bf16.msra.mxu0 %v6833
  %6867 = vmatprep.subr.bf16.mxu0 %v6836
  %6868 = vmatpush1.bf16.msra.mxu0 %v6835
  %6869 = vmatprep.subr.bf16.mxu0 0
  %6870 = vmatpush1.bf16.msra.mxu0 0
  %6871 = vmatprep.subr.bf16.mxu0 0
  %6872 = vmatpush1.bf16.msra.mxu0 0
  %6873 = vmatprep.subr.bf16.mxu0 0
  %6874 = vmatpush1.bf16.msra.mxu0 0
  %6875 = vmatprep.subr.bf16.mxu0 0
  %6876 = vmatpush1.bf16.msra.mxu0 0
  %6877 = vmatprep.subr.bf16.mxu0 0
  %6878 = vmatpush1.bf16.msra.mxu0 0
  %6879 = vmatprep.subr.bf16.mxu0 0
  %6880 = vmatpush1.bf16.msra.mxu0 0
  %6881 = vmatprep.subr.bf16.mxu0 0
  %6882 = vmatpush1.bf16.msra.mxu0 0
  %6883 = vmatprep.subr.bf16.mxu0 0
  %6884 = vmatpush1.bf16.msra.mxu0 0
  %6885 = vmatprep.mubr.bf16.mxu0 0
  %6886 = vmatmul.mubr.bf16.gmra.mrb[0].mxu0 %v6761
  %v6887 = vpop.f32.mrb[0].mxu0
  %v6888 = vadd.f32 %v6768, %v6887
  %v6889 = vpop.f32.mrb[0].mxu0
  %v6890 = vadd.f32 %v6772, %v6889
  %v6891 = vpop.f32.mrb[0].mxu0
  %v6892 = vadd.f32 %v6768, %v6891
  %v6893 = vpop.f32.mrb[0].mxu0
  %v6894 = vadd.f32 %v6772, %v6893
  %6895 = vmatprep.mubr.bf16.mxu0 0
  %6896 = vmatmul.mubr.bf16.gmra.mrb[0].mxu0 %v6762
  %v6897 = vpop.f32.mrb[0].mxu0
  %v6898 = vadd.f32 %v6768, %v6897
  %v6899 = vpop.f32.mrb[0].mxu0
  %v6900 = vadd.f32 %v6772, %v6899
  %v6901 = vpop.f32.mrb[0].mxu0
  %v6902 = vadd.f32 %v6768, %v6901
  %v6903 = vpop.f32.mrb[0].mxu0
  %v6904 = vadd.f32 %v6772, %v6903
  %6905 = vmatprep.mubr.bf16.mxu0 0
  %6906 = vmatmul.mubr.bf16.gmra.mrb[0].mxu0 %v6763
  %v6907 = vpop.f32.mrb[0].mxu0
  %v6908 = vadd.f32 %v6768, %v6907
  %v6909 = vpop.f32.mrb[0].mxu0
  %v6910 = vadd.f32 %v6772, %v6909
  %v6911 = vpop.f32.mrb[0].mxu0
  %v6912 = vadd.f32 %v6768, %v6911
  %v6913 = vpop.f32.mrb[0].mxu0
  %v6914 = vadd.f32 %v6772, %v6913
  %6915 = vmatprep.mubr.bf16.mxu0 0
  %6916 = vmatmul.mubr.bf16.gmra.mrb[0].mxu0 %v6764
  %v6917 = vpop.f32.mrb[0].mxu0
  %v6918 = vadd.f32 %v6768, %v6917
  %v6919 = vpop.f32.mrb[0].mxu0
  %v6920 = vadd.f32 %v6772, %v6919
  %v6921 = vpop.f32.mrb[0].mxu0
  %v6922 = vadd.f32 %v6768, %v6921
  %v6923 = vpop.f32.mrb[0].mxu0
  %v6924 = vadd.f32 %v6772, %v6923
  %6925 = vdwg.mxu0
  %v6926 = vmax.f32 %v6888, 0.0
  %v6927 = vmax.f32 %v6892, 0.0
  %v6928 = vmax.f32 %v6898, 0.0
  %v6929 = vmax.f32 %v6902, 0.0
  %v6930 = vmax.f32 %v6908, 0.0
  %v6931 = vmax.f32 %v6912, 0.0
  %v6932 = vmax.f32 %v6918, 0.0
  %v6933 = vmax.f32 %v6922, 0.0
  %v6934 = vrot.slane %v6926, 7
  %v6935 = vrot.slane %v6927, 7
  %v6936 = vrot.slane %v6928, 7
  %v6937 = vrot.slane %v6929, 7
  %v6938 = vrot.slane %v6930, 7
  %v6939 = vrot.slane %v6931, 7
  %v6940 = vrot.slane %v6932, 7
  %v6941 = vrot.slane %v6933, 7
  %v6942 = vsel %vm4368, %v6940, %v6941
  %v6943 = vsel %vm4368, %v6939, %v6940
  %v6944 = vsel %vm4368, %v6938, %v6939
  %v6945 = vsel %vm4368, %v6937, %v6938
  %v6946 = vsel %vm4368, %v6936, %v6937
  %v6947 = vsel %vm4368, %v6935, %v6936
  %v6948 = vsel %vm4368, %v6934, %v6935
  %v6949 = vsel %vm4368, %v6941, %v6934
  %v6950 = vsel %vm4393, %v6949, 0.0
  %v6951 = vsel %vm4394, %v6948, 0.0
  %v6952 = vsel %vm4395, %v6947, 0.0
  %v6953 = vsel %vm4396, %v6946, 0.0
  %v6954 = vsel %vm4397, %v6945, 0.0
  %v6955 = vsel %vm4398, %v6944, 0.0
  %v6956 = vsel %vm4399, %v6943, 0.0
  %v6957 = vsel %vm4400, %v6942, 0.0
  %6966 = vrot.lane.b32.xlu0 %v6926, 72
  %v6967 = vpop.permute.xlu0 %6966
  %6968 = vrot.lane.b32.xlu0 %v6927, 72
  %v6969 = vpop.permute.xlu0 %6968
  %6970 = vrot.lane.b32.xlu0 %v6928, 72
  %v6971 = vpop.permute.xlu0 %6970
  %6972 = vrot.lane.b32.xlu0 %v6929, 72
  %v6973 = vpop.permute.xlu0 %6972
  %6974 = vrot.lane.b32.xlu0 %v6930, 72
  %v6975 = vpop.permute.xlu0 %6974
  %6976 = vrot.lane.b32.xlu0 %v6931, 72
  %v6977 = vpop.permute.xlu0 %6976
  %6978 = vrot.lane.b32.xlu0 %v6932, 72
  %v6979 = vpop.permute.xlu0 %6978
  %6980 = vrot.lane.b32.xlu0 %v6933, 72
  %v6981 = vpop.permute.xlu0 %6980
  %v6990 = vsel %vm4670, %v6950, %v6967
  %v6991 = vsel %vm4670, %v6951, %v6969
  %v6992 = vsel %vm4670, %v6952, %v6971
  %v6993 = vsel %vm4670, %v6953, %v6973
  %v6994 = vsel %vm4670, %v6954, %v6975
  %v6995 = vsel %vm4670, %v6955, %v6977
  %v6996 = vsel %vm4670, %v6956, %v6979
  %v6997 = vsel %vm4670, %v6957, %v6981
  %v6998 = vpack.c.bf16 %v6991, %v6990
  %v6999 = vpack.c.bf16 %v6969, %v6967
  %v7000 = vpack.c.bf16 %v6993, %v6992
  %v7001 = vpack.c.bf16 %v6973, %v6971
  %v7002 = vpack.c.bf16 %v6995, %v6994
  %v7003 = vpack.c.bf16 %v6977, %v6975
  %v7004 = vpack.c.bf16 %v6997, %v6996
  %v7005 = vpack.c.bf16 %v6981, %v6979
  %v7006 = vlaneseq
  %v7007 = vshrl.u32 %v7006, 7
  %v7008 = vsub.s32 0, %v7007
  %v7009 = vrot.slane %v6696, %v7008
  %v7028 = vunpack.c.l.b16 %v6677
  %v7029 = vunpack.c.l.b16 %v6678
  %v7030 = vunpack.c.l.b16 %v6679
  %v7031 = vunpack.c.l.b16 %v6680
  %v7032 = vunpack.c.l.b16 %v6681
  %v7033 = vunpack.c.l.b16 %v6682
  %v7034 = vunpack.c.l.b16 %v6683
  %v7035 = vunpack.c.l.b16 %v6684
  %v7036 = vunpack.c.l.b16 %v6685
  %v7037 = vunpack.c.l.b16 %v6686
  %v7038 = vunpack.c.l.b16 %v6687
  %v7039 = vunpack.c.l.b16 %v6688
  %v7040 = vunpack.c.l.b16 %v6689
  %v7041 = vunpack.c.l.b16 %v6690
  %v7042 = vunpack.c.l.b16 %v6691
  %v7043 = vunpack.c.l.b16 %v6692
  %v7044 = vunpack.c.l.b16 %v6693
  %v7045 = vunpack.c.l.b16 %v6694
  %v7046 = vpack.c.b16 %v7029, %v7028
  %v7047 = vpack.c.b16 %v7031, %v7030
  %v7048 = vpack.c.b16 %v7033, %v7032
  %v7049 = vpack.c.b16 %v7035, %v7034
  %v7050 = vpack.c.b16 %v7037, %v7036
  %v7051 = vpack.c.b16 %v7039, %v7038
  %v7052 = vpack.c.b16 %v7041, %v7040
  %v7053 = vpack.c.b16 %v7043, %v7042
  %v7054 = vpack.c.b16 %v7045, %v7044
  %v7065 = vsel %vm922, %v6999, 0
  %v7068 = vsel %vm922, %v7001, 0
  %v7071 = vsel %vm922, %v7003, 0
  %v7074 = vsel %vm922, %v7005, 0
  %7076 = vmatprep.subr.bf16.mxu0 0
  %7077 = vmatpush1.bf16.msra.mxu0 %v7046
  %7078 = vmatprep.subr.bf16.mxu0 0
  %7079 = vmatpush1.bf16.msra.mxu0 %v7047
  %7080 = vmatprep.subr.bf16.mxu0 0
  %7081 = vmatpush1.bf16.msra.mxu0 %v7048
  %7082 = vmatprep.subr.bf16.mxu0 0
  %7083 = vmatpush1.bf16.msra.mxu0 %v7049
  %7084 = vmatprep.subr.bf16.mxu0 0
  %7085 = vmatpush1.bf16.msra.mxu0 %v7050
  %7086 = vmatprep.subr.bf16.mxu0 0
  %7087 = vmatpush1.bf16.msra.mxu0 %v7051
  %7088 = vmatprep.subr.bf16.mxu0 0
  %7089 = vmatpush1.bf16.msra.mxu0 %v7052
  %7090 = vmatprep.subr.bf16.mxu0 0
  %7091 = vmatpush1.bf16.msra.mxu0 %v7053
  %7092 = vmatprep.subr.bf16.mxu0 0
  %7093 = vmatpush1.bf16.msra.mxu0 %v7054
  %7094 = vmatprep.subr.bf16.mxu0 0
  %7095 = vmatpush1.bf16.msra.mxu0 0
  %7096 = vmatprep.subr.bf16.mxu0 0
  %7097 = vmatpush1.bf16.msra.mxu0 0
  %7098 = vmatprep.subr.bf16.mxu0 0
  %7099 = vmatpush1.bf16.msra.mxu0 0
  %7100 = vmatprep.subr.bf16.mxu0 0
  %7101 = vmatpush1.bf16.msra.mxu0 0
  %7102 = vmatprep.subr.bf16.mxu0 0
  %7103 = vmatpush1.bf16.msra.mxu0 0
  %7104 = vmatprep.subr.bf16.mxu0 0
  %7105 = vmatpush1.bf16.msra.mxu0 0
  %7106 = vmatprep.subr.bf16.mxu0 0
  %7107 = vmatpush1.bf16.msra.mxu0 0
  %7108 = vmatprep.mubr.bf16.mxu0 %v7065
  %7109 = vmatmul.mubr.bf16.gmra.mrb[0].mxu0 %v6998
  %v7110 = vpop.f32.mrb[0].mxu0
  %v7111 = vadd.f32 %v7009, %v7110
  %v7112 = vpop.f32.mrb[0].mxu0
  %v7113 = vpop.f32.mrb[0].mxu0
  %v7114 = vadd.f32 %v7009, %v7113
  %v7115 = vpop.f32.mrb[0].mxu0
  %7116 = vmatprep.mubr.bf16.mxu0 %v7068
  %7117 = vmatmul.mubr.bf16.gmra.mrb[0].mxu0 %v7000
  %v7118 = vpop.f32.mrb[0].mxu0
  %v7119 = vadd.f32 %v7009, %v7118
  %v7120 = vpop.f32.mrb[0].mxu0
  %v7121 = vpop.f32.mrb[0].mxu0
  %v7122 = vadd.f32 %v7009, %v7121
  %v7123 = vpop.f32.mrb[0].mxu0
  %7124 = vmatprep.mubr.bf16.mxu0 %v7071
  %7125 = vmatmul.mubr.bf16.gmra.mrb[0].mxu0 %v7002
  %v7126 = vpop.f32.mrb[0].mxu0
  %v7127 = vadd.f32 %v7009, %v7126
  %v7128 = vpop.f32.mrb[0].mxu0
  %v7129 = vpop.f32.mrb[0].mxu0
  %v7130 = vadd.f32 %v7009, %v7129
  %v7131 = vpop.f32.mrb[0].mxu0
  %7132 = vmatprep.mubr.bf16.mxu0 %v7074
  %7133 = vmatmul.mubr.bf16.gmra.mrb[0].mxu0 %v7004
  %v7134 = vpop.f32.mrb[0].mxu0
  %v7135 = vadd.f32 %v7009, %v7134
  %v7136 = vpop.f32.mrb[0].mxu0
  %v7137 = vpop.f32.mrb[0].mxu0
  %v7138 = vadd.f32 %v7009, %v7137
  %v7139 = vpop.f32.mrb[0].mxu0
  %7140 = vdwg.mxu0
  %v7141 = vmax.f32 %v7111, 0.0
  %v7142 = vmax.f32 %v7114, 0.0
  %v7143 = vmax.f32 %v7119, 0.0
  %v7144 = vmax.f32 %v7122, 0.0
  %v7145 = vmax.f32 %v7127, 0.0
  %v7146 = vmax.f32 %v7130, 0.0
  %v7147 = vmax.f32 %v7135, 0.0
  %v7148 = vmax.f32 %v7138, 0.0
  %7165 = vrot.lane.b32.xlu0 %v6888, 56
  %v7166 = vpop.permute.xlu0 %7165
  %7167 = vrot.lane.b32.xlu0 %v6890, 56
  %v7168 = vpop.permute.xlu0 %7167
  %7169 = vrot.lane.b32.xlu0 %v6892, 56
  %v7170 = vpop.permute.xlu0 %7169
  %7171 = vrot.lane.b32.xlu0 %v6894, 56
  %v7172 = vpop.permute.xlu0 %7171
  %7173 = vrot.lane.b32.xlu0 %v6898, 56
  %v7174 = vpop.permute.xlu0 %7173
  %7175 = vrot.lane.b32.xlu0 %v6900, 56
  %v7176 = vpop.permute.xlu0 %7175
  %7177 = vrot.lane.b32.xlu0 %v6902, 56
  %v7178 = vpop.permute.xlu0 %7177
  %7179 = vrot.lane.b32.xlu0 %v6904, 56
  %v7180 = vpop.permute.xlu0 %7179
  %7181 = vrot.lane.b32.xlu0 %v6908, 56
  %v7182 = vpop.permute.xlu0 %7181
  %7183 = vrot.lane.b32.xlu0 %v6910, 56
  %v7184 = vpop.permute.xlu0 %7183
  %7185 = vrot.lane.b32.xlu0 %v6912, 56
  %v7186 = vpop.permute.xlu0 %7185
  %7187 = vrot.lane.b32.xlu0 %v6914, 56
  %v7188 = vpop.permute.xlu0 %7187
  %7189 = vrot.lane.b32.xlu0 %v6918, 56
  %v7190 = vpop.permute.xlu0 %7189
  %7191 = vrot.lane.b32.xlu0 %v6920, 56
  %v7192 = vpop.permute.xlu0 %7191
  %7193 = vrot.lane.b32.xlu0 %v6922, 56
  %v7194 = vpop.permute.xlu0 %7193
  %7195 = vrot.lane.b32.xlu0 %v6924, 56
  %v7196 = vpop.permute.xlu0 %7195
  %v7197 = vsel %vm4878, %v7166, %v7168
  %v7198 = vsel %vm4878, %v7170, %v7172
  %v7199 = vsel %vm4878, %v7174, %v7176
  %v7200 = vsel %vm4878, %v7178, %v7180
  %v7201 = vsel %vm4878, %v7182, %v7184
  %v7202 = vsel %vm4878, %v7186, %v7188
  %v7203 = vsel %vm4878, %v7190, %v7192
  %v7204 = vsel %vm4878, %v7194, %v7196
  %v7213 = vadd.f32 %v7141, %v7197
  %v7214 = vadd.f32 %v7142, %v7198
  %v7215 = vadd.f32 %v7143, %v7199
  %v7216 = vadd.f32 %v7144, %v7200
  %v7217 = vadd.f32 %v7145, %v7201
  %v7218 = vadd.f32 %v7146, %v7202
  %v7219 = vadd.f32 %v7147, %v7203
  %v7220 = vadd.f32 %v7148, %v7204
  %v7221 = vmax.f32 %v7213, 0.0
  %v7222 = vmax.f32 %v7214, 0.0
  %v7223 = vmax.f32 %v7215, 0.0
  %v7224 = vmax.f32 %v7216, 0.0
  %v7225 = vmax.f32 %v7217, 0.0
  %v7226 = vmax.f32 %v7218, 0.0
  %v7227 = vmax.f32 %v7219, 0.0
  %v7228 = vmax.f32 %v7220, 0.0
  %v7229 = vld [vmem:[%s1 + $0x458] sm:$0xf]
  %v7230 = vld [vmem:[%s1 + $0x460] sm:$0xf]
  %v7231 = vld [vmem:[%s1 + $0x468] sm:$0xf]
  %v7232 = vld [vmem:[%s1 + $0x470] sm:$0xf]
  %v7233 = vld [vmem:[%s1 + $0x478] sm:$0xf]
  %v7234 = vld [vmem:[%s1 + $0x480] sm:$0xf]
  %v7235 = vld [vmem:[%s1 + $0x488] sm:$0xf]
  %v7236 = vld [vmem:[%s1 + $0x490] sm:$0xf]
  %v7237 = vld [vmem:[%s1 + $0x498] sm:$0xf]
  %v7238 = vld [vmem:[%s1 + $0x4a0] sm:$0xf]
  %v7239 = vld [vmem:[%s1 + $0x4a8] sm:$0xf]
  %v7240 = vld [vmem:[%s1 + $0x4b0] sm:$0xf]
  %v7241 = vld [vmem:[%s1 + $0x4b8] sm:$0xf]
  %v7242 = vld [vmem:[%s1 + $0x4c0] sm:$0xf]
  %v7243 = vld [vmem:[%s1 + $0x4c8] sm:$0xf]
  %v7244 = vld [vmem:[%s1 + $0x4d0] sm:$0xf]
  %v7245 = vld [vmem:[%s1 + $0x4d8] sm:$0xf]
  %v7246 = vld [vmem:[%s1 + $0x4e0] sm:$0xf]
  %v7247 = vld [vmem:[%s1 + $0x4e8] sm:$0x1]
  %v7248 = vunpack.c.l.bf16 %v7247
  %v7249 = vld [vmem:[%s1 + $0x4f0] sm:$0xf]
  %v7250 = vld [vmem:[%s1 + $0x4f8] sm:$0xf]
  %v7251 = vld [vmem:[%s1 + $0x500] sm:$0xf]
  %v7252 = vld [vmem:[%s1 + $0x508] sm:$0xf]
  %v7253 = vld [vmem:[%s1 + $0x510] sm:$0xf]
  %v7254 = vld [vmem:[%s1 + $0x518] sm:$0xf]
  %v7255 = vld [vmem:[%s1 + $0x520] sm:$0xf]
  %v7256 = vld [vmem:[%s1 + $0x528] sm:$0xf]
  %v7257 = vld [vmem:[%s1 + $0x530] sm:$0xf]
  %v7258 = vld [vmem:[%s1 + $0x538] sm:$0x1]
  %v7259 = vunpack.c.l.bf16 %v7258
  %v7260 = vrot.slane %v7221, 6
  %v7261 = vrot.slane %v7222, 6
  %v7262 = vrot.slane %v7223, 6
  %v7263 = vrot.slane %v7224, 6
  %v7264 = vrot.slane %v7225, 6
  %v7265 = vrot.slane %v7226, 6
  %v7266 = vrot.slane %v7227, 6
  %v7267 = vrot.slane %v7228, 6
  %v7268 = vsel %vm4950, %v7266, %v7267
  %v7269 = vsel %vm4950, %v7265, %v7266
  %v7270 = vsel %vm4950, %v7264, %v7265
  %v7271 = vsel %vm4950, %v7263, %v7264
  %v7272 = vsel %vm4950, %v7262, %v7263
  %v7273 = vsel %vm4950, %v7261, %v7262
  %v7274 = vsel %vm4950, %v7260, %v7261
  %v7275 = vsel %vm4950, %v7267, %v7260
  %v7276 = vsel %vm4975, %v7275, 0.0
  %v7277 = vsel %vm4976, %v7274, 0.0
  %v7278 = vsel %vm4977, %v7273, 0.0
  %v7279 = vsel %vm4978, %v7272, 0.0
  %v7280 = vsel %vm4979, %v7271, 0.0
  %v7281 = vsel %vm4980, %v7270, 0.0
  %v7282 = vsel %vm4981, %v7269, 0.0
  %v7283 = vsel %vm4982, %v7268, 0.0
  %7292 = vrot.lane.b32.xlu0 %v7221, 72
  %v7293 = vpop.permute.xlu0 %7292
  %7294 = vrot.lane.b32.xlu0 %v7222, 72
  %v7295 = vpop.permute.xlu0 %7294
  %7296 = vrot.lane.b32.xlu0 %v7223, 72
  %v7297 = vpop.permute.xlu0 %7296
  %7298 = vrot.lane.b32.xlu0 %v7224, 72
  %v7299 = vpop.permute.xlu0 %7298
  %7300 = vrot.lane.b32.xlu0 %v7225, 72
  %v7301 = vpop.permute.xlu0 %7300
  %7302 = vrot.lane.b32.xlu0 %v7226, 72
  %v7303 = vpop.permute.xlu0 %7302
  %7304 = vrot.lane.b32.xlu0 %v7227, 72
  %v7305 = vpop.permute.xlu0 %7304
  %7306 = vrot.lane.b32.xlu0 %v7228, 72
  %v7307 = vpop.permute.xlu0 %7306
  %v7316 = vsel %vm4670, %v7276, %v7293
  %v7317 = vsel %vm4670, %v7277, %v7295
  %v7318 = vsel %vm4670, %v7278, %v7297
  %v7319 = vsel %vm4670, %v7279, %v7299
  %v7320 = vsel %vm4670, %v7280, %v7301
  %v7321 = vsel %vm4670, %v7281, %v7303
  %v7322 = vsel %vm4670, %v7282, %v7305
  %v7323 = vsel %vm4670, %v7283, %v7307
  %v7324 = vpack.c.bf16 %v7317, %v7316
  %v7325 = vpack.c.bf16 %v7295, %v7293
  %v7326 = vpack.c.bf16 %v7319, %v7318
  %v7327 = vpack.c.bf16 %v7299, %v7297
  %v7328 = vpack.c.bf16 %v7321, %v7320
  %v7329 = vpack.c.bf16 %v7303, %v7301
  %v7330 = vpack.c.bf16 %v7323, %v7322
  %v7331 = vpack.c.bf16 %v7307, %v7305
  %v7332 = vlaneseq
  %v7333 = vshrl.u32 %v7332, 7
  %v7334 = vsub.s32 0, %v7333
  %v7335 = vrot.slane %v7248, %v7334
  %v7354 = vunpack.c.l.b16 %v7229
  %v7355 = vunpack.c.l.b16 %v7230
  %v7356 = vunpack.c.l.b16 %v7231
  %v7357 = vunpack.c.l.b16 %v7232
  %v7358 = vunpack.c.l.b16 %v7233
  %v7359 = vunpack.c.l.b16 %v7234
  %v7360 = vunpack.c.l.b16 %v7235
  %v7361 = vunpack.c.l.b16 %v7236
  %v7362 = vunpack.c.l.b16 %v7237
  %v7363 = vunpack.c.l.b16 %v7238
  %v7364 = vunpack.c.l.b16 %v7239
  %v7365 = vunpack.c.l.b16 %v7240
  %v7366 = vunpack.c.l.b16 %v7241
  %v7367 = vunpack.c.l.b16 %v7242
  %v7368 = vunpack.c.l.b16 %v7243
  %v7369 = vunpack.c.l.b16 %v7244
  %v7370 = vunpack.c.l.b16 %v7245
  %v7371 = vunpack.c.l.b16 %v7246
  %v7372 = vpack.c.b16 %v7355, %v7354
  %v7373 = vpack.c.b16 %v7357, %v7356
  %v7374 = vpack.c.b16 %v7359, %v7358
  %v7375 = vpack.c.b16 %v7361, %v7360
  %v7376 = vpack.c.b16 %v7363, %v7362
  %v7377 = vpack.c.b16 %v7365, %v7364
  %v7378 = vpack.c.b16 %v7367, %v7366
  %v7379 = vpack.c.b16 %v7369, %v7368
  %v7380 = vpack.c.b16 %v7371, %v7370
  %v7391 = vsel %vm922, %v7325, 0
  %v7394 = vsel %vm922, %v7327, 0
  %v7397 = vsel %vm922, %v7329, 0
  %v7400 = vsel %vm922, %v7331, 0
  %7402 = vmatprep.subr.bf16.mxu0 0
  %7403 = vmatpush1.bf16.msra.mxu0 %v7372
  %7404 = vmatprep.subr.bf16.mxu0 0
  %7405 = vmatpush1.bf16.msra.mxu0 %v7373
  %7406 = vmatprep.subr.bf16.mxu0 0
  %7407 = vmatpush1.bf16.msra.mxu0 %v7374
  %7408 = vmatprep.subr.bf16.mxu0 0
  %7409 = vmatpush1.bf16.msra.mxu0 %v7375
  %7410 = vmatprep.subr.bf16.mxu0 0
  %7411 = vmatpush1.bf16.msra.mxu0 %v7376
  %7412 = vmatprep.subr.bf16.mxu0 0
  %7413 = vmatpush1.bf16.msra.mxu0 %v7377
  %7414 = vmatprep.subr.bf16.mxu0 0
  %7415 = vmatpush1.bf16.msra.mxu0 %v7378
  %7416 = vmatprep.subr.bf16.mxu0 0
  %7417 = vmatpush1.bf16.msra.mxu0 %v7379
  %7418 = vmatprep.subr.bf16.mxu0 0
  %7419 = vmatpush1.bf16.msra.mxu0 %v7380
  %7420 = vmatprep.subr.bf16.mxu0 0
  %7421 = vmatpush1.bf16.msra.mxu0 0
  %7422 = vmatprep.subr.bf16.mxu0 0
  %7423 = vmatpush1.bf16.msra.mxu0 0
  %7424 = vmatprep.subr.bf16.mxu0 0
  %7425 = vmatpush1.bf16.msra.mxu0 0
  %7426 = vmatprep.subr.bf16.mxu0 0
  %7427 = vmatpush1.bf16.msra.mxu0 0
  %7428 = vmatprep.subr.bf16.mxu0 0
  %7429 = vmatpush1.bf16.msra.mxu0 0
  %7430 = vmatprep.subr.bf16.mxu0 0
  %7431 = vmatpush1.bf16.msra.mxu0 0
  %7432 = vmatprep.subr.bf16.mxu0 0
  %7433 = vmatpush1.bf16.msra.mxu0 0
  %7434 = vmatprep.mubr.bf16.mxu0 %v7391
  %7435 = vmatmul.mubr.bf16.gmra.mrb[0].mxu0 %v7324
  %v7436 = vpop.f32.mrb[0].mxu0
  %v7437 = vadd.f32 %v7335, %v7436
  %v7438 = vpop.f32.mrb[0].mxu0
  %v7439 = vpop.f32.mrb[0].mxu0
  %v7440 = vadd.f32 %v7335, %v7439
  %v7441 = vpop.f32.mrb[0].mxu0
  %7442 = vmatprep.mubr.bf16.mxu0 %v7394
  %7443 = vmatmul.mubr.bf16.gmra.mrb[0].mxu0 %v7326
  %v7444 = vpop.f32.mrb[0].mxu0
  %v7445 = vadd.f32 %v7335, %v7444
  %v7446 = vpop.f32.mrb[0].mxu0
  %v7447 = vpop.f32.mrb[0].mxu0
  %v7448 = vadd.f32 %v7335, %v7447
  %v7449 = vpop.f32.mrb[0].mxu0
  %7450 = vmatprep.mubr.bf16.mxu0 %v7397
  %7451 = vmatmul.mubr.bf16.gmra.mrb[0].mxu0 %v7328
  %v7452 = vpop.f32.mrb[0].mxu0
  %v7453 = vadd.f32 %v7335, %v7452
  %v7454 = vpop.f32.mrb[0].mxu0
  %v7455 = vpop.f32.mrb[0].mxu0
  %v7456 = vadd.f32 %v7335, %v7455
  %v7457 = vpop.f32.mrb[0].mxu0
  %7458 = vmatprep.mubr.bf16.mxu0 %v7400
  %7459 = vmatmul.mubr.bf16.gmra.mrb[0].mxu0 %v7330
  %v7460 = vpop.f32.mrb[0].mxu0
  %v7461 = vadd.f32 %v7335, %v7460
  %v7462 = vpop.f32.mrb[0].mxu0
  %v7463 = vpop.f32.mrb[0].mxu0
  %v7464 = vadd.f32 %v7335, %v7463
  %v7465 = vpop.f32.mrb[0].mxu0
  %7466 = vdwg.mxu0
  %v7467 = vmax.f32 %v7437, 0.0
  %v7468 = vmax.f32 %v7440, 0.0
  %v7469 = vmax.f32 %v7445, 0.0
  %v7470 = vmax.f32 %v7448, 0.0
  %v7471 = vmax.f32 %v7453, 0.0
  %v7472 = vmax.f32 %v7456, 0.0
  %v7473 = vmax.f32 %v7461, 0.0
  %v7474 = vmax.f32 %v7464, 0.0
  %v7475 = vrot.slane %v7467, 6
  %v7476 = vrot.slane %v7468, 6
  %v7477 = vrot.slane %v7469, 6
  %v7478 = vrot.slane %v7470, 6
  %v7479 = vrot.slane %v7471, 6
  %v7480 = vrot.slane %v7472, 6
  %v7481 = vrot.slane %v7473, 6
  %v7482 = vrot.slane %v7474, 6
  %v7483 = vsel %vm4950, %v7481, %v7482
  %v7484 = vsel %vm4950, %v7480, %v7481
  %v7485 = vsel %vm4950, %v7479, %v7480
  %v7486 = vsel %vm4950, %v7478, %v7479
  %v7487 = vsel %vm4950, %v7477, %v7478
  %v7488 = vsel %vm4950, %v7476, %v7477
  %v7489 = vsel %vm4950, %v7475, %v7476
  %v7490 = vsel %vm4950, %v7482, %v7475
  %v7491 = vsel %vm4975, %v7490, 0.0
  %v7492 = vsel %vm4976, %v7489, 0.0
  %v7493 = vsel %vm4977, %v7488, 0.0
  %v7494 = vsel %vm4978, %v7487, 0.0
  %v7495 = vsel %vm4979, %v7486, 0.0
  %v7496 = vsel %vm4980, %v7485, 0.0
  %v7497 = vsel %vm4981, %v7484, 0.0
  %v7498 = vsel %vm4982, %v7483, 0.0
  %7507 = vrot.lane.b32.xlu0 %v7467, 36
  %v7508 = vpop.permute.xlu0 %7507
  %7509 = vrot.lane.b32.xlu0 %v7468, 36
  %v7510 = vpop.permute.xlu0 %7509
  %7511 = vrot.lane.b32.xlu0 %v7469, 36
  %v7512 = vpop.permute.xlu0 %7511
  %7513 = vrot.lane.b32.xlu0 %v7470, 36
  %v7514 = vpop.permute.xlu0 %7513
  %7515 = vrot.lane.b32.xlu0 %v7471, 36
  %v7516 = vpop.permute.xlu0 %7515
  %7517 = vrot.lane.b32.xlu0 %v7472, 36
  %v7518 = vpop.permute.xlu0 %7517
  %7519 = vrot.lane.b32.xlu0 %v7473, 36
  %v7520 = vpop.permute.xlu0 %7519
  %7521 = vrot.lane.b32.xlu0 %v7474, 36
  %v7522 = vpop.permute.xlu0 %7521
  %v7531 = vsel %vm5238, %v7491, %v7508
  %v7532 = vsel %vm5238, %v7492, %v7510
  %v7533 = vsel %vm5238, %v7493, %v7512
  %v7534 = vsel %vm5238, %v7494, %v7514
  %v7535 = vsel %vm5238, %v7495, %v7516
  %v7536 = vsel %vm5238, %v7496, %v7518
  %v7537 = vsel %vm5238, %v7497, %v7520
  %v7538 = vsel %vm5238, %v7498, %v7522
  %v7539 = vpack.c.bf16 %v7532, %v7531
  %v7540 = vpack.c.bf16 %v7534, %v7533
  %v7541 = vpack.c.bf16 %v7536, %v7535
  %v7542 = vpack.c.bf16 %v7538, %v7537
  %v7543 = vlaneseq
  %v7544 = vshrl.u32 %v7543, 7
  %v7545 = vsub.s32 0, %v7544
  %v7546 = vrot.slane %v7259, %v7545
  %v7556 = vunpack.c.l.b16 %v7249
  %v7557 = vunpack.c.l.b16 %v7250
  %v7558 = vunpack.c.l.b16 %v7251
  %v7559 = vunpack.c.l.b16 %v7252
  %v7560 = vunpack.c.l.b16 %v7253
  %v7561 = vunpack.c.l.b16 %v7254
  %v7562 = vunpack.c.l.b16 %v7255
  %v7563 = vunpack.c.l.b16 %v7256
  %v7564 = vunpack.c.l.b16 %v7257
  %v7565 = vpack.c.b16 %v7557, %v7556
  %v7566 = vpack.c.b16 %v7559, %v7558
  %v7567 = vpack.c.b16 %v7561, %v7560
  %v7568 = vpack.c.b16 %v7563, %v7562
  %v7569 = vpack.c.b16 %v7564, %v7564
  %v7575 = vsel %vm4670, %v7539, 0
  %v7578 = vsel %vm4670, %v7540, 0
  %v7581 = vsel %vm4670, %v7541, 0
  %v7584 = vsel %vm4670, %v7542, 0
  %v7587 = vsel %vm5294, %v7569, 0
  %7589 = vmatprep.subr.bf16.mxu0 0
  %7590 = vmatpush1.bf16.msra.mxu0 %v7565
  %7591 = vmatprep.subr.bf16.mxu0 0
  %7592 = vmatpush1.bf16.msra.mxu0 %v7566
  %7593 = vmatprep.subr.bf16.mxu0 0
  %7594 = vmatpush1.bf16.msra.mxu0 %v7567
  %7595 = vmatprep.subr.bf16.mxu0 0
  %7596 = vmatpush1.bf16.msra.mxu0 %v7568
  %7597 = vmatprep.subr.bf16.mxu0 0
  %7598 = vmatpush1.bf16.msra.mxu0 %v7587
  %7599 = vmatprep.subr.bf16.mxu0 0
  %7600 = vmatpush1.bf16.msra.mxu0 0
  %7601 = vmatprep.subr.bf16.mxu0 0
  %7602 = vmatpush1.bf16.msra.mxu0 0
  %7603 = vmatprep.subr.bf16.mxu0 0
  %7604 = vmatpush1.bf16.msra.mxu0 0
  %7605 = vmatprep.subr.bf16.mxu0 0
  %7606 = vmatpush1.bf16.msra.mxu0 0
  %7607 = vmatprep.subr.bf16.mxu0 0
  %7608 = vmatpush1.bf16.msra.mxu0 0
  %7609 = vmatprep.subr.bf16.mxu0 0
  %7610 = vmatpush1.bf16.msra.mxu0 0
  %7611 = vmatprep.subr.bf16.mxu0 0
  %7612 = vmatpush1.bf16.msra.mxu0 0
  %7613 = vmatprep.subr.bf16.mxu0 0
  %7614 = vmatpush1.bf16.msra.mxu0 0
  %7615 = vmatprep.subr.bf16.mxu0 0
  %7616 = vmatpush1.bf16.msra.mxu0 0
  %7617 = vmatprep.subr.bf16.mxu0 0
  %7618 = vmatpush1.bf16.msra.mxu0 0
  %7619 = vmatprep.subr.bf16.mxu0 0
  %7620 = vmatpush1.bf16.msra.mxu0 0
  %7621 = vmatprep.mubr.bf16.mxu0 0
  %7622 = vmatmul.mubr.bf16.gmra.mrb[0].mxu0 %v7575
  %v7623 = vpop.f32.mrb[0].mxu0
  %v7624 = vadd.f32 %v7546, %v7623
  %v7625 = vpop.f32.mrb[0].mxu0
  %v7626 = vpop.f32.mrb[0].mxu0
  %v7627 = vadd.f32 %v7546, %v7626
  %v7628 = vpop.f32.mrb[0].mxu0
  %7629 = vmatprep.mubr.bf16.mxu0 0
  %7630 = vmatmul.mubr.bf16.gmra.mrb[0].mxu0 %v7578
  %v7631 = vpop.f32.mrb[0].mxu0
  %v7632 = vadd.f32 %v7546, %v7631
  %v7633 = vpop.f32.mrb[0].mxu0
  %v7634 = vpop.f32.mrb[0].mxu0
  %v7635 = vadd.f32 %v7546, %v7634
  %v7636 = vpop.f32.mrb[0].mxu0
  %7637 = vmatprep.mubr.bf16.mxu0 0
  %7638 = vmatmul.mubr.bf16.gmra.mrb[0].mxu0 %v7581
  %v7639 = vpop.f32.mrb[0].mxu0
  %v7640 = vadd.f32 %v7546, %v7639
  %v7641 = vpop.f32.mrb[0].mxu0
  %v7642 = vpop.f32.mrb[0].mxu0
  %v7643 = vadd.f32 %v7546, %v7642
  %v7644 = vpop.f32.mrb[0].mxu0
  %7645 = vmatprep.mubr.bf16.mxu0 0
  %7646 = vmatmul.mubr.bf16.gmra.mrb[0].mxu0 %v7584
  %v7647 = vpop.f32.mrb[0].mxu0
  %v7648 = vadd.f32 %v7546, %v7647
  %v7649 = vpop.f32.mrb[0].mxu0
  %v7650 = vpop.f32.mrb[0].mxu0
  %v7651 = vadd.f32 %v7546, %v7650
  %v7652 = vpop.f32.mrb[0].mxu0
  %7653 = vdwg.mxu0
  %v7654 = vmax.f32 %v7624, 0.0
  %v7655 = vmax.f32 %v7627, 0.0
  %v7656 = vmax.f32 %v7632, 0.0
  %v7657 = vmax.f32 %v7635, 0.0
  %v7658 = vmax.f32 %v7640, 0.0
  %v7659 = vmax.f32 %v7643, 0.0
  %v7660 = vmax.f32 %v7648, 0.0
  %v7661 = vmax.f32 %v7651, 0.0
  %7670 = vrot.lane.b32.xlu0 %v7437, 92
  %v7671 = vpop.permute.xlu0 %7670
  %7672 = vrot.lane.b32.xlu0 %v7440, 92
  %v7673 = vpop.permute.xlu0 %7672
  %7674 = vrot.lane.b32.xlu0 %v7445, 92
  %v7675 = vpop.permute.xlu0 %7674
  %7676 = vrot.lane.b32.xlu0 %v7448, 92
  %v7677 = vpop.permute.xlu0 %7676
  %7678 = vrot.lane.b32.xlu0 %v7453, 92
  %v7679 = vpop.permute.xlu0 %7678
  %7680 = vrot.lane.b32.xlu0 %v7456, 92
  %v7681 = vpop.permute.xlu0 %7680
  %7682 = vrot.lane.b32.xlu0 %v7461, 92
  %v7683 = vpop.permute.xlu0 %7682
  %7684 = vrot.lane.b32.xlu0 %v7464, 92
  %v7685 = vpop.permute.xlu0 %7684
  %v7694 = vadd.f32 %v7654, %v7671
  %v7695 = vadd.f32 %v7655, %v7673
  %v7696 = vadd.f32 %v7656, %v7675
  %v7697 = vadd.f32 %v7657, %v7677
  %v7698 = vadd.f32 %v7658, %v7679
  %v7699 = vadd.f32 %v7659, %v7681
  %v7700 = vadd.f32 %v7660, %v7683
  %v7701 = vadd.f32 %v7661, %v7685
  %v7702 = vmax.f32 %v7694, 0.0
  %v7703 = vmax.f32 %v7695, 0.0
  %v7704 = vmax.f32 %v7696, 0.0
  %v7705 = vmax.f32 %v7697, 0.0
  %v7706 = vmax.f32 %v7698, 0.0
  %v7707 = vmax.f32 %v7699, 0.0
  %v7708 = vmax.f32 %v7700, 0.0
  %v7709 = vmax.f32 %v7701, 0.0
  %v7710 = vld [vmem:[%s1 + $0x540] sm:$0xf]
  %v7711 = vld [vmem:[%s1 + $0x548] sm:$0xf]
  %v7712 = vld [vmem:[%s1 + $0x550] sm:$0xf]
  %v7713 = vld [vmem:[%s1 + $0x558] sm:$0xf]
  %v7714 = vld [vmem:[%s1 + $0x560] sm:$0xf]
  %v7715 = vld [vmem:[%s1 + $0x568] sm:$0xf]
  %v7716 = vld [vmem:[%s1 + $0x570] sm:$0xf]
  %v7717 = vld [vmem:[%s1 + $0x578] sm:$0xf]
  %v7718 = vld [vmem:[%s1 + $0x580] sm:$0xf]
  %v7719 = vld [vmem:[%s1 + $0x588] sm:$0x1]
  %v7720 = vunpack.c.l.bf16 %v7719
  %v7721 = vld [vmem:[%s1 + $0x590] sm:$0xf]
  %v7722 = vld [vmem:[%s1 + $0x598] sm:$0xf]
  %v7723 = vld [vmem:[%s1 + $0x5a0] sm:$0xf]
  %v7724 = vld [vmem:[%s1 + $0x5a8] sm:$0xf]
  %v7725 = vld [vmem:[%s1 + $0x5b0] sm:$0xf]
  %v7726 = vld [vmem:[%s1 + $0x5b8] sm:$0xf]
  %v7727 = vld [vmem:[%s1 + $0x5c0] sm:$0x1]
  %v7728 = vunpack.c.l.bf16 %v7727
  %v7729 = vrot.slane %v7702, 4
  %v7730 = vrot.slane %v7703, 4
  %v7731 = vrot.slane %v7704, 4
  %v7732 = vrot.slane %v7705, 4
  %v7733 = vrot.slane %v7706, 4
  %v7734 = vrot.slane %v7707, 4
  %v7735 = vrot.slane %v7708, 4
  %v7736 = vrot.slane %v7709, 4
  %v7737 = vsel %vm5446, %v7735, %v7736
  %v7738 = vsel %vm5446, %v7734, %v7735
  %v7739 = vsel %vm5446, %v7733, %v7734
  %v7740 = vsel %vm5446, %v7732, %v7733
  %v7741 = vsel %vm5446, %v7731, %v7732
  %v7742 = vsel %vm5446, %v7730, %v7731
  %v7743 = vsel %vm5446, %v7729, %v7730
  %v7744 = vsel %vm5446, %v7736, %v7729
  %v7745 = vsel %vm5471, %v7744, 0.0
  %v7746 = vsel %vm5472, %v7743, 0.0
  %v7747 = vsel %vm5473, %v7742, 0.0
  %v7748 = vsel %vm5474, %v7741, 0.0
  %v7749 = vsel %vm5475, %v7740, 0.0
  %v7750 = vsel %vm5476, %v7739, 0.0
  %v7751 = vsel %vm5477, %v7738, 0.0
  %v7752 = vsel %vm5478, %v7737, 0.0
  %7761 = vrot.lane.b32.xlu0 %v7702, 36
  %v7762 = vpop.permute.xlu0 %7761
  %7763 = vrot.lane.b32.xlu0 %v7703, 36
  %v7764 = vpop.permute.xlu0 %7763
  %7765 = vrot.lane.b32.xlu0 %v7704, 36
  %v7766 = vpop.permute.xlu0 %7765
  %7767 = vrot.lane.b32.xlu0 %v7705, 36
  %v7768 = vpop.permute.xlu0 %7767
  %7769 = vrot.lane.b32.xlu0 %v7706, 36
  %v7770 = vpop.permute.xlu0 %7769
  %7771 = vrot.lane.b32.xlu0 %v7707, 36
  %v7772 = vpop.permute.xlu0 %7771
  %7773 = vrot.lane.b32.xlu0 %v7708, 36
  %v7774 = vpop.permute.xlu0 %7773
  %7775 = vrot.lane.b32.xlu0 %v7709, 36
  %v7776 = vpop.permute.xlu0 %7775
  %v7785 = vsel %vm5238, %v7745, %v7762
  %v7786 = vsel %vm5238, %v7746, %v7764
  %v7787 = vsel %vm5238, %v7747, %v7766
  %v7788 = vsel %vm5238, %v7748, %v7768
  %v7789 = vsel %vm5238, %v7749, %v7770
  %v7790 = vsel %vm5238, %v7750, %v7772
  %v7791 = vsel %vm5238, %v7751, %v7774
  %v7792 = vsel %vm5238, %v7752, %v7776
  %v7793 = vpack.c.bf16 %v7786, %v7785
  %v7794 = vpack.c.bf16 %v7788, %v7787
  %v7795 = vpack.c.bf16 %v7790, %v7789
  %v7796 = vpack.c.bf16 %v7792, %v7791
  %v7797 = vlaneseq
  %v7798 = vshrl.u32 %v7797, 7
  %v7799 = vsub.s32 0, %v7798
  %v7800 = vrot.slane %v7720, %v7799
  %v7810 = vunpack.c.l.b16 %v7710
  %v7811 = vunpack.c.l.b16 %v7711
  %v7812 = vunpack.c.l.b16 %v7712
  %v7813 = vunpack.c.l.b16 %v7713
  %v7814 = vunpack.c.l.b16 %v7714
  %v7815 = vunpack.c.l.b16 %v7715
  %v7816 = vunpack.c.l.b16 %v7716
  %v7817 = vunpack.c.l.b16 %v7717
  %v7818 = vunpack.c.l.b16 %v7718
  %v7819 = vpack.c.b16 %v7811, %v7810
  %v7820 = vpack.c.b16 %v7813, %v7812
  %v7821 = vpack.c.b16 %v7815, %v7814
  %v7822 = vpack.c.b16 %v7817, %v7816
  %v7823 = vpack.c.b16 %v7818, %v7818
  %v7829 = vsel %vm4670, %v7793, 0
  %v7832 = vsel %vm4670, %v7794, 0
  %v7835 = vsel %vm4670, %v7795, 0
  %v7838 = vsel %vm4670, %v7796, 0
  %v7841 = vsel %vm5294, %v7823, 0
  %7843 = vmatprep.subr.bf16.mxu0 0
  %7844 = vmatpush1.bf16.msra.mxu0 %v7819
  %7845 = vmatprep.subr.bf16.mxu0 0
  %7846 = vmatpush1.bf16.msra.mxu0 %v7820
  %7847 = vmatprep.subr.bf16.mxu0 0
  %7848 = vmatpush1.bf16.msra.mxu0 %v7821
  %7849 = vmatprep.subr.bf16.mxu0 0
  %7850 = vmatpush1.bf16.msra.mxu0 %v7822
  %7851 = vmatprep.subr.bf16.mxu0 0
  %7852 = vmatpush1.bf16.msra.mxu0 %v7841
  %7853 = vmatprep.subr.bf16.mxu0 0
  %7854 = vmatpush1.bf16.msra.mxu0 0
  %7855 = vmatprep.subr.bf16.mxu0 0
  %7856 = vmatpush1.bf16.msra.mxu0 0
  %7857 = vmatprep.subr.bf16.mxu0 0
  %7858 = vmatpush1.bf16.msra.mxu0 0
  %7859 = vmatprep.subr.bf16.mxu0 0
  %7860 = vmatpush1.bf16.msra.mxu0 0
  %7861 = vmatprep.subr.bf16.mxu0 0
  %7862 = vmatpush1.bf16.msra.mxu0 0
  %7863 = vmatprep.subr.bf16.mxu0 0
  %7864 = vmatpush1.bf16.msra.mxu0 0
  %7865 = vmatprep.subr.bf16.mxu0 0
  %7866 = vmatpush1.bf16.msra.mxu0 0
  %7867 = vmatprep.subr.bf16.mxu0 0
  %7868 = vmatpush1.bf16.msra.mxu0 0
  %7869 = vmatprep.subr.bf16.mxu0 0
  %7870 = vmatpush1.bf16.msra.mxu0 0
  %7871 = vmatprep.subr.bf16.mxu0 0
  %7872 = vmatpush1.bf16.msra.mxu0 0
  %7873 = vmatprep.subr.bf16.mxu0 0
  %7874 = vmatpush1.bf16.msra.mxu0 0
  %7875 = vmatprep.mubr.bf16.mxu0 0
  %7876 = vmatmul.mubr.bf16.gmra.mrb[0].mxu0 %v7829
  %v7877 = vpop.f32.mrb[0].mxu0
  %v7878 = vadd.f32 %v7800, %v7877
  %v7879 = vpop.f32.mrb[0].mxu0
  %v7880 = vpop.f32.mrb[0].mxu0
  %v7881 = vadd.f32 %v7800, %v7880
  %v7882 = vpop.f32.mrb[0].mxu0
  %7883 = vmatprep.mubr.bf16.mxu0 0
  %7884 = vmatmul.mubr.bf16.gmra.mrb[0].mxu0 %v7832
  %v7885 = vpop.f32.mrb[0].mxu0
  %v7886 = vadd.f32 %v7800, %v7885
  %v7887 = vpop.f32.mrb[0].mxu0
  %v7888 = vpop.f32.mrb[0].mxu0
  %v7889 = vadd.f32 %v7800, %v7888
  %v7890 = vpop.f32.mrb[0].mxu0
  %7891 = vmatprep.mubr.bf16.mxu0 0
  %7892 = vmatmul.mubr.bf16.gmra.mrb[0].mxu0 %v7835
  %v7893 = vpop.f32.mrb[0].mxu0
  %v7894 = vadd.f32 %v7800, %v7893
  %v7895 = vpop.f32.mrb[0].mxu0
  %v7896 = vpop.f32.mrb[0].mxu0
  %v7897 = vadd.f32 %v7800, %v7896
  %v7898 = vpop.f32.mrb[0].mxu0
  %7899 = vmatprep.mubr.bf16.mxu0 0
  %7900 = vmatmul.mubr.bf16.gmra.mrb[0].mxu0 %v7838
  %v7901 = vpop.f32.mrb[0].mxu0
  %v7902 = vadd.f32 %v7800, %v7901
  %v7903 = vpop.f32.mrb[0].mxu0
  %v7904 = vpop.f32.mrb[0].mxu0
  %v7905 = vadd.f32 %v7800, %v7904
  %v7906 = vpop.f32.mrb[0].mxu0
  %7907 = vdwg.mxu0
  %v7908 = vmax.f32 %v7878, 0.0
  %v7909 = vmax.f32 %v7881, 0.0
  %v7910 = vmax.f32 %v7886, 0.0
  %v7911 = vmax.f32 %v7889, 0.0
  %v7912 = vmax.f32 %v7894, 0.0
  %v7913 = vmax.f32 %v7897, 0.0
  %v7914 = vmax.f32 %v7902, 0.0
  %v7915 = vmax.f32 %v7905, 0.0
  %v7916 = vrot.slane %v7908, 4
  %v7917 = vrot.slane %v7909, 4
  %v7918 = vrot.slane %v7910, 4
  %v7919 = vrot.slane %v7911, 4
  %v7920 = vrot.slane %v7912, 4
  %v7921 = vrot.slane %v7913, 4
  %v7922 = vrot.slane %v7914, 4
  %v7923 = vrot.slane %v7915, 4
  %v7924 = vsel %vm5446, %v7922, %v7923
  %v7925 = vsel %vm5446, %v7921, %v7922
  %v7926 = vsel %vm5446, %v7920, %v7921
  %v7927 = vsel %vm5446, %v7919, %v7920
  %v7928 = vsel %vm5446, %v7918, %v7919
  %v7929 = vsel %vm5446, %v7917, %v7918
  %v7930 = vsel %vm5446, %v7916, %v7917
  %v7931 = vsel %vm5446, %v7923, %v7916
  %v7932 = vsel %vm5471, %v7931, 0.0
  %v7933 = vsel %vm5472, %v7930, 0.0
  %v7934 = vsel %vm5473, %v7929, 0.0
  %v7935 = vsel %vm5474, %v7928, 0.0
  %v7936 = vsel %vm5475, %v7927, 0.0
  %v7937 = vsel %vm5476, %v7926, 0.0
  %v7938 = vsel %vm5477, %v7925, 0.0
  %v7939 = vsel %vm5478, %v7924, 0.0
  %7948 = vrot.lane.b32.xlu0 %v7908, 24
  %v7949 = vpop.permute.xlu0 %7948
  %7950 = vrot.lane.b32.xlu0 %v7909, 24
  %v7951 = vpop.permute.xlu0 %7950
  %7952 = vrot.lane.b32.xlu0 %v7910, 24
  %v7953 = vpop.permute.xlu0 %7952
  %7954 = vrot.lane.b32.xlu0 %v7911, 24
  %v7955 = vpop.permute.xlu0 %7954
  %7956 = vrot.lane.b32.xlu0 %v7912, 24
  %v7957 = vpop.permute.xlu0 %7956
  %7958 = vrot.lane.b32.xlu0 %v7913, 24
  %v7959 = vpop.permute.xlu0 %7958
  %7960 = vrot.lane.b32.xlu0 %v7914, 24
  %v7961 = vpop.permute.xlu0 %7960
  %7962 = vrot.lane.b32.xlu0 %v7915, 24
  %v7963 = vpop.permute.xlu0 %7962
  %v7972 = vsel %vm5706, %v7932, %v7949
  %v7973 = vsel %vm5706, %v7933, %v7951
  %v7974 = vsel %vm5706, %v7934, %v7953
  %v7975 = vsel %vm5706, %v7935, %v7955
  %v7976 = vsel %vm5706, %v7936, %v7957
  %v7977 = vsel %vm5706, %v7937, %v7959
  %v7978 = vsel %vm5706, %v7938, %v7961
  %v7979 = vsel %vm5706, %v7939, %v7963
  %v7980 = vpack.c.bf16 %v7973, %v7972
  %v7981 = vpack.c.bf16 %v7975, %v7974
  %v7982 = vpack.c.bf16 %v7977, %v7976
  %v7983 = vpack.c.bf16 %v7979, %v7978
  %v7984 = vlaneseq
  %v7985 = vshrl.u32 %v7984, 7
  %v7986 = vsub.s32 0, %v7985
  %v7987 = vrot.slane %v7728, %v7986
  %v7994 = vunpack.c.l.b16 %v7721
  %v7995 = vunpack.c.l.b16 %v7722
  %v7996 = vunpack.c.l.b16 %v7723
  %v7997 = vunpack.c.l.b16 %v7724
  %v7998 = vunpack.c.l.b16 %v7725
  %v7999 = vunpack.c.l.b16 %v7726
  %v8000 = vpack.c.b16 %v7995, %v7994
  %v8001 = vpack.c.b16 %v7997, %v7996
  %v8002 = vpack.c.b16 %v7999, %v7998
  %v8007 = vsel %vm5741, %v7980, 0
  %v8010 = vsel %vm5741, %v7981, 0
  %v8013 = vsel %vm5741, %v7982, 0
  %v8016 = vsel %vm5741, %v7983, 0
  %8018 = vmatprep.subr.bf16.mxu0 0
  %8019 = vmatpush1.bf16.msra.mxu0 %v8000
  %8020 = vmatprep.subr.bf16.mxu0 0
  %8021 = vmatpush1.bf16.msra.mxu0 %v8001
  %8022 = vmatprep.subr.bf16.mxu0 0
  %8023 = vmatpush1.bf16.msra.mxu0 %v8002
  %8024 = vmatprep.subr.bf16.mxu0 0
  %8025 = vmatpush1.bf16.msra.mxu0 0
  %8026 = vmatprep.subr.bf16.mxu0 0
  %8027 = vmatpush1.bf16.msra.mxu0 0
  %8028 = vmatprep.subr.bf16.mxu0 0
  %8029 = vmatpush1.bf16.msra.mxu0 0
  %8030 = vmatprep.subr.bf16.mxu0 0
  %8031 = vmatpush1.bf16.msra.mxu0 0
  %8032 = vmatprep.subr.bf16.mxu0 0
  %8033 = vmatpush1.bf16.msra.mxu0 0
  %8034 = vmatprep.subr.bf16.mxu0 0
  %8035 = vmatpush1.bf16.msra.mxu0 0
  %8036 = vmatprep.subr.bf16.mxu0 0
  %8037 = vmatpush1.bf16.msra.mxu0 0
  %8038 = vmatprep.subr.bf16.mxu0 0
  %8039 = vmatpush1.bf16.msra.mxu0 0
  %8040 = vmatprep.subr.bf16.mxu0 0
  %8041 = vmatpush1.bf16.msra.mxu0 0
  %8042 = vmatprep.subr.bf16.mxu0 0
  %8043 = vmatpush1.bf16.msra.mxu0 0
  %8044 = vmatprep.subr.bf16.mxu0 0
  %8045 = vmatpush1.bf16.msra.mxu0 0
  %8046 = vmatprep.subr.bf16.mxu0 0
  %8047 = vmatpush1.bf16.msra.mxu0 0
  %8048 = vmatprep.subr.bf16.mxu0 0
  %8049 = vmatpush1.bf16.msra.mxu0 0
  %8050 = vmatprep.mubr.bf16.mxu0 0
  %8051 = vmatmul.mubr.bf16.gmra.mrb[0].mxu0 %v8007
  %v8052 = vpop.f32.mrb[0].mxu0
  %v8053 = vadd.f32 %v7987, %v8052
  %v8054 = vpop.f32.mrb[0].mxu0
  %v8055 = vpop.f32.mrb[0].mxu0
  %v8056 = vadd.f32 %v7987, %v8055
  %v8057 = vpop.f32.mrb[0].mxu0
  %8058 = vmatprep.mubr.bf16.mxu0 0
  %8059 = vmatmul.mubr.bf16.gmra.mrb[0].mxu0 %v8010
  %v8060 = vpop.f32.mrb[0].mxu0
  %v8061 = vadd.f32 %v7987, %v8060
  %v8062 = vpop.f32.mrb[0].mxu0
  %v8063 = vpop.f32.mrb[0].mxu0
  %v8064 = vadd.f32 %v7987, %v8063
  %v8065 = vpop.f32.mrb[0].mxu0
  %8066 = vmatprep.mubr.bf16.mxu0 0
  %8067 = vmatmul.mubr.bf16.gmra.mrb[0].mxu0 %v8013
  %v8068 = vpop.f32.mrb[0].mxu0
  %v8069 = vadd.f32 %v7987, %v8068
  %v8070 = vpop.f32.mrb[0].mxu0
  %v8071 = vpop.f32.mrb[0].mxu0
  %v8072 = vadd.f32 %v7987, %v8071
  %v8073 = vpop.f32.mrb[0].mxu0
  %8074 = vmatprep.mubr.bf16.mxu0 0
  %8075 = vmatmul.mubr.bf16.gmra.mrb[0].mxu0 %v8016
  %v8076 = vpop.f32.mrb[0].mxu0
  %v8077 = vadd.f32 %v7987, %v8076
  %v8078 = vpop.f32.mrb[0].mxu0
  %v8079 = vpop.f32.mrb[0].mxu0
  %v8080 = vadd.f32 %v7987, %v8079
  %v8081 = vpop.f32.mrb[0].mxu0
  %8082 = vdwg.mxu0
  %v8083 = vmax.f32 %v8053, 0.0
  %v8084 = vmax.f32 %v8056, 0.0
  %v8085 = vmax.f32 %v8061, 0.0
  %v8086 = vmax.f32 %v8064, 0.0
  %v8087 = vmax.f32 %v8069, 0.0
  %v8088 = vmax.f32 %v8072, 0.0
  %v8089 = vmax.f32 %v8077, 0.0
  %v8090 = vmax.f32 %v8080, 0.0
  %8099 = vrot.lane.b32.xlu0 %v7878, 104
  %v8100 = vpop.permute.xlu0 %8099
  %8101 = vrot.lane.b32.xlu0 %v7881, 104
  %v8102 = vpop.permute.xlu0 %8101
  %8103 = vrot.lane.b32.xlu0 %v7886, 104
  %v8104 = vpop.permute.xlu0 %8103
  %8105 = vrot.lane.b32.xlu0 %v7889, 104
  %v8106 = vpop.permute.xlu0 %8105
  %8107 = vrot.lane.b32.xlu0 %v7894, 104
  %v8108 = vpop.permute.xlu0 %8107
  %8109 = vrot.lane.b32.xlu0 %v7897, 104
  %v8110 = vpop.permute.xlu0 %8109
  %8111 = vrot.lane.b32.xlu0 %v7902, 104
  %v8112 = vpop.permute.xlu0 %8111
  %8113 = vrot.lane.b32.xlu0 %v7905, 104
  %v8114 = vpop.permute.xlu0 %8113
  %v8123 = vadd.f32 %v8083, %v8100
  %v8124 = vadd.f32 %v8084, %v8102
  %v8125 = vadd.f32 %v8085, %v8104
  %v8126 = vadd.f32 %v8086, %v8106
  %v8127 = vadd.f32 %v8087, %v8108
  %v8128 = vadd.f32 %v8088, %v8110
  %v8129 = vadd.f32 %v8089, %v8112
  %v8130 = vadd.f32 %v8090, %v8114
  %v8131 = vmax.f32 %v8123, 0.0
  %v8132 = vmax.f32 %v8124, 0.0
  %v8133 = vmax.f32 %v8125, 0.0
  %v8134 = vmax.f32 %v8126, 0.0
  %v8135 = vmax.f32 %v8127, 0.0
  %v8136 = vmax.f32 %v8128, 0.0
  %v8137 = vmax.f32 %v8129, 0.0
  %v8138 = vmax.f32 %v8130, 0.0
  %v8139 = vld [vmem:[%s1 + $0x5c8] sm:$0xf]
  %v8140 = vld [vmem:[%s1 + $0x5d0] sm:$0xf]
  %v8141 = vld [vmem:[%s1 + $0x5d8] sm:$0xf]
  %v8142 = vld [vmem:[%s1 + $0x5e0] sm:$0xf]
  %v8143 = vld [vmem:[%s1 + $0x5e8] sm:$0xf]
  %v8144 = vld [vmem:[%s1 + $0x5f0] sm:$0xf]
  %v8145 = vld [vmem:[%s1 + $0x5f8] sm:$0x1]
  %v8146 = vunpack.c.l.bf16 %v8145
  %v8147 = vld [vmem:[%s1 + $0x600] sm:$0xf]
  %v8148 = vld [vmem:[%s1 + $0x608] sm:$0xf]
  %v8149 = vld [vmem:[%s1 + $0x610] sm:$0xf]
  %v8150 = vld [vmem:[%s1 + $0x618] sm:$0x1]
  %v8151 = vunpack.c.l.bf16 %v8150
  %v8152 = vsel %vm5904, %v8138, 0.0
  %v8153 = vsel %vm5905, %v8131, 0.0
  %v8154 = vsel %vm5906, %v8132, 0.0
  %v8155 = vsel %vm5907, %v8133, 0.0
  %v8156 = vsel %vm5908, %v8134, 0.0
  %v8157 = vsel %vm5909, %v8135, 0.0
  %v8158 = vsel %vm5910, %v8136, 0.0
  %v8159 = vsel %vm5911, %v8137, 0.0
  %8168 = vrot.lane.b32.xlu0 %v8131, 24
  %v8169 = vpop.permute.xlu0 %8168
  %8170 = vrot.lane.b32.xlu0 %v8132, 24
  %v8171 = vpop.permute.xlu0 %8170
  %8172 = vrot.lane.b32.xlu0 %v8133, 24
  %v8173 = vpop.permute.xlu0 %8172
  %8174 = vrot.lane.b32.xlu0 %v8134, 24
  %v8175 = vpop.permute.xlu0 %8174
  %8176 = vrot.lane.b32.xlu0 %v8135, 24
  %v8177 = vpop.permute.xlu0 %8176
  %8178 = vrot.lane.b32.xlu0 %v8136, 24
  %v8179 = vpop.permute.xlu0 %8178
  %8180 = vrot.lane.b32.xlu0 %v8137, 24
  %v8181 = vpop.permute.xlu0 %8180
  %8182 = vrot.lane.b32.xlu0 %v8138, 24
  %v8183 = vpop.permute.xlu0 %8182
  %v8192 = vsel %vm5706, %v8152, %v8169
  %v8193 = vsel %vm5706, %v8153, %v8171
  %v8194 = vsel %vm5706, %v8154, %v8173
  %v8195 = vsel %vm5706, %v8155, %v8175
  %v8196 = vsel %vm5706, %v8156, %v8177
  %v8197 = vsel %vm5706, %v8157, %v8179
  %v8198 = vsel %vm5706, %v8158, %v8181
  %v8199 = vsel %vm5706, %v8159, %v8183
  %v8200 = vpack.c.bf16 %v8193, %v8192
  %v8201 = vpack.c.bf16 %v8195, %v8194
  %v8202 = vpack.c.bf16 %v8197, %v8196
  %v8203 = vpack.c.bf16 %v8199, %v8198
  %v8204 = vlaneseq
  %v8205 = vshrl.u32 %v8204, 7
  %v8206 = vsub.s32 0, %v8205
  %v8207 = vrot.slane %v8146, %v8206
  %v8214 = vunpack.c.l.b16 %v8139
  %v8215 = vunpack.c.l.b16 %v8140
  %v8216 = vunpack.c.l.b16 %v8141
  %v8217 = vunpack.c.l.b16 %v8142
  %v8218 = vunpack.c.l.b16 %v8143
  %v8219 = vunpack.c.l.b16 %v8144
  %v8220 = vpack.c.b16 %v8215, %v8214
  %v8221 = vpack.c.b16 %v8217, %v8216
  %v8222 = vpack.c.b16 %v8219, %v8218
  %v8227 = vsel %vm5741, %v8200, 0
  %v8230 = vsel %vm5741, %v8201, 0
  %v8233 = vsel %vm5741, %v8202, 0
  %v8236 = vsel %vm5741, %v8203, 0
  %8238 = vmatprep.subr.bf16.mxu0 0
  %8239 = vmatpush1.bf16.msra.mxu0 %v8220
  %8240 = vmatprep.subr.bf16.mxu0 0
  %8241 = vmatpush1.bf16.msra.mxu0 %v8221
  %8242 = vmatprep.subr.bf16.mxu0 0
  %8243 = vmatpush1.bf16.msra.mxu0 %v8222
  %8244 = vmatprep.subr.bf16.mxu0 0
  %8245 = vmatpush1.bf16.msra.mxu0 0
  %8246 = vmatprep.subr.bf16.mxu0 0
  %8247 = vmatpush1.bf16.msra.mxu0 0
  %8248 = vmatprep.subr.bf16.mxu0 0
  %8249 = vmatpush1.bf16.msra.mxu0 0
  %8250 = vmatprep.subr.bf16.mxu0 0
  %8251 = vmatpush1.bf16.msra.mxu0 0
  %8252 = vmatprep.subr.bf16.mxu0 0
  %8253 = vmatpush1.bf16.msra.mxu0 0
  %8254 = vmatprep.subr.bf16.mxu0 0
  %8255 = vmatpush1.bf16.msra.mxu0 0
  %8256 = vmatprep.subr.bf16.mxu0 0
  %8257 = vmatpush1.bf16.msra.mxu0 0
  %8258 = vmatprep.subr.bf16.mxu0 0
  %8259 = vmatpush1.bf16.msra.mxu0 0
  %8260 = vmatprep.subr.bf16.mxu0 0
  %8261 = vmatpush1.bf16.msra.mxu0 0
  %8262 = vmatprep.subr.bf16.mxu0 0
  %8263 = vmatpush1.bf16.msra.mxu0 0
  %8264 = vmatprep.subr.bf16.mxu0 0
  %8265 = vmatpush1.bf16.msra.mxu0 0
  %8266 = vmatprep.subr.bf16.mxu0 0
  %8267 = vmatpush1.bf16.msra.mxu0 0
  %8268 = vmatprep.subr.bf16.mxu0 0
  %8269 = vmatpush1.bf16.msra.mxu0 0
  %8270 = vmatprep.mubr.bf16.mxu0 0
  %8271 = vmatmul.mubr.bf16.gmra.mrb[0].mxu0 %v8227
  %v8272 = vpop.f32.mrb[0].mxu0
  %v8273 = vadd.f32 %v8207, %v8272
  %v8274 = vpop.f32.mrb[0].mxu0
  %v8275 = vpop.f32.mrb[0].mxu0
  %v8276 = vadd.f32 %v8207, %v8275
  %v8277 = vpop.f32.mrb[0].mxu0
  %8278 = vmatprep.mubr.bf16.mxu0 0
  %8279 = vmatmul.mubr.bf16.gmra.mrb[0].mxu0 %v8230
  %v8280 = vpop.f32.mrb[0].mxu0
  %v8281 = vadd.f32 %v8207, %v8280
  %v8282 = vpop.f32.mrb[0].mxu0
  %v8283 = vpop.f32.mrb[0].mxu0
  %v8284 = vadd.f32 %v8207, %v8283
  %v8285 = vpop.f32.mrb[0].mxu0
  %8286 = vmatprep.mubr.bf16.mxu0 0
  %8287 = vmatmul.mubr.bf16.gmra.mrb[0].mxu0 %v8233
  %v8288 = vpop.f32.mrb[0].mxu0
  %v8289 = vadd.f32 %v8207, %v8288
  %v8290 = vpop.f32.mrb[0].mxu0
  %v8291 = vpop.f32.mrb[0].mxu0
  %v8292 = vadd.f32 %v8207, %v8291
  %v8293 = vpop.f32.mrb[0].mxu0
  %8294 = vmatprep.mubr.bf16.mxu0 0
  %8295 = vmatmul.mubr.bf16.gmra.mrb[0].mxu0 %v8236
  %v8296 = vpop.f32.mrb[0].mxu0
  %v8297 = vadd.f32 %v8207, %v8296
  %v8298 = vpop.f32.mrb[0].mxu0
  %v8299 = vpop.f32.mrb[0].mxu0
  %v8300 = vadd.f32 %v8207, %v8299
  %v8301 = vpop.f32.mrb[0].mxu0
  %8302 = vdwg.mxu0
  %v8303 = vmax.f32 %v8273, 0.0
  %v8304 = vmax.f32 %v8276, 0.0
  %v8305 = vmax.f32 %v8281, 0.0
  %v8306 = vmax.f32 %v8284, 0.0
  %v8307 = vmax.f32 %v8289, 0.0
  %v8308 = vmax.f32 %v8292, 0.0
  %v8309 = vmax.f32 %v8297, 0.0
  %v8310 = vmax.f32 %v8300, 0.0
  %v8311 = vsel %vm5904, %v8310, 0.0
  %v8312 = vsel %vm5905, %v8303, 0.0
  %v8313 = vsel %vm5906, %v8304, 0.0
  %v8314 = vsel %vm5907, %v8305, 0.0
  %v8315 = vsel %vm5908, %v8306, 0.0
  %v8316 = vsel %vm5909, %v8307, 0.0
  %v8317 = vsel %vm5910, %v8308, 0.0
  %v8318 = vsel %vm5911, %v8309, 0.0
  %8327 = vrot.lane.b32.xlu0 %v8303, 12
  %v8328 = vpop.permute.xlu0 %8327
  %8329 = vrot.lane.b32.xlu0 %v8304, 12
  %v8330 = vpop.permute.xlu0 %8329
  %8331 = vrot.lane.b32.xlu0 %v8305, 12
  %v8332 = vpop.permute.xlu0 %8331
  %8333 = vrot.lane.b32.xlu0 %v8306, 12
  %v8334 = vpop.permute.xlu0 %8333
  %8335 = vrot.lane.b32.xlu0 %v8307, 12
  %v8336 = vpop.permute.xlu0 %8335
  %8337 = vrot.lane.b32.xlu0 %v8308, 12
  %v8338 = vpop.permute.xlu0 %8337
  %8339 = vrot.lane.b32.xlu0 %v8309, 12
  %v8340 = vpop.permute.xlu0 %8339
  %8341 = vrot.lane.b32.xlu0 %v8310, 12
  %v8342 = vpop.permute.xlu0 %8341
  %v8351 = vsel %vm6111, %v8311, %v8328
  %v8352 = vsel %vm6111, %v8312, %v8330
  %v8353 = vsel %vm6111, %v8313, %v8332
  %v8354 = vsel %vm6111, %v8314, %v8334
  %v8355 = vsel %vm6111, %v8315, %v8336
  %v8356 = vsel %vm6111, %v8316, %v8338
  %v8357 = vsel %vm6111, %v8317, %v8340
  %v8358 = vsel %vm6111, %v8318, %v8342
  %v8359 = vpack.c.bf16 %v8352, %v8351
  %v8360 = vpack.c.bf16 %v8354, %v8353
  %v8361 = vpack.c.bf16 %v8356, %v8355
  %v8362 = vpack.c.bf16 %v8358, %v8357
  %v8363 = vlaneseq
  %v8364 = vshrl.u32 %v8363, 7
  %v8365 = vsub.s32 0, %v8364
  %v8366 = vrot.slane %v8151, %v8365
  %v8370 = vunpack.c.l.b16 %v8147
  %v8371 = vunpack.c.l.b16 %v8148
  %v8372 = vunpack.c.l.b16 %v8149
  %v8373 = vpack.c.b16 %v8371, %v8370
  %v8374 = vpack.c.b16 %v8372, %v8372
  %v8377 = vsel %vm5706, %v8359, 0
  %v8380 = vsel %vm5706, %v8360, 0
  %v8383 = vsel %vm5706, %v8361, 0
  %v8386 = vsel %vm5706, %v8362, 0
  %v8389 = vsel %vm5294, %v8374, 0
  %8391 = vmatprep.subr.bf16.mxu0 0
  %8392 = vmatpush1.bf16.msra.mxu0 %v8373
  %8393 = vmatprep.subr.bf16.mxu0 0
  %8394 = vmatpush1.bf16.msra.mxu0 %v8389
  %8395 = vmatprep.subr.bf16.mxu0 0
  %8396 = vmatpush1.bf16.msra.mxu0 0
  %8397 = vmatprep.subr.bf16.mxu0 0
  %8398 = vmatpush1.bf16.msra.mxu0 0
  %8399 = vmatprep.subr.bf16.mxu0 0
  %8400 = vmatpush1.bf16.msra.mxu0 0
  %8401 = vmatprep.subr.bf16.mxu0 0
  %8402 = vmatpush1.bf16.msra.mxu0 0
  %8403 = vmatprep.subr.bf16.mxu0 0
  %8404 = vmatpush1.bf16.msra.mxu0 0
  %8405 = vmatprep.subr.bf16.mxu0 0
  %8406 = vmatpush1.bf16.msra.mxu0 0
  %8407 = vmatprep.subr.bf16.mxu0 0
  %8408 = vmatpush1.bf16.msra.mxu0 0
  %8409 = vmatprep.subr.bf16.mxu0 0
  %8410 = vmatpush1.bf16.msra.mxu0 0
  %8411 = vmatprep.subr.bf16.mxu0 0
  %8412 = vmatpush1.bf16.msra.mxu0 0
  %8413 = vmatprep.subr.bf16.mxu0 0
  %8414 = vmatpush1.bf16.msra.mxu0 0
  %8415 = vmatprep.subr.bf16.mxu0 0
  %8416 = vmatpush1.bf16.msra.mxu0 0
  %8417 = vmatprep.subr.bf16.mxu0 0
  %8418 = vmatpush1.bf16.msra.mxu0 0
  %8419 = vmatprep.subr.bf16.mxu0 0
  %8420 = vmatpush1.bf16.msra.mxu0 0
  %8421 = vmatprep.subr.bf16.mxu0 0
  %8422 = vmatpush1.bf16.msra.mxu0 0
  %8423 = vmatprep.mubr.bf16.mxu0 0
  %8424 = vmatmul.mubr.bf16.gmra.mrb[0].mxu0 %v8377
  %v8425 = vpop.f32.mrb[0].mxu0
  %v8426 = vadd.f32 %v8366, %v8425
  %v8427 = vpop.f32.mrb[0].mxu0
  %v8428 = vpop.f32.mrb[0].mxu0
  %v8429 = vadd.f32 %v8366, %v8428
  %v8430 = vpop.f32.mrb[0].mxu0
  %8431 = vmatprep.mubr.bf16.mxu0 0
  %8432 = vmatmul.mubr.bf16.gmra.mrb[0].mxu0 %v8380
  %v8433 = vpop.f32.mrb[0].mxu0
  %v8434 = vadd.f32 %v8366, %v8433
  %v8435 = vpop.f32.mrb[0].mxu0
  %v8436 = vpop.f32.mrb[0].mxu0
  %v8437 = vadd.f32 %v8366, %v8436
  %v8438 = vpop.f32.mrb[0].mxu0
  %8439 = vmatprep.mubr.bf16.mxu0 0
  %8440 = vmatmul.mubr.bf16.gmra.mrb[0].mxu0 %v8383
  %v8441 = vpop.f32.mrb[0].mxu0
  %v8442 = vadd.f32 %v8366, %v8441
  %v8443 = vpop.f32.mrb[0].mxu0
  %v8444 = vpop.f32.mrb[0].mxu0
  %v8445 = vadd.f32 %v8366, %v8444
  %v8446 = vpop.f32.mrb[0].mxu0
  %8447 = vmatprep.mubr.bf16.mxu0 0
  %8448 = vmatmul.mubr.bf16.gmra.mrb[0].mxu0 %v8386
  %v8449 = vpop.f32.mrb[0].mxu0
  %v8450 = vadd.f32 %v8366, %v8449
  %v8451 = vpop.f32.mrb[0].mxu0
  %v8452 = vpop.f32.mrb[0].mxu0
  %v8453 = vadd.f32 %v8366, %v8452
  %v8454 = vpop.f32.mrb[0].mxu0
  %8455 = vdwg.mxu0
  %v8456 = vmax.f32 %v8426, 0.0
  %v8457 = vmax.f32 %v8429, 0.0
  %v8458 = vmax.f32 %v8434, 0.0
  %v8459 = vmax.f32 %v8437, 0.0
  %v8460 = vmax.f32 %v8442, 0.0
  %v8461 = vmax.f32 %v8445, 0.0
  %v8462 = vmax.f32 %v8450, 0.0
  %v8463 = vmax.f32 %v8453, 0.0
  %8472 = vrot.lane.b32.xlu0 %v8273, 116
  %v8473 = vpop.permute.xlu0 %8472
  %8474 = vrot.lane.b32.xlu0 %v8276, 116
  %v8475 = vpop.permute.xlu0 %8474
  %8476 = vrot.lane.b32.xlu0 %v8281, 116
  %v8477 = vpop.permute.xlu0 %8476
  %8478 = vrot.lane.b32.xlu0 %v8284, 116
  %v8479 = vpop.permute.xlu0 %8478
  %8480 = vrot.lane.b32.xlu0 %v8289, 116
  %v8481 = vpop.permute.xlu0 %8480
  %8482 = vrot.lane.b32.xlu0 %v8292, 116
  %v8483 = vpop.permute.xlu0 %8482
  %8484 = vrot.lane.b32.xlu0 %v8297, 116
  %v8485 = vpop.permute.xlu0 %8484
  %8486 = vrot.lane.b32.xlu0 %v8300, 116
  %v8487 = vpop.permute.xlu0 %8486
  %v8496 = vadd.f32 %v8456, %v8473
  %v8497 = vadd.f32 %v8457, %v8475
  %v8498 = vadd.f32 %v8458, %v8477
  %v8499 = vadd.f32 %v8459, %v8479
  %v8500 = vadd.f32 %v8460, %v8481
  %v8501 = vadd.f32 %v8461, %v8483
  %v8502 = vadd.f32 %v8462, %v8485
  %v8503 = vadd.f32 %v8463, %v8487
  %v8504 = vmax.f32 %v8496, 0.0
  %v8505 = vmax.f32 %v8497, 0.0
  %v8506 = vmax.f32 %v8498, 0.0
  %v8507 = vmax.f32 %v8499, 0.0
  %v8508 = vmax.f32 %v8500, 0.0
  %v8509 = vmax.f32 %v8501, 0.0
  %v8510 = vmax.f32 %v8502, 0.0
  %v8511 = vmax.f32 %v8503, 0.0
  %v8512 = vld [vmem:[%s1 + $0x620] sm:$0xf]
  %v8513 = vld [vmem:[%s1 + $0x628] sm:$0xf]
  %v8514 = vld [vmem:[%s1 + $0x630] sm:$0xf]
  %v8515 = vld [vmem:[%s1 + $0x638] sm:$0x1]
  %v8516 = vunpack.c.l.bf16 %v8515
  %v8517 = vld [vmem:[%s1 + $0x640] sm:$0xf]
  %v8518 = vld [vmem:[%s1 + $0x648] sm:$0x3]
  %v8519 = vld [vmem:[%s1 + $0x650] sm:$0x1]
  %v8520 = vunpack.c.l.bf16 %v8519
  %v8521 = vsel %vm6298, %v8510, 0.0
  %v8522 = vsel %vm6299, %v8511, 0.0
  %v8523 = vsel %vm6300, %v8504, 0.0
  %v8524 = vsel %vm6301, %v8505, 0.0
  %v8525 = vsel %vm6302, %v8506, 0.0
  %v8526 = vsel %vm6303, %v8507, 0.0
  %v8527 = vsel %vm6304, %v8508, 0.0
  %v8528 = vsel %vm6305, %v8509, 0.0
  %8537 = vrot.lane.b32.xlu0 %v8504, 12
  %v8538 = vpop.permute.xlu0 %8537
  %8539 = vrot.lane.b32.xlu0 %v8505, 12
  %v8540 = vpop.permute.xlu0 %8539
  %8541 = vrot.lane.b32.xlu0 %v8506, 12
  %v8542 = vpop.permute.xlu0 %8541
  %8543 = vrot.lane.b32.xlu0 %v8507, 12
  %v8544 = vpop.permute.xlu0 %8543
  %8545 = vrot.lane.b32.xlu0 %v8508, 12
  %v8546 = vpop.permute.xlu0 %8545
  %8547 = vrot.lane.b32.xlu0 %v8509, 12
  %v8548 = vpop.permute.xlu0 %8547
  %8549 = vrot.lane.b32.xlu0 %v8510, 12
  %v8550 = vpop.permute.xlu0 %8549
  %8551 = vrot.lane.b32.xlu0 %v8511, 12
  %v8552 = vpop.permute.xlu0 %8551
  %v8561 = vsel %vm6111, %v8521, %v8538
  %v8562 = vsel %vm6111, %v8522, %v8540
  %v8563 = vsel %vm6111, %v8523, %v8542
  %v8564 = vsel %vm6111, %v8524, %v8544
  %v8565 = vsel %vm6111, %v8525, %v8546
  %v8566 = vsel %vm6111, %v8526, %v8548
  %v8567 = vsel %vm6111, %v8527, %v8550
  %v8568 = vsel %vm6111, %v8528, %v8552
  %v8569 = vpack.c.bf16 %v8562, %v8561
  %v8570 = vpack.c.bf16 %v8564, %v8563
  %v8571 = vpack.c.bf16 %v8566, %v8565
  %v8572 = vpack.c.bf16 %v8568, %v8567
  %v8573 = vlaneseq
  %v8574 = vshrl.u32 %v8573, 7
  %v8575 = vsub.s32 0, %v8574
  %v8576 = vrot.slane %v8516, %v8575
  %v8580 = vunpack.c.l.b16 %v8512
  %v8581 = vunpack.c.l.b16 %v8513
  %v8582 = vunpack.c.l.b16 %v8514
  %v8583 = vpack.c.b16 %v8581, %v8580
  %v8584 = vpack.c.b16 %v8582, %v8582
  %v8587 = vsel %vm5706, %v8569, 0
  %v8590 = vsel %vm5706, %v8570, 0
  %v8593 = vsel %vm5706, %v8571, 0
  %v8596 = vsel %vm5706, %v8572, 0
  %v8599 = vsel %vm5294, %v8584, 0
  %8601 = vmatprep.subr.bf16.mxu0 0
  %8602 = vmatpush1.bf16.msra.mxu0 %v8583
  %8603 = vmatprep.subr.bf16.mxu0 0
  %8604 = vmatpush1.bf16.msra.mxu0 %v8599
  %8605 = vmatprep.subr.bf16.mxu0 0
  %8606 = vmatpush1.bf16.msra.mxu0 0
  %8607 = vmatprep.subr.bf16.mxu0 0
  %8608 = vmatpush1.bf16.msra.mxu0 0
  %8609 = vmatprep.subr.bf16.mxu0 0
  %8610 = vmatpush1.bf16.msra.mxu0 0
  %8611 = vmatprep.subr.bf16.mxu0 0
  %8612 = vmatpush1.bf16.msra.mxu0 0
  %8613 = vmatprep.subr.bf16.mxu0 0
  %8614 = vmatpush1.bf16.msra.mxu0 0
  %8615 = vmatprep.subr.bf16.mxu0 0
  %8616 = vmatpush1.bf16.msra.mxu0 0
  %8617 = vmatprep.subr.bf16.mxu0 0
  %8618 = vmatpush1.bf16.msra.mxu0 0
  %8619 = vmatprep.subr.bf16.mxu0 0
  %8620 = vmatpush1.bf16.msra.mxu0 0
  %8621 = vmatprep.subr.bf16.mxu0 0
  %8622 = vmatpush1.bf16.msra.mxu0 0
  %8623 = vmatprep.subr.bf16.mxu0 0
  %8624 = vmatpush1.bf16.msra.mxu0 0
  %8625 = vmatprep.subr.bf16.mxu0 0
  %8626 = vmatpush1.bf16.msra.mxu0 0
  %8627 = vmatprep.subr.bf16.mxu0 0
  %8628 = vmatpush1.bf16.msra.mxu0 0
  %8629 = vmatprep.subr.bf16.mxu0 0
  %8630 = vmatpush1.bf16.msra.mxu0 0
  %8631 = vmatprep.subr.bf16.mxu0 0
  %8632 = vmatpush1.bf16.msra.mxu0 0
  %8633 = vmatprep.mubr.bf16.mxu0 0
  %8634 = vmatmul.mubr.bf16.gmra.mrb[0].mxu0 %v8587
  %v8635 = vpop.f32.mrb[0].mxu0
  %v8636 = vadd.f32 %v8576, %v8635
  %v8637 = vpop.f32.mrb[0].mxu0
  %v8638 = vpop.f32.mrb[0].mxu0
  %v8639 = vadd.f32 %v8576, %v8638
  %v8640 = vpop.f32.mrb[0].mxu0
  %8641 = vmatprep.mubr.bf16.mxu0 0
  %8642 = vmatmul.mubr.bf16.gmra.mrb[0].mxu0 %v8590
  %v8643 = vpop.f32.mrb[0].mxu0
  %v8644 = vadd.f32 %v8576, %v8643
  %v8645 = vpop.f32.mrb[0].mxu0
  %v8646 = vpop.f32.mrb[0].mxu0
  %v8647 = vadd.f32 %v8576, %v8646
  %v8648 = vpop.f32.mrb[0].mxu0
  %8649 = vmatprep.mubr.bf16.mxu0 0
  %8650 = vmatmul.mubr.bf16.gmra.mrb[0].mxu0 %v8593
  %v8651 = vpop.f32.mrb[0].mxu0
  %v8652 = vadd.f32 %v8576, %v8651
  %v8653 = vpop.f32.mrb[0].mxu0
  %v8654 = vpop.f32.mrb[0].mxu0
  %v8655 = vadd.f32 %v8576, %v8654
  %v8656 = vpop.f32.mrb[0].mxu0
  %8657 = vmatprep.mubr.bf16.mxu0 0
  %8658 = vmatmul.mubr.bf16.gmra.mrb[0].mxu0 %v8596
  %v8659 = vpop.f32.mrb[0].mxu0
  %v8660 = vadd.f32 %v8576, %v8659
  %v8661 = vpop.f32.mrb[0].mxu0
  %v8662 = vpop.f32.mrb[0].mxu0
  %v8663 = vadd.f32 %v8576, %v8662
  %v8664 = vpop.f32.mrb[0].mxu0
  %8665 = vdwg.mxu0
  %v8666 = vmax.f32 %v8636, 0.0
  %v8667 = vmax.f32 %v8639, 0.0
  %v8668 = vmax.f32 %v8644, 0.0
  %v8669 = vmax.f32 %v8647, 0.0
  %v8670 = vmax.f32 %v8652, 0.0
  %v8671 = vmax.f32 %v8655, 0.0
  %v8672 = vmax.f32 %v8660, 0.0
  %v8673 = vmax.f32 %v8663, 0.0
  %v8674 = vsel %vm6298, %v8672, 0.0
  %v8675 = vsel %vm6299, %v8673, 0.0
  %v8676 = vsel %vm6300, %v8666, 0.0
  %v8677 = vsel %vm6301, %v8667, 0.0
  %v8678 = vsel %vm6302, %v8668, 0.0
  %v8679 = vsel %vm6303, %v8669, 0.0
  %v8680 = vsel %vm6304, %v8670, 0.0
  %v8681 = vsel %vm6305, %v8671, 0.0
  %8690 = vrot.lane.b32.xlu0 %v8666, 6
  %v8691 = vpop.permute.xlu0 %8690
  %8692 = vrot.lane.b32.xlu0 %v8667, 6
  %v8693 = vpop.permute.xlu0 %8692
  %8694 = vrot.lane.b32.xlu0 %v8668, 6
  %v8695 = vpop.permute.xlu0 %8694
  %8696 = vrot.lane.b32.xlu0 %v8669, 6
  %v8697 = vpop.permute.xlu0 %8696
  %8698 = vrot.lane.b32.xlu0 %v8670, 6
  %v8699 = vpop.permute.xlu0 %8698
  %8700 = vrot.lane.b32.xlu0 %v8671, 6
  %v8701 = vpop.permute.xlu0 %8700
  %8702 = vrot.lane.b32.xlu0 %v8672, 6
  %v8703 = vpop.permute.xlu0 %8702
  %8704 = vrot.lane.b32.xlu0 %v8673, 6
  %v8705 = vpop.permute.xlu0 %8704
  %v8714 = vsel %vm6499, %v8674, %v8691
  %v8715 = vsel %vm6499, %v8675, %v8693
  %v8716 = vsel %vm6499, %v8676, %v8695
  %v8717 = vsel %vm6499, %v8677, %v8697
  %v8718 = vsel %vm6499, %v8678, %v8699
  %v8719 = vsel %vm6499, %v8679, %v8701
  %v8720 = vsel %vm6499, %v8680, %v8703
  %v8721 = vsel %vm6499, %v8681, %v8705
  %v8722 = vpack.c.bf16 %v8715, %v8714
  %v8723 = vpack.c.bf16 %v8717, %v8716
  %v8724 = vpack.c.bf16 %v8719, %v8718
  %v8725 = vpack.c.bf16 %v8721, %v8720
  %v8726 = vlaneseq
  %v8727 = vshrl.u32 %v8726, 7
  %v8728 = vsub.s32 0, %v8727
  %v8729 = vrot.slane %v8520, %v8728
  %v8732 = vunpack.c.l.b16 %v8517
  %v8733 = vunpack.c.l.b16 %v8518
  %v8734 = vpack.c.b16 %v8733, %v8732
  %v8736 = vsel %vm6111, %v8722, 0
  %v8739 = vsel %vm6111, %v8723, 0
  %v8742 = vsel %vm6111, %v8724, 0
  %v8745 = vsel %vm6111, %v8725, 0
  %v8748 = vsel %vm6533, %v8734, 0
  %8750 = vmatprep.subr.bf16.mxu0 0
  %8751 = vmatpush1.bf16.msra.mxu0 %v8748
  %8752 = vmatprep.subr.bf16.mxu0 0
  %8753 = vmatpush1.bf16.msra.mxu0 0
  %8754 = vmatprep.subr.bf16.mxu0 0
  %8755 = vmatpush1.bf16.msra.mxu0 0
  %8756 = vmatprep.subr.bf16.mxu0 0
  %8757 = vmatpush1.bf16.msra.mxu0 0
  %8758 = vmatprep.subr.bf16.mxu0 0
  %8759 = vmatpush1.bf16.msra.mxu0 0
  %8760 = vmatprep.subr.bf16.mxu0 0
  %8761 = vmatpush1.bf16.msra.mxu0 0
  %8762 = vmatprep.subr.bf16.mxu0 0
  %8763 = vmatpush1.bf16.msra.mxu0 0
  %8764 = vmatprep.subr.bf16.mxu0 0
  %8765 = vmatpush1.bf16.msra.mxu0 0
  %8766 = vmatprep.subr.bf16.mxu0 0
  %8767 = vmatpush1.bf16.msra.mxu0 0
  %8768 = vmatprep.subr.bf16.mxu0 0
  %8769 = vmatpush1.bf16.msra.mxu0 0
  %8770 = vmatprep.subr.bf16.mxu0 0
  %8771 = vmatpush1.bf16.msra.mxu0 0
  %8772 = vmatprep.subr.bf16.mxu0 0
  %8773 = vmatpush1.bf16.msra.mxu0 0
  %8774 = vmatprep.subr.bf16.mxu0 0
  %8775 = vmatpush1.bf16.msra.mxu0 0
  %8776 = vmatprep.subr.bf16.mxu0 0
  %8777 = vmatpush1.bf16.msra.mxu0 0
  %8778 = vmatprep.subr.bf16.mxu0 0
  %8779 = vmatpush1.bf16.msra.mxu0 0
  %8780 = vmatprep.subr.bf16.mxu0 0
  %8781 = vmatpush1.bf16.msra.mxu0 0
  %8782 = vmatprep.mubr.bf16.mxu0 0
  %8783 = vmatmul.mubr.bf16.gmra.mrb[0].mxu0 %v8736
  %v8784 = vpop.f32.mrb[0].mxu0
  %v8785 = vadd.f32 %v8729, %v8784
  %v8786 = vpop.f32.mrb[0].mxu0
  %v8787 = vpop.f32.mrb[0].mxu0
  %v8788 = vadd.f32 %v8729, %v8787
  %v8789 = vpop.f32.mrb[0].mxu0
  %8790 = vmatprep.mubr.bf16.mxu0 0
  %8791 = vmatmul.mubr.bf16.gmra.mrb[0].mxu0 %v8739
  %v8792 = vpop.f32.mrb[0].mxu0
  %v8793 = vadd.f32 %v8729, %v8792
  %v8794 = vpop.f32.mrb[0].mxu0
  %v8795 = vpop.f32.mrb[0].mxu0
  %v8796 = vadd.f32 %v8729, %v8795
  %v8797 = vpop.f32.mrb[0].mxu0
  %8798 = vmatprep.mubr.bf16.mxu0 0
  %8799 = vmatmul.mubr.bf16.gmra.mrb[0].mxu0 %v8742
  %v8800 = vpop.f32.mrb[0].mxu0
  %v8801 = vadd.f32 %v8729, %v8800
  %v8802 = vpop.f32.mrb[0].mxu0
  %v8803 = vpop.f32.mrb[0].mxu0
  %v8804 = vadd.f32 %v8729, %v8803
  %v8805 = vpop.f32.mrb[0].mxu0
  %8806 = vmatprep.mubr.bf16.mxu0 0
  %8807 = vmatmul.mubr.bf16.gmra.mrb[0].mxu0 %v8745
  %v8808 = vpop.f32.mrb[0].mxu0
  %v8809 = vadd.f32 %v8729, %v8808
  %v8810 = vpop.f32.mrb[0].mxu0
  %v8811 = vpop.f32.mrb[0].mxu0
  %v8812 = vadd.f32 %v8729, %v8811
  %v8813 = vpop.f32.mrb[0].mxu0
  %8814 = vdwg.mxu0
  %v8815 = vmax.f32 %v8785, 0.0
  %v8816 = vmax.f32 %v8788, 0.0
  %v8817 = vmax.f32 %v8793, 0.0
  %v8818 = vmax.f32 %v8796, 0.0
  %v8819 = vmax.f32 %v8801, 0.0
  %v8820 = vmax.f32 %v8804, 0.0
  %v8821 = vmax.f32 %v8809, 0.0
  %v8822 = vmax.f32 %v8812, 0.0
  %8831 = vrot.lane.b32.xlu0 %v8636, 122
  %v8832 = vpop.permute.xlu0 %8831
  %8833 = vrot.lane.b32.xlu0 %v8639, 122
  %v8834 = vpop.permute.xlu0 %8833
  %8835 = vrot.lane.b32.xlu0 %v8644, 122
  %v8836 = vpop.permute.xlu0 %8835
  %8837 = vrot.lane.b32.xlu0 %v8647, 122
  %v8838 = vpop.permute.xlu0 %8837
  %8839 = vrot.lane.b32.xlu0 %v8652, 122
  %v8840 = vpop.permute.xlu0 %8839
  %8841 = vrot.lane.b32.xlu0 %v8655, 122
  %v8842 = vpop.permute.xlu0 %8841
  %8843 = vrot.lane.b32.xlu0 %v8660, 122
  %v8844 = vpop.permute.xlu0 %8843
  %8845 = vrot.lane.b32.xlu0 %v8663, 122
  %v8846 = vpop.permute.xlu0 %8845
  %v8855 = vadd.f32 %v8815, %v8832
  %v8856 = vadd.f32 %v8816, %v8834
  %v8857 = vadd.f32 %v8817, %v8836
  %v8858 = vadd.f32 %v8818, %v8838
  %v8859 = vadd.f32 %v8819, %v8840
  %v8860 = vadd.f32 %v8820, %v8842
  %v8861 = vadd.f32 %v8821, %v8844
  %v8862 = vadd.f32 %v8822, %v8846
  %v8863 = vmax.f32 %v8855, 0.0
  %v8864 = vmax.f32 %v8856, 0.0
  %v8865 = vmax.f32 %v8857, 0.0
  %v8866 = vmax.f32 %v8858, 0.0
  %v8867 = vmax.f32 %v8859, 0.0
  %v8868 = vmax.f32 %v8860, 0.0
  %v8869 = vmax.f32 %v8861, 0.0
  %v8870 = vmax.f32 %v8862, 0.0
  %8879 = vrot.lane.b32.xlu0 %v8863, 6
  %v8880 = vpop.permute.xlu0 %8879
  %8881 = vrot.lane.b32.xlu0 %v8864, 6
  %v8882 = vpop.permute.xlu0 %8881
  %8883 = vrot.lane.b32.xlu0 %v8865, 6
  %v8884 = vpop.permute.xlu0 %8883
  %8885 = vrot.lane.b32.xlu0 %v8866, 6
  %v8886 = vpop.permute.xlu0 %8885
  %8887 = vrot.lane.b32.xlu0 %v8867, 6
  %v8888 = vpop.permute.xlu0 %8887
  %8889 = vrot.lane.b32.xlu0 %v8868, 6
  %v8890 = vpop.permute.xlu0 %8889
  %8891 = vrot.lane.b32.xlu0 %v8869, 6
  %v8892 = vpop.permute.xlu0 %8891
  %8893 = vrot.lane.b32.xlu0 %v8870, 6
  %v8894 = vpop.permute.xlu0 %8893
  %v8903 = vsel %vm6499, %v6650, %v8880
  %v8904 = vsel %vm6499, %v6651, %v8882
  %v8905 = vsel %vm6499, %v6652, %v8884
  %v8906 = vsel %vm6499, %v6653, %v8886
  %v8907 = vsel %vm6499, %v6654, %v8888
  %v8908 = vsel %vm6499, %v6655, %v8890
  %v8909 = vsel %vm6499, %v6656, %v8892
  %v8910 = vsel %vm6499, %v6657, %v8894
  %v8911 = vsel %vm6111, %v8903, 0.0
  %v8912 = vsel %vm6111, %v8904, 0.0
  %v8913 = vsel %vm6111, %v8905, 0.0
  %v8914 = vsel %vm6111, %v8906, 0.0
  %v8915 = vsel %vm6111, %v8907, 0.0
  %v8916 = vsel %vm6111, %v8908, 0.0
  %v8917 = vsel %vm6111, %v8909, 0.0
  %v8918 = vsel %vm6111, %v8910, 0.0
  %8919 = vst [vmem:[%s2] sm:$0xff] %v8911
  %8920 = vst [vmem:[%s2 + $0x8] sm:$0xff] %v8912
  %8921 = vst [vmem:[%s2 + $0x10] sm:$0xff] %v8913
  %8922 = vst [vmem:[%s2 + $0x18] sm:$0xff] %v8914
  %8923 = vst [vmem:[%s2 + $0x20] sm:$0xff] %v8915
  %8924 = vst [vmem:[%s2 + $0x28] sm:$0xff] %v8916
  %8925 = vst [vmem:[%s2 + $0x30] sm:$0xff] %v8917
  %8926 = vst [vmem:[%s2 + $0x38] sm:$0xff] %v8918
  // Predicated region
  $region10: #{forward.1} parent=0 // pred_check
    _
  $region11: #{forward.1} parent=0 // pred_check_branch
    %8928 = sbr.rel (0) target = $region13
  $region12: #{forward.1} parent=0 // pred_region
    _
  $region13: #{forward.1} parent=0 // pred_fallthru
    _
  // Predicated region
  $region14: #{forward.1} parent=0 // pred_check
    _
  $region15: #{forward.1} parent=0 // pred_check_branch
    %8930 = sbr.rel (0) target = $region17
  $region16: #{forward.1} parent=0 // pred_region
    _
  $region17: #{forward.1} parent=0 // pred_fallthru
    _

</llo_original>
